<compile_context>
chip_gen: v6e
topology: v6e:2x2x1
jax: 0.10.0
libtpu: 0.0.40
codegen_flags: <defaults>
</compile_context>

<pallas_src>
import jax
import jax.numpy as jnp
from jax import lax
from jax.experimental import pallas as pl
from jax.experimental.pallas import tpu as pltpu

CP = 128  # lane-padded channel width (all channel dims <= 128 here)


def _round_up(x, m):
    return (x + m - 1) // m * m


# ----------------------------------------------------------------------------
# Pallas kernel
# ----------------------------------------------------------------------------
def _make_kernel(G, P, W, PAD, bp, collapsed):
    """G images per grid step, P=H*W pixels per image, bp = conv2 channel count."""
    N = G * P
    halo_dt = jnp.bfloat16 if collapsed else jnp.float32

    def kernel(x_ref, m_ref, pool_ref, wsc_ref, w1_ref, b1_ref, w2_ref, b2_ref,
               w3_ref, b3_ref, f1w_ref, f1b_ref, f2w_ref, f2b_ref,
               o_ref, hpad_ref):
        xf = x_ref[...]                                            # (N, CP) bf16

        # conv1 (1x1, BN scale folded into weight) + bias + relu.
        h = jnp.dot(xf, w1_ref[...], preferred_element_type=jnp.float32)
        h = jnp.maximum(h + b1_ref[...], 0.0)                      # (N, CP) f32

        # conv2: 3x3 grouped conv (pad=1, stride=1) via 9 statically shifted slices of a
        # zero-haloed copy of h; row/column edge validity comes from the precomputed mask.
        zero_halo = jnp.zeros((PAD, CP), halo_dt)
        hpad_ref[pl.ds(0, PAD), :] = zero_halo
        hpad_ref[pl.ds(PAD + N, PAD), :] = zero_halo
        hpad_ref[pl.ds(PAD, N), :] = h.astype(halo_dt)

        if collapsed:
            # Single-matmul form: tap k's bp real lanes are rolled to lane group bp*k of
            # one combined bf16 operand; the taps are stacked along the weight rows.
            comb = None
            for k in range(9):
                dy, dx = k // 3 - 1, k % 3 - 1
                hk = hpad_ref[pl.ds(PAD + dy * W + dx, N), :]      # (N, CP) bf16
                if k:
                    hk = pltpu.roll(hk, bp * k, axis=1)
                comb = hk if comb is None else comb + hk
            comb = comb * m_ref[...]                               # fold all edge masks
            acc = jnp.dot(comb, w2_ref[...], preferred_element_type=jnp.float32)
        else:
            # Fallback: 9 masked per-tap matmuls accumulated in f32 (f32 halo).
            acc = jnp.zeros((N, CP), jnp.float32)
            for k in range(9):
                dy, dx = k // 3 - 1, k % 3 - 1
                hk = hpad_ref[pl.ds(PAD + dy * W + dx, N), :]      # (N, CP) f32
                if (dy, dx) != (0, 0):
                    hk = hk * m_ref[:, pl.ds(bp * k, 1)]
                acc = acc + jnp.dot(hk.astype(jnp.bfloat16), w2_ref[k],
                                    preferred_element_type=jnp.float32)

        h2 = jnp.maximum(acc + b2_ref[...], 0.0).astype(jnp.bfloat16)   # bn2 bias + relu

        # conv3 (1x1, BN scale folded) + bias (no relu before SE)
        h3 = jnp.dot(h2, w3_ref[...], preferred_element_type=jnp.float32) + b3_ref[...]

        # SE: per-image global average pool (constant pooling matrix -> idle MXU)
        # -> fc1 -> relu -> fc2 -> sigmoid.
        y = jnp.dot(pool_ref[...], h3, preferred_element_type=jnp.float32)   # (G, CP)
        y = jnp.dot(y.astype(jnp.bfloat16), f1w_ref[...],
                    preferred_element_type=jnp.float32) + f1b_ref[...]
        y = jnp.maximum(y, 0.0)
        y = jnp.dot(y.astype(jnp.bfloat16), f2w_ref[...],
                    preferred_element_type=jnp.float32) + f2b_ref[...]
        gate = pl.reciprocal(1.0 + jnp.exp(-y), approx=True)       # sigmoid via EUP

        # shortcut 1x1 conv, computed last from the still-resident input block (no scratch)
        res = jnp.dot(xf, wsc_ref[...], preferred_element_type=jnp.float32)  # (N, CP)

        for g in range(G):                                         # SE scale + residual + relu
            rows = slice(g * P, (g + 1) * P)
            o_ref[pl.ds(g * P, P), :] = jnp.maximum(
                h3[rows] * gate[g:g + 1, :] + res[rows], 0.0)

    return kernel


# ----------------------------------------------------------------------------
# Wrapper (layout glue + pallas_call)
# ----------------------------------------------------------------------------
def _pick_images_per_step(B, P):
    try:
        kind = (jax.devices()[0].device_kind or "").lower()
    except Exception:
        kind = ""
    # Chips whose JAX device exposes 2 TensorCores (megacore): keep multiple grid steps
    # so the 'parallel' batch axis can be split across cores; 1-TC chips fuse the batch.
    two_tc = any(t in kind for t in ("v7", "7x", "v5p", "v4"))
    g = max(1, B // 2) if two_tc else B
    g = max(1, min(g, max(1, 4096 // max(P, 1))))   # keep per-step row count modest
    while B % g:
        g -= 1
    return g


def _build_geometry(G, H, W, bp):
    """Precomputed per-step tap-validity mask (N, CP) and mean-pooling matrix (G, N)."""
    P = H * W
    N = G * P
    q = jnp.arange(N) % P
    yy = q // W
    xx = q % W
    m = jnp.zeros((N, CP), jnp.float32)
    for k in range(9):
        dy, dx = k // 3 - 1, k % 3 - 1
        valid = jnp.ones((N,), jnp.float32)
        if dy == -1:
            valid = valid * (yy > 0).astype(jnp.float32)
        elif dy == 1:
            valid = valid * (yy < H - 1).astype(jnp.float32)
        if dx == -1:
            valid = valid * (xx > 0).astype(jnp.float32)
        elif dx == 1:
            valid = valid * (xx < W - 1).astype(jnp.float32)
        m = m.at[:, bp * k: bp * (k + 1)].set(
            jnp.broadcast_to(valid[:, None], (N, bp)))
    pool = jnp.kron(jnp.eye(G, dtype=jnp.float32),
                    jnp.ones((1, P), jnp.float32)) / float(P)
    return m.astype(jnp.bfloat16), pool


def _forward(x_nchw, kp, G, collapsed):
    B, Cin, H, W = x_nchw.shape
    P = H * W
    N = G * P
    planes = kp["planes"]
    bp = kp["bp"]
    PAD = _round_up(W + 1, 8)            # halo rows at each end (>= W+1, 8-aligned)
    assert B % G == 0

    # NCHW -> (B*P, CP) lane-padded bf16 (half the input DMA, no in-kernel pack)
    x_flat = jnp.transpose(x_nchw, (0, 2, 3, 1)).reshape(B * P, Cin)
    x_flat = jnp.pad(x_flat, ((0, 0), (0, CP - Cin))).astype(jnp.bfloat16)

    mask, pool = _build_geometry(G, H, W, bp)
    w2 = kp["w2c"] if collapsed else kp["w2d"]

    consts = [mask, pool, kp["wsc"], kp["w1"], kp["b1"], w2, kp["b2"],
              kp["w3"], kp["b3"], kp["f1w"], kp["f1b"], kp["f2w"], kp["f2b"]]

    def const_spec(a):
        nd = a.ndim
        return pl.BlockSpec(a.shape, lambda b, nd=nd: (0,) * nd)   # resident, no re-DMA

    in_specs = [pl.BlockSpec((N, CP), lambda b: (b, 0))]
    in_specs += [const_spec(a) for a in consts]

    halo_dt = jnp.bfloat16 if collapsed else jnp.float32
    out_flat = pl.pallas_call(
        _make_kernel(G, P, W, PAD, bp, collapsed),
        out_shape=jax.ShapeDtypeStruct((B * P, CP), jnp.float32),
        grid_spec=pltpu.PrefetchScalarGridSpec(
            num_scalar_prefetch=0,
            grid=(B // G,),
            in_specs=in_specs,
            out_specs=pl.BlockSpec((N, CP), lambda b: (b, 0)),
            scratch_shapes=[pltpu.VMEM((N + 2 * PAD, CP), halo_dt)]),
        compiler_params=pltpu.CompilerParams(
            dimension_semantics=("parallel",),
            vmem_limit_bytes=32 * 1024 * 1024),
    )(x_flat, *consts)
    out_flat = jax.block_until_ready(out_flat)

    out = out_flat.reshape(B, H, W, CP)[..., :planes]
    return jnp.transpose(out, (0, 3, 1, 2))


def se_bottleneck_forward(x_nchw, kp, images_per_step=None):
    B, _, H, W = x_nchw.shape
    P = H * W
    G = images_per_step or _pick_images_per_step(B, P)
    bp = kp["bp"]
    try:
        # primary path: bf16 halo + single collapsed conv2 matmul via lane rolls
        return _forward(x_nchw, kp, G, collapsed=(9 * bp <= CP))
    except Exception:
        # conservative fallback: f32 halo + 9 per-tap matmuls (previously verified form)
        return _forward(x_nchw, kp, G, collapsed=False)


# ----------------------------------------------------------------------------
# Deterministic parameter init (PyTorch-layout "raw" + padded, BN-folded kernel params)
# ----------------------------------------------------------------------------
def init_params(key, inplanes, planes, reduction=8, eps=1e-5):
    bp = planes // 4
    card = bp // 4
    gsize = bp // card
    hid = planes // reduction
    ks = jax.random.split(key, 20)

    def nrm(k, shape, fan_in):
        return jax.random.normal(k, shape, jnp.float32) / jnp.sqrt(float(fan_in))

    wsc_t = nrm(ks[0], (planes, inplanes, 1, 1), inplanes)      # shortcut 1x1, OIHW
    w1_t = nrm(ks[1], (bp, inplanes, 1, 1), inplanes)           # conv1 1x1
    w2_t = nrm(ks[2], (bp, gsize, 3, 3), 9 * gsize)             # conv2 3x3 grouped
    w3_t = nrm(ks[3], (planes, bp, 1, 1), bp)                   # conv3 1x1
    f1w_t = nrm(ks[4], (hid, planes), planes)                   # SE fc1 (torch (out,in))
    f1b_t = 0.1 * jax.random.normal(ks[5], (hid,), jnp.float32)
    f2w_t = nrm(ks[6], (planes, hid), hid)                      # SE fc2
    f2b_t = 0.1 * jax.random.normal(ks[7], (planes,), jnp.float32)

    def bn_params(kg, kb, km, kv, C):
        gamma = 1.0 + 0.1 * jax.random.normal(kg, (C,), jnp.float32)
        beta = 0.1 * jax.random.normal(kb, (C,), jnp.float32)
        mean = 0.1 * jax.random.normal(km, (C,), jnp.float32)
        var = jax.random.uniform(kv, (C,), jnp.float32, minval=0.5, maxval=1.5)
        return gamma, beta, mean, var

    bn1 = bn_params(ks[8], ks[9], ks[10], ks[11], bp)
    bn2 = bn_params(ks[12], ks[13], ks[14], ks[15], bp)
    bn3 = bn_params(ks[16], ks[17], ks[18], ks[19], planes)

    def fold(bn):
        g, b, m, v = bn
        s = g / jnp.sqrt(v + eps)
        return s, b - m * s

    s1, b1 = fold(bn1)
    s2, b2 = fold(bn2)
    s3, b3 = fold(bn3)

    # BN scales folded into the conv weight columns; only the biases go to the kernel.
    w1f = w1_t[:, :, 0, 0].T * s1[None, :]                      # (inplanes, bp)
    w3f = w3_t[:, :, 0, 0].T * s3[None, :]                      # (bp, planes)
    wscf = wsc_t[:, :, 0, 0].T                                  # (inplanes, planes)

    # conv2 grouped 3x3 -> per-tap block-diagonal (bp_in, bp_out) blocks, s2 folded in
    w2_blocks = jnp.zeros((9, bp, bp), jnp.float32)
    for co in range(bp):
        g = co // gsize
        for ci in range(gsize):
            w2_blocks = w2_blocks.at[:, g * gsize + ci, co].set(
                w2_t[co, ci].reshape(9) * s2[co])
    # collapsed single (CP, CP) weight: tap k occupies rows bp*k .. bp*k+bp-1
    w2c = jnp.zeros((CP, CP), jnp.float32)
    for k in range(9):
        w2c = w2c.at[bp * k: bp * k + bp, :bp].set(w2_blocks[k])

    def padw(a):   # 2-D weight -> (CP, CP) bf16
        return jnp.pad(a, ((0, CP - a.shape[0]), (0, CP - a.shape[1]))).astype(jnp.bfloat16)

    def padv(v):   # per-channel vector -> (1, CP) f32
        return jnp.pad(v.reshape(1, -1), ((0, 0), (0, CP - v.shape[0])))

    kernel_params = dict(
        planes=planes, bp=bp,
        wsc=padw(wscf), w1=padw(w1f), b1=padv(b1),
        w2c=w2c.astype(jnp.bfloat16),
        w2d=jnp.pad(w2_blocks, ((0, 0), (0, CP - bp), (0, CP - bp))).astype(jnp.bfloat16),
        b2=padv(b2),
        w3=padw(w3f), b3=padv(b3),
        f1w=padw(f1w_t.T), f1b=padv(f1b_t),
        f2w=padw(f2w_t.T), f2b=padv(f2b_t),
    )
    raw = dict(wsc_t=wsc_t, w1_t=w1_t, w2_t=w2_t, w3_t=w3_t,
               f1w_t=f1w_t, f1b_t=f1b_t, f2w_t=f2w_t, f2b_t=f2b_t,
               bn1=bn1, bn2=bn2, bn3=bn3, card=card, eps=eps)
    return raw, kernel_params


# ----------------------------------------------------------------------------
# Pure-JAX reference (NCHW, matches PyTorch eval-mode semantics)
# ----------------------------------------------------------------------------
def ref_forward(x, raw):
    eps = raw["eps"]

    def bn(t, params):
        g, b, m, v = params
        sh = (1, -1, 1, 1)
        return (t - m.reshape(sh)) / jnp.sqrt(v.reshape(sh) + eps) * g.reshape(sh) + b.reshape(sh)

    def conv(t, w, pad=0, groups=1):
        return lax.conv_general_dilated(
            t, w, (1, 1), [(pad, pad), (pad, pad)],
            feature_group_count=groups,
            dimension_numbers=("NCHW", "OIHW", "NCHW"))

    residual = conv(x, raw["wsc_t"])
    out = jax.nn.relu(bn(conv(x, raw["w1_t"]), raw["bn1"]))
    out = jax.nn.relu(bn(conv(out, raw["w2_t"], pad=1, groups=raw["card"]), raw["bn2"]))
    out = bn(conv(out, raw["w3_t"]), raw["bn3"])
    y = out.mean(axis=(2, 3))                                   # (B, planes)
    y = jax.nn.relu(y @ raw["f1w_t"].T + raw["f1b_t"])
    y = jax.nn.sigmoid(y @ raw["f2w_t"].T + raw["f2b_t"])
    out = out * y[:, :, None, None] + residual
    return jax.nn.relu(out)


# ----------------------------------------------------------------------------
if __name__ == "__main__":
    key = jax.random.PRNGKey(0)
    kx, kp = jax.random.split(key)

    B, inplanes, planes, H, W = 2, 16, 32, 16, 16     # bp=8, cardinality=2, SE hidden=4
    x = jax.random.normal(kx, (B, inplanes, H, W), jnp.float32)

    raw, kernel_params = init_params(kp, inplanes, planes, reduction=8)

    out = se_bottleneck_forward(x, kernel_params)
    out = jax.block_until_ready(out)
    assert out.shape == (B, planes, H, W)

    ref = ref_forward(x, raw)
    max_err = float(jnp.max(jnp.abs(out - ref)))
    mean_err = float(jnp.mean(jnp.abs(out - ref)))
    # bf16 MXU operands with f32 accumulation -> loose-ish tolerance vs f32 reference
    assert max_err < 1e-1, f"max abs error vs reference: {max_err}"
    assert mean_err < 2e-2, f"mean abs error vs reference: {mean_err}"

    print("KERNEL_OK")
</pallas_src>

<mosaic_0001>
module attributes {stable_mosaic.version = 11 : i64} {
  func.func @kernel(%arg0: i32, %arg1: memref<512x128xbf16, #tpu.memory_space<vmem>>, %arg2: memref<512x128xbf16, #tpu.memory_space<vmem>>, %arg3: memref<2x512xf32, #tpu.memory_space<vmem>>, %arg4: memref<128x128xbf16, #tpu.memory_space<vmem>>, %arg5: memref<128x128xbf16, #tpu.memory_space<vmem>>, %arg6: memref<1x128xf32, #tpu.memory_space<vmem>>, %arg7: memref<128x128xbf16, #tpu.memory_space<vmem>>, %arg8: memref<1x128xf32, #tpu.memory_space<vmem>>, %arg9: memref<128x128xbf16, #tpu.memory_space<vmem>>, %arg10: memref<1x128xf32, #tpu.memory_space<vmem>>, %arg11: memref<128x128xbf16, #tpu.memory_space<vmem>>, %arg12: memref<1x128xf32, #tpu.memory_space<vmem>>, %arg13: memref<128x128xbf16, #tpu.memory_space<vmem>>, %arg14: memref<1x128xf32, #tpu.memory_space<vmem>>, %arg15: memref<512x128xf32, #tpu.memory_space<vmem>>, %arg16: memref<560x128xbf16, #tpu.memory_space<vmem>>) attributes {dimension_semantics = [#tpu.dimension_semantics<parallel>], iteration_bounds = array<i64: 1>, scalar_prefetch = 0 : i64, scratch_operands = 1 : i64, tpu.core_type = #tpu.core_type<tc>, window_params = [{transform_indices = @transform_0, window_bounds = array<i64: 512, 128>}, {pipeline_mode = #tpu.pipeline_mode<synchronous>, transform_indices = @transform_1, window_bounds = array<i64: 512, 128>}, {pipeline_mode = #tpu.pipeline_mode<synchronous>, transform_indices = @transform_2, window_bounds = array<i64: 2, 512>}, {pipeline_mode = #tpu.pipeline_mode<synchronous>, transform_indices = @transform_3, window_bounds = array<i64: 128, 128>}, {pipeline_mode = #tpu.pipeline_mode<synchronous>, transform_indices = @transform_4, window_bounds = array<i64: 128, 128>}, {pipeline_mode = #tpu.pipeline_mode<synchronous>, transform_indices = @transform_5, window_bounds = array<i64: 1, 128>}, {pipeline_mode = #tpu.pipeline_mode<synchronous>, transform_indices = @transform_6, window_bounds = array<i64: 128, 128>}, {pipeline_mode = #tpu.pipeline_mode<synchronous>, transform_indices = @transform_7, window_bounds = array<i64: 1, 128>}, {pipeline_mode = #tpu.pipeline_mode<synchronous>, transform_indices = @transform_8, window_bounds = array<i64: 128, 128>}, {pipeline_mode = #tpu.pipeline_mode<synchronous>, transform_indices = @transform_9, window_bounds = array<i64: 1, 128>}, {pipeline_mode = #tpu.pipeline_mode<synchronous>, transform_indices = @transform_10, window_bounds = array<i64: 128, 128>}, {pipeline_mode = #tpu.pipeline_mode<synchronous>, transform_indices = @transform_11, window_bounds = array<i64: 1, 128>}, {pipeline_mode = #tpu.pipeline_mode<synchronous>, transform_indices = @transform_12, window_bounds = array<i64: 128, 128>}, {pipeline_mode = #tpu.pipeline_mode<synchronous>, transform_indices = @transform_13, window_bounds = array<i64: 1, 128>}, {transform_indices = @transform_14, window_bounds = array<i64: 512, 128>}]} {
    %c0 = arith.constant 0 : index
    %c0_0 = arith.constant 0 : index
    %0 = vector.load %arg1[%c0, %c0_0] : memref<512x128xbf16, #tpu.memory_space<vmem>>, vector<512x128xbf16>
    %c0_1 = arith.constant 0 : index
    %c0_2 = arith.constant 0 : index
    %1 = vector.load %arg5[%c0_1, %c0_2] : memref<128x128xbf16, #tpu.memory_space<vmem>>, vector<128x128xbf16>
    %cst = arith.constant dense<0.000000e+00> : vector<512x128xf32>
    %2 = tpu.matmul %0, %1, %cst {dimension_numbers = #tpu.dot_dimension_numbers<[1], [0], [0], [1], [0, 0, 1, 1], [], []>} : vector<512x128xbf16>, vector<128x128xbf16>, vector<512x128xf32> -> vector<512x128xf32>
    %c0_3 = arith.constant 0 : index
    %c0_4 = arith.constant 0 : index
    %3 = vector.load %arg6[%c0_3, %c0_4] : memref<1x128xf32, #tpu.memory_space<vmem>>, vector<1x128xf32>
    %4 = vector.broadcast %3 : vector<1x128xf32> to vector<512x128xf32>
    %5 = arith.addf %2, %4 : vector<512x128xf32>
    %cst_5 = arith.constant 0.000000e+00 : f32
    %6 = vector.broadcast %cst_5 : f32 to vector<512x128xf32>
    %7 = arith.maximumf %5, %6 : vector<512x128xf32>
    %cst_6 = arith.constant 0.000000e+00 : bf16
    %8 = vector.broadcast %cst_6 : bf16 to vector<24x128xbf16>
    %c0_7 = arith.constant 0 : index
    %c0_8 = arith.constant 0 : index
    %9 = vector.load %arg16[%c0_7, %c0_8] : memref<560x128xbf16, #tpu.memory_space<vmem>>, vector<24x128xbf16>
    tpu.vector_store %arg16[%c0_7, %c0_8], %8 {strides = array<i32>} : memref<560x128xbf16, #tpu.memory_space<vmem>>, vector<24x128xbf16>,
    %c536 = arith.constant 536 : index
    %c0_9 = arith.constant 0 : index
    %10 = vector.load %arg16[%c536, %c0_9] : memref<560x128xbf16, #tpu.memory_space<vmem>>, vector<24x128xbf16>
    tpu.vector_store %arg16[%c536, %c0_9], %8 {strides = array<i32>} : memref<560x128xbf16, #tpu.memory_space<vmem>>, vector<24x128xbf16>,
    %11 = arith.truncf %7 : vector<512x128xf32> to vector<512x128xbf16>
    %c24 = arith.constant 24 : index
    %c0_10 = arith.constant 0 : index
    %12 = vector.load %arg16[%c24, %c0_10] : memref<560x128xbf16, #tpu.memory_space<vmem>>, vector<512x128xbf16>
    tpu.vector_store %arg16[%c24, %c0_10], %11 {strides = array<i32>} : memref<560x128xbf16, #tpu.memory_space<vmem>>, vector<512x128xbf16>,
    %c7 = arith.constant 7 : index
    %c0_11 = arith.constant 0 : index
    %13 = vector.load %arg16[%c7, %c0_11] : memref<560x128xbf16, #tpu.memory_space<vmem>>, vector<512x128xbf16>
    %c8 = arith.constant 8 : index
    %c0_12 = arith.constant 0 : index
    %14 = vector.load %arg16[%c8, %c0_12] : memref<560x128xbf16, #tpu.memory_space<vmem>>, vector<512x128xbf16>
    %c8_i32 = arith.constant 8 : i32
    %15 = tpu.dynamic_rotate %14 by %c8_i32 dim 1 : vector<512x128xbf16>, i32 -> vector<512x128xbf16>
    %16 = arith.addf %13, %15 : vector<512x128xbf16>
    %c9 = arith.constant 9 : index
    %c0_13 = arith.constant 0 : index
    %17 = vector.load %arg16[%c9, %c0_13] : memref<560x128xbf16, #tpu.memory_space<vmem>>, vector<512x128xbf16>
    %c16_i32 = arith.constant 16 : i32
    %18 = tpu.dynamic_rotate %17 by %c16_i32 dim 1 : vector<512x128xbf16>, i32 -> vector<512x128xbf16>
    %19 = arith.addf %16, %18 : vector<512x128xbf16>
    %c23 = arith.constant 23 : index
    %c0_14 = arith.constant 0 : index
    %20 = vector.load %arg16[%c23, %c0_14] : memref<560x128xbf16, #tpu.memory_space<vmem>>, vector<512x128xbf16>
    %c24_i32 = arith.constant 24 : i32
    %21 = tpu.dynamic_rotate %20 by %c24_i32 dim 1 : vector<512x128xbf16>, i32 -> vector<512x128xbf16>
    %22 = arith.addf %19, %21 : vector<512x128xbf16>
    %c24_15 = arith.constant 24 : index
    %c0_16 = arith.constant 0 : index
    %23 = vector.load %arg16[%c24_15, %c0_16] : memref<560x128xbf16, #tpu.memory_space<vmem>>, vector<512x128xbf16>
    %c32_i32 = arith.constant 32 : i32
    %24 = tpu.dynamic_rotate %23 by %c32_i32 dim 1 : vector<512x128xbf16>, i32 -> vector<512x128xbf16>
    %25 = arith.addf %22, %24 : vector<512x128xbf16>
    %c25 = arith.constant 25 : index
    %c0_17 = arith.constant 0 : index
    %26 = vector.load %arg16[%c25, %c0_17] : memref<560x128xbf16, #tpu.memory_space<vmem>>, vector<512x128xbf16>
    %c40_i32 = arith.constant 40 : i32
    %27 = tpu.dynamic_rotate %26 by %c40_i32 dim 1 : vector<512x128xbf16>, i32 -> vector<512x128xbf16>
    %28 = arith.addf %25, %27 : vector<512x128xbf16>
    %c39 = arith.constant 39 : index
    %c0_18 = arith.constant 0 : index
    %29 = vector.load %arg16[%c39, %c0_18] : memref<560x128xbf16, #tpu.memory_space<vmem>>, vector<512x128xbf16>
    %c48_i32 = arith.constant 48 : i32
    %30 = tpu.dynamic_rotate %29 by %c48_i32 dim 1 : vector<512x128xbf16>, i32 -> vector<512x128xbf16>
    %31 = arith.addf %28, %30 : vector<512x128xbf16>
    %c40 = arith.constant 40 : index
    %c0_19 = arith.constant 0 : index
    %32 = vector.load %arg16[%c40, %c0_19] : memref<560x128xbf16, #tpu.memory_space<vmem>>, vector<512x128xbf16>
    %c56_i32 = arith.constant 56 : i32
    %33 = tpu.dynamic_rotate %32 by %c56_i32 dim 1 : vector<512x128xbf16>, i32 -> vector<512x128xbf16>
    %34 = arith.addf %31, %33 : vector<512x128xbf16>
    %c41 = arith.constant 41 : index
    %c0_20 = arith.constant 0 : index
    %35 = vector.load %arg16[%c41, %c0_20] : memref<560x128xbf16, #tpu.memory_space<vmem>>, vector<512x128xbf16>
    %c64_i32 = arith.constant 64 : i32
    %36 = tpu.dynamic_rotate %35 by %c64_i32 dim 1 : vector<512x128xbf16>, i32 -> vector<512x128xbf16>
    %37 = arith.addf %34, %36 : vector<512x128xbf16>
    %c0_21 = arith.constant 0 : index
    %c0_22 = arith.constant 0 : index
    %38 = vector.load %arg2[%c0_21, %c0_22] : memref<512x128xbf16, #tpu.memory_space<vmem>>, vector<512x128xbf16>
    %39 = arith.mulf %37, %38 : vector<512x128xbf16>
    %c0_23 = arith.constant 0 : index
    %c0_24 = arith.constant 0 : index
    %40 = vector.load %arg7[%c0_23, %c0_24] : memref<128x128xbf16, #tpu.memory_space<vmem>>, vector<128x128xbf16>
    %cst_25 = arith.constant dense<0.000000e+00> : vector<512x128xf32>
    %41 = tpu.matmul %39, %40, %cst_25 {dimension_numbers = #tpu.dot_dimension_numbers<[1], [0], [0], [1], [0, 0, 1, 1], [], []>} : vector<512x128xbf16>, vector<128x128xbf16>, vector<512x128xf32> -> vector<512x128xf32>
    %c0_26 = arith.constant 0 : index
    %c0_27 = arith.constant 0 : index
    %42 = vector.load %arg8[%c0_26, %c0_27] : memref<1x128xf32, #tpu.memory_space<vmem>>, vector<1x128xf32>
    %43 = vector.broadcast %42 : vector<1x128xf32> to vector<512x128xf32>
    %44 = arith.addf %41, %43 : vector<512x128xf32>
    %cst_28 = arith.constant 0.000000e+00 : f32
    %45 = vector.broadcast %cst_28 : f32 to vector<512x128xf32>
    %46 = arith.maximumf %44, %45 : vector<512x128xf32>
    %47 = arith.truncf %46 : vector<512x128xf32> to vector<512x128xbf16>
    %c0_29 = arith.constant 0 : index
    %c0_30 = arith.constant 0 : index
    %48 = vector.load %arg9[%c0_29, %c0_30] : memref<128x128xbf16, #tpu.memory_space<vmem>>, vector<128x128xbf16>
    %cst_31 = arith.constant dense<0.000000e+00> : vector<512x128xf32>
    %49 = tpu.matmul %47, %48, %cst_31 {dimension_numbers = #tpu.dot_dimension_numbers<[1], [0], [0], [1], [0, 0, 1, 1], [], []>} : vector<512x128xbf16>, vector<128x128xbf16>, vector<512x128xf32> -> vector<512x128xf32>
    %c0_32 = arith.constant 0 : index
    %c0_33 = arith.constant 0 : index
    %50 = vector.load %arg10[%c0_32, %c0_33] : memref<1x128xf32, #tpu.memory_space<vmem>>, vector<1x128xf32>
    %51 = vector.broadcast %50 : vector<1x128xf32> to vector<512x128xf32>
    %52 = arith.addf %49, %51 : vector<512x128xf32>
    %c0_34 = arith.constant 0 : index
    %c0_35 = arith.constant 0 : index
    %53 = vector.load %arg3[%c0_34, %c0_35] : memref<2x512xf32, #tpu.memory_space<vmem>>, vector<2x512xf32>
    %cst_36 = arith.constant dense<0.000000e+00> : vector<2x128xf32>
    %54 = tpu.matmul %53, %52, %cst_36 {dimension_numbers = #tpu.dot_dimension_numbers<[1], [0], [0], [1], [0, 0, 1, 1], [], []>} : vector<2x512xf32>, vector<512x128xf32>, vector<2x128xf32> -> vector<2x128xf32>
    %55 = arith.truncf %54 : vector<2x128xf32> to vector<2x128xbf16>
    %c0_37 = arith.constant 0 : index
    %c0_38 = arith.constant 0 : index
    %56 = vector.load %arg11[%c0_37, %c0_38] : memref<128x128xbf16, #tpu.memory_space<vmem>>, vector<128x128xbf16>
    %cst_39 = arith.constant dense<0.000000e+00> : vector<2x128xf32>
    %57 = tpu.matmul %55, %56, %cst_39 {dimension_numbers = #tpu.dot_dimension_numbers<[1], [0], [0], [1], [0, 0, 1, 1], [], []>} : vector<2x128xbf16>, vector<128x128xbf16>, vector<2x128xf32> -> vector<2x128xf32>
    %c0_40 = arith.constant 0 : index
    %c0_41 = arith.constant 0 : index
    %58 = vector.load %arg12[%c0_40, %c0_41] : memref<1x128xf32, #tpu.memory_space<vmem>>, vector<1x128xf32>
    %59 = vector.broadcast %58 : vector<1x128xf32> to vector<2x128xf32>
    %60 = arith.addf %57, %59 : vector<2x128xf32>
    %cst_42 = arith.constant 0.000000e+00 : f32
    %61 = vector.broadcast %cst_42 : f32 to vector<2x128xf32>
    %62 = arith.maximumf %60, %61 : vector<2x128xf32>
    %63 = arith.truncf %62 : vector<2x128xf32> to vector<2x128xbf16>
    %c0_43 = arith.constant 0 : index
    %c0_44 = arith.constant 0 : index
    %64 = vector.load %arg13[%c0_43, %c0_44] : memref<128x128xbf16, #tpu.memory_space<vmem>>, vector<128x128xbf16>
    %cst_45 = arith.constant dense<0.000000e+00> : vector<2x128xf32>
    %65 = tpu.matmul %63, %64, %cst_45 {dimension_numbers = #tpu.dot_dimension_numbers<[1], [0], [0], [1], [0, 0, 1, 1], [], []>} : vector<2x128xbf16>, vector<128x128xbf16>, vector<2x128xf32> -> vector<2x128xf32>
    %c0_46 = arith.constant 0 : index
    %c0_47 = arith.constant 0 : index
    %66 = vector.load %arg14[%c0_46, %c0_47] : memref<1x128xf32, #tpu.memory_space<vmem>>, vector<1x128xf32>
    %67 = vector.broadcast %66 : vector<1x128xf32> to vector<2x128xf32>
    %68 = arith.addf %65, %67 : vector<2x128xf32>
    %cst_48 = arith.constant 0.000000e+00 : f32
    %69 = vector.broadcast %cst_48 : f32 to vector<2x128xf32>
    %70 = arith.subf %69, %68 : vector<2x128xf32>
    %71 = math.exp %70 : vector<2x128xf32>
    %cst_49 = arith.constant 1.000000e+00 : f32
    %72 = vector.broadcast %cst_49 : f32 to vector<2x128xf32>
    %73 = arith.addf %72, %71 : vector<2x128xf32>
    %74 = tpu.reciprocal %73 {approx = true} : vector<2x128xf32> -> vector<2x128xf32>
    %c0_50 = arith.constant 0 : index
    %c0_51 = arith.constant 0 : index
    %75 = vector.load %arg4[%c0_50, %c0_51] : memref<128x128xbf16, #tpu.memory_space<vmem>>, vector<128x128xbf16>
    %cst_52 = arith.constant dense<0.000000e+00> : vector<512x128xf32>
    %76 = tpu.matmul %0, %75, %cst_52 {dimension_numbers = #tpu.dot_dimension_numbers<[1], [0], [0], [1], [0, 0, 1, 1], [], []>} : vector<512x128xbf16>, vector<128x128xbf16>, vector<512x128xf32> -> vector<512x128xf32>
    %77 = vector.extract_strided_slice %52 {offsets = [0, 0], sizes = [256, 128], strides = [1, 1]} : vector<512x128xf32> to vector<256x128xf32>
    %78 = vector.extract_strided_slice %74 {offsets = [0, 0], sizes = [1, 128], strides = [1, 1]} : vector<2x128xf32> to vector<1x128xf32>
    %79 = vector.broadcast %78 : vector<1x128xf32> to vector<256x128xf32>
    %80 = arith.mulf %77, %79 : vector<256x128xf32>
    %81 = vector.extract_strided_slice %76 {offsets = [0, 0], sizes = [256, 128], strides = [1, 1]} : vector<512x128xf32> to vector<256x128xf32>
    %82 = arith.addf %80, %81 : vector<256x128xf32>
    %cst_53 = arith.constant 0.000000e+00 : f32
    %83 = vector.broadcast %cst_53 : f32 to vector<256x128xf32>
    %84 = arith.maximumf %82, %83 : vector<256x128xf32>
    %c0_54 = arith.constant 0 : index
    %c0_55 = arith.constant 0 : index
    %85 = vector.load %arg15[%c0_54, %c0_55] : memref<512x128xf32, #tpu.memory_space<vmem>>, vector<256x128xf32>
    tpu.vector_store %arg15[%c0_54, %c0_55], %84 {strides = array<i32>} : memref<512x128xf32, #tpu.memory_space<vmem>>, vector<256x128xf32>,
    %86 = vector.extract_strided_slice %52 {offsets = [256, 0], sizes = [256, 128], strides = [1, 1]} : vector<512x128xf32> to vector<256x128xf32>
    %87 = vector.extract_strided_slice %74 {offsets = [1, 0], sizes = [1, 128], strides = [1, 1]} : vector<2x128xf32> to vector<1x128xf32>
    %88 = vector.broadcast %87 : vector<1x128xf32> to vector<256x128xf32>
    %89 = arith.mulf %86, %88 : vector<256x128xf32>
    %90 = vector.extract_strided_slice %76 {offsets = [256, 0], sizes = [256, 128], strides = [1, 1]} : vector<512x128xf32> to vector<256x128xf32>
    %91 = arith.addf %89, %90 : vector<256x128xf32>
    %cst_56 = arith.constant 0.000000e+00 : f32
    %92 = vector.broadcast %cst_56 : f32 to vector<256x128xf32>
    %93 = arith.maximumf %91, %92 : vector<256x128xf32>
    %c256 = arith.constant 256 : index
    %c0_57 = arith.constant 0 : index
    %94 = vector.load %arg15[%c256, %c0_57] : memref<512x128xf32, #tpu.memory_space<vmem>>, vector<256x128xf32>
    tpu.vector_store %arg15[%c256, %c0_57], %93 {strides = array<i32>} : memref<512x128xf32, #tpu.memory_space<vmem>>, vector<256x128xf32>,
    return
  }
  func.func @transform_0(%arg0: i32) -> (i32, i32) {
    %c0_i32 = arith.constant 0 : i32
    %c0_i32_0 = arith.constant 0 : i32
    return %arg0, %c0_i32 : i32, i32
  }
  func.func @transform_1(%arg0: i32) -> (i32, i32) {
    %c0_i32 = arith.constant 0 : i32
    %c0_i32_0 = arith.constant 0 : i32
    %c0_i32_1 = arith.constant 0 : i32
    return %c0_i32, %c0_i32_0 : i32, i32
  }
  func.func @transform_2(%arg0: i32) -> (i32, i32) {
    %c0_i32 = arith.constant 0 : i32
    %c0_i32_0 = arith.constant 0 : i32
    %c0_i32_1 = arith.constant 0 : i32
    return %c0_i32, %c0_i32_0 : i32, i32
  }
  func.func @transform_3(%arg0: i32) -> (i32, i32) {
    %c0_i32 = arith.constant 0 : i32
    %c0_i32_0 = arith.constant 0 : i32
    %c0_i32_1 = arith.constant 0 : i32
    return %c0_i32, %c0_i32_0 : i32, i32
  }
  func.func @transform_4(%arg0: i32) -> (i32, i32) {
    %c0_i32 = arith.constant 0 : i32
    %c0_i32_0 = arith.constant 0 : i32
    %c0_i32_1 = arith.constant 0 : i32
    return %c0_i32, %c0_i32_0 : i32, i32
  }
  func.func @transform_5(%arg0: i32) -> (i32, i32) {
    %c0_i32 = arith.constant 0 : i32
    %c0_i32_0 = arith.constant 0 : i32
    %c0_i32_1 = arith.constant 0 : i32
    return %c0_i32, %c0_i32_0 : i32, i32
  }
  func.func @transform_6(%arg0: i32) -> (i32, i32) {
    %c0_i32 = arith.constant 0 : i32
    %c0_i32_0 = arith.constant 0 : i32
    %c0_i32_1 = arith.constant 0 : i32
    return %c0_i32, %c0_i32_0 : i32, i32
  }
  func.func @transform_7(%arg0: i32) -> (i32, i32) {
    %c0_i32 = arith.constant 0 : i32
    %c0_i32_0 = arith.constant 0 : i32
    %c0_i32_1 = arith.constant 0 : i32
    return %c0_i32, %c0_i32_0 : i32, i32
  }
  func.func @transform_8(%arg0: i32) -> (i32, i32) {
    %c0_i32 = arith.constant 0 : i32
    %c0_i32_0 = arith.constant 0 : i32
    %c0_i32_1 = arith.constant 0 : i32
    return %c0_i32, %c0_i32_0 : i32, i32
  }
  func.func @transform_9(%arg0: i32) -> (i32, i32) {
    %c0_i32 = arith.constant 0 : i32
    %c0_i32_0 = arith.constant 0 : i32
    %c0_i32_1 = arith.constant 0 : i32
    return %c0_i32, %c0_i32_0 : i32, i32
  }
  func.func @transform_10(%arg0: i32) -> (i32, i32) {
    %c0_i32 = arith.constant 0 : i32
    %c0_i32_0 = arith.constant 0 : i32
    %c0_i32_1 = arith.constant 0 : i32
    return %c0_i32, %c0_i32_0 : i32, i32
  }
  func.func @transform_11(%arg0: i32) -> (i32, i32) {
    %c0_i32 = arith.constant 0 : i32
    %c0_i32_0 = arith.constant 0 : i32
    %c0_i32_1 = arith.constant 0 : i32
    return %c0_i32, %c0_i32_0 : i32, i32
  }
  func.func @transform_12(%arg0: i32) -> (i32, i32) {
    %c0_i32 = arith.constant 0 : i32
    %c0_i32_0 = arith.constant 0 : i32
    %c0_i32_1 = arith.constant 0 : i32
    return %c0_i32, %c0_i32_0 : i32, i32
  }
  func.func @transform_13(%arg0: i32) -> (i32, i32) {
    %c0_i32 = arith.constant 0 : i32
    %c0_i32_0 = arith.constant 0 : i32
    %c0_i32_1 = arith.constant 0 : i32
    return %c0_i32, %c0_i32_0 : i32, i32
  }
  func.func @transform_14(%arg0: i32) -> (i32, i32) {
    %c0_i32 = arith.constant 0 : i32
    %c0_i32_0 = arith.constant 0 : i32
    return %arg0, %c0_i32 : i32, i32
  }
}

module attributes {stable_mosaic.version = 11 : i64} {
  func.func @kernel(%arg0: i32, %arg1: memref<512x128xbf16, #tpu.memory_space<vmem>>, %arg2: memref<512x128xbf16, #tpu.memory_space<vmem>>, %arg3: memref<2x512xf32, #tpu.memory_space<vmem>>, %arg4: memref<128x128xbf16, #tpu.memory_space<vmem>>, %arg5: memref<128x128xbf16, #tpu.memory_space<vmem>>, %arg6: memref<1x128xf32, #tpu.memory_space<vmem>>, %arg7: memref<9x128x128xbf16, #tpu.memory_space<vmem>>, %arg8: memref<1x128xf32, #tpu.memory_space<vmem>>, %arg9: memref<128x128xbf16, #tpu.memory_space<vmem>>, %arg10: memref<1x128xf32, #tpu.memory_space<vmem>>, %arg11: memref<128x128xbf16, #tpu.memory_space<vmem>>, %arg12: memref<1x128xf32, #tpu.memory_space<vmem>>, %arg13: memref<128x128xbf16, #tpu.memory_space<vmem>>, %arg14: memref<1x128xf32, #tpu.memory_space<vmem>>, %arg15: memref<512x128xf32, #tpu.memory_space<vmem>>, %arg16: memref<560x128xf32, #tpu.memory_space<vmem>>) attributes {dimension_semantics = [#tpu.dimension_semantics<parallel>], iteration_bounds = array<i64: 1>, scalar_prefetch = 0 : i64, scratch_operands = 1 : i64, tpu.core_type = #tpu.core_type<tc>, window_params = [{transform_indices = @transform_0, window_bounds = array<i64: 512, 128>}, {pipeline_mode = #tpu.pipeline_mode<synchronous>, transform_indices = @transform_1, window_bounds = array<i64: 512, 128>}, {pipeline_mode = #tpu.pipeline_mode<synchronous>, transform_indices = @transform_2, window_bounds = array<i64: 2, 512>}, {pipeline_mode = #tpu.pipeline_mode<synchronous>, transform_indices = @transform_3, window_bounds = array<i64: 128, 128>}, {pipeline_mode = #tpu.pipeline_mode<synchronous>, transform_indices = @transform_4, window_bounds = array<i64: 128, 128>}, {pipeline_mode = #tpu.pipeline_mode<synchronous>, transform_indices = @transform_5, window_bounds = array<i64: 1, 128>}, {pipeline_mode = #tpu.pipeline_mode<synchronous>, transform_indices = @transform_6, window_bounds = array<i64: 9, 128, 128>}, {pipeline_mode = #tpu.pipeline_mode<synchronous>, transform_indices = @transform_7, window_bounds = array<i64: 1, 128>}, {pipeline_mode = #tpu.pipeline_mode<synchronous>, transform_indices = @transform_8, window_bounds = array<i64: 128, 128>}, {pipeline_mode = #tpu.pipeline_mode<synchronous>, transform_indices = @transform_9, window_bounds = array<i64: 1, 128>}, {pipeline_mode = #tpu.pipeline_mode<synchronous>, transform_indices = @transform_10, window_bounds = array<i64: 128, 128>}, {pipeline_mode = #tpu.pipeline_mode<synchronous>, transform_indices = @transform_11, window_bounds = array<i64: 1, 128>}, {pipeline_mode = #tpu.pipeline_mode<synchronous>, transform_indices = @transform_12, window_bounds = array<i64: 128, 128>}, {pipeline_mode = #tpu.pipeline_mode<synchronous>, transform_indices = @transform_13, window_bounds = array<i64: 1, 128>}, {transform_indices = @transform_14, window_bounds = array<i64: 512, 128>}]} {
    %c0 = arith.constant 0 : index
    %c0_0 = arith.constant 0 : index
    %0 = vector.load %arg1[%c0, %c0_0] : memref<512x128xbf16, #tpu.memory_space<vmem>>, vector<512x128xbf16>
    %c0_1 = arith.constant 0 : index
    %c0_2 = arith.constant 0 : index
    %1 = vector.load %arg5[%c0_1, %c0_2] : memref<128x128xbf16, #tpu.memory_space<vmem>>, vector<128x128xbf16>
    %cst = arith.constant dense<0.000000e+00> : vector<512x128xf32>
    %2 = tpu.matmul %0, %1, %cst {dimension_numbers = #tpu.dot_dimension_numbers<[1], [0], [0], [1], [0, 0, 1, 1], [], []>} : vector<512x128xbf16>, vector<128x128xbf16>, vector<512x128xf32> -> vector<512x128xf32>
    %c0_3 = arith.constant 0 : index
    %c0_4 = arith.constant 0 : index
    %3 = vector.load %arg6[%c0_3, %c0_4] : memref<1x128xf32, #tpu.memory_space<vmem>>, vector<1x128xf32>
    %4 = vector.broadcast %3 : vector<1x128xf32> to vector<512x128xf32>
    %5 = arith.addf %2, %4 : vector<512x128xf32>
    %cst_5 = arith.constant 0.000000e+00 : f32
    %6 = vector.broadcast %cst_5 : f32 to vector<512x128xf32>
    %7 = arith.maximumf %5, %6 : vector<512x128xf32>
    %cst_6 = arith.constant 0.000000e+00 : f32
    %8 = vector.broadcast %cst_6 : f32 to vector<24x128xf32>
    %c0_7 = arith.constant 0 : index
    %c0_8 = arith.constant 0 : index
    %9 = vector.load %arg16[%c0_7, %c0_8] : memref<560x128xf32, #tpu.memory_space<vmem>>, vector<24x128xf32>
    tpu.vector_store %arg16[%c0_7, %c0_8], %8 {strides = array<i32>} : memref<560x128xf32, #tpu.memory_space<vmem>>, vector<24x128xf32>,
    %c536 = arith.constant 536 : index
    %c0_9 = arith.constant 0 : index
    %10 = vector.load %arg16[%c536, %c0_9] : memref<560x128xf32, #tpu.memory_space<vmem>>, vector<24x128xf32>
    tpu.vector_store %arg16[%c536, %c0_9], %8 {strides = array<i32>} : memref<560x128xf32, #tpu.memory_space<vmem>>, vector<24x128xf32>,
    %c24 = arith.constant 24 : index
    %c0_10 = arith.constant 0 : index
    %11 = vector.load %arg16[%c24, %c0_10] : memref<560x128xf32, #tpu.memory_space<vmem>>, vector<512x128xf32>
    tpu.vector_store %arg16[%c24, %c0_10], %7 {strides = array<i32>} : memref<560x128xf32, #tpu.memory_space<vmem>>, vector<512x128xf32>,
    %cst_11 = arith.constant 0.000000e+00 : f32
    %12 = vector.broadcast %cst_11 : f32 to vector<512x128xf32>
    %c7 = arith.constant 7 : index
    %c0_12 = arith.constant 0 : index
    %13 = vector.load %arg16[%c7, %c0_12] : memref<560x128xf32, #tpu.memory_space<vmem>>, vector<512x128xf32>
    %c0_13 = arith.constant 0 : index
    %c0_14 = arith.constant 0 : index
    %14 = vector.load %arg2[%c0_13, %c0_14] : memref<512x128xbf16, #tpu.memory_space<vmem>>, vector<512x1xbf16>
    %15 = arith.extf %14 : vector<512x1xbf16> to vector<512x1xf32>
    %16 = vector.broadcast %15 : vector<512x1xf32> to vector<512x128xf32>
    %17 = arith.mulf %13, %16 : vector<512x128xf32>
    %18 = arith.truncf %17 : vector<512x128xf32> to vector<512x128xbf16>
    %c0_15 = arith.constant 0 : index
    %c0_16 = arith.constant 0 : index
    %c0_17 = arith.constant 0 : index
    %19 = vector.load %arg7[%c0_15, %c0_16, %c0_17] : memref<9x128x128xbf16, #tpu.memory_space<vmem>>, vector<1x128x128xbf16>
    %20 = vector.shape_cast %19 : vector<1x128x128xbf16> to vector<128x128xbf16>
    %cst_18 = arith.constant dense<0.000000e+00> : vector<512x128xf32>
    %21 = tpu.matmul %18, %20, %cst_18 {dimension_numbers = #tpu.dot_dimension_numbers<[1], [0], [0], [1], [0, 0, 1, 1], [], []>} : vector<512x128xbf16>, vector<128x128xbf16>, vector<512x128xf32> -> vector<512x128xf32>
    %22 = arith.addf %12, %21 : vector<512x128xf32>
    %c8 = arith.constant 8 : index
    %c0_19 = arith.constant 0 : index
    %23 = vector.load %arg16[%c8, %c0_19] : memref<560x128xf32, #tpu.memory_space<vmem>>, vector<512x128xf32>
    %c0_20 = arith.constant 0 : index
    %c8_21 = arith.constant 8 : index
    %24 = vector.load %arg2[%c0_20, %c8_21] : memref<512x128xbf16, #tpu.memory_space<vmem>>, vector<512x1xbf16>
    %25 = arith.extf %24 : vector<512x1xbf16> to vector<512x1xf32>
    %26 = vector.broadcast %25 : vector<512x1xf32> to vector<512x128xf32>
    %27 = arith.mulf %23, %26 : vector<512x128xf32>
    %28 = arith.truncf %27 : vector<512x128xf32> to vector<512x128xbf16>
    %c1 = arith.constant 1 : index
    %c0_22 = arith.constant 0 : index
    %c0_23 = arith.constant 0 : index
    %29 = vector.load %arg7[%c1, %c0_22, %c0_23] : memref<9x128x128xbf16, #tpu.memory_space<vmem>>, vector<1x128x128xbf16>
    %30 = vector.shape_cast %29 : vector<1x128x128xbf16> to vector<128x128xbf16>
    %cst_24 = arith.constant dense<0.000000e+00> : vector<512x128xf32>
    %31 = tpu.matmul %28, %30, %cst_24 {dimension_numbers = #tpu.dot_dimension_numbers<[1], [0], [0], [1], [0, 0, 1, 1], [], []>} : vector<512x128xbf16>, vector<128x128xbf16>, vector<512x128xf32> -> vector<512x128xf32>
    %32 = arith.addf %22, %31 : vector<512x128xf32>
    %c9 = arith.constant 9 : index
    %c0_25 = arith.constant 0 : index
    %33 = vector.load %arg16[%c9, %c0_25] : memref<560x128xf32, #tpu.memory_space<vmem>>, vector<512x128xf32>
    %c0_26 = arith.constant 0 : index
    %c16 = arith.constant 16 : index
    %34 = vector.load %arg2[%c0_26, %c16] : memref<512x128xbf16, #tpu.memory_space<vmem>>, vector<512x1xbf16>
    %35 = arith.extf %34 : vector<512x1xbf16> to vector<512x1xf32>
    %36 = vector.broadcast %35 : vector<512x1xf32> to vector<512x128xf32>
    %37 = arith.mulf %33, %36 : vector<512x128xf32>
    %38 = arith.truncf %37 : vector<512x128xf32> to vector<512x128xbf16>
    %c2 = arith.constant 2 : index
    %c0_27 = arith.constant 0 : index
    %c0_28 = arith.constant 0 : index
    %39 = vector.load %arg7[%c2, %c0_27, %c0_28] : memref<9x128x128xbf16, #tpu.memory_space<vmem>>, vector<1x128x128xbf16>
    %40 = vector.shape_cast %39 : vector<1x128x128xbf16> to vector<128x128xbf16>
    %cst_29 = arith.constant dense<0.000000e+00> : vector<512x128xf32>
    %41 = tpu.matmul %38, %40, %cst_29 {dimension_numbers = #tpu.dot_dimension_numbers<[1], [0], [0], [1], [0, 0, 1, 1], [], []>} : vector<512x128xbf16>, vector<128x128xbf16>, vector<512x128xf32> -> vector<512x128xf32>
    %42 = arith.addf %32, %41 : vector<512x128xf32>
    %c23 = arith.constant 23 : index
    %c0_30 = arith.constant 0 : index
    %43 = vector.load %arg16[%c23, %c0_30] : memref<560x128xf32, #tpu.memory_space<vmem>>, vector<512x128xf32>
    %c0_31 = arith.constant 0 : index
    %c24_32 = arith.constant 24 : index
    %44 = vector.load %arg2[%c0_31, %c24_32] : memref<512x128xbf16, #tpu.memory_space<vmem>>, vector<512x1xbf16>
    %45 = arith.extf %44 : vector<512x1xbf16> to vector<512x1xf32>
    %46 = vector.broadcast %45 : vector<512x1xf32> to vector<512x128xf32>
    %47 = arith.mulf %43, %46 : vector<512x128xf32>
    %48 = arith.truncf %47 : vector<512x128xf32> to vector<512x128xbf16>
    %c3 = arith.constant 3 : index
    %c0_33 = arith.constant 0 : index
    %c0_34 = arith.constant 0 : index
    %49 = vector.load %arg7[%c3, %c0_33, %c0_34] : memref<9x128x128xbf16, #tpu.memory_space<vmem>>, vector<1x128x128xbf16>
    %50 = vector.shape_cast %49 : vector<1x128x128xbf16> to vector<128x128xbf16>
    %cst_35 = arith.constant dense<0.000000e+00> : vector<512x128xf32>
    %51 = tpu.matmul %48, %50, %cst_35 {dimension_numbers = #tpu.dot_dimension_numbers<[1], [0], [0], [1], [0, 0, 1, 1], [], []>} : vector<512x128xbf16>, vector<128x128xbf16>, vector<512x128xf32> -> vector<512x128xf32>
    %52 = arith.addf %42, %51 : vector<512x128xf32>
    %c24_36 = arith.constant 24 : index
    %c0_37 = arith.constant 0 : index
    %53 = vector.load %arg16[%c24_36, %c0_37] : memref<560x128xf32, #tpu.memory_space<vmem>>, vector<512x128xf32>
    %54 = arith.truncf %53 : vector<512x128xf32> to vector<512x128xbf16>
    %c4 = arith.constant 4 : index
    %c0_38 = arith.constant 0 : index
    %c0_39 = arith.constant 0 : index
    %55 = vector.load %arg7[%c4, %c0_38, %c0_39] : memref<9x128x128xbf16, #tpu.memory_space<vmem>>, vector<1x128x128xbf16>
    %56 = vector.shape_cast %55 : vector<1x128x128xbf16> to vector<128x128xbf16>
    %cst_40 = arith.constant dense<0.000000e+00> : vector<512x128xf32>
    %57 = tpu.matmul %54, %56, %cst_40 {dimension_numbers = #tpu.dot_dimension_numbers<[1], [0], [0], [1], [0, 0, 1, 1], [], []>} : vector<512x128xbf16>, vector<128x128xbf16>, vector<512x128xf32> -> vector<512x128xf32>
    %58 = arith.addf %52, %57 : vector<512x128xf32>
    %c25 = arith.constant 25 : index
    %c0_41 = arith.constant 0 : index
    %59 = vector.load %arg16[%c25, %c0_41] : memref<560x128xf32, #tpu.memory_space<vmem>>, vector<512x128xf32>
    %c0_42 = arith.constant 0 : index
    %c40 = arith.constant 40 : index
    %60 = vector.load %arg2[%c0_42, %c40] : memref<512x128xbf16, #tpu.memory_space<vmem>>, vector<512x1xbf16>
    %61 = arith.extf %60 : vector<512x1xbf16> to vector<512x1xf32>
    %62 = vector.broadcast %61 : vector<512x1xf32> to vector<512x128xf32>
    %63 = arith.mulf %59, %62 : vector<512x128xf32>
    %64 = arith.truncf %63 : vector<512x128xf32> to vector<512x128xbf16>
    %c5 = arith.constant 5 : index
    %c0_43 = arith.constant 0 : index
    %c0_44 = arith.constant 0 : index
    %65 = vector.load %arg7[%c5, %c0_43, %c0_44] : memref<9x128x128xbf16, #tpu.memory_space<vmem>>, vector<1x128x128xbf16>
    %66 = vector.shape_cast %65 : vector<1x128x128xbf16> to vector<128x128xbf16>
    %cst_45 = arith.constant dense<0.000000e+00> : vector<512x128xf32>
    %67 = tpu.matmul %64, %66, %cst_45 {dimension_numbers = #tpu.dot_dimension_numbers<[1], [0], [0], [1], [0, 0, 1, 1], [], []>} : vector<512x128xbf16>, vector<128x128xbf16>, vector<512x128xf32> -> vector<512x128xf32>
    %68 = arith.addf %58, %67 : vector<512x128xf32>
    %c39 = arith.constant 39 : index
    %c0_46 = arith.constant 0 : index
    %69 = vector.load %arg16[%c39, %c0_46] : memref<560x128xf32, #tpu.memory_space<vmem>>, vector<512x128xf32>
    %c0_47 = arith.constant 0 : index
    %c48 = arith.constant 48 : index
    %70 = vector.load %arg2[%c0_47, %c48] : memref<512x128xbf16, #tpu.memory_space<vmem>>, vector<512x1xbf16>
    %71 = arith.extf %70 : vector<512x1xbf16> to vector<512x1xf32>
    %72 = vector.broadcast %71 : vector<512x1xf32> to vector<512x128xf32>
    %73 = arith.mulf %69, %72 : vector<512x128xf32>
    %74 = arith.truncf %73 : vector<512x128xf32> to vector<512x128xbf16>
    %c6 = arith.constant 6 : index
    %c0_48 = arith.constant 0 : index
    %c0_49 = arith.constant 0 : index
    %75 = vector.load %arg7[%c6, %c0_48, %c0_49] : memref<9x128x128xbf16, #tpu.memory_space<vmem>>, vector<1x128x128xbf16>
    %76 = vector.shape_cast %75 : vector<1x128x128xbf16> to vector<128x128xbf16>
    %cst_50 = arith.constant dense<0.000000e+00> : vector<512x128xf32>
    %77 = tpu.matmul %74, %76, %cst_50 {dimension_numbers = #tpu.dot_dimension_numbers<[1], [0], [0], [1], [0, 0, 1, 1], [], []>} : vector<512x128xbf16>, vector<128x128xbf16>, vector<512x128xf32> -> vector<512x128xf32>
    %78 = arith.addf %68, %77 : vector<512x128xf32>
    %c40_51 = arith.constant 40 : index
    %c0_52 = arith.constant 0 : index
    %79 = vector.load %arg16[%c40_51, %c0_52] : memref<560x128xf32, #tpu.memory_space<vmem>>, vector<512x128xf32>
    %c0_53 = arith.constant 0 : index
    %c56 = arith.constant 56 : index
    %80 = vector.load %arg2[%c0_53, %c56] : memref<512x128xbf16, #tpu.memory_space<vmem>>, vector<512x1xbf16>
    %81 = arith.extf %80 : vector<512x1xbf16> to vector<512x1xf32>
    %82 = vector.broadcast %81 : vector<512x1xf32> to vector<512x128xf32>
    %83 = arith.mulf %79, %82 : vector<512x128xf32>
    %84 = arith.truncf %83 : vector<512x128xf32> to vector<512x128xbf16>
    %c7_54 = arith.constant 7 : index
    %c0_55 = arith.constant 0 : index
    %c0_56 = arith.constant 0 : index
    %85 = vector.load %arg7[%c7_54, %c0_55, %c0_56] : memref<9x128x128xbf16, #tpu.memory_space<vmem>>, vector<1x128x128xbf16>
    %86 = vector.shape_cast %85 : vector<1x128x128xbf16> to vector<128x128xbf16>
    %cst_57 = arith.constant dense<0.000000e+00> : vector<512x128xf32>
    %87 = tpu.matmul %84, %86, %cst_57 {dimension_numbers = #tpu.dot_dimension_numbers<[1], [0], [0], [1], [0, 0, 1, 1], [], []>} : vector<512x128xbf16>, vector<128x128xbf16>, vector<512x128xf32> -> vector<512x128xf32>
    %88 = arith.addf %78, %87 : vector<512x128xf32>
    %c41 = arith.constant 41 : index
    %c0_58 = arith.constant 0 : index
    %89 = vector.load %arg16[%c41, %c0_58] : memref<560x128xf32, #tpu.memory_space<vmem>>, vector<512x128xf32>
    %c0_59 = arith.constant 0 : index
    %c64 = arith.constant 64 : index
    %90 = vector.load %arg2[%c0_59, %c64] : memref<512x128xbf16, #tpu.memory_space<vmem>>, vector<512x1xbf16>
    %91 = arith.extf %90 : vector<512x1xbf16> to vector<512x1xf32>
    %92 = vector.broadcast %91 : vector<512x1xf32> to vector<512x128xf32>
    %93 = arith.mulf %89, %92 : vector<512x128xf32>
    %94 = arith.truncf %93 : vector<512x128xf32> to vector<512x128xbf16>
    %c8_60 = arith.constant 8 : index
    %c0_61 = arith.constant 0 : index
    %c0_62 = arith.constant 0 : index
    %95 = vector.load %arg7[%c8_60, %c0_61, %c0_62] : memref<9x128x128xbf16, #tpu.memory_space<vmem>>, vector<1x128x128xbf16>
    %96 = vector.shape_cast %95 : vector<1x128x128xbf16> to vector<128x128xbf16>
    %cst_63 = arith.constant dense<0.000000e+00> : vector<512x128xf32>
    %97 = tpu.matmul %94, %96, %cst_63 {dimension_numbers = #tpu.dot_dimension_numbers<[1], [0], [0], [1], [0, 0, 1, 1], [], []>} : vector<512x128xbf16>, vector<128x128xbf16>, vector<512x128xf32> -> vector<512x128xf32>
    %98 = arith.addf %88, %97 : vector<512x128xf32>
    %c0_64 = arith.constant 0 : index
    %c0_65 = arith.constant 0 : index
    %99 = vector.load %arg8[%c0_64, %c0_65] : memref<1x128xf32, #tpu.memory_space<vmem>>, vector<1x128xf32>
    %100 = vector.broadcast %99 : vector<1x128xf32> to vector<512x128xf32>
    %101 = arith.addf %98, %100 : vector<512x128xf32>
    %cst_66 = arith.constant 0.000000e+00 : f32
    %102 = vector.broadcast %cst_66 : f32 to vector<512x128xf32>
    %103 = arith.maximumf %101, %102 : vector<512x128xf32>
    %104 = arith.truncf %103 : vector<512x128xf32> to vector<512x128xbf16>
    %c0_67 = arith.constant 0 : index
    %c0_68 = arith.constant 0 : index
    %105 = vector.load %arg9[%c0_67, %c0_68] : memref<128x128xbf16, #tpu.memory_space<vmem>>, vector<128x128xbf16>
    %cst_69 = arith.constant dense<0.000000e+00> : vector<512x128xf32>
    %106 = tpu.matmul %104, %105, %cst_69 {dimension_numbers = #tpu.dot_dimension_numbers<[1], [0], [0], [1], [0, 0, 1, 1], [], []>} : vector<512x128xbf16>, vector<128x128xbf16>, vector<512x128xf32> -> vector<512x128xf32>
    %c0_70 = arith.constant 0 : index
    %c0_71 = arith.constant 0 : index
    %107 = vector.load %arg10[%c0_70, %c0_71] : memref<1x128xf32, #tpu.memory_space<vmem>>, vector<1x128xf32>
    %108 = vector.broadcast %107 : vector<1x128xf32> to vector<512x128xf32>
    %109 = arith.addf %106, %108 : vector<512x128xf32>
    %c0_72 = arith.constant 0 : index
    %c0_73 = arith.constant 0 : index
    %110 = vector.load %arg3[%c0_72, %c0_73] : memref<2x512xf32, #tpu.memory_space<vmem>>, vector<2x512xf32>
    %cst_74 = arith.constant dense<0.000000e+00> : vector<2x128xf32>
    %111 = tpu.matmul %110, %109, %cst_74 {dimension_numbers = #tpu.dot_dimension_numbers<[1], [0], [0], [1], [0, 0, 1, 1], [], []>} : vector<2x512xf32>, vector<512x128xf32>, vector<2x128xf32> -> vector<2x128xf32>
    %112 = arith.truncf %111 : vector<2x128xf32> to vector<2x128xbf16>
    %c0_75 = arith.constant 0 : index
    %c0_76 = arith.constant 0 : index
    %113 = vector.load %arg11[%c0_75, %c0_76] : memref<128x128xbf16, #tpu.memory_space<vmem>>, vector<128x128xbf16>
    %cst_77 = arith.constant dense<0.000000e+00> : vector<2x128xf32>
    %114 = tpu.matmul %112, %113, %cst_77 {dimension_numbers = #tpu.dot_dimension_numbers<[1], [0], [0], [1], [0, 0, 1, 1], [], []>} : vector<2x128xbf16>, vector<128x128xbf16>, vector<2x128xf32> -> vector<2x128xf32>
    %c0_78 = arith.constant 0 : index
    %c0_79 = arith.constant 0 : index
    %115 = vector.load %arg12[%c0_78, %c0_79] : memref<1x128xf32, #tpu.memory_space<vmem>>, vector<1x128xf32>
    %116 = vector.broadcast %115 : vector<1x128xf32> to vector<2x128xf32>
    %117 = arith.addf %114, %116 : vector<2x128xf32>
    %cst_80 = arith.constant 0.000000e+00 : f32
    %118 = vector.broadcast %cst_80 : f32 to vector<2x128xf32>
    %119 = arith.maximumf %117, %118 : vector<2x128xf32>
    %120 = arith.truncf %119 : vector<2x128xf32> to vector<2x128xbf16>
    %c0_81 = arith.constant 0 : index
    %c0_82 = arith.constant 0 : index
    %121 = vector.load %arg13[%c0_81, %c0_82] : memref<128x128xbf16, #tpu.memory_space<vmem>>, vector<128x128xbf16>
    %cst_83 = arith.constant dense<0.000000e+00> : vector<2x128xf32>
    %122 = tpu.matmul %120, %121, %cst_83 {dimension_numbers = #tpu.dot_dimension_numbers<[1], [0], [0], [1], [0, 0, 1, 1], [], []>} : vector<2x128xbf16>, vector<128x128xbf16>, vector<2x128xf32> -> vector<2x128xf32>
    %c0_84 = arith.constant 0 : index
    %c0_85 = arith.constant 0 : index
    %123 = vector.load %arg14[%c0_84, %c0_85] : memref<1x128xf32, #tpu.memory_space<vmem>>, vector<1x128xf32>
    %124 = vector.broadcast %123 : vector<1x128xf32> to vector<2x128xf32>
    %125 = arith.addf %122, %124 : vector<2x128xf32>
    %cst_86 = arith.constant 0.000000e+00 : f32
    %126 = vector.broadcast %cst_86 : f32 to vector<2x128xf32>
    %127 = arith.subf %126, %125 : vector<2x128xf32>
    %128 = math.exp %127 : vector<2x128xf32>
    %cst_87 = arith.constant 1.000000e+00 : f32
    %129 = vector.broadcast %cst_87 : f32 to vector<2x128xf32>
    %130 = arith.addf %129, %128 : vector<2x128xf32>
    %131 = tpu.reciprocal %130 {approx = true} : vector<2x128xf32> -> vector<2x128xf32>
    %c0_88 = arith.constant 0 : index
    %c0_89 = arith.constant 0 : index
    %132 = vector.load %arg4[%c0_88, %c0_89] : memref<128x128xbf16, #tpu.memory_space<vmem>>, vector<128x128xbf16>
    %cst_90 = arith.constant dense<0.000000e+00> : vector<512x128xf32>
    %133 = tpu.matmul %0, %132, %cst_90 {dimension_numbers = #tpu.dot_dimension_numbers<[1], [0], [0], [1], [0, 0, 1, 1], [], []>} : vector<512x128xbf16>, vector<128x128xbf16>, vector<512x128xf32> -> vector<512x128xf32>
    %134 = vector.extract_strided_slice %109 {offsets = [0, 0], sizes = [256, 128], strides = [1, 1]} : vector<512x128xf32> to vector<256x128xf32>
    %135 = vector.extract_strided_slice %131 {offsets = [0, 0], sizes = [1, 128], strides = [1, 1]} : vector<2x128xf32> to vector<1x128xf32>
    %136 = vector.broadcast %135 : vector<1x128xf32> to vector<256x128xf32>
    %137 = arith.mulf %134, %136 : vector<256x128xf32>
    %138 = vector.extract_strided_slice %133 {offsets = [0, 0], sizes = [256, 128], strides = [1, 1]} : vector<512x128xf32> to vector<256x128xf32>
    %139 = arith.addf %137, %138 : vector<256x128xf32>
    %cst_91 = arith.constant 0.000000e+00 : f32
    %140 = vector.broadcast %cst_91 : f32 to vector<256x128xf32>
    %141 = arith.maximumf %139, %140 : vector<256x128xf32>
    %c0_92 = arith.constant 0 : index
    %c0_93 = arith.constant 0 : index
    %142 = vector.load %arg15[%c0_92, %c0_93] : memref<512x128xf32, #tpu.memory_space<vmem>>, vector<256x128xf32>
    tpu.vector_store %arg15[%c0_92, %c0_93], %141 {strides = array<i32>} : memref<512x128xf32, #tpu.memory_space<vmem>>, vector<256x128xf32>,
    %143 = vector.extract_strided_slice %109 {offsets = [256, 0], sizes = [256, 128], strides = [1, 1]} : vector<512x128xf32> to vector<256x128xf32>
    %144 = vector.extract_strided_slice %131 {offsets = [1, 0], sizes = [1, 128], strides = [1, 1]} : vector<2x128xf32> to vector<1x128xf32>
    %145 = vector.broadcast %144 : vector<1x128xf32> to vector<256x128xf32>
    %146 = arith.mulf %143, %145 : vector<256x128xf32>
    %147 = vector.extract_strided_slice %133 {offsets = [256, 0], sizes = [256, 128], strides = [1, 1]} : vector<512x128xf32> to vector<256x128xf32>
    %148 = arith.addf %146, %147 : vector<256x128xf32>
    %cst_94 = arith.constant 0.000000e+00 : f32
    %149 = vector.broadcast %cst_94 : f32 to vector<256x128xf32>
    %150 = arith.maximumf %148, %149 : vector<256x128xf32>
    %c256 = arith.constant 256 : index
    %c0_95 = arith.constant 0 : index
    %151 = vector.load %arg15[%c256, %c0_95] : memref<512x128xf32, #tpu.memory_space<vmem>>, vector<256x128xf32>
    tpu.vector_store %arg15[%c256, %c0_95], %150 {strides = array<i32>} : memref<512x128xf32, #tpu.memory_space<vmem>>, vector<256x128xf32>,
    return
  }
  func.func @transform_0(%arg0: i32) -> (i32, i32) {
    %c0_i32 = arith.constant 0 : i32
    %c0_i32_0 = arith.constant 0 : i32
    return %arg0, %c0_i32 : i32, i32
  }
  func.func @transform_1(%arg0: i32) -> (i32, i32) {
    %c0_i32 = arith.constant 0 : i32
    %c0_i32_0 = arith.constant 0 : i32
    %c0_i32_1 = arith.constant 0 : i32
    return %c0_i32, %c0_i32_0 : i32, i32
  }
  func.func @transform_2(%arg0: i32) -> (i32, i32) {
    %c0_i32 = arith.constant 0 : i32
    %c0_i32_0 = arith.constant 0 : i32
    %c0_i32_1 = arith.constant 0 : i32
    return %c0_i32, %c0_i32_0 : i32, i32
  }
  func.func @transform_3(%arg0: i32) -> (i32, i32) {
    %c0_i32 = arith.constant 0 : i32
    %c0_i32_0 = arith.constant 0 : i32
    %c0_i32_1 = arith.constant 0 : i32
    return %c0_i32, %c0_i32_0 : i32, i32
  }
  func.func @transform_4(%arg0: i32) -> (i32, i32) {
    %c0_i32 = arith.constant 0 : i32
    %c0_i32_0 = arith.constant 0 : i32
    %c0_i32_1 = arith.constant 0 : i32
    return %c0_i32, %c0_i32_0 : i32, i32
  }
  func.func @transform_5(%arg0: i32) -> (i32, i32) {
    %c0_i32 = arith.constant 0 : i32
    %c0_i32_0 = arith.constant 0 : i32
    %c0_i32_1 = arith.constant 0 : i32
    return %c0_i32, %c0_i32_0 : i32, i32
  }
  func.func @transform_6(%arg0: i32) -> (i32, i32, i32) {
    %c0_i32 = arith.constant 0 : i32
    %c0_i32_0 = arith.constant 0 : i32
    %c0_i32_1 = arith.constant 0 : i32
    %c0_i32_2 = arith.constant 0 : i32
    return %c0_i32, %c0_i32_0, %c0_i32_1 : i32, i32, i32
  }
  func.func @transform_7(%arg0: i32) -> (i32, i32) {
    %c0_i32 = arith.constant 0 : i32
    %c0_i32_0 = arith.constant 0 : i32
    %c0_i32_1 = arith.constant 0 : i32
    return %c0_i32, %c0_i32_0 : i32, i32
  }
  func.func @transform_8(%arg0: i32) -> (i32, i32) {
    %c0_i32 = arith.constant 0 : i32
    %c0_i32_0 = arith.constant 0 : i32
    %c0_i32_1 = arith.constant 0 : i32
    return %c0_i32, %c0_i32_0 : i32, i32
  }
  func.func @transform_9(%arg0: i32) -> (i32, i32) {
    %c0_i32 = arith.constant 0 : i32
    %c0_i32_0 = arith.constant 0 : i32
    %c0_i32_1 = arith.constant 0 : i32
    return %c0_i32, %c0_i32_0 : i32, i32
  }
  func.func @transform_10(%arg0: i32) -> (i32, i32) {
    %c0_i32 = arith.constant 0 : i32
    %c0_i32_0 = arith.constant 0 : i32
    %c0_i32_1 = arith.constant 0 : i32
    return %c0_i32, %c0_i32_0 : i32, i32
  }
  func.func @transform_11(%arg0: i32) -> (i32, i32) {
    %c0_i32 = arith.constant 0 : i32
    %c0_i32_0 = arith.constant 0 : i32
    %c0_i32_1 = arith.constant 0 : i32
    return %c0_i32, %c0_i32_0 : i32, i32
  }
  func.func @transform_12(%arg0: i32) -> (i32, i32) {
    %c0_i32 = arith.constant 0 : i32
    %c0_i32_0 = arith.constant 0 : i32
    %c0_i32_1 = arith.constant 0 : i32
    return %c0_i32, %c0_i32_0 : i32, i32
  }
  func.func @transform_13(%arg0: i32) -> (i32, i32) {
    %c0_i32 = arith.constant 0 : i32
    %c0_i32_0 = arith.constant 0 : i32
    %c0_i32_1 = arith.constant 0 : i32
    return %c0_i32, %c0_i32_0 : i32, i32
  }
  func.func @transform_14(%arg0: i32) -> (i32, i32) {
    %c0_i32 = arith.constant 0 : i32
    %c0_i32_0 = arith.constant 0 : i32
    return %arg0, %c0_i32 : i32, i32
  }
}

</mosaic_0001>

<llo_original>
// kernel: tpu_custom_call.1
$region0: #{tpu_custom_call.1}
  #allocation0 [shape = 'u32[]', space=smem, size = 0x4, offset = 0x4, fixed_abs, tag = 'smem constant byte address 0x4 - core index']
  #allocation1 [shape = 'u32[144,128]{1,0:T(1,128)}', space=vmem, size = 0x12000, scoped, tag = 'internal scratch']
  #allocation2 [shape = 'f32[560,128]{1,0:T(8,128)}', space=vmem, size = 0x46000, scoped, tag = 'scratch operand']
  %s0 = inlined_call_operand.hbm [shape: bf16[512,128], index: 0, kind: input, shape index: {}]
  %s1 = inlined_call_operand.hbm [shape: bf16[512,128], index: 1, kind: input, shape index: {}]
  %s2 = inlined_call_operand.hbm [shape: f32[2,512], index: 2, kind: input, shape index: {}]
  %s3 = inlined_call_operand.hbm [shape: bf16[128,128], index: 3, kind: input, shape index: {}]
  %s4 = inlined_call_operand.hbm [shape: bf16[128,128], index: 4, kind: input, shape index: {}]
  %s5 = inlined_call_operand.vmem [shape: f32[1,128], index: 5, kind: input, shape index: {}]
  %s6 = inlined_call_operand.hbm [shape: bf16[9,128,128], index: 6, kind: input, shape index: {}]
  %s7 = inlined_call_operand.vmem [shape: f32[1,128], index: 7, kind: input, shape index: {}]
  %s8 = inlined_call_operand.hbm [shape: bf16[128,128], index: 8, kind: input, shape index: {}]
  %s9 = inlined_call_operand.vmem [shape: f32[1,128], index: 9, kind: input, shape index: {}]
  %s10 = inlined_call_operand.hbm [shape: bf16[128,128], index: 10, kind: input, shape index: {}]
  %s11 = inlined_call_operand.vmem [shape: f32[1,128], index: 11, kind: input, shape index: {}]
  %s12 = inlined_call_operand.hbm [shape: bf16[128,128], index: 12, kind: input, shape index: {}]
  %s13 = inlined_call_operand.vmem [shape: f32[1,128], index: 13, kind: input, shape index: {}]
  %s14 = inlined_call_operand.hbm [shape: f32[512,128], index: 14, kind: output, shape index: {}]
  %s15 = sld [smem:[#allocation0]]
  $region102: #{tpu_custom_call.1} parent=0
    _
  %s17 = ssub.s32 1, %s15
  %s18 = scalar_select 0, %s17, %s15
  $region1: #{tpu_custom_call.1} parent=0
    #allocation3 [shape = 'u8[131072]{0}', space=vmem, size = 0x20000, scoped, tag = 'input window, operand 0, single buffered']
    #allocation4 [shape = 's32[1]{0}', space=sflag, size = 0x4, scoped, tag = 'scoped memory for tpu_custom_call.1']
    #allocation5 [shape = 's32[1]{0}', space=sflag, size = 0x4, scoped, tag = 'scoped memory for tpu_custom_call.1']
    #allocation6 [shape = 'u8[131072]{0}', space=vmem, size = 0x20000, scoped, tag = 'input window, operand 1, single buffered']
    #allocation7 [shape = 's32[1]{0}', space=sflag, size = 0x4, scoped, tag = 'scoped memory for tpu_custom_call.1']
    #allocation8 [shape = 'u8[4096]{0}', space=vmem, size = 0x1000, scoped, tag = 'input window, operand 2, single buffered']
    #allocation9 [shape = 'u8[32768]{0}', space=vmem, size = 0x8000, scoped, tag = 'input window, operand 3, single buffered']
    #allocation10 [shape = 's32[1]{0}', space=sflag, size = 0x4, scoped, tag = 'scoped memory for tpu_custom_call.1']
    #allocation11 [shape = 'u8[32768]{0}', space=vmem, size = 0x8000, scoped, tag = 'input window, operand 4, single buffered']
    #allocation12 [shape = 'u8[294912]{0}', space=vmem, size = 0x48000, scoped, tag = 'input window, operand 6, single buffered']
    #allocation13 [shape = 's32[1]{0}', space=sflag, size = 0x4, scoped, tag = 'scoped memory for tpu_custom_call.1']
    #allocation14 [shape = 'u8[32768]{0}', space=vmem, size = 0x8000, scoped, tag = 'input window, operand 8, single buffered']
    #allocation15 [shape = 'u8[32768]{0}', space=vmem, size = 0x8000, scoped, tag = 'input window, operand 10, single buffered']
    #allocation16 [shape = 's32[1]{0}', space=sflag, size = 0x4, scoped, tag = 'scoped memory for tpu_custom_call.1']
    #allocation17 [shape = 'u8[32768]{0}', space=vmem, size = 0x8000, scoped, tag = 'input window, operand 12, single buffered']
    #allocation18 [shape = 'u8[262144]{0}', space=vmem, size = 0x40000, scoped, tag = 'output window, operand 0, single buffered']
    %19 = vsyncpa [#allocation4], 0
    %20 = vsyncpa [#allocation7], 0
    %21 = vsyncpa [#allocation10], 0
    %22 = vsyncpa [#allocation13], 0
    %23 = vsyncpa [#allocation16], 0
    %24 = vsyncpa [#allocation5], 0
    // Predicated region
    $region2: #{tpu_custom_call.1} parent=1 // pred_check
      _
    $region3: #{tpu_custom_call.1} parent=1 // pred_check_branch
      %26 = sbr.rel (0) target = $region5
    $region4: #{tpu_custom_call.1} parent=1 // pred_region
      %s28 = ssub.s32 4096, 4096
      %29 = vsyncadd [#allocation4], %s28
      %s30 = sshll.u32 [#allocation3], 4
      %s31 = int_to_ptr.vmem [resolvable:$true] %s30
      %36 = dma.hbm_to_vmem [thread:$0]  %s0, 4096, %s31, [#allocation4], 64, 64, 4
    $region5: #{tpu_custom_call.1} parent=1 // pred_fallthru
      _
    // Predicated region
    $region6: #{tpu_custom_call.1} parent=1 // pred_check
      _
    $region7: #{tpu_custom_call.1} parent=1 // pred_check_branch
      %38 = sbr.rel (0) target = $region9
    $region8: #{tpu_custom_call.1} parent=1 // pred_region
      %s40 = ssub.s32 4096, 4096
      %41 = vsyncadd [#allocation7], %s40
      %s42 = sshll.u32 [#allocation6], 4
      %s43 = int_to_ptr.vmem [resolvable:$true] %s42
      %48 = dma.hbm_to_vmem [thread:$0]  %s1, 4096, %s43, [#allocation7], 64, 64, 4
    $region9: #{tpu_custom_call.1} parent=1 // pred_fallthru
      _
    // Predicated region
    $region10: #{tpu_custom_call.1} parent=1 // pred_check
      _
    $region11: #{tpu_custom_call.1} parent=1 // pred_check_branch
      %50 = sbr.rel (0) target = $region13
    $region12: #{tpu_custom_call.1} parent=1 // pred_region
      %s52 = ssub.s32 128, 128
      %53 = vsyncadd [#allocation7], %s52
      %s55 = sshll.u32 [#allocation8], 4
      %s56 = int_to_ptr.vmem [resolvable:$true] %s55
      %58 = dma.hbm_to_vmem [thread:$0]  %s2, 128, %s56, [#allocation7]
    $region13: #{tpu_custom_call.1} parent=1 // pred_fallthru
      _
    // Predicated region
    $region14: #{tpu_custom_call.1} parent=1 // pred_check
      _
    $region15: #{tpu_custom_call.1} parent=1 // pred_check_branch
      %60 = sbr.rel (0) target = $region17
    $region16: #{tpu_custom_call.1} parent=1 // pred_region
      %s62 = ssub.s32 1024, 1024
      %63 = vsyncadd [#allocation10], %s62
      %s64 = sshll.u32 [#allocation9], 4
      %s65 = int_to_ptr.vmem [resolvable:$true] %s64
      %70 = dma.hbm_to_vmem [thread:$0]  %s3, 1024, %s65, [#allocation10], 64, 64, 4
    $region17: #{tpu_custom_call.1} parent=1 // pred_fallthru
      _
    // Predicated region
    $region18: #{tpu_custom_call.1} parent=1 // pred_check
      _
    $region19: #{tpu_custom_call.1} parent=1 // pred_check_branch
      %72 = sbr.rel (0) target = $region21
    $region20: #{tpu_custom_call.1} parent=1 // pred_region
      %s74 = ssub.s32 1024, 1024
      %75 = vsyncadd [#allocation10], %s74
      %s76 = sshll.u32 [#allocation11], 4
      %s77 = int_to_ptr.vmem [resolvable:$true] %s76
      %82 = dma.hbm_to_vmem [thread:$0]  %s4, 1024, %s77, [#allocation10], 64, 64, 4
    $region21: #{tpu_custom_call.1} parent=1 // pred_fallthru
      _
    // Predicated region
    $region22: #{tpu_custom_call.1} parent=1 // pred_check
      _
    $region23: #{tpu_custom_call.1} parent=1 // pred_check_branch
      %84 = sbr.rel (0) target = $region25
    $region24: #{tpu_custom_call.1} parent=1 // pred_region
      _
    $region25: #{tpu_custom_call.1} parent=1 // pred_fallthru
      _
    // Predicated region
    $region26: #{tpu_custom_call.1} parent=1 // pred_check
      _
    $region27: #{tpu_custom_call.1} parent=1 // pred_check_branch
      %86 = sbr.rel (0) target = $region29
    $region28: #{tpu_custom_call.1} parent=1 // pred_region
      %s88 = ssub.s32 9216, 9216
      %89 = vsyncadd [#allocation13], %s88
      %s90 = sshll.u32 [#allocation12], 4
      %s91 = int_to_ptr.vmem [resolvable:$true] %s90
      %96 = dma.hbm_to_vmem [thread:$0]  %s6, 9216, %s91, [#allocation13], 64, 64, 4
    $region29: #{tpu_custom_call.1} parent=1 // pred_fallthru
      _
    // Predicated region
    $region30: #{tpu_custom_call.1} parent=1 // pred_check
      _
    $region31: #{tpu_custom_call.1} parent=1 // pred_check_branch
      %98 = sbr.rel (0) target = $region33
    $region32: #{tpu_custom_call.1} parent=1 // pred_region
      _
    $region33: #{tpu_custom_call.1} parent=1 // pred_fallthru
      _
    // Predicated region
    $region34: #{tpu_custom_call.1} parent=1 // pred_check
      _
    $region35: #{tpu_custom_call.1} parent=1 // pred_check_branch
      %100 = sbr.rel (0) target = $region37
    $region36: #{tpu_custom_call.1} parent=1 // pred_region
      %s102 = ssub.s32 1024, 1024
      %103 = vsyncadd [#allocation13], %s102
      %s104 = sshll.u32 [#allocation14], 4
      %s105 = int_to_ptr.vmem [resolvable:$true] %s104
      %110 = dma.hbm_to_vmem [thread:$0]  %s8, 1024, %s105, [#allocation13], 64, 64, 4
    $region37: #{tpu_custom_call.1} parent=1 // pred_fallthru
      _
    // Predicated region
    $region38: #{tpu_custom_call.1} parent=1 // pred_check
      _
    $region39: #{tpu_custom_call.1} parent=1 // pred_check_branch
      %112 = sbr.rel (0) target = $region41
    $region40: #{tpu_custom_call.1} parent=1 // pred_region
      _
    $region41: #{tpu_custom_call.1} parent=1 // pred_fallthru
      _
    // Predicated region
    $region42: #{tpu_custom_call.1} parent=1 // pred_check
      _
    $region43: #{tpu_custom_call.1} parent=1 // pred_check_branch
      %114 = sbr.rel (0) target = $region45
    $region44: #{tpu_custom_call.1} parent=1 // pred_region
      %s116 = ssub.s32 1024, 1024
      %117 = vsyncadd [#allocation16], %s116
      %s118 = sshll.u32 [#allocation15], 4
      %s119 = int_to_ptr.vmem [resolvable:$true] %s118
      %124 = dma.hbm_to_vmem [thread:$0]  %s10, 1024, %s119, [#allocation16], 64, 64, 4
    $region45: #{tpu_custom_call.1} parent=1 // pred_fallthru
      _
    // Predicated region
    $region46: #{tpu_custom_call.1} parent=1 // pred_check
      _
    $region47: #{tpu_custom_call.1} parent=1 // pred_check_branch
      %126 = sbr.rel (0) target = $region49
    $region48: #{tpu_custom_call.1} parent=1 // pred_region
      _
    $region49: #{tpu_custom_call.1} parent=1 // pred_fallthru
      _
    // Predicated region
    $region50: #{tpu_custom_call.1} parent=1 // pred_check
      _
    $region51: #{tpu_custom_call.1} parent=1 // pred_check_branch
      %128 = sbr.rel (0) target = $region53
    $region52: #{tpu_custom_call.1} parent=1 // pred_region
      %s130 = ssub.s32 1024, 1024
      %131 = vsyncadd [#allocation16], %s130
      %s132 = sshll.u32 [#allocation17], 4
      %s133 = int_to_ptr.vmem [resolvable:$true] %s132
      %138 = dma.hbm_to_vmem [thread:$0]  %s12, 1024, %s133, [#allocation16], 64, 64, 4
    $region53: #{tpu_custom_call.1} parent=1 // pred_fallthru
      _
    // Predicated region
    $region54: #{tpu_custom_call.1} parent=1 // pred_check
      _
    $region55: #{tpu_custom_call.1} parent=1 // pred_check_branch
      %140 = sbr.rel (0) target = $region57
    $region56: #{tpu_custom_call.1} parent=1 // pred_region
      _
    $region57: #{tpu_custom_call.1} parent=1 // pred_fallthru
      _
    // Predicated region
    $region58: #{tpu_custom_call.1} parent=1 // pred_check
      _
    $region59: #{tpu_custom_call.1} parent=1 // pred_check_branch
      %142 = sbr.rel (0) target = $region61
    $region60: #{tpu_custom_call.1} parent=1 // pred_region
      %143 = dma.done [#allocation4], 4096
    $region61: #{tpu_custom_call.1} parent=1 // pred_fallthru
      _
    // Predicated region
    $region62: #{tpu_custom_call.1} parent=1 // pred_check
      _
    $region63: #{tpu_custom_call.1} parent=1 // pred_check_branch
      %145 = sbr.rel (0) target = $region65
    $region64: #{tpu_custom_call.1} parent=1 // pred_region
      %146 = dma.done [#allocation7], 4096
    $region65: #{tpu_custom_call.1} parent=1 // pred_fallthru
      _
    // Predicated region
    $region66: #{tpu_custom_call.1} parent=1 // pred_check
      _
    $region67: #{tpu_custom_call.1} parent=1 // pred_check_branch
      %148 = sbr.rel (0) target = $region69
    $region68: #{tpu_custom_call.1} parent=1 // pred_region
      %149 = dma.done [#allocation7], 128
    $region69: #{tpu_custom_call.1} parent=1 // pred_fallthru
      _
    // Predicated region
    $region70: #{tpu_custom_call.1} parent=1 // pred_check
      _
    $region71: #{tpu_custom_call.1} parent=1 // pred_check_branch
      %151 = sbr.rel (0) target = $region73
    $region72: #{tpu_custom_call.1} parent=1 // pred_region
      %152 = dma.done [#allocation10], 1024
    $region73: #{tpu_custom_call.1} parent=1 // pred_fallthru
      _
    // Predicated region
    $region74: #{tpu_custom_call.1} parent=1 // pred_check
      _
    $region75: #{tpu_custom_call.1} parent=1 // pred_check_branch
      %154 = sbr.rel (0) target = $region77
    $region76: #{tpu_custom_call.1} parent=1 // pred_region
      %155 = dma.done [#allocation10], 1024
    $region77: #{tpu_custom_call.1} parent=1 // pred_fallthru
      _
    // Predicated region
    $region78: #{tpu_custom_call.1} parent=1 // pred_check
      _
    $region79: #{tpu_custom_call.1} parent=1 // pred_check_branch
      %157 = sbr.rel (0) target = $region81
    $region80: #{tpu_custom_call.1} parent=1 // pred_region
      %158 = dma.done [#allocation13], 9216
    $region81: #{tpu_custom_call.1} parent=1 // pred_fallthru
      _
    // Predicated region
    $region82: #{tpu_custom_call.1} parent=1 // pred_check
      _
    $region83: #{tpu_custom_call.1} parent=1 // pred_check_branch
      %160 = sbr.rel (0) target = $region85
    $region84: #{tpu_custom_call.1} parent=1 // pred_region
      %161 = dma.done [#allocation13], 1024
    $region85: #{tpu_custom_call.1} parent=1 // pred_fallthru
      _
    // Predicated region
    $region86: #{tpu_custom_call.1} parent=1 // pred_check
      _
    $region87: #{tpu_custom_call.1} parent=1 // pred_check_branch
      %163 = sbr.rel (0) target = $region89
    $region88: #{tpu_custom_call.1} parent=1 // pred_region
      %164 = dma.done [#allocation16], 1024
    $region89: #{tpu_custom_call.1} parent=1 // pred_fallthru
      _
    // Predicated region
    $region90: #{tpu_custom_call.1} parent=1 // pred_check
      _
    $region91: #{tpu_custom_call.1} parent=1 // pred_check_branch
      %166 = sbr.rel (0) target = $region93
    $region92: #{tpu_custom_call.1} parent=1 // pred_region
      %167 = dma.done [#allocation16], 1024
    $region93: #{tpu_custom_call.1} parent=1 // pred_fallthru
      _
    %v169 = vld [vmem:[#allocation3] sm:$0xf]
    %v170 = vld [vmem:[#allocation3 + $0x4] sm:$0xf]
    %v171 = vld [vmem:[#allocation3 + $0x8] sm:$0xf]
    %v172 = vld [vmem:[#allocation3 + $0xc] sm:$0xf]
    %v173 = vld [vmem:[#allocation3 + $0x10] sm:$0xf]
    %v174 = vld [vmem:[#allocation3 + $0x14] sm:$0xf]
    %v175 = vld [vmem:[#allocation3 + $0x18] sm:$0xf]
    %v176 = vld [vmem:[#allocation3 + $0x1c] sm:$0xf]
    %v177 = vld [vmem:[#allocation3 + $0x20] sm:$0xf]
    %v178 = vld [vmem:[#allocation3 + $0x24] sm:$0xf]
    %v179 = vld [vmem:[#allocation3 + $0x28] sm:$0xf]
    %v180 = vld [vmem:[#allocation3 + $0x2c] sm:$0xf]
    %v181 = vld [vmem:[#allocation3 + $0x30] sm:$0xf]
    %v182 = vld [vmem:[#allocation3 + $0x34] sm:$0xf]
    %v183 = vld [vmem:[#allocation3 + $0x38] sm:$0xf]
    %v184 = vld [vmem:[#allocation3 + $0x3c] sm:$0xf]
    %v185 = vld [vmem:[#allocation3 + $0x40] sm:$0xf]
    %v186 = vld [vmem:[#allocation3 + $0x44] sm:$0xf]
    %v187 = vld [vmem:[#allocation3 + $0x48] sm:$0xf]
    %v188 = vld [vmem:[#allocation3 + $0x4c] sm:$0xf]
    %v189 = vld [vmem:[#allocation3 + $0x50] sm:$0xf]
    %v190 = vld [vmem:[#allocation3 + $0x54] sm:$0xf]
    %v191 = vld [vmem:[#allocation3 + $0x58] sm:$0xf]
    %v192 = vld [vmem:[#allocation3 + $0x5c] sm:$0xf]
    %v193 = vld [vmem:[#allocation3 + $0x60] sm:$0xf]
    %v194 = vld [vmem:[#allocation3 + $0x64] sm:$0xf]
    %v195 = vld [vmem:[#allocation3 + $0x68] sm:$0xf]
    %v196 = vld [vmem:[#allocation3 + $0x6c] sm:$0xf]
    %v197 = vld [vmem:[#allocation3 + $0x70] sm:$0xf]
    %v198 = vld [vmem:[#allocation3 + $0x74] sm:$0xf]
    %v199 = vld [vmem:[#allocation3 + $0x78] sm:$0xf]
    %v200 = vld [vmem:[#allocation3 + $0x7c] sm:$0xf]
    %v201 = vld [vmem:[#allocation3 + $0x80] sm:$0xf]
    %v202 = vld [vmem:[#allocation3 + $0x84] sm:$0xf]
    %v203 = vld [vmem:[#allocation3 + $0x88] sm:$0xf]
    %v204 = vld [vmem:[#allocation3 + $0x8c] sm:$0xf]
    %v205 = vld [vmem:[#allocation3 + $0x90] sm:$0xf]
    %v206 = vld [vmem:[#allocation3 + $0x94] sm:$0xf]
    %v207 = vld [vmem:[#allocation3 + $0x98] sm:$0xf]
    %v208 = vld [vmem:[#allocation3 + $0x9c] sm:$0xf]
    %v209 = vld [vmem:[#allocation3 + $0xa0] sm:$0xf]
    %v210 = vld [vmem:[#allocation3 + $0xa4] sm:$0xf]
    %v211 = vld [vmem:[#allocation3 + $0xa8] sm:$0xf]
    %v212 = vld [vmem:[#allocation3 + $0xac] sm:$0xf]
    %v213 = vld [vmem:[#allocation3 + $0xb0] sm:$0xf]
    %v214 = vld [vmem:[#allocation3 + $0xb4] sm:$0xf]
    %v215 = vld [vmem:[#allocation3 + $0xb8] sm:$0xf]
    %v216 = vld [vmem:[#allocation3 + $0xbc] sm:$0xf]
    %v217 = vld [vmem:[#allocation3 + $0xc0] sm:$0xf]
    %v218 = vld [vmem:[#allocation3 + $0xc4] sm:$0xf]
    %v219 = vld [vmem:[#allocation3 + $0xc8] sm:$0xf]
    %v220 = vld [vmem:[#allocation3 + $0xcc] sm:$0xf]
    %v221 = vld [vmem:[#allocation3 + $0xd0] sm:$0xf]
    %v222 = vld [vmem:[#allocation3 + $0xd4] sm:$0xf]
    %v223 = vld [vmem:[#allocation3 + $0xd8] sm:$0xf]
    %v224 = vld [vmem:[#allocation3 + $0xdc] sm:$0xf]
    %v225 = vld [vmem:[#allocation3 + $0xe0] sm:$0xf]
    %v226 = vld [vmem:[#allocation3 + $0xe4] sm:$0xf]
    %v227 = vld [vmem:[#allocation3 + $0xe8] sm:$0xf]
    %v228 = vld [vmem:[#allocation3 + $0xec] sm:$0xf]
    %v229 = vld [vmem:[#allocation3 + $0xf0] sm:$0xf]
    %v230 = vld [vmem:[#allocation3 + $0xf4] sm:$0xf]
    %v231 = vld [vmem:[#allocation3 + $0xf8] sm:$0xf]
    %v232 = vld [vmem:[#allocation3 + $0xfc] sm:$0xf]
    %v233 = vld [vmem:[#allocation11] sm:$0xf]
    %v234 = vld [vmem:[#allocation11 + $0x4] sm:$0xf]
    %v235 = vld [vmem:[#allocation11 + $0x8] sm:$0xf]
    %v236 = vld [vmem:[#allocation11 + $0xc] sm:$0xf]
    %v237 = vld [vmem:[#allocation11 + $0x10] sm:$0xf]
    %v238 = vld [vmem:[#allocation11 + $0x14] sm:$0xf]
    %v239 = vld [vmem:[#allocation11 + $0x18] sm:$0xf]
    %v240 = vld [vmem:[#allocation11 + $0x1c] sm:$0xf]
    %v241 = vld [vmem:[#allocation11 + $0x20] sm:$0xf]
    %v242 = vld [vmem:[#allocation11 + $0x24] sm:$0xf]
    %v243 = vld [vmem:[#allocation11 + $0x28] sm:$0xf]
    %v244 = vld [vmem:[#allocation11 + $0x2c] sm:$0xf]
    %v245 = vld [vmem:[#allocation11 + $0x30] sm:$0xf]
    %v246 = vld [vmem:[#allocation11 + $0x34] sm:$0xf]
    %v247 = vld [vmem:[#allocation11 + $0x38] sm:$0xf]
    %v248 = vld [vmem:[#allocation11 + $0x3c] sm:$0xf]
    %v249 = vld [vmem:[%s5] sm:$0x1]
    %v251 = vlaneseq
    %v252 = vshrl.u32 %v251, 7
    %v253 = vsub.s32 0, %v252
    %v254 = vrot.slane %v249, %v253
    %v320 = vunpack.c.l.b16 %v169
    %v321 = vunpack.c.l.b16 %v170
    %v322 = vunpack.c.l.b16 %v171
    %v323 = vunpack.c.l.b16 %v172
    %v324 = vunpack.c.l.b16 %v173
    %v325 = vunpack.c.l.b16 %v174
    %v326 = vunpack.c.l.b16 %v175
    %v327 = vunpack.c.l.b16 %v176
    %v328 = vunpack.c.l.b16 %v177
    %v329 = vunpack.c.l.b16 %v178
    %v330 = vunpack.c.l.b16 %v179
    %v331 = vunpack.c.l.b16 %v180
    %v332 = vunpack.c.l.b16 %v181
    %v333 = vunpack.c.l.b16 %v182
    %v334 = vunpack.c.l.b16 %v183
    %v335 = vunpack.c.l.b16 %v184
    %v336 = vunpack.c.l.b16 %v185
    %v337 = vunpack.c.l.b16 %v186
    %v338 = vunpack.c.l.b16 %v187
    %v339 = vunpack.c.l.b16 %v188
    %v340 = vunpack.c.l.b16 %v189
    %v341 = vunpack.c.l.b16 %v190
    %v342 = vunpack.c.l.b16 %v191
    %v343 = vunpack.c.l.b16 %v192
    %v344 = vunpack.c.l.b16 %v193
    %v345 = vunpack.c.l.b16 %v194
    %v346 = vunpack.c.l.b16 %v195
    %v347 = vunpack.c.l.b16 %v196
    %v348 = vunpack.c.l.b16 %v197
    %v349 = vunpack.c.l.b16 %v198
    %v350 = vunpack.c.l.b16 %v199
    %v351 = vunpack.c.l.b16 %v200
    %v352 = vunpack.c.l.b16 %v201
    %v353 = vunpack.c.l.b16 %v202
    %v354 = vunpack.c.l.b16 %v203
    %v355 = vunpack.c.l.b16 %v204
    %v356 = vunpack.c.l.b16 %v205
    %v357 = vunpack.c.l.b16 %v206
    %v358 = vunpack.c.l.b16 %v207
    %v359 = vunpack.c.l.b16 %v208
    %v360 = vunpack.c.l.b16 %v209
    %v361 = vunpack.c.l.b16 %v210
    %v362 = vunpack.c.l.b16 %v211
    %v363 = vunpack.c.l.b16 %v212
    %v364 = vunpack.c.l.b16 %v213
    %v365 = vunpack.c.l.b16 %v214
    %v366 = vunpack.c.l.b16 %v215
    %v367 = vunpack.c.l.b16 %v216
    %v368 = vunpack.c.l.b16 %v217
    %v369 = vunpack.c.l.b16 %v218
    %v370 = vunpack.c.l.b16 %v219
    %v371 = vunpack.c.l.b16 %v220
    %v372 = vunpack.c.l.b16 %v221
    %v373 = vunpack.c.l.b16 %v222
    %v374 = vunpack.c.l.b16 %v223
    %v375 = vunpack.c.l.b16 %v224
    %v376 = vunpack.c.l.b16 %v225
    %v377 = vunpack.c.l.b16 %v226
    %v378 = vunpack.c.l.b16 %v227
    %v379 = vunpack.c.l.b16 %v228
    %v380 = vunpack.c.l.b16 %v229
    %v381 = vunpack.c.l.b16 %v230
    %v382 = vunpack.c.l.b16 %v231
    %v383 = vunpack.c.l.b16 %v232
    %v384 = vpack.c.b16 %v321, %v320
    %v385 = vpack.c.b16 %v323, %v322
    %v386 = vpack.c.b16 %v325, %v324
    %v387 = vpack.c.b16 %v327, %v326
    %v388 = vpack.c.b16 %v329, %v328
    %v389 = vpack.c.b16 %v331, %v330
    %v390 = vpack.c.b16 %v333, %v332
    %v391 = vpack.c.b16 %v335, %v334
    %v392 = vpack.c.b16 %v337, %v336
    %v393 = vpack.c.b16 %v339, %v338
    %v394 = vpack.c.b16 %v341, %v340
    %v395 = vpack.c.b16 %v343, %v342
    %v396 = vpack.c.b16 %v345, %v344
    %v397 = vpack.c.b16 %v347, %v346
    %v398 = vpack.c.b16 %v349, %v348
    %v399 = vpack.c.b16 %v351, %v350
    %v400 = vpack.c.b16 %v353, %v352
    %v401 = vpack.c.b16 %v355, %v354
    %v402 = vpack.c.b16 %v357, %v356
    %v403 = vpack.c.b16 %v359, %v358
    %v404 = vpack.c.b16 %v361, %v360
    %v405 = vpack.c.b16 %v363, %v362
    %v406 = vpack.c.b16 %v365, %v364
    %v407 = vpack.c.b16 %v367, %v366
    %v408 = vpack.c.b16 %v369, %v368
    %v409 = vpack.c.b16 %v371, %v370
    %v410 = vpack.c.b16 %v373, %v372
    %v411 = vpack.c.b16 %v375, %v374
    %v412 = vpack.c.b16 %v377, %v376
    %v413 = vpack.c.b16 %v379, %v378
    %v414 = vpack.c.b16 %v381, %v380
    %v415 = vpack.c.b16 %v383, %v382
    %v464 = vunpack.c.l.b16 %v233
    %v465 = vunpack.c.l.b16 %v234
    %v466 = vunpack.c.l.b16 %v235
    %v467 = vunpack.c.l.b16 %v236
    %v468 = vunpack.c.l.b16 %v237
    %v469 = vunpack.c.l.b16 %v238
    %v470 = vunpack.c.l.b16 %v239
    %v471 = vunpack.c.l.b16 %v240
    %v472 = vunpack.c.l.b16 %v241
    %v473 = vunpack.c.l.b16 %v242
    %v474 = vunpack.c.l.b16 %v243
    %v475 = vunpack.c.l.b16 %v244
    %v476 = vunpack.c.l.b16 %v245
    %v477 = vunpack.c.l.b16 %v246
    %v478 = vunpack.c.l.b16 %v247
    %v479 = vunpack.c.l.b16 %v248
    %v480 = vpack.c.b16 %v465, %v464
    %v481 = vpack.c.b16 %v467, %v466
    %v482 = vpack.c.b16 %v469, %v468
    %v483 = vpack.c.b16 %v471, %v470
    %v484 = vpack.c.b16 %v473, %v472
    %v485 = vpack.c.b16 %v475, %v474
    %v486 = vpack.c.b16 %v477, %v476
    %v487 = vpack.c.b16 %v479, %v478
    %496 = vmatprep.subr.bf16.mxu0 0
    %497 = vmatpush1.bf16.msra.mxu0 %v487
    %498 = vmatprep.subr.bf16.mxu0 0
    %499 = vmatpush1.bf16.msra.mxu0 %v486
    %500 = vmatprep.subr.bf16.mxu0 0
    %501 = vmatpush1.bf16.msra.mxu0 %v485
    %502 = vmatprep.subr.bf16.mxu0 0
    %503 = vmatpush1.bf16.msra.mxu0 %v484
    %504 = vmatprep.subr.bf16.mxu0 0
    %505 = vmatpush1.bf16.msra.mxu0 %v483
    %506 = vmatprep.subr.bf16.mxu0 0
    %507 = vmatpush1.bf16.msra.mxu0 %v482
    %508 = vmatprep.subr.bf16.mxu0 0
    %509 = vmatpush1.bf16.msra.mxu0 %v481
    %510 = vmatprep.subr.bf16.mxu0 0
    %511 = vmatpush1.bf16.msra.mxu0 %v480
    %512 = vmatprep.subr.bf16.mxu0 0
    %513 = vmatpush2.bf16.msra.mxu0 0
    %514 = vmatprep.subr.bf16.mxu0 0
    %515 = vmatpush2.bf16.msra.mxu0 0
    %516 = vmatprep.subr.bf16.mxu0 0
    %517 = vmatpush2.bf16.msra.mxu0 0
    %518 = vmatprep.subr.bf16.mxu0 0
    %519 = vmatpush2.bf16.msra.mxu0 0
    %520 = vmatprep.subr.bf16.mxu0 0
    %521 = vmatpush2.bf16.msra.mxu0 0
    %522 = vmatprep.subr.bf16.mxu0 0
    %523 = vmatpush2.bf16.msra.mxu0 0
    %524 = vmatprep.subr.bf16.mxu0 0
    %525 = vmatpush2.bf16.msra.mxu0 0
    %526 = vmatprep.subr.bf16.mxu0 0
    %527 = vmatpush2.bf16.msra.mxu0 0
    %528 = vmatprep.mubr.bf16.mxu0 0
    %529 = vmatmul.mubr.bf16.gmra.mxu0 %v384
    %v530 = vpop.f32.mrf.mxu0
    %v531 = vadd.f32 %v254, %v530
    %v532 = vpop.f32.mrf.mxu0
    %v533 = vpop.f32.mrf.mxu0
    %v534 = vadd.f32 %v254, %v533
    %v535 = vpop.f32.mrf.mxu0
    %536 = vmatprep.mubr.bf16.mxu0 0
    %537 = vmatmul.mubr.bf16.gmra.mxu0 %v385
    %v538 = vpop.f32.mrf.mxu0
    %v539 = vadd.f32 %v254, %v538
    %v540 = vpop.f32.mrf.mxu0
    %v541 = vpop.f32.mrf.mxu0
    %v542 = vadd.f32 %v254, %v541
    %v543 = vpop.f32.mrf.mxu0
    %544 = vmatprep.mubr.bf16.mxu0 0
    %545 = vmatmul.mubr.bf16.gmra.mxu0 %v386
    %v546 = vpop.f32.mrf.mxu0
    %v547 = vadd.f32 %v254, %v546
    %v548 = vpop.f32.mrf.mxu0
    %v549 = vpop.f32.mrf.mxu0
    %v550 = vadd.f32 %v254, %v549
    %v551 = vpop.f32.mrf.mxu0
    %552 = vmatprep.mubr.bf16.mxu0 0
    %553 = vmatmul.mubr.bf16.gmra.mxu0 %v387
    %v554 = vpop.f32.mrf.mxu0
    %v555 = vadd.f32 %v254, %v554
    %v556 = vpop.f32.mrf.mxu0
    %v557 = vpop.f32.mrf.mxu0
    %v558 = vadd.f32 %v254, %v557
    %v559 = vpop.f32.mrf.mxu0
    %560 = vmatprep.mubr.bf16.mxu0 0
    %561 = vmatmul.mubr.bf16.gmra.mxu0 %v388
    %v562 = vpop.f32.mrf.mxu0
    %v563 = vadd.f32 %v254, %v562
    %v564 = vpop.f32.mrf.mxu0
    %v565 = vpop.f32.mrf.mxu0
    %v566 = vadd.f32 %v254, %v565
    %v567 = vpop.f32.mrf.mxu0
    %568 = vmatprep.mubr.bf16.mxu0 0
    %569 = vmatmul.mubr.bf16.gmra.mxu0 %v389
    %v570 = vpop.f32.mrf.mxu0
    %v571 = vadd.f32 %v254, %v570
    %v572 = vpop.f32.mrf.mxu0
    %v573 = vpop.f32.mrf.mxu0
    %v574 = vadd.f32 %v254, %v573
    %v575 = vpop.f32.mrf.mxu0
    %576 = vmatprep.mubr.bf16.mxu0 0
    %577 = vmatmul.mubr.bf16.gmra.mxu0 %v390
    %v578 = vpop.f32.mrf.mxu0
    %v579 = vadd.f32 %v254, %v578
    %v580 = vpop.f32.mrf.mxu0
    %v581 = vpop.f32.mrf.mxu0
    %v582 = vadd.f32 %v254, %v581
    %v583 = vpop.f32.mrf.mxu0
    %584 = vmatprep.mubr.bf16.mxu0 0
    %585 = vmatmul.mubr.bf16.gmra.mxu0 %v391
    %v586 = vpop.f32.mrf.mxu0
    %v587 = vadd.f32 %v254, %v586
    %v588 = vpop.f32.mrf.mxu0
    %v589 = vpop.f32.mrf.mxu0
    %v590 = vadd.f32 %v254, %v589
    %v591 = vpop.f32.mrf.mxu0
    %592 = vmatprep.mubr.bf16.mxu0 0
    %593 = vmatmul.mubr.bf16.gmra.mxu0 %v392
    %v594 = vpop.f32.mrf.mxu0
    %v595 = vadd.f32 %v254, %v594
    %v596 = vpop.f32.mrf.mxu0
    %v597 = vpop.f32.mrf.mxu0
    %v598 = vadd.f32 %v254, %v597
    %v599 = vpop.f32.mrf.mxu0
    %600 = vmatprep.mubr.bf16.mxu0 0
    %601 = vmatmul.mubr.bf16.gmra.mxu0 %v393
    %v602 = vpop.f32.mrf.mxu0
    %v603 = vadd.f32 %v254, %v602
    %v604 = vpop.f32.mrf.mxu0
    %v605 = vpop.f32.mrf.mxu0
    %v606 = vadd.f32 %v254, %v605
    %v607 = vpop.f32.mrf.mxu0
    %608 = vmatprep.mubr.bf16.mxu0 0
    %609 = vmatmul.mubr.bf16.gmra.mxu0 %v394
    %v610 = vpop.f32.mrf.mxu0
    %v611 = vadd.f32 %v254, %v610
    %v612 = vpop.f32.mrf.mxu0
    %v613 = vpop.f32.mrf.mxu0
    %v614 = vadd.f32 %v254, %v613
    %v615 = vpop.f32.mrf.mxu0
    %616 = vmatprep.mubr.bf16.mxu0 0
    %617 = vmatmul.mubr.bf16.gmra.mxu0 %v395
    %v618 = vpop.f32.mrf.mxu0
    %v619 = vadd.f32 %v254, %v618
    %v620 = vpop.f32.mrf.mxu0
    %v621 = vpop.f32.mrf.mxu0
    %v622 = vadd.f32 %v254, %v621
    %v623 = vpop.f32.mrf.mxu0
    %624 = vmatprep.mubr.bf16.mxu0 0
    %625 = vmatmul.mubr.bf16.gmra.mxu0 %v396
    %v626 = vpop.f32.mrf.mxu0
    %v627 = vadd.f32 %v254, %v626
    %v628 = vpop.f32.mrf.mxu0
    %v629 = vpop.f32.mrf.mxu0
    %v630 = vadd.f32 %v254, %v629
    %v631 = vpop.f32.mrf.mxu0
    %632 = vmatprep.mubr.bf16.mxu0 0
    %633 = vmatmul.mubr.bf16.gmra.mxu0 %v397
    %v634 = vpop.f32.mrf.mxu0
    %v635 = vadd.f32 %v254, %v634
    %v636 = vpop.f32.mrf.mxu0
    %v637 = vpop.f32.mrf.mxu0
    %v638 = vadd.f32 %v254, %v637
    %v639 = vpop.f32.mrf.mxu0
    %640 = vmatprep.mubr.bf16.mxu0 0
    %641 = vmatmul.mubr.bf16.gmra.mxu0 %v398
    %v642 = vpop.f32.mrf.mxu0
    %v643 = vadd.f32 %v254, %v642
    %v644 = vpop.f32.mrf.mxu0
    %v645 = vpop.f32.mrf.mxu0
    %v646 = vadd.f32 %v254, %v645
    %v647 = vpop.f32.mrf.mxu0
    %648 = vmatprep.mubr.bf16.mxu0 0
    %649 = vmatmul.mubr.bf16.gmra.mxu0 %v399
    %v650 = vpop.f32.mrf.mxu0
    %v651 = vadd.f32 %v254, %v650
    %v652 = vpop.f32.mrf.mxu0
    %v653 = vpop.f32.mrf.mxu0
    %v654 = vadd.f32 %v254, %v653
    %v655 = vpop.f32.mrf.mxu0
    %656 = vmatprep.mubr.bf16.mxu0 0
    %657 = vmatmul.mubr.bf16.gmra.mxu0 %v400
    %v658 = vpop.f32.mrf.mxu0
    %v659 = vadd.f32 %v254, %v658
    %v660 = vpop.f32.mrf.mxu0
    %v661 = vpop.f32.mrf.mxu0
    %v662 = vadd.f32 %v254, %v661
    %v663 = vpop.f32.mrf.mxu0
    %664 = vmatprep.mubr.bf16.mxu0 0
    %665 = vmatmul.mubr.bf16.gmra.mxu0 %v401
    %v666 = vpop.f32.mrf.mxu0
    %v667 = vadd.f32 %v254, %v666
    %v668 = vpop.f32.mrf.mxu0
    %v669 = vpop.f32.mrf.mxu0
    %v670 = vadd.f32 %v254, %v669
    %v671 = vpop.f32.mrf.mxu0
    %672 = vmatprep.mubr.bf16.mxu0 0
    %673 = vmatmul.mubr.bf16.gmra.mxu0 %v402
    %v674 = vpop.f32.mrf.mxu0
    %v675 = vadd.f32 %v254, %v674
    %v676 = vpop.f32.mrf.mxu0
    %v677 = vpop.f32.mrf.mxu0
    %v678 = vadd.f32 %v254, %v677
    %v679 = vpop.f32.mrf.mxu0
    %680 = vmatprep.mubr.bf16.mxu0 0
    %681 = vmatmul.mubr.bf16.gmra.mxu0 %v403
    %v682 = vpop.f32.mrf.mxu0
    %v683 = vadd.f32 %v254, %v682
    %v684 = vpop.f32.mrf.mxu0
    %v685 = vpop.f32.mrf.mxu0
    %v686 = vadd.f32 %v254, %v685
    %v687 = vpop.f32.mrf.mxu0
    %688 = vmatprep.mubr.bf16.mxu0 0
    %689 = vmatmul.mubr.bf16.gmra.mxu0 %v404
    %v690 = vpop.f32.mrf.mxu0
    %v691 = vadd.f32 %v254, %v690
    %v692 = vpop.f32.mrf.mxu0
    %v693 = vpop.f32.mrf.mxu0
    %v694 = vadd.f32 %v254, %v693
    %v695 = vpop.f32.mrf.mxu0
    %696 = vmatprep.mubr.bf16.mxu0 0
    %697 = vmatmul.mubr.bf16.gmra.mxu0 %v405
    %v698 = vpop.f32.mrf.mxu0
    %v699 = vadd.f32 %v254, %v698
    %v700 = vpop.f32.mrf.mxu0
    %v701 = vpop.f32.mrf.mxu0
    %v702 = vadd.f32 %v254, %v701
    %v703 = vpop.f32.mrf.mxu0
    %704 = vmatprep.mubr.bf16.mxu0 0
    %705 = vmatmul.mubr.bf16.gmra.mxu0 %v406
    %v706 = vpop.f32.mrf.mxu0
    %v707 = vadd.f32 %v254, %v706
    %v708 = vpop.f32.mrf.mxu0
    %v709 = vpop.f32.mrf.mxu0
    %v710 = vadd.f32 %v254, %v709
    %v711 = vpop.f32.mrf.mxu0
    %712 = vmatprep.mubr.bf16.mxu0 0
    %713 = vmatmul.mubr.bf16.gmra.mxu0 %v407
    %v714 = vpop.f32.mrf.mxu0
    %v715 = vadd.f32 %v254, %v714
    %v716 = vpop.f32.mrf.mxu0
    %v717 = vpop.f32.mrf.mxu0
    %v718 = vadd.f32 %v254, %v717
    %v719 = vpop.f32.mrf.mxu0
    %720 = vmatprep.mubr.bf16.mxu0 0
    %721 = vmatmul.mubr.bf16.gmra.mxu0 %v408
    %v722 = vpop.f32.mrf.mxu0
    %v723 = vadd.f32 %v254, %v722
    %v724 = vpop.f32.mrf.mxu0
    %v725 = vpop.f32.mrf.mxu0
    %v726 = vadd.f32 %v254, %v725
    %v727 = vpop.f32.mrf.mxu0
    %728 = vmatprep.mubr.bf16.mxu0 0
    %729 = vmatmul.mubr.bf16.gmra.mxu0 %v409
    %v730 = vpop.f32.mrf.mxu0
    %v731 = vadd.f32 %v254, %v730
    %v732 = vpop.f32.mrf.mxu0
    %v733 = vpop.f32.mrf.mxu0
    %v734 = vadd.f32 %v254, %v733
    %v735 = vpop.f32.mrf.mxu0
    %736 = vmatprep.mubr.bf16.mxu0 0
    %737 = vmatmul.mubr.bf16.gmra.mxu0 %v410
    %v738 = vpop.f32.mrf.mxu0
    %v739 = vadd.f32 %v254, %v738
    %v740 = vpop.f32.mrf.mxu0
    %v741 = vpop.f32.mrf.mxu0
    %v742 = vadd.f32 %v254, %v741
    %v743 = vpop.f32.mrf.mxu0
    %744 = vmatprep.mubr.bf16.mxu0 0
    %745 = vmatmul.mubr.bf16.gmra.mxu0 %v411
    %v746 = vpop.f32.mrf.mxu0
    %v747 = vadd.f32 %v254, %v746
    %v748 = vpop.f32.mrf.mxu0
    %v749 = vpop.f32.mrf.mxu0
    %v750 = vadd.f32 %v254, %v749
    %v751 = vpop.f32.mrf.mxu0
    %752 = vmatprep.mubr.bf16.mxu0 0
    %753 = vmatmul.mubr.bf16.gmra.mxu0 %v412
    %v754 = vpop.f32.mrf.mxu0
    %v755 = vadd.f32 %v254, %v754
    %v756 = vpop.f32.mrf.mxu0
    %v757 = vpop.f32.mrf.mxu0
    %v758 = vadd.f32 %v254, %v757
    %v759 = vpop.f32.mrf.mxu0
    %760 = vmatprep.mubr.bf16.mxu0 0
    %761 = vmatmul.mubr.bf16.gmra.mxu0 %v413
    %v762 = vpop.f32.mrf.mxu0
    %v763 = vadd.f32 %v254, %v762
    %v764 = vpop.f32.mrf.mxu0
    %v765 = vpop.f32.mrf.mxu0
    %v766 = vadd.f32 %v254, %v765
    %v767 = vpop.f32.mrf.mxu0
    %768 = vmatprep.mubr.bf16.mxu0 0
    %769 = vmatmul.mubr.bf16.gmra.mxu0 %v414
    %v770 = vpop.f32.mrf.mxu0
    %v771 = vadd.f32 %v254, %v770
    %v772 = vpop.f32.mrf.mxu0
    %v773 = vpop.f32.mrf.mxu0
    %v774 = vadd.f32 %v254, %v773
    %v775 = vpop.f32.mrf.mxu0
    %776 = vmatprep.mubr.bf16.mxu0 0
    %777 = vmatmul.mubr.bf16.gmra.mxu0 %v415
    %v778 = vpop.f32.mrf.mxu0
    %v779 = vadd.f32 %v254, %v778
    %v780 = vpop.f32.mrf.mxu0
    %v781 = vpop.f32.mrf.mxu0
    %v782 = vadd.f32 %v254, %v781
    %v783 = vpop.f32.mrf.mxu0
    %784 = vdwg.mxu0
    %v785 = vmax.f32 %v531, 0.0
    %v786 = vmax.f32 %v534, 0.0
    %v787 = vmax.f32 %v539, 0.0
    %v788 = vmax.f32 %v542, 0.0
    %v789 = vmax.f32 %v547, 0.0
    %v790 = vmax.f32 %v550, 0.0
    %v791 = vmax.f32 %v555, 0.0
    %v792 = vmax.f32 %v558, 0.0
    %v793 = vmax.f32 %v563, 0.0
    %v794 = vmax.f32 %v566, 0.0
    %v795 = vmax.f32 %v571, 0.0
    %v796 = vmax.f32 %v574, 0.0
    %v797 = vmax.f32 %v579, 0.0
    %v798 = vmax.f32 %v582, 0.0
    %v799 = vmax.f32 %v587, 0.0
    %v800 = vmax.f32 %v590, 0.0
    %v801 = vmax.f32 %v595, 0.0
    %v802 = vmax.f32 %v598, 0.0
    %v803 = vmax.f32 %v603, 0.0
    %v804 = vmax.f32 %v606, 0.0
    %v805 = vmax.f32 %v611, 0.0
    %v806 = vmax.f32 %v614, 0.0
    %v807 = vmax.f32 %v619, 0.0
    %v808 = vmax.f32 %v622, 0.0
    %v809 = vmax.f32 %v627, 0.0
    %v810 = vmax.f32 %v630, 0.0
    %v811 = vmax.f32 %v635, 0.0
    %v812 = vmax.f32 %v638, 0.0
    %v813 = vmax.f32 %v643, 0.0
    %v814 = vmax.f32 %v646, 0.0
    %v815 = vmax.f32 %v651, 0.0
    %v816 = vmax.f32 %v654, 0.0
    %v817 = vmax.f32 %v659, 0.0
    %v818 = vmax.f32 %v662, 0.0
    %v819 = vmax.f32 %v667, 0.0
    %v820 = vmax.f32 %v670, 0.0
    %v821 = vmax.f32 %v675, 0.0
    %v822 = vmax.f32 %v678, 0.0
    %v823 = vmax.f32 %v683, 0.0
    %v824 = vmax.f32 %v686, 0.0
    %v825 = vmax.f32 %v691, 0.0
    %v826 = vmax.f32 %v694, 0.0
    %v827 = vmax.f32 %v699, 0.0
    %v828 = vmax.f32 %v702, 0.0
    %v829 = vmax.f32 %v707, 0.0
    %v830 = vmax.f32 %v710, 0.0
    %v831 = vmax.f32 %v715, 0.0
    %v832 = vmax.f32 %v718, 0.0
    %v833 = vmax.f32 %v723, 0.0
    %v834 = vmax.f32 %v726, 0.0
    %v835 = vmax.f32 %v731, 0.0
    %v836 = vmax.f32 %v734, 0.0
    %v837 = vmax.f32 %v739, 0.0
    %v838 = vmax.f32 %v742, 0.0
    %v839 = vmax.f32 %v747, 0.0
    %v840 = vmax.f32 %v750, 0.0
    %v841 = vmax.f32 %v755, 0.0
    %v842 = vmax.f32 %v758, 0.0
    %v843 = vmax.f32 %v763, 0.0
    %v844 = vmax.f32 %v766, 0.0
    %v845 = vmax.f32 %v771, 0.0
    %v846 = vmax.f32 %v774, 0.0
    %v847 = vmax.f32 %v779, 0.0
    %v848 = vmax.f32 %v782, 0.0
    %849 = vst [vmem:[#allocation2] sm:$0xff] 0.0
    %850 = vst [vmem:[#allocation2 + $0x8] sm:$0xff] 0.0
    %851 = vst [vmem:[#allocation2 + $0x10] sm:$0xff] 0.0
    %852 = vst [vmem:[#allocation2 + $0x218] sm:$0xff] 0.0
    %853 = vst [vmem:[#allocation2 + $0x220] sm:$0xff] 0.0
    %854 = vst [vmem:[#allocation2 + $0x228] sm:$0xff] 0.0
    %855 = vst [vmem:[#allocation2 + $0x18] sm:$0xff] %v785
    %856 = vst [vmem:[#allocation2 + $0x20] sm:$0xff] %v786
    %857 = vst [vmem:[#allocation2 + $0x28] sm:$0xff] %v787
    %858 = vst [vmem:[#allocation2 + $0x30] sm:$0xff] %v788
    %859 = vst [vmem:[#allocation2 + $0x38] sm:$0xff] %v789
    %860 = vst [vmem:[#allocation2 + $0x40] sm:$0xff] %v790
    %861 = vst [vmem:[#allocation2 + $0x48] sm:$0xff] %v791
    %862 = vst [vmem:[#allocation2 + $0x50] sm:$0xff] %v792
    %863 = vst [vmem:[#allocation2 + $0x58] sm:$0xff] %v793
    %864 = vst [vmem:[#allocation2 + $0x60] sm:$0xff] %v794
    %865 = vst [vmem:[#allocation2 + $0x68] sm:$0xff] %v795
    %866 = vst [vmem:[#allocation2 + $0x70] sm:$0xff] %v796
    %867 = vst [vmem:[#allocation2 + $0x78] sm:$0xff] %v797
    %868 = vst [vmem:[#allocation2 + $0x80] sm:$0xff] %v798
    %869 = vst [vmem:[#allocation2 + $0x88] sm:$0xff] %v799
    %870 = vst [vmem:[#allocation2 + $0x90] sm:$0xff] %v800
    %871 = vst [vmem:[#allocation2 + $0x98] sm:$0xff] %v801
    %872 = vst [vmem:[#allocation2 + $0xa0] sm:$0xff] %v802
    %873 = vst [vmem:[#allocation2 + $0xa8] sm:$0xff] %v803
    %874 = vst [vmem:[#allocation2 + $0xb0] sm:$0xff] %v804
    %875 = vst [vmem:[#allocation2 + $0xb8] sm:$0xff] %v805
    %876 = vst [vmem:[#allocation2 + $0xc0] sm:$0xff] %v806
    %877 = vst [vmem:[#allocation2 + $0xc8] sm:$0xff] %v807
    %878 = vst [vmem:[#allocation2 + $0xd0] sm:$0xff] %v808
    %879 = vst [vmem:[#allocation2 + $0xd8] sm:$0xff] %v809
    %880 = vst [vmem:[#allocation2 + $0xe0] sm:$0xff] %v810
    %881 = vst [vmem:[#allocation2 + $0xe8] sm:$0xff] %v811
    %882 = vst [vmem:[#allocation2 + $0xf0] sm:$0xff] %v812
    %883 = vst [vmem:[#allocation2 + $0xf8] sm:$0xff] %v813
    %884 = vst [vmem:[#allocation2 + $0x100] sm:$0xff] %v814
    %885 = vst [vmem:[#allocation2 + $0x108] sm:$0xff] %v815
    %886 = vst [vmem:[#allocation2 + $0x110] sm:$0xff] %v816
    %887 = vst [vmem:[#allocation2 + $0x118] sm:$0xff] %v817
    %888 = vst [vmem:[#allocation2 + $0x120] sm:$0xff] %v818
    %889 = vst [vmem:[#allocation2 + $0x128] sm:$0xff] %v819
    %890 = vst [vmem:[#allocation2 + $0x130] sm:$0xff] %v820
    %891 = vst [vmem:[#allocation2 + $0x138] sm:$0xff] %v821
    %892 = vst [vmem:[#allocation2 + $0x140] sm:$0xff] %v822
    %893 = vst [vmem:[#allocation2 + $0x148] sm:$0xff] %v823
    %894 = vst [vmem:[#allocation2 + $0x150] sm:$0xff] %v824
    %895 = vst [vmem:[#allocation2 + $0x158] sm:$0xff] %v825
    %896 = vst [vmem:[#allocation2 + $0x160] sm:$0xff] %v826
    %897 = vst [vmem:[#allocation2 + $0x168] sm:$0xff] %v827
    %898 = vst [vmem:[#allocation2 + $0x170] sm:$0xff] %v828
    %899 = vst [vmem:[#allocation2 + $0x178] sm:$0xff] %v829
    %900 = vst [vmem:[#allocation2 + $0x180] sm:$0xff] %v830
    %901 = vst [vmem:[#allocation2 + $0x188] sm:$0xff] %v831
    %902 = vst [vmem:[#allocation2 + $0x190] sm:$0xff] %v832
    %903 = vst [vmem:[#allocation2 + $0x198] sm:$0xff] %v833
    %904 = vst [vmem:[#allocation2 + $0x1a0] sm:$0xff] %v834
    %905 = vst [vmem:[#allocation2 + $0x1a8] sm:$0xff] %v835
    %906 = vst [vmem:[#allocation2 + $0x1b0] sm:$0xff] %v836
    %907 = vst [vmem:[#allocation2 + $0x1b8] sm:$0xff] %v837
    %908 = vst [vmem:[#allocation2 + $0x1c0] sm:$0xff] %v838
    %909 = vst [vmem:[#allocation2 + $0x1c8] sm:$0xff] %v839
    %910 = vst [vmem:[#allocation2 + $0x1d0] sm:$0xff] %v840
    %911 = vst [vmem:[#allocation2 + $0x1d8] sm:$0xff] %v841
    %912 = vst [vmem:[#allocation2 + $0x1e0] sm:$0xff] %v842
    %913 = vst [vmem:[#allocation2 + $0x1e8] sm:$0xff] %v843
    %914 = vst [vmem:[#allocation2 + $0x1f0] sm:$0xff] %v844
    %915 = vst [vmem:[#allocation2 + $0x1f8] sm:$0xff] %v845
    %916 = vst [vmem:[#allocation2 + $0x200] sm:$0xff] %v846
    %917 = vst [vmem:[#allocation2 + $0x208] sm:$0xff] %v847
    %918 = vst [vmem:[#allocation2 + $0x210] sm:$0xff] %v848
    %v919 = vld [vmem:[#allocation2 + $0x7] sm:$0xff]
    %v920 = vld [vmem:[#allocation2 + $0xf] sm:$0xff]
    %v921 = vld [vmem:[#allocation2 + $0x17] sm:$0xff]
    %v922 = vld [vmem:[#allocation2 + $0x1f] sm:$0xff]
    %v923 = vld [vmem:[#allocation2 + $0x27] sm:$0xff]
    %v924 = vld [vmem:[#allocation2 + $0x2f] sm:$0xff]
    %v925 = vld [vmem:[#allocation2 + $0x37] sm:$0xff]
    %v926 = vld [vmem:[#allocation2 + $0x3f] sm:$0xff]
    %v927 = vld [vmem:[#allocation2 + $0x47] sm:$0xff]
    %v928 = vld [vmem:[#allocation2 + $0x4f] sm:$0xff]
    %v929 = vld [vmem:[#allocation2 + $0x57] sm:$0xff]
    %v930 = vld [vmem:[#allocation2 + $0x5f] sm:$0xff]
    %v931 = vld [vmem:[#allocation2 + $0x67] sm:$0xff]
    %v932 = vld [vmem:[#allocation2 + $0x6f] sm:$0xff]
    %v933 = vld [vmem:[#allocation2 + $0x77] sm:$0xff]
    %v934 = vld [vmem:[#allocation2 + $0x7f] sm:$0xff]
    %v935 = vld [vmem:[#allocation2 + $0x87] sm:$0xff]
    %v936 = vld [vmem:[#allocation2 + $0x8f] sm:$0xff]
    %v937 = vld [vmem:[#allocation2 + $0x97] sm:$0xff]
    %v938 = vld [vmem:[#allocation2 + $0x9f] sm:$0xff]
    %v939 = vld [vmem:[#allocation2 + $0xa7] sm:$0xff]
    %v940 = vld [vmem:[#allocation2 + $0xaf] sm:$0xff]
    %v941 = vld [vmem:[#allocation2 + $0xb7] sm:$0xff]
    %v942 = vld [vmem:[#allocation2 + $0xbf] sm:$0xff]
    %v943 = vld [vmem:[#allocation2 + $0xc7] sm:$0xff]
    %v944 = vld [vmem:[#allocation2 + $0xcf] sm:$0xff]
    %v945 = vld [vmem:[#allocation2 + $0xd7] sm:$0xff]
    %v946 = vld [vmem:[#allocation2 + $0xdf] sm:$0xff]
    %v947 = vld [vmem:[#allocation2 + $0xe7] sm:$0xff]
    %v948 = vld [vmem:[#allocation2 + $0xef] sm:$0xff]
    %v949 = vld [vmem:[#allocation2 + $0xf7] sm:$0xff]
    %v950 = vld [vmem:[#allocation2 + $0xff] sm:$0xff]
    %v951 = vld [vmem:[#allocation2 + $0x107] sm:$0xff]
    %v952 = vld [vmem:[#allocation2 + $0x10f] sm:$0xff]
    %v953 = vld [vmem:[#allocation2 + $0x117] sm:$0xff]
    %v954 = vld [vmem:[#allocation2 + $0x11f] sm:$0xff]
    %v955 = vld [vmem:[#allocation2 + $0x127] sm:$0xff]
    %v956 = vld [vmem:[#allocation2 + $0x12f] sm:$0xff]
    %v957 = vld [vmem:[#allocation2 + $0x137] sm:$0xff]
    %v958 = vld [vmem:[#allocation2 + $0x13f] sm:$0xff]
    %v959 = vld [vmem:[#allocation2 + $0x147] sm:$0xff]
    %v960 = vld [vmem:[#allocation2 + $0x14f] sm:$0xff]
    %v961 = vld [vmem:[#allocation2 + $0x157] sm:$0xff]
    %v962 = vld [vmem:[#allocation2 + $0x15f] sm:$0xff]
    %v963 = vld [vmem:[#allocation2 + $0x167] sm:$0xff]
    %v964 = vld [vmem:[#allocation2 + $0x16f] sm:$0xff]
    %v965 = vld [vmem:[#allocation2 + $0x177] sm:$0xff]
    %v966 = vld [vmem:[#allocation2 + $0x17f] sm:$0xff]
    %v967 = vld [vmem:[#allocation2 + $0x187] sm:$0xff]
    %v968 = vld [vmem:[#allocation2 + $0x18f] sm:$0xff]
    %v969 = vld [vmem:[#allocation2 + $0x197] sm:$0xff]
    %v970 = vld [vmem:[#allocation2 + $0x19f] sm:$0xff]
    %v971 = vld [vmem:[#allocation2 + $0x1a7] sm:$0xff]
    %v972 = vld [vmem:[#allocation2 + $0x1af] sm:$0xff]
    %v973 = vld [vmem:[#allocation2 + $0x1b7] sm:$0xff]
    %v974 = vld [vmem:[#allocation2 + $0x1bf] sm:$0xff]
    %v975 = vld [vmem:[#allocation2 + $0x1c7] sm:$0xff]
    %v976 = vld [vmem:[#allocation2 + $0x1cf] sm:$0xff]
    %v977 = vld [vmem:[#allocation2 + $0x1d7] sm:$0xff]
    %v978 = vld [vmem:[#allocation2 + $0x1df] sm:$0xff]
    %v979 = vld [vmem:[#allocation2 + $0x1e7] sm:$0xff]
    %v980 = vld [vmem:[#allocation2 + $0x1ef] sm:$0xff]
    %v981 = vld [vmem:[#allocation2 + $0x1f7] sm:$0xff]
    %v982 = vld [vmem:[#allocation2 + $0x1ff] sm:$0xff]
    %v983 = vld [vmem:[#allocation6] sm:$0xf]
    %v984 = vld [vmem:[#allocation6 + $0x4] sm:$0xf]
    %v985 = vld [vmem:[#allocation6 + $0x8] sm:$0xf]
    %v986 = vld [vmem:[#allocation6 + $0xc] sm:$0xf]
    %v987 = vld [vmem:[#allocation6 + $0x10] sm:$0xf]
    %v988 = vld [vmem:[#allocation6 + $0x14] sm:$0xf]
    %v989 = vld [vmem:[#allocation6 + $0x18] sm:$0xf]
    %v990 = vld [vmem:[#allocation6 + $0x1c] sm:$0xf]
    %v991 = vld [vmem:[#allocation6 + $0x20] sm:$0xf]
    %v992 = vld [vmem:[#allocation6 + $0x24] sm:$0xf]
    %v993 = vld [vmem:[#allocation6 + $0x28] sm:$0xf]
    %v994 = vld [vmem:[#allocation6 + $0x2c] sm:$0xf]
    %v995 = vld [vmem:[#allocation6 + $0x30] sm:$0xf]
    %v996 = vld [vmem:[#allocation6 + $0x34] sm:$0xf]
    %v997 = vld [vmem:[#allocation6 + $0x38] sm:$0xf]
    %v998 = vld [vmem:[#allocation6 + $0x3c] sm:$0xf]
    %v999 = vld [vmem:[#allocation6 + $0x40] sm:$0xf]
    %v1000 = vld [vmem:[#allocation6 + $0x44] sm:$0xf]
    %v1001 = vld [vmem:[#allocation6 + $0x48] sm:$0xf]
    %v1002 = vld [vmem:[#allocation6 + $0x4c] sm:$0xf]
    %v1003 = vld [vmem:[#allocation6 + $0x50] sm:$0xf]
    %v1004 = vld [vmem:[#allocation6 + $0x54] sm:$0xf]
    %v1005 = vld [vmem:[#allocation6 + $0x58] sm:$0xf]
    %v1006 = vld [vmem:[#allocation6 + $0x5c] sm:$0xf]
    %v1007 = vld [vmem:[#allocation6 + $0x60] sm:$0xf]
    %v1008 = vld [vmem:[#allocation6 + $0x64] sm:$0xf]
    %v1009 = vld [vmem:[#allocation6 + $0x68] sm:$0xf]
    %v1010 = vld [vmem:[#allocation6 + $0x6c] sm:$0xf]
    %v1011 = vld [vmem:[#allocation6 + $0x70] sm:$0xf]
    %v1012 = vld [vmem:[#allocation6 + $0x74] sm:$0xf]
    %v1013 = vld [vmem:[#allocation6 + $0x78] sm:$0xf]
    %v1014 = vld [vmem:[#allocation6 + $0x7c] sm:$0xf]
    %v1015 = vld [vmem:[#allocation6 + $0x80] sm:$0xf]
    %v1016 = vld [vmem:[#allocation6 + $0x84] sm:$0xf]
    %v1017 = vld [vmem:[#allocation6 + $0x88] sm:$0xf]
    %v1018 = vld [vmem:[#allocation6 + $0x8c] sm:$0xf]
    %v1019 = vld [vmem:[#allocation6 + $0x90] sm:$0xf]
    %v1020 = vld [vmem:[#allocation6 + $0x94] sm:$0xf]
    %v1021 = vld [vmem:[#allocation6 + $0x98] sm:$0xf]
    %v1022 = vld [vmem:[#allocation6 + $0x9c] sm:$0xf]
    %v1023 = vld [vmem:[#allocation6 + $0xa0] sm:$0xf]
    %v1024 = vld [vmem:[#allocation6 + $0xa4] sm:$0xf]
    %v1025 = vld [vmem:[#allocation6 + $0xa8] sm:$0xf]
    %v1026 = vld [vmem:[#allocation6 + $0xac] sm:$0xf]
    %v1027 = vld [vmem:[#allocation6 + $0xb0] sm:$0xf]
    %v1028 = vld [vmem:[#allocation6 + $0xb4] sm:$0xf]
    %v1029 = vld [vmem:[#allocation6 + $0xb8] sm:$0xf]
    %v1030 = vld [vmem:[#allocation6 + $0xbc] sm:$0xf]
    %v1031 = vld [vmem:[#allocation6 + $0xc0] sm:$0xf]
    %v1032 = vld [vmem:[#allocation6 + $0xc4] sm:$0xf]
    %v1033 = vld [vmem:[#allocation6 + $0xc8] sm:$0xf]
    %v1034 = vld [vmem:[#allocation6 + $0xcc] sm:$0xf]
    %v1035 = vld [vmem:[#allocation6 + $0xd0] sm:$0xf]
    %v1036 = vld [vmem:[#allocation6 + $0xd4] sm:$0xf]
    %v1037 = vld [vmem:[#allocation6 + $0xd8] sm:$0xf]
    %v1038 = vld [vmem:[#allocation6 + $0xdc] sm:$0xf]
    %v1039 = vld [vmem:[#allocation6 + $0xe0] sm:$0xf]
    %v1040 = vld [vmem:[#allocation6 + $0xe4] sm:$0xf]
    %v1041 = vld [vmem:[#allocation6 + $0xe8] sm:$0xf]
    %v1042 = vld [vmem:[#allocation6 + $0xec] sm:$0xf]
    %v1043 = vld [vmem:[#allocation6 + $0xf0] sm:$0xf]
    %v1044 = vld [vmem:[#allocation6 + $0xf4] sm:$0xf]
    %v1045 = vld [vmem:[#allocation6 + $0xf8] sm:$0xf]
    %v1046 = vld [vmem:[#allocation6 + $0xfc] sm:$0xf]
    %v1047 = vunpack.c.l.bf16 %v983
    %v1048 = vunpack.c.l.bf16 %v984
    %v1049 = vunpack.c.l.bf16 %v985
    %v1050 = vunpack.c.l.bf16 %v986
    %v1051 = vunpack.c.l.bf16 %v987
    %v1052 = vunpack.c.l.bf16 %v988
    %v1053 = vunpack.c.l.bf16 %v989
    %v1054 = vunpack.c.l.bf16 %v990
    %v1055 = vunpack.c.l.bf16 %v991
    %v1056 = vunpack.c.l.bf16 %v992
    %v1057 = vunpack.c.l.bf16 %v993
    %v1058 = vunpack.c.l.bf16 %v994
    %v1059 = vunpack.c.l.bf16 %v995
    %v1060 = vunpack.c.l.bf16 %v996
    %v1061 = vunpack.c.l.bf16 %v997
    %v1062 = vunpack.c.l.bf16 %v998
    %v1063 = vunpack.c.l.bf16 %v999
    %v1064 = vunpack.c.l.bf16 %v1000
    %v1065 = vunpack.c.l.bf16 %v1001
    %v1066 = vunpack.c.l.bf16 %v1002
    %v1067 = vunpack.c.l.bf16 %v1003
    %v1068 = vunpack.c.l.bf16 %v1004
    %v1069 = vunpack.c.l.bf16 %v1005
    %v1070 = vunpack.c.l.bf16 %v1006
    %v1071 = vunpack.c.l.bf16 %v1007
    %v1072 = vunpack.c.l.bf16 %v1008
    %v1073 = vunpack.c.l.bf16 %v1009
    %v1074 = vunpack.c.l.bf16 %v1010
    %v1075 = vunpack.c.l.bf16 %v1011
    %v1076 = vunpack.c.l.bf16 %v1012
    %v1077 = vunpack.c.l.bf16 %v1013
    %v1078 = vunpack.c.l.bf16 %v1014
    %v1079 = vunpack.c.l.bf16 %v1015
    %v1080 = vunpack.c.l.bf16 %v1016
    %v1081 = vunpack.c.l.bf16 %v1017
    %v1082 = vunpack.c.l.bf16 %v1018
    %v1083 = vunpack.c.l.bf16 %v1019
    %v1084 = vunpack.c.l.bf16 %v1020
    %v1085 = vunpack.c.l.bf16 %v1021
    %v1086 = vunpack.c.l.bf16 %v1022
    %v1087 = vunpack.c.l.bf16 %v1023
    %v1088 = vunpack.c.l.bf16 %v1024
    %v1089 = vunpack.c.l.bf16 %v1025
    %v1090 = vunpack.c.l.bf16 %v1026
    %v1091 = vunpack.c.l.bf16 %v1027
    %v1092 = vunpack.c.l.bf16 %v1028
    %v1093 = vunpack.c.l.bf16 %v1029
    %v1094 = vunpack.c.l.bf16 %v1030
    %v1095 = vunpack.c.l.bf16 %v1031
    %v1096 = vunpack.c.l.bf16 %v1032
    %v1097 = vunpack.c.l.bf16 %v1033
    %v1098 = vunpack.c.l.bf16 %v1034
    %v1099 = vunpack.c.l.bf16 %v1035
    %v1100 = vunpack.c.l.bf16 %v1036
    %v1101 = vunpack.c.l.bf16 %v1037
    %v1102 = vunpack.c.l.bf16 %v1038
    %v1103 = vunpack.c.l.bf16 %v1039
    %v1104 = vunpack.c.l.bf16 %v1040
    %v1105 = vunpack.c.l.bf16 %v1041
    %v1106 = vunpack.c.l.bf16 %v1042
    %v1107 = vunpack.c.l.bf16 %v1043
    %v1108 = vunpack.c.l.bf16 %v1044
    %v1109 = vunpack.c.l.bf16 %v1045
    %v1110 = vunpack.c.l.bf16 %v1046
    %1112 = vset.pattern.permute.xlu0 0
    %1113 = vperm.xlu0 %1112, %v1047
    %v1114 = vpop.permute.xlu0 %1113
    %1117 = vset.pattern.permute.xlu0 0
    %1118 = vperm.xlu0 %1117, %v1048
    %v1119 = vpop.permute.xlu0 %1118
    %1122 = vset.pattern.permute.xlu0 0
    %1123 = vperm.xlu0 %1122, %v1049
    %v1124 = vpop.permute.xlu0 %1123
    %1127 = vset.pattern.permute.xlu0 0
    %1128 = vperm.xlu0 %1127, %v1050
    %v1129 = vpop.permute.xlu0 %1128
    %1132 = vset.pattern.permute.xlu0 0
    %1133 = vperm.xlu0 %1132, %v1051
    %v1134 = vpop.permute.xlu0 %1133
    %1137 = vset.pattern.permute.xlu0 0
    %1138 = vperm.xlu0 %1137, %v1052
    %v1139 = vpop.permute.xlu0 %1138
    %1142 = vset.pattern.permute.xlu0 0
    %1143 = vperm.xlu0 %1142, %v1053
    %v1144 = vpop.permute.xlu0 %1143
    %1147 = vset.pattern.permute.xlu0 0
    %1148 = vperm.xlu0 %1147, %v1054
    %v1149 = vpop.permute.xlu0 %1148
    %1152 = vset.pattern.permute.xlu0 0
    %1153 = vperm.xlu0 %1152, %v1055
    %v1154 = vpop.permute.xlu0 %1153
    %1157 = vset.pattern.permute.xlu0 0
    %1158 = vperm.xlu0 %1157, %v1056
    %v1159 = vpop.permute.xlu0 %1158
    %1162 = vset.pattern.permute.xlu0 0
    %1163 = vperm.xlu0 %1162, %v1057
    %v1164 = vpop.permute.xlu0 %1163
    %1167 = vset.pattern.permute.xlu0 0
    %1168 = vperm.xlu0 %1167, %v1058
    %v1169 = vpop.permute.xlu0 %1168
    %1172 = vset.pattern.permute.xlu0 0
    %1173 = vperm.xlu0 %1172, %v1059
    %v1174 = vpop.permute.xlu0 %1173
    %1177 = vset.pattern.permute.xlu0 0
    %1178 = vperm.xlu0 %1177, %v1060
    %v1179 = vpop.permute.xlu0 %1178
    %1182 = vset.pattern.permute.xlu0 0
    %1183 = vperm.xlu0 %1182, %v1061
    %v1184 = vpop.permute.xlu0 %1183
    %1187 = vset.pattern.permute.xlu0 0
    %1188 = vperm.xlu0 %1187, %v1062
    %v1189 = vpop.permute.xlu0 %1188
    %1192 = vset.pattern.permute.xlu0 0
    %1193 = vperm.xlu0 %1192, %v1063
    %v1194 = vpop.permute.xlu0 %1193
    %1197 = vset.pattern.permute.xlu0 0
    %1198 = vperm.xlu0 %1197, %v1064
    %v1199 = vpop.permute.xlu0 %1198
    %1202 = vset.pattern.permute.xlu0 0
    %1203 = vperm.xlu0 %1202, %v1065
    %v1204 = vpop.permute.xlu0 %1203
    %1207 = vset.pattern.permute.xlu0 0
    %1208 = vperm.xlu0 %1207, %v1066
    %v1209 = vpop.permute.xlu0 %1208
    %1212 = vset.pattern.permute.xlu0 0
    %1213 = vperm.xlu0 %1212, %v1067
    %v1214 = vpop.permute.xlu0 %1213
    %1217 = vset.pattern.permute.xlu0 0
    %1218 = vperm.xlu0 %1217, %v1068
    %v1219 = vpop.permute.xlu0 %1218
    %1222 = vset.pattern.permute.xlu0 0
    %1223 = vperm.xlu0 %1222, %v1069
    %v1224 = vpop.permute.xlu0 %1223
    %1227 = vset.pattern.permute.xlu0 0
    %1228 = vperm.xlu0 %1227, %v1070
    %v1229 = vpop.permute.xlu0 %1228
    %1232 = vset.pattern.permute.xlu0 0
    %1233 = vperm.xlu0 %1232, %v1071
    %v1234 = vpop.permute.xlu0 %1233
    %1237 = vset.pattern.permute.xlu0 0
    %1238 = vperm.xlu0 %1237, %v1072
    %v1239 = vpop.permute.xlu0 %1238
    %1242 = vset.pattern.permute.xlu0 0
    %1243 = vperm.xlu0 %1242, %v1073
    %v1244 = vpop.permute.xlu0 %1243
    %1247 = vset.pattern.permute.xlu0 0
    %1248 = vperm.xlu0 %1247, %v1074
    %v1249 = vpop.permute.xlu0 %1248
    %1252 = vset.pattern.permute.xlu0 0
    %1253 = vperm.xlu0 %1252, %v1075
    %v1254 = vpop.permute.xlu0 %1253
    %1257 = vset.pattern.permute.xlu0 0
    %1258 = vperm.xlu0 %1257, %v1076
    %v1259 = vpop.permute.xlu0 %1258
    %1262 = vset.pattern.permute.xlu0 0
    %1263 = vperm.xlu0 %1262, %v1077
    %v1264 = vpop.permute.xlu0 %1263
    %1267 = vset.pattern.permute.xlu0 0
    %1268 = vperm.xlu0 %1267, %v1078
    %v1269 = vpop.permute.xlu0 %1268
    %1272 = vset.pattern.permute.xlu0 0
    %1273 = vperm.xlu0 %1272, %v1079
    %v1274 = vpop.permute.xlu0 %1273
    %1277 = vset.pattern.permute.xlu0 0
    %1278 = vperm.xlu0 %1277, %v1080
    %v1279 = vpop.permute.xlu0 %1278
    %1282 = vset.pattern.permute.xlu0 0
    %1283 = vperm.xlu0 %1282, %v1081
    %v1284 = vpop.permute.xlu0 %1283
    %1287 = vset.pattern.permute.xlu0 0
    %1288 = vperm.xlu0 %1287, %v1082
    %v1289 = vpop.permute.xlu0 %1288
    %1292 = vset.pattern.permute.xlu0 0
    %1293 = vperm.xlu0 %1292, %v1083
    %v1294 = vpop.permute.xlu0 %1293
    %1297 = vset.pattern.permute.xlu0 0
    %1298 = vperm.xlu0 %1297, %v1084
    %v1299 = vpop.permute.xlu0 %1298
    %1302 = vset.pattern.permute.xlu0 0
    %1303 = vperm.xlu0 %1302, %v1085
    %v1304 = vpop.permute.xlu0 %1303
    %1307 = vset.pattern.permute.xlu0 0
    %1308 = vperm.xlu0 %1307, %v1086
    %v1309 = vpop.permute.xlu0 %1308
    %1312 = vset.pattern.permute.xlu0 0
    %1313 = vperm.xlu0 %1312, %v1087
    %v1314 = vpop.permute.xlu0 %1313
    %1317 = vset.pattern.permute.xlu0 0
    %1318 = vperm.xlu0 %1317, %v1088
    %v1319 = vpop.permute.xlu0 %1318
    %1322 = vset.pattern.permute.xlu0 0
    %1323 = vperm.xlu0 %1322, %v1089
    %v1324 = vpop.permute.xlu0 %1323
    %1327 = vset.pattern.permute.xlu0 0
    %1328 = vperm.xlu0 %1327, %v1090
    %v1329 = vpop.permute.xlu0 %1328
    %1332 = vset.pattern.permute.xlu0 0
    %1333 = vperm.xlu0 %1332, %v1091
    %v1334 = vpop.permute.xlu0 %1333
    %1337 = vset.pattern.permute.xlu0 0
    %1338 = vperm.xlu0 %1337, %v1092
    %v1339 = vpop.permute.xlu0 %1338
    %1342 = vset.pattern.permute.xlu0 0
    %1343 = vperm.xlu0 %1342, %v1093
    %v1344 = vpop.permute.xlu0 %1343
    %1347 = vset.pattern.permute.xlu0 0
    %1348 = vperm.xlu0 %1347, %v1094
    %v1349 = vpop.permute.xlu0 %1348
    %1352 = vset.pattern.permute.xlu0 0
    %1353 = vperm.xlu0 %1352, %v1095
    %v1354 = vpop.permute.xlu0 %1353
    %1357 = vset.pattern.permute.xlu0 0
    %1358 = vperm.xlu0 %1357, %v1096
    %v1359 = vpop.permute.xlu0 %1358
    %1362 = vset.pattern.permute.xlu0 0
    %1363 = vperm.xlu0 %1362, %v1097
    %v1364 = vpop.permute.xlu0 %1363
    %1367 = vset.pattern.permute.xlu0 0
    %1368 = vperm.xlu0 %1367, %v1098
    %v1369 = vpop.permute.xlu0 %1368
    %1372 = vset.pattern.permute.xlu0 0
    %1373 = vperm.xlu0 %1372, %v1099
    %v1374 = vpop.permute.xlu0 %1373
    %1377 = vset.pattern.permute.xlu0 0
    %1378 = vperm.xlu0 %1377, %v1100
    %v1379 = vpop.permute.xlu0 %1378
    %1382 = vset.pattern.permute.xlu0 0
    %1383 = vperm.xlu0 %1382, %v1101
    %v1384 = vpop.permute.xlu0 %1383
    %1387 = vset.pattern.permute.xlu0 0
    %1388 = vperm.xlu0 %1387, %v1102
    %v1389 = vpop.permute.xlu0 %1388
    %1392 = vset.pattern.permute.xlu0 0
    %1393 = vperm.xlu0 %1392, %v1103
    %v1394 = vpop.permute.xlu0 %1393
    %1397 = vset.pattern.permute.xlu0 0
    %1398 = vperm.xlu0 %1397, %v1104
    %v1399 = vpop.permute.xlu0 %1398
    %1402 = vset.pattern.permute.xlu0 0
    %1403 = vperm.xlu0 %1402, %v1105
    %v1404 = vpop.permute.xlu0 %1403
    %1407 = vset.pattern.permute.xlu0 0
    %1408 = vperm.xlu0 %1407, %v1106
    %v1409 = vpop.permute.xlu0 %1408
    %1412 = vset.pattern.permute.xlu0 0
    %1413 = vperm.xlu0 %1412, %v1107
    %v1414 = vpop.permute.xlu0 %1413
    %1417 = vset.pattern.permute.xlu0 0
    %1418 = vperm.xlu0 %1417, %v1108
    %v1419 = vpop.permute.xlu0 %1418
    %1422 = vset.pattern.permute.xlu0 0
    %1423 = vperm.xlu0 %1422, %v1109
    %v1424 = vpop.permute.xlu0 %1423
    %1427 = vset.pattern.permute.xlu0 0
    %1428 = vperm.xlu0 %1427, %v1110
    %v1429 = vpop.permute.xlu0 %1428
    %v1431 = vmul.f32 %v919, %v1114
    %v1432 = vmul.f32 %v920, %v1119
    %v1433 = vmul.f32 %v921, %v1124
    %v1434 = vmul.f32 %v922, %v1129
    %v1435 = vmul.f32 %v923, %v1134
    %v1436 = vmul.f32 %v924, %v1139
    %v1437 = vmul.f32 %v925, %v1144
    %v1438 = vmul.f32 %v926, %v1149
    %v1439 = vmul.f32 %v927, %v1154
    %v1440 = vmul.f32 %v928, %v1159
    %v1441 = vmul.f32 %v929, %v1164
    %v1442 = vmul.f32 %v930, %v1169
    %v1443 = vmul.f32 %v931, %v1174
    %v1444 = vmul.f32 %v932, %v1179
    %v1445 = vmul.f32 %v933, %v1184
    %v1446 = vmul.f32 %v934, %v1189
    %v1447 = vmul.f32 %v935, %v1194
    %v1448 = vmul.f32 %v936, %v1199
    %v1449 = vmul.f32 %v937, %v1204
    %v1450 = vmul.f32 %v938, %v1209
    %v1451 = vmul.f32 %v939, %v1214
    %v1452 = vmul.f32 %v940, %v1219
    %v1453 = vmul.f32 %v941, %v1224
    %v1454 = vmul.f32 %v942, %v1229
    %v1455 = vmul.f32 %v943, %v1234
    %v1456 = vmul.f32 %v944, %v1239
    %v1457 = vmul.f32 %v945, %v1244
    %v1458 = vmul.f32 %v946, %v1249
    %v1459 = vmul.f32 %v947, %v1254
    %v1460 = vmul.f32 %v948, %v1259
    %v1461 = vmul.f32 %v949, %v1264
    %v1462 = vmul.f32 %v950, %v1269
    %v1463 = vmul.f32 %v951, %v1274
    %v1464 = vmul.f32 %v952, %v1279
    %v1465 = vmul.f32 %v953, %v1284
    %v1466 = vmul.f32 %v954, %v1289
    %v1467 = vmul.f32 %v955, %v1294
    %v1468 = vmul.f32 %v956, %v1299
    %v1469 = vmul.f32 %v957, %v1304
    %v1470 = vmul.f32 %v958, %v1309
    %v1471 = vmul.f32 %v959, %v1314
    %v1472 = vmul.f32 %v960, %v1319
    %v1473 = vmul.f32 %v961, %v1324
    %v1474 = vmul.f32 %v962, %v1329
    %v1475 = vmul.f32 %v963, %v1334
    %v1476 = vmul.f32 %v964, %v1339
    %v1477 = vmul.f32 %v965, %v1344
    %v1478 = vmul.f32 %v966, %v1349
    %v1479 = vmul.f32 %v967, %v1354
    %v1480 = vmul.f32 %v968, %v1359
    %v1481 = vmul.f32 %v969, %v1364
    %v1482 = vmul.f32 %v970, %v1369
    %v1483 = vmul.f32 %v971, %v1374
    %v1484 = vmul.f32 %v972, %v1379
    %v1485 = vmul.f32 %v973, %v1384
    %v1486 = vmul.f32 %v974, %v1389
    %v1487 = vmul.f32 %v975, %v1394
    %v1488 = vmul.f32 %v976, %v1399
    %v1489 = vmul.f32 %v977, %v1404
    %v1490 = vmul.f32 %v978, %v1409
    %v1491 = vmul.f32 %v979, %v1414
    %v1492 = vmul.f32 %v980, %v1419
    %v1493 = vmul.f32 %v981, %v1424
    %v1494 = vmul.f32 %v982, %v1429
    %v1495 = vpack.c.bf16 %v1432, %v1431
    %v1496 = vpack.c.bf16 %v1434, %v1433
    %v1497 = vpack.c.bf16 %v1436, %v1435
    %v1498 = vpack.c.bf16 %v1438, %v1437
    %v1499 = vpack.c.bf16 %v1440, %v1439
    %v1500 = vpack.c.bf16 %v1442, %v1441
    %v1501 = vpack.c.bf16 %v1444, %v1443
    %v1502 = vpack.c.bf16 %v1446, %v1445
    %v1503 = vpack.c.bf16 %v1448, %v1447
    %v1504 = vpack.c.bf16 %v1450, %v1449
    %v1505 = vpack.c.bf16 %v1452, %v1451
    %v1506 = vpack.c.bf16 %v1454, %v1453
    %v1507 = vpack.c.bf16 %v1456, %v1455
    %v1508 = vpack.c.bf16 %v1458, %v1457
    %v1509 = vpack.c.bf16 %v1460, %v1459
    %v1510 = vpack.c.bf16 %v1462, %v1461
    %v1511 = vpack.c.bf16 %v1464, %v1463
    %v1512 = vpack.c.bf16 %v1466, %v1465
    %v1513 = vpack.c.bf16 %v1468, %v1467
    %v1514 = vpack.c.bf16 %v1470, %v1469
    %v1515 = vpack.c.bf16 %v1472, %v1471
    %v1516 = vpack.c.bf16 %v1474, %v1473
    %v1517 = vpack.c.bf16 %v1476, %v1475
    %v1518 = vpack.c.bf16 %v1478, %v1477
    %v1519 = vpack.c.bf16 %v1480, %v1479
    %v1520 = vpack.c.bf16 %v1482, %v1481
    %v1521 = vpack.c.bf16 %v1484, %v1483
    %v1522 = vpack.c.bf16 %v1486, %v1485
    %v1523 = vpack.c.bf16 %v1488, %v1487
    %v1524 = vpack.c.bf16 %v1490, %v1489
    %v1525 = vpack.c.bf16 %v1492, %v1491
    %v1526 = vpack.c.bf16 %v1494, %v1493
    %v1527 = vld [vmem:[#allocation12] sm:$0xf]
    %v1528 = vld [vmem:[#allocation12 + $0x4] sm:$0xf]
    %v1529 = vld [vmem:[#allocation12 + $0x8] sm:$0xf]
    %v1530 = vld [vmem:[#allocation12 + $0xc] sm:$0xf]
    %v1531 = vld [vmem:[#allocation12 + $0x10] sm:$0xf]
    %v1532 = vld [vmem:[#allocation12 + $0x14] sm:$0xf]
    %v1533 = vld [vmem:[#allocation12 + $0x18] sm:$0xf]
    %v1534 = vld [vmem:[#allocation12 + $0x1c] sm:$0xf]
    %v1535 = vld [vmem:[#allocation12 + $0x20] sm:$0xf]
    %v1536 = vld [vmem:[#allocation12 + $0x24] sm:$0xf]
    %v1537 = vld [vmem:[#allocation12 + $0x28] sm:$0xf]
    %v1538 = vld [vmem:[#allocation12 + $0x2c] sm:$0xf]
    %v1539 = vld [vmem:[#allocation12 + $0x30] sm:$0xf]
    %v1540 = vld [vmem:[#allocation12 + $0x34] sm:$0xf]
    %v1541 = vld [vmem:[#allocation12 + $0x38] sm:$0xf]
    %v1542 = vld [vmem:[#allocation12 + $0x3c] sm:$0xf]
    %v1543 = vld [vmem:[#allocation2 + $0x8] sm:$0xff]
    %v1544 = vld [vmem:[#allocation2 + $0x10] sm:$0xff]
    %v1545 = vld [vmem:[#allocation2 + $0x18] sm:$0xff]
    %v1546 = vld [vmem:[#allocation2 + $0x20] sm:$0xff]
    %v1547 = vld [vmem:[#allocation2 + $0x28] sm:$0xff]
    %v1548 = vld [vmem:[#allocation2 + $0x30] sm:$0xff]
    %v1549 = vld [vmem:[#allocation2 + $0x38] sm:$0xff]
    %v1550 = vld [vmem:[#allocation2 + $0x40] sm:$0xff]
    %v1551 = vld [vmem:[#allocation2 + $0x48] sm:$0xff]
    %v1552 = vld [vmem:[#allocation2 + $0x50] sm:$0xff]
    %v1553 = vld [vmem:[#allocation2 + $0x58] sm:$0xff]
    %v1554 = vld [vmem:[#allocation2 + $0x60] sm:$0xff]
    %v1555 = vld [vmem:[#allocation2 + $0x68] sm:$0xff]
    %v1556 = vld [vmem:[#allocation2 + $0x70] sm:$0xff]
    %v1557 = vld [vmem:[#allocation2 + $0x78] sm:$0xff]
    %v1558 = vld [vmem:[#allocation2 + $0x80] sm:$0xff]
    %v1559 = vld [vmem:[#allocation2 + $0x88] sm:$0xff]
    %v1560 = vld [vmem:[#allocation2 + $0x90] sm:$0xff]
    %v1561 = vld [vmem:[#allocation2 + $0x98] sm:$0xff]
    %v1562 = vld [vmem:[#allocation2 + $0xa0] sm:$0xff]
    %v1563 = vld [vmem:[#allocation2 + $0xa8] sm:$0xff]
    %v1564 = vld [vmem:[#allocation2 + $0xb0] sm:$0xff]
    %v1565 = vld [vmem:[#allocation2 + $0xb8] sm:$0xff]
    %v1566 = vld [vmem:[#allocation2 + $0xc0] sm:$0xff]
    %v1567 = vld [vmem:[#allocation2 + $0xc8] sm:$0xff]
    %v1568 = vld [vmem:[#allocation2 + $0xd0] sm:$0xff]
    %v1569 = vld [vmem:[#allocation2 + $0xd8] sm:$0xff]
    %v1570 = vld [vmem:[#allocation2 + $0xe0] sm:$0xff]
    %v1571 = vld [vmem:[#allocation2 + $0xe8] sm:$0xff]
    %v1572 = vld [vmem:[#allocation2 + $0xf0] sm:$0xff]
    %v1573 = vld [vmem:[#allocation2 + $0xf8] sm:$0xff]
    %v1574 = vld [vmem:[#allocation2 + $0x100] sm:$0xff]
    %v1575 = vld [vmem:[#allocation2 + $0x108] sm:$0xff]
    %v1576 = vld [vmem:[#allocation2 + $0x110] sm:$0xff]
    %v1577 = vld [vmem:[#allocation2 + $0x118] sm:$0xff]
    %v1578 = vld [vmem:[#allocation2 + $0x120] sm:$0xff]
    %v1579 = vld [vmem:[#allocation2 + $0x128] sm:$0xff]
    %v1580 = vld [vmem:[#allocation2 + $0x130] sm:$0xff]
    %v1581 = vld [vmem:[#allocation2 + $0x138] sm:$0xff]
    %v1582 = vld [vmem:[#allocation2 + $0x140] sm:$0xff]
    %v1583 = vld [vmem:[#allocation2 + $0x148] sm:$0xff]
    %v1584 = vld [vmem:[#allocation2 + $0x150] sm:$0xff]
    %v1585 = vld [vmem:[#allocation2 + $0x158] sm:$0xff]
    %v1586 = vld [vmem:[#allocation2 + $0x160] sm:$0xff]
    %v1587 = vld [vmem:[#allocation2 + $0x168] sm:$0xff]
    %v1588 = vld [vmem:[#allocation2 + $0x170] sm:$0xff]
    %v1589 = vld [vmem:[#allocation2 + $0x178] sm:$0xff]
    %v1590 = vld [vmem:[#allocation2 + $0x180] sm:$0xff]
    %v1591 = vld [vmem:[#allocation2 + $0x188] sm:$0xff]
    %v1592 = vld [vmem:[#allocation2 + $0x190] sm:$0xff]
    %v1593 = vld [vmem:[#allocation2 + $0x198] sm:$0xff]
    %v1594 = vld [vmem:[#allocation2 + $0x1a0] sm:$0xff]
    %v1595 = vld [vmem:[#allocation2 + $0x1a8] sm:$0xff]
    %v1596 = vld [vmem:[#allocation2 + $0x1b0] sm:$0xff]
    %v1597 = vld [vmem:[#allocation2 + $0x1b8] sm:$0xff]
    %v1598 = vld [vmem:[#allocation2 + $0x1c0] sm:$0xff]
    %v1599 = vld [vmem:[#allocation2 + $0x1c8] sm:$0xff]
    %v1600 = vld [vmem:[#allocation2 + $0x1d0] sm:$0xff]
    %v1601 = vld [vmem:[#allocation2 + $0x1d8] sm:$0xff]
    %v1602 = vld [vmem:[#allocation2 + $0x1e0] sm:$0xff]
    %v1603 = vld [vmem:[#allocation2 + $0x1e8] sm:$0xff]
    %v1604 = vld [vmem:[#allocation2 + $0x1f0] sm:$0xff]
    %v1605 = vld [vmem:[#allocation2 + $0x1f8] sm:$0xff]
    %v1606 = vld [vmem:[#allocation2 + $0x200] sm:$0xff]
    %1607 = vset.pattern.permute.xlu0 8
    %1608 = vperm.xlu0 %1607, %v1047
    %v1609 = vpop.permute.xlu0 %1608
    %1611 = vset.pattern.permute.xlu0 8
    %1612 = vperm.xlu0 %1611, %v1048
    %v1613 = vpop.permute.xlu0 %1612
    %1615 = vset.pattern.permute.xlu0 8
    %1616 = vperm.xlu0 %1615, %v1049
    %v1617 = vpop.permute.xlu0 %1616
    %1619 = vset.pattern.permute.xlu0 8
    %1620 = vperm.xlu0 %1619, %v1050
    %v1621 = vpop.permute.xlu0 %1620
    %1623 = vset.pattern.permute.xlu0 8
    %1624 = vperm.xlu0 %1623, %v1051
    %v1625 = vpop.permute.xlu0 %1624
    %1627 = vset.pattern.permute.xlu0 8
    %1628 = vperm.xlu0 %1627, %v1052
    %v1629 = vpop.permute.xlu0 %1628
    %1631 = vset.pattern.permute.xlu0 8
    %1632 = vperm.xlu0 %1631, %v1053
    %v1633 = vpop.permute.xlu0 %1632
    %1635 = vset.pattern.permute.xlu0 8
    %1636 = vperm.xlu0 %1635, %v1054
    %v1637 = vpop.permute.xlu0 %1636
    %1639 = vset.pattern.permute.xlu0 8
    %1640 = vperm.xlu0 %1639, %v1055
    %v1641 = vpop.permute.xlu0 %1640
    %1643 = vset.pattern.permute.xlu0 8
    %1644 = vperm.xlu0 %1643, %v1056
    %v1645 = vpop.permute.xlu0 %1644
    %1647 = vset.pattern.permute.xlu0 8
    %1648 = vperm.xlu0 %1647, %v1057
    %v1649 = vpop.permute.xlu0 %1648
    %1651 = vset.pattern.permute.xlu0 8
    %1652 = vperm.xlu0 %1651, %v1058
    %v1653 = vpop.permute.xlu0 %1652
    %1655 = vset.pattern.permute.xlu0 8
    %1656 = vperm.xlu0 %1655, %v1059
    %v1657 = vpop.permute.xlu0 %1656
    %1659 = vset.pattern.permute.xlu0 8
    %1660 = vperm.xlu0 %1659, %v1060
    %v1661 = vpop.permute.xlu0 %1660
    %1663 = vset.pattern.permute.xlu0 8
    %1664 = vperm.xlu0 %1663, %v1061
    %v1665 = vpop.permute.xlu0 %1664
    %1667 = vset.pattern.permute.xlu0 8
    %1668 = vperm.xlu0 %1667, %v1062
    %v1669 = vpop.permute.xlu0 %1668
    %1671 = vset.pattern.permute.xlu0 8
    %1672 = vperm.xlu0 %1671, %v1063
    %v1673 = vpop.permute.xlu0 %1672
    %1675 = vset.pattern.permute.xlu0 8
    %1676 = vperm.xlu0 %1675, %v1064
    %v1677 = vpop.permute.xlu0 %1676
    %1679 = vset.pattern.permute.xlu0 8
    %1680 = vperm.xlu0 %1679, %v1065
    %v1681 = vpop.permute.xlu0 %1680
    %1683 = vset.pattern.permute.xlu0 8
    %1684 = vperm.xlu0 %1683, %v1066
    %v1685 = vpop.permute.xlu0 %1684
    %1687 = vset.pattern.permute.xlu0 8
    %1688 = vperm.xlu0 %1687, %v1067
    %v1689 = vpop.permute.xlu0 %1688
    %1691 = vset.pattern.permute.xlu0 8
    %1692 = vperm.xlu0 %1691, %v1068
    %v1693 = vpop.permute.xlu0 %1692
    %1695 = vset.pattern.permute.xlu0 8
    %1696 = vperm.xlu0 %1695, %v1069
    %v1697 = vpop.permute.xlu0 %1696
    %1699 = vset.pattern.permute.xlu0 8
    %1700 = vperm.xlu0 %1699, %v1070
    %v1701 = vpop.permute.xlu0 %1700
    %1703 = vset.pattern.permute.xlu0 8
    %1704 = vperm.xlu0 %1703, %v1071
    %v1705 = vpop.permute.xlu0 %1704
    %1707 = vset.pattern.permute.xlu0 8
    %1708 = vperm.xlu0 %1707, %v1072
    %v1709 = vpop.permute.xlu0 %1708
    %1711 = vset.pattern.permute.xlu0 8
    %1712 = vperm.xlu0 %1711, %v1073
    %v1713 = vpop.permute.xlu0 %1712
    %1715 = vset.pattern.permute.xlu0 8
    %1716 = vperm.xlu0 %1715, %v1074
    %v1717 = vpop.permute.xlu0 %1716
    %1719 = vset.pattern.permute.xlu0 8
    %1720 = vperm.xlu0 %1719, %v1075
    %v1721 = vpop.permute.xlu0 %1720
    %1723 = vset.pattern.permute.xlu0 8
    %1724 = vperm.xlu0 %1723, %v1076
    %v1725 = vpop.permute.xlu0 %1724
    %1727 = vset.pattern.permute.xlu0 8
    %1728 = vperm.xlu0 %1727, %v1077
    %v1729 = vpop.permute.xlu0 %1728
    %1731 = vset.pattern.permute.xlu0 8
    %1732 = vperm.xlu0 %1731, %v1078
    %v1733 = vpop.permute.xlu0 %1732
    %1735 = vset.pattern.permute.xlu0 8
    %1736 = vperm.xlu0 %1735, %v1079
    %v1737 = vpop.permute.xlu0 %1736
    %1739 = vset.pattern.permute.xlu0 8
    %1740 = vperm.xlu0 %1739, %v1080
    %v1741 = vpop.permute.xlu0 %1740
    %1743 = vset.pattern.permute.xlu0 8
    %1744 = vperm.xlu0 %1743, %v1081
    %v1745 = vpop.permute.xlu0 %1744
    %1747 = vset.pattern.permute.xlu0 8
    %1748 = vperm.xlu0 %1747, %v1082
    %v1749 = vpop.permute.xlu0 %1748
    %1751 = vset.pattern.permute.xlu0 8
    %1752 = vperm.xlu0 %1751, %v1083
    %v1753 = vpop.permute.xlu0 %1752
    %1755 = vset.pattern.permute.xlu0 8
    %1756 = vperm.xlu0 %1755, %v1084
    %v1757 = vpop.permute.xlu0 %1756
    %1759 = vset.pattern.permute.xlu0 8
    %1760 = vperm.xlu0 %1759, %v1085
    %v1761 = vpop.permute.xlu0 %1760
    %1763 = vset.pattern.permute.xlu0 8
    %1764 = vperm.xlu0 %1763, %v1086
    %v1765 = vpop.permute.xlu0 %1764
    %1767 = vset.pattern.permute.xlu0 8
    %1768 = vperm.xlu0 %1767, %v1087
    %v1769 = vpop.permute.xlu0 %1768
    %1771 = vset.pattern.permute.xlu0 8
    %1772 = vperm.xlu0 %1771, %v1088
    %v1773 = vpop.permute.xlu0 %1772
    %1775 = vset.pattern.permute.xlu0 8
    %1776 = vperm.xlu0 %1775, %v1089
    %v1777 = vpop.permute.xlu0 %1776
    %1779 = vset.pattern.permute.xlu0 8
    %1780 = vperm.xlu0 %1779, %v1090
    %v1781 = vpop.permute.xlu0 %1780
    %1783 = vset.pattern.permute.xlu0 8
    %1784 = vperm.xlu0 %1783, %v1091
    %v1785 = vpop.permute.xlu0 %1784
    %1787 = vset.pattern.permute.xlu0 8
    %1788 = vperm.xlu0 %1787, %v1092
    %v1789 = vpop.permute.xlu0 %1788
    %1791 = vset.pattern.permute.xlu0 8
    %1792 = vperm.xlu0 %1791, %v1093
    %v1793 = vpop.permute.xlu0 %1792
    %1795 = vset.pattern.permute.xlu0 8
    %1796 = vperm.xlu0 %1795, %v1094
    %v1797 = vpop.permute.xlu0 %1796
    %1799 = vset.pattern.permute.xlu0 8
    %1800 = vperm.xlu0 %1799, %v1095
    %v1801 = vpop.permute.xlu0 %1800
    %1803 = vset.pattern.permute.xlu0 8
    %1804 = vperm.xlu0 %1803, %v1096
    %v1805 = vpop.permute.xlu0 %1804
    %1807 = vset.pattern.permute.xlu0 8
    %1808 = vperm.xlu0 %1807, %v1097
    %v1809 = vpop.permute.xlu0 %1808
    %1811 = vset.pattern.permute.xlu0 8
    %1812 = vperm.xlu0 %1811, %v1098
    %v1813 = vpop.permute.xlu0 %1812
    %1815 = vset.pattern.permute.xlu0 8
    %1816 = vperm.xlu0 %1815, %v1099
    %v1817 = vpop.permute.xlu0 %1816
    %1819 = vset.pattern.permute.xlu0 8
    %1820 = vperm.xlu0 %1819, %v1100
    %v1821 = vpop.permute.xlu0 %1820
    %1823 = vset.pattern.permute.xlu0 8
    %1824 = vperm.xlu0 %1823, %v1101
    %v1825 = vpop.permute.xlu0 %1824
    %1827 = vset.pattern.permute.xlu0 8
    %1828 = vperm.xlu0 %1827, %v1102
    %v1829 = vpop.permute.xlu0 %1828
    %1831 = vset.pattern.permute.xlu0 8
    %1832 = vperm.xlu0 %1831, %v1103
    %v1833 = vpop.permute.xlu0 %1832
    %1835 = vset.pattern.permute.xlu0 8
    %1836 = vperm.xlu0 %1835, %v1104
    %v1837 = vpop.permute.xlu0 %1836
    %1839 = vset.pattern.permute.xlu0 8
    %1840 = vperm.xlu0 %1839, %v1105
    %v1841 = vpop.permute.xlu0 %1840
    %1843 = vset.pattern.permute.xlu0 8
    %1844 = vperm.xlu0 %1843, %v1106
    %v1845 = vpop.permute.xlu0 %1844
    %1847 = vset.pattern.permute.xlu0 8
    %1848 = vperm.xlu0 %1847, %v1107
    %v1849 = vpop.permute.xlu0 %1848
    %1851 = vset.pattern.permute.xlu0 8
    %1852 = vperm.xlu0 %1851, %v1108
    %v1853 = vpop.permute.xlu0 %1852
    %1855 = vset.pattern.permute.xlu0 8
    %1856 = vperm.xlu0 %1855, %v1109
    %v1857 = vpop.permute.xlu0 %1856
    %1859 = vset.pattern.permute.xlu0 8
    %1860 = vperm.xlu0 %1859, %v1110
    %v1861 = vpop.permute.xlu0 %1860
    %v1863 = vmul.f32 %v1543, %v1609
    %v1864 = vmul.f32 %v1544, %v1613
    %v1865 = vmul.f32 %v1545, %v1617
    %v1866 = vmul.f32 %v1546, %v1621
    %v1867 = vmul.f32 %v1547, %v1625
    %v1868 = vmul.f32 %v1548, %v1629
    %v1869 = vmul.f32 %v1549, %v1633
    %v1870 = vmul.f32 %v1550, %v1637
    %v1871 = vmul.f32 %v1551, %v1641
    %v1872 = vmul.f32 %v1552, %v1645
    %v1873 = vmul.f32 %v1553, %v1649
    %v1874 = vmul.f32 %v1554, %v1653
    %v1875 = vmul.f32 %v1555, %v1657
    %v1876 = vmul.f32 %v1556, %v1661
    %v1877 = vmul.f32 %v1557, %v1665
    %v1878 = vmul.f32 %v1558, %v1669
    %v1879 = vmul.f32 %v1559, %v1673
    %v1880 = vmul.f32 %v1560, %v1677
    %v1881 = vmul.f32 %v1561, %v1681
    %v1882 = vmul.f32 %v1562, %v1685
    %v1883 = vmul.f32 %v1563, %v1689
    %v1884 = vmul.f32 %v1564, %v1693
    %v1885 = vmul.f32 %v1565, %v1697
    %v1886 = vmul.f32 %v1566, %v1701
    %v1887 = vmul.f32 %v1567, %v1705
    %v1888 = vmul.f32 %v1568, %v1709
    %v1889 = vmul.f32 %v1569, %v1713
    %v1890 = vmul.f32 %v1570, %v1717
    %v1891 = vmul.f32 %v1571, %v1721
    %v1892 = vmul.f32 %v1572, %v1725
    %v1893 = vmul.f32 %v1573, %v1729
    %v1894 = vmul.f32 %v1574, %v1733
    %v1895 = vmul.f32 %v1575, %v1737
    %v1896 = vmul.f32 %v1576, %v1741
    %v1897 = vmul.f32 %v1577, %v1745
    %v1898 = vmul.f32 %v1578, %v1749
    %v1899 = vmul.f32 %v1579, %v1753
    %v1900 = vmul.f32 %v1580, %v1757
    %v1901 = vmul.f32 %v1581, %v1761
    %v1902 = vmul.f32 %v1582, %v1765
    %v1903 = vmul.f32 %v1583, %v1769
    %v1904 = vmul.f32 %v1584, %v1773
    %v1905 = vmul.f32 %v1585, %v1777
    %v1906 = vmul.f32 %v1586, %v1781
    %v1907 = vmul.f32 %v1587, %v1785
    %v1908 = vmul.f32 %v1588, %v1789
    %v1909 = vmul.f32 %v1589, %v1793
    %v1910 = vmul.f32 %v1590, %v1797
    %v1911 = vmul.f32 %v1591, %v1801
    %v1912 = vmul.f32 %v1592, %v1805
    %v1913 = vmul.f32 %v1593, %v1809
    %v1914 = vmul.f32 %v1594, %v1813
    %v1915 = vmul.f32 %v1595, %v1817
    %v1916 = vmul.f32 %v1596, %v1821
    %v1917 = vmul.f32 %v1597, %v1825
    %v1918 = vmul.f32 %v1598, %v1829
    %v1919 = vmul.f32 %v1599, %v1833
    %v1920 = vmul.f32 %v1600, %v1837
    %v1921 = vmul.f32 %v1601, %v1841
    %v1922 = vmul.f32 %v1602, %v1845
    %v1923 = vmul.f32 %v1603, %v1849
    %v1924 = vmul.f32 %v1604, %v1853
    %v1925 = vmul.f32 %v1605, %v1857
    %v1926 = vmul.f32 %v1606, %v1861
    %v1927 = vpack.c.bf16 %v1864, %v1863
    %v1928 = vpack.c.bf16 %v1866, %v1865
    %v1929 = vpack.c.bf16 %v1868, %v1867
    %v1930 = vpack.c.bf16 %v1870, %v1869
    %v1931 = vpack.c.bf16 %v1872, %v1871
    %v1932 = vpack.c.bf16 %v1874, %v1873
    %v1933 = vpack.c.bf16 %v1876, %v1875
    %v1934 = vpack.c.bf16 %v1878, %v1877
    %v1935 = vpack.c.bf16 %v1880, %v1879
    %v1936 = vpack.c.bf16 %v1882, %v1881
    %v1937 = vpack.c.bf16 %v1884, %v1883
    %v1938 = vpack.c.bf16 %v1886, %v1885
    %v1939 = vpack.c.bf16 %v1888, %v1887
    %v1940 = vpack.c.bf16 %v1890, %v1889
    %v1941 = vpack.c.bf16 %v1892, %v1891
    %v1942 = vpack.c.bf16 %v1894, %v1893
    %v1943 = vpack.c.bf16 %v1896, %v1895
    %v1944 = vpack.c.bf16 %v1898, %v1897
    %v1945 = vpack.c.bf16 %v1900, %v1899
    %v1946 = vpack.c.bf16 %v1902, %v1901
    %v1947 = vpack.c.bf16 %v1904, %v1903
    %v1948 = vpack.c.bf16 %v1906, %v1905
    %v1949 = vpack.c.bf16 %v1908, %v1907
    %v1950 = vpack.c.bf16 %v1910, %v1909
    %v1951 = vpack.c.bf16 %v1912, %v1911
    %v1952 = vpack.c.bf16 %v1914, %v1913
    %v1953 = vpack.c.bf16 %v1916, %v1915
    %v1954 = vpack.c.bf16 %v1918, %v1917
    %v1955 = vpack.c.bf16 %v1920, %v1919
    %v1956 = vpack.c.bf16 %v1922, %v1921
    %v1957 = vpack.c.bf16 %v1924, %v1923
    %v1958 = vpack.c.bf16 %v1926, %v1925
    %s1959 = scalar_lea.vmem [#allocation12], 64
    %v1960 = vld [vmem:[%s1959] sm:$0xf]
    %v1961 = vld [vmem:[%s1959 + $0x4] sm:$0xf]
    %v1962 = vld [vmem:[%s1959 + $0x8] sm:$0xf]
    %v1963 = vld [vmem:[%s1959 + $0xc] sm:$0xf]
    %v1964 = vld [vmem:[%s1959 + $0x10] sm:$0xf]
    %v1965 = vld [vmem:[%s1959 + $0x14] sm:$0xf]
    %v1966 = vld [vmem:[%s1959 + $0x18] sm:$0xf]
    %v1967 = vld [vmem:[%s1959 + $0x1c] sm:$0xf]
    %v1968 = vld [vmem:[%s1959 + $0x20] sm:$0xf]
    %v1969 = vld [vmem:[%s1959 + $0x24] sm:$0xf]
    %v1970 = vld [vmem:[%s1959 + $0x28] sm:$0xf]
    %v1971 = vld [vmem:[%s1959 + $0x2c] sm:$0xf]
    %v1972 = vld [vmem:[%s1959 + $0x30] sm:$0xf]
    %v1973 = vld [vmem:[%s1959 + $0x34] sm:$0xf]
    %v1974 = vld [vmem:[%s1959 + $0x38] sm:$0xf]
    %v1975 = vld [vmem:[%s1959 + $0x3c] sm:$0xf]
    %v1992 = vunpack.c.l.b16 %v1960
    %v1993 = vunpack.c.l.b16 %v1961
    %v1994 = vunpack.c.l.b16 %v1962
    %v1995 = vunpack.c.l.b16 %v1963
    %v1996 = vunpack.c.l.b16 %v1964
    %v1997 = vunpack.c.l.b16 %v1965
    %v1998 = vunpack.c.l.b16 %v1966
    %v1999 = vunpack.c.l.b16 %v1967
    %v2000 = vunpack.c.l.b16 %v1968
    %v2001 = vunpack.c.l.b16 %v1969
    %v2002 = vunpack.c.l.b16 %v1970
    %v2003 = vunpack.c.l.b16 %v1971
    %v2004 = vunpack.c.l.b16 %v1972
    %v2005 = vunpack.c.l.b16 %v1973
    %v2006 = vunpack.c.l.b16 %v1974
    %v2007 = vunpack.c.l.b16 %v1975
    %v2008 = vpack.c.b16 %v1993, %v1992
    %v2009 = vpack.c.b16 %v1995, %v1994
    %v2010 = vpack.c.b16 %v1997, %v1996
    %v2011 = vpack.c.b16 %v1999, %v1998
    %v2012 = vpack.c.b16 %v2001, %v2000
    %v2013 = vpack.c.b16 %v2003, %v2002
    %v2014 = vpack.c.b16 %v2005, %v2004
    %v2015 = vpack.c.b16 %v2007, %v2006
    %2024 = vmatprep.subr.bf16.mxu0 0
    %2025 = vmatpush1.bf16.msra.mxu0 %v2015
    %2026 = vmatprep.subr.bf16.mxu0 0
    %2027 = vmatpush1.bf16.msra.mxu0 %v2014
    %2028 = vmatprep.subr.bf16.mxu0 0
    %2029 = vmatpush1.bf16.msra.mxu0 %v2013
    %2030 = vmatprep.subr.bf16.mxu0 0
    %2031 = vmatpush1.bf16.msra.mxu0 %v2012
    %2032 = vmatprep.subr.bf16.mxu0 0
    %2033 = vmatpush1.bf16.msra.mxu0 %v2011
    %2034 = vmatprep.subr.bf16.mxu0 0
    %2035 = vmatpush1.bf16.msra.mxu0 %v2010
    %2036 = vmatprep.subr.bf16.mxu0 0
    %2037 = vmatpush1.bf16.msra.mxu0 %v2009
    %2038 = vmatprep.subr.bf16.mxu0 0
    %2039 = vmatpush1.bf16.msra.mxu0 %v2008
    %2040 = vmatprep.subr.bf16.mxu0 0
    %2041 = vmatpush2.bf16.msra.mxu0 0
    %2042 = vmatprep.subr.bf16.mxu0 0
    %2043 = vmatpush2.bf16.msra.mxu0 0
    %2044 = vmatprep.subr.bf16.mxu0 0
    %2045 = vmatpush2.bf16.msra.mxu0 0
    %2046 = vmatprep.subr.bf16.mxu0 0
    %2047 = vmatpush2.bf16.msra.mxu0 0
    %2048 = vmatprep.subr.bf16.mxu0 0
    %2049 = vmatpush2.bf16.msra.mxu0 0
    %2050 = vmatprep.subr.bf16.mxu0 0
    %2051 = vmatpush2.bf16.msra.mxu0 0
    %2052 = vmatprep.subr.bf16.mxu0 0
    %2053 = vmatpush2.bf16.msra.mxu0 0
    %2054 = vmatprep.subr.bf16.mxu0 0
    %2055 = vmatpush2.bf16.msra.mxu0 0
    %2056 = vmatprep.mubr.bf16.mxu0 0
    %2057 = vmatmul.mubr.bf16.gmra.mxu0 %v1927
    %v2058 = vpop.f32.mrf.mxu0
    %v2059 = vadd.f32 0.0, %v2058
    %v2060 = vpop.f32.mrf.mxu0
    %v2061 = vpop.f32.mrf.mxu0
    %v2062 = vadd.f32 0.0, %v2061
    %v2063 = vpop.f32.mrf.mxu0
    %2064 = vmatprep.mubr.bf16.mxu0 0
    %2065 = vmatmul.mubr.bf16.gmra.mxu0 %v1928
    %v2066 = vpop.f32.mrf.mxu0
    %v2067 = vadd.f32 0.0, %v2066
    %v2068 = vpop.f32.mrf.mxu0
    %v2069 = vpop.f32.mrf.mxu0
    %v2070 = vadd.f32 0.0, %v2069
    %v2071 = vpop.f32.mrf.mxu0
    %2072 = vmatprep.mubr.bf16.mxu0 0
    %2073 = vmatmul.mubr.bf16.gmra.mxu0 %v1929
    %v2074 = vpop.f32.mrf.mxu0
    %v2075 = vadd.f32 0.0, %v2074
    %v2076 = vpop.f32.mrf.mxu0
    %v2077 = vpop.f32.mrf.mxu0
    %v2078 = vadd.f32 0.0, %v2077
    %v2079 = vpop.f32.mrf.mxu0
    %2080 = vmatprep.mubr.bf16.mxu0 0
    %2081 = vmatmul.mubr.bf16.gmra.mxu0 %v1930
    %v2082 = vpop.f32.mrf.mxu0
    %v2083 = vadd.f32 0.0, %v2082
    %v2084 = vpop.f32.mrf.mxu0
    %v2085 = vpop.f32.mrf.mxu0
    %v2086 = vadd.f32 0.0, %v2085
    %v2087 = vpop.f32.mrf.mxu0
    %2088 = vmatprep.mubr.bf16.mxu0 0
    %2089 = vmatmul.mubr.bf16.gmra.mxu0 %v1931
    %v2090 = vpop.f32.mrf.mxu0
    %v2091 = vadd.f32 0.0, %v2090
    %v2092 = vpop.f32.mrf.mxu0
    %v2093 = vpop.f32.mrf.mxu0
    %v2094 = vadd.f32 0.0, %v2093
    %v2095 = vpop.f32.mrf.mxu0
    %2096 = vmatprep.mubr.bf16.mxu0 0
    %2097 = vmatmul.mubr.bf16.gmra.mxu0 %v1932
    %v2098 = vpop.f32.mrf.mxu0
    %v2099 = vadd.f32 0.0, %v2098
    %v2100 = vpop.f32.mrf.mxu0
    %v2101 = vpop.f32.mrf.mxu0
    %v2102 = vadd.f32 0.0, %v2101
    %v2103 = vpop.f32.mrf.mxu0
    %2104 = vmatprep.mubr.bf16.mxu0 0
    %2105 = vmatmul.mubr.bf16.gmra.mxu0 %v1933
    %v2106 = vpop.f32.mrf.mxu0
    %v2107 = vadd.f32 0.0, %v2106
    %v2108 = vpop.f32.mrf.mxu0
    %v2109 = vpop.f32.mrf.mxu0
    %v2110 = vadd.f32 0.0, %v2109
    %v2111 = vpop.f32.mrf.mxu0
    %2112 = vmatprep.mubr.bf16.mxu0 0
    %2113 = vmatmul.mubr.bf16.gmra.mxu0 %v1934
    %v2114 = vpop.f32.mrf.mxu0
    %v2115 = vadd.f32 0.0, %v2114
    %v2116 = vpop.f32.mrf.mxu0
    %v2117 = vpop.f32.mrf.mxu0
    %v2118 = vadd.f32 0.0, %v2117
    %v2119 = vpop.f32.mrf.mxu0
    %2120 = vmatprep.mubr.bf16.mxu0 0
    %2121 = vmatmul.mubr.bf16.gmra.mxu0 %v1935
    %v2122 = vpop.f32.mrf.mxu0
    %v2123 = vadd.f32 0.0, %v2122
    %v2124 = vpop.f32.mrf.mxu0
    %v2125 = vpop.f32.mrf.mxu0
    %v2126 = vadd.f32 0.0, %v2125
    %v2127 = vpop.f32.mrf.mxu0
    %2128 = vmatprep.mubr.bf16.mxu0 0
    %2129 = vmatmul.mubr.bf16.gmra.mxu0 %v1936
    %v2130 = vpop.f32.mrf.mxu0
    %v2131 = vadd.f32 0.0, %v2130
    %v2132 = vpop.f32.mrf.mxu0
    %v2133 = vpop.f32.mrf.mxu0
    %v2134 = vadd.f32 0.0, %v2133
    %v2135 = vpop.f32.mrf.mxu0
    %2136 = vmatprep.mubr.bf16.mxu0 0
    %2137 = vmatmul.mubr.bf16.gmra.mxu0 %v1937
    %v2138 = vpop.f32.mrf.mxu0
    %v2139 = vadd.f32 0.0, %v2138
    %v2140 = vpop.f32.mrf.mxu0
    %v2141 = vpop.f32.mrf.mxu0
    %v2142 = vadd.f32 0.0, %v2141
    %v2143 = vpop.f32.mrf.mxu0
    %2144 = vmatprep.mubr.bf16.mxu0 0
    %2145 = vmatmul.mubr.bf16.gmra.mxu0 %v1938
    %v2146 = vpop.f32.mrf.mxu0
    %v2147 = vadd.f32 0.0, %v2146
    %v2148 = vpop.f32.mrf.mxu0
    %v2149 = vpop.f32.mrf.mxu0
    %v2150 = vadd.f32 0.0, %v2149
    %v2151 = vpop.f32.mrf.mxu0
    %2152 = vmatprep.mubr.bf16.mxu0 0
    %2153 = vmatmul.mubr.bf16.gmra.mxu0 %v1939
    %v2154 = vpop.f32.mrf.mxu0
    %v2155 = vadd.f32 0.0, %v2154
    %v2156 = vpop.f32.mrf.mxu0
    %v2157 = vpop.f32.mrf.mxu0
    %v2158 = vadd.f32 0.0, %v2157
    %v2159 = vpop.f32.mrf.mxu0
    %2160 = vmatprep.mubr.bf16.mxu0 0
    %2161 = vmatmul.mubr.bf16.gmra.mxu0 %v1940
    %v2162 = vpop.f32.mrf.mxu0
    %v2163 = vadd.f32 0.0, %v2162
    %v2164 = vpop.f32.mrf.mxu0
    %v2165 = vpop.f32.mrf.mxu0
    %v2166 = vadd.f32 0.0, %v2165
    %v2167 = vpop.f32.mrf.mxu0
    %2168 = vmatprep.mubr.bf16.mxu0 0
    %2169 = vmatmul.mubr.bf16.gmra.mxu0 %v1941
    %v2170 = vpop.f32.mrf.mxu0
    %v2171 = vadd.f32 0.0, %v2170
    %v2172 = vpop.f32.mrf.mxu0
    %v2173 = vpop.f32.mrf.mxu0
    %v2174 = vadd.f32 0.0, %v2173
    %v2175 = vpop.f32.mrf.mxu0
    %2176 = vmatprep.mubr.bf16.mxu0 0
    %2177 = vmatmul.mubr.bf16.gmra.mxu0 %v1942
    %v2178 = vpop.f32.mrf.mxu0
    %v2179 = vadd.f32 0.0, %v2178
    %v2180 = vpop.f32.mrf.mxu0
    %v2181 = vpop.f32.mrf.mxu0
    %v2182 = vadd.f32 0.0, %v2181
    %v2183 = vpop.f32.mrf.mxu0
    %2184 = vmatprep.mubr.bf16.mxu0 0
    %2185 = vmatmul.mubr.bf16.gmra.mxu0 %v1943
    %v2186 = vpop.f32.mrf.mxu0
    %v2187 = vadd.f32 0.0, %v2186
    %v2188 = vpop.f32.mrf.mxu0
    %v2189 = vpop.f32.mrf.mxu0
    %v2190 = vadd.f32 0.0, %v2189
    %v2191 = vpop.f32.mrf.mxu0
    %2192 = vmatprep.mubr.bf16.mxu0 0
    %2193 = vmatmul.mubr.bf16.gmra.mxu0 %v1944
    %v2194 = vpop.f32.mrf.mxu0
    %v2195 = vadd.f32 0.0, %v2194
    %v2196 = vpop.f32.mrf.mxu0
    %v2197 = vpop.f32.mrf.mxu0
    %v2198 = vadd.f32 0.0, %v2197
    %v2199 = vpop.f32.mrf.mxu0
    %2200 = vmatprep.mubr.bf16.mxu0 0
    %2201 = vmatmul.mubr.bf16.gmra.mxu0 %v1945
    %v2202 = vpop.f32.mrf.mxu0
    %v2203 = vadd.f32 0.0, %v2202
    %v2204 = vpop.f32.mrf.mxu0
    %v2205 = vpop.f32.mrf.mxu0
    %v2206 = vadd.f32 0.0, %v2205
    %v2207 = vpop.f32.mrf.mxu0
    %2208 = vmatprep.mubr.bf16.mxu0 0
    %2209 = vmatmul.mubr.bf16.gmra.mxu0 %v1946
    %v2210 = vpop.f32.mrf.mxu0
    %v2211 = vadd.f32 0.0, %v2210
    %v2212 = vpop.f32.mrf.mxu0
    %v2213 = vpop.f32.mrf.mxu0
    %v2214 = vadd.f32 0.0, %v2213
    %v2215 = vpop.f32.mrf.mxu0
    %2216 = vmatprep.mubr.bf16.mxu0 0
    %2217 = vmatmul.mubr.bf16.gmra.mxu0 %v1947
    %v2218 = vpop.f32.mrf.mxu0
    %v2219 = vadd.f32 0.0, %v2218
    %v2220 = vpop.f32.mrf.mxu0
    %v2221 = vpop.f32.mrf.mxu0
    %v2222 = vadd.f32 0.0, %v2221
    %v2223 = vpop.f32.mrf.mxu0
    %2224 = vmatprep.mubr.bf16.mxu0 0
    %2225 = vmatmul.mubr.bf16.gmra.mxu0 %v1948
    %v2226 = vpop.f32.mrf.mxu0
    %v2227 = vadd.f32 0.0, %v2226
    %v2228 = vpop.f32.mrf.mxu0
    %v2229 = vpop.f32.mrf.mxu0
    %v2230 = vadd.f32 0.0, %v2229
    %v2231 = vpop.f32.mrf.mxu0
    %2232 = vmatprep.mubr.bf16.mxu0 0
    %2233 = vmatmul.mubr.bf16.gmra.mxu0 %v1949
    %v2234 = vpop.f32.mrf.mxu0
    %v2235 = vadd.f32 0.0, %v2234
    %v2236 = vpop.f32.mrf.mxu0
    %v2237 = vpop.f32.mrf.mxu0
    %v2238 = vadd.f32 0.0, %v2237
    %v2239 = vpop.f32.mrf.mxu0
    %2240 = vmatprep.mubr.bf16.mxu0 0
    %2241 = vmatmul.mubr.bf16.gmra.mxu0 %v1950
    %v2242 = vpop.f32.mrf.mxu0
    %v2243 = vadd.f32 0.0, %v2242
    %v2244 = vpop.f32.mrf.mxu0
    %v2245 = vpop.f32.mrf.mxu0
    %v2246 = vadd.f32 0.0, %v2245
    %v2247 = vpop.f32.mrf.mxu0
    %2248 = vmatprep.mubr.bf16.mxu0 0
    %2249 = vmatmul.mubr.bf16.gmra.mxu0 %v1951
    %v2250 = vpop.f32.mrf.mxu0
    %v2251 = vadd.f32 0.0, %v2250
    %v2252 = vpop.f32.mrf.mxu0
    %v2253 = vpop.f32.mrf.mxu0
    %v2254 = vadd.f32 0.0, %v2253
    %v2255 = vpop.f32.mrf.mxu0
    %2256 = vmatprep.mubr.bf16.mxu0 0
    %2257 = vmatmul.mubr.bf16.gmra.mxu0 %v1952
    %v2258 = vpop.f32.mrf.mxu0
    %v2259 = vadd.f32 0.0, %v2258
    %v2260 = vpop.f32.mrf.mxu0
    %v2261 = vpop.f32.mrf.mxu0
    %v2262 = vadd.f32 0.0, %v2261
    %v2263 = vpop.f32.mrf.mxu0
    %2264 = vmatprep.mubr.bf16.mxu0 0
    %2265 = vmatmul.mubr.bf16.gmra.mxu0 %v1953
    %v2266 = vpop.f32.mrf.mxu0
    %v2267 = vadd.f32 0.0, %v2266
    %v2268 = vpop.f32.mrf.mxu0
    %v2269 = vpop.f32.mrf.mxu0
    %v2270 = vadd.f32 0.0, %v2269
    %v2271 = vpop.f32.mrf.mxu0
    %2272 = vmatprep.mubr.bf16.mxu0 0
    %2273 = vmatmul.mubr.bf16.gmra.mxu0 %v1954
    %v2274 = vpop.f32.mrf.mxu0
    %v2275 = vadd.f32 0.0, %v2274
    %v2276 = vpop.f32.mrf.mxu0
    %v2277 = vpop.f32.mrf.mxu0
    %v2278 = vadd.f32 0.0, %v2277
    %v2279 = vpop.f32.mrf.mxu0
    %2280 = vmatprep.mubr.bf16.mxu0 0
    %2281 = vmatmul.mubr.bf16.gmra.mxu0 %v1955
    %v2282 = vpop.f32.mrf.mxu0
    %v2283 = vadd.f32 0.0, %v2282
    %v2284 = vpop.f32.mrf.mxu0
    %v2285 = vpop.f32.mrf.mxu0
    %v2286 = vadd.f32 0.0, %v2285
    %v2287 = vpop.f32.mrf.mxu0
    %2288 = vmatprep.mubr.bf16.mxu0 0
    %2289 = vmatmul.mubr.bf16.gmra.mxu0 %v1956
    %v2290 = vpop.f32.mrf.mxu0
    %v2291 = vadd.f32 0.0, %v2290
    %v2292 = vpop.f32.mrf.mxu0
    %v2293 = vpop.f32.mrf.mxu0
    %v2294 = vadd.f32 0.0, %v2293
    %v2295 = vpop.f32.mrf.mxu0
    %2296 = vmatprep.mubr.bf16.mxu0 0
    %2297 = vmatmul.mubr.bf16.gmra.mxu0 %v1957
    %v2298 = vpop.f32.mrf.mxu0
    %v2299 = vadd.f32 0.0, %v2298
    %v2300 = vpop.f32.mrf.mxu0
    %v2301 = vpop.f32.mrf.mxu0
    %v2302 = vadd.f32 0.0, %v2301
    %v2303 = vpop.f32.mrf.mxu0
    %2304 = vmatprep.mubr.bf16.mxu0 0
    %2305 = vmatmul.mubr.bf16.gmra.mxu0 %v1958
    %v2306 = vpop.f32.mrf.mxu0
    %v2307 = vadd.f32 0.0, %v2306
    %v2308 = vpop.f32.mrf.mxu0
    %v2309 = vpop.f32.mrf.mxu0
    %v2310 = vadd.f32 0.0, %v2309
    %v2311 = vpop.f32.mrf.mxu0
    %2312 = vdwg.mxu0
    %v2329 = vunpack.c.l.b16 %v1527
    %v2330 = vunpack.c.l.b16 %v1528
    %v2331 = vunpack.c.l.b16 %v1529
    %v2332 = vunpack.c.l.b16 %v1530
    %v2333 = vunpack.c.l.b16 %v1531
    %v2334 = vunpack.c.l.b16 %v1532
    %v2335 = vunpack.c.l.b16 %v1533
    %v2336 = vunpack.c.l.b16 %v1534
    %v2337 = vunpack.c.l.b16 %v1535
    %v2338 = vunpack.c.l.b16 %v1536
    %v2339 = vunpack.c.l.b16 %v1537
    %v2340 = vunpack.c.l.b16 %v1538
    %v2341 = vunpack.c.l.b16 %v1539
    %v2342 = vunpack.c.l.b16 %v1540
    %v2343 = vunpack.c.l.b16 %v1541
    %v2344 = vunpack.c.l.b16 %v1542
    %v2345 = vpack.c.b16 %v2330, %v2329
    %v2346 = vpack.c.b16 %v2332, %v2331
    %v2347 = vpack.c.b16 %v2334, %v2333
    %v2348 = vpack.c.b16 %v2336, %v2335
    %v2349 = vpack.c.b16 %v2338, %v2337
    %v2350 = vpack.c.b16 %v2340, %v2339
    %v2351 = vpack.c.b16 %v2342, %v2341
    %v2352 = vpack.c.b16 %v2344, %v2343
    %2361 = vmatprep.subr.bf16.mxu0 0
    %2362 = vmatpush1.bf16.msra.mxu0 %v2352
    %2363 = vmatprep.subr.bf16.mxu0 0
    %2364 = vmatpush1.bf16.msra.mxu0 %v2351
    %2365 = vmatprep.subr.bf16.mxu0 0
    %2366 = vmatpush1.bf16.msra.mxu0 %v2350
    %2367 = vmatprep.subr.bf16.mxu0 0
    %2368 = vmatpush1.bf16.msra.mxu0 %v2349
    %2369 = vmatprep.subr.bf16.mxu0 0
    %2370 = vmatpush1.bf16.msra.mxu0 %v2348
    %2371 = vmatprep.subr.bf16.mxu0 0
    %2372 = vmatpush1.bf16.msra.mxu0 %v2347
    %2373 = vmatprep.subr.bf16.mxu0 0
    %2374 = vmatpush1.bf16.msra.mxu0 %v2346
    %2375 = vmatprep.subr.bf16.mxu0 0
    %2376 = vmatpush1.bf16.msra.mxu0 %v2345
    %2377 = vmatprep.subr.bf16.mxu0 0
    %2378 = vmatpush2.bf16.msra.mxu0 0
    %2379 = vmatprep.subr.bf16.mxu0 0
    %2380 = vmatpush2.bf16.msra.mxu0 0
    %2381 = vmatprep.subr.bf16.mxu0 0
    %2382 = vmatpush2.bf16.msra.mxu0 0
    %2383 = vmatprep.subr.bf16.mxu0 0
    %2384 = vmatpush2.bf16.msra.mxu0 0
    %2385 = vmatprep.subr.bf16.mxu0 0
    %2386 = vmatpush2.bf16.msra.mxu0 0
    %2387 = vmatprep.subr.bf16.mxu0 0
    %2388 = vmatpush2.bf16.msra.mxu0 0
    %2389 = vmatprep.subr.bf16.mxu0 0
    %2390 = vmatpush2.bf16.msra.mxu0 0
    %2391 = vmatprep.subr.bf16.mxu0 0
    %2392 = vmatpush2.bf16.msra.mxu0 0
    %2393 = vmatprep.mubr.bf16.mxu0 0
    %2394 = vmatmul.mubr.bf16.gmra.mxu0 %v1495
    %v2395 = vpop.f32.mrf.mxu0
    %v2396 = vadd.f32 %v2059, %v2395
    %v2397 = vpop.f32.mrf.mxu0
    %v2398 = vpop.f32.mrf.mxu0
    %v2399 = vadd.f32 %v2062, %v2398
    %v2400 = vpop.f32.mrf.mxu0
    %2401 = vmatprep.mubr.bf16.mxu0 0
    %2402 = vmatmul.mubr.bf16.gmra.mxu0 %v1496
    %v2403 = vpop.f32.mrf.mxu0
    %v2404 = vadd.f32 %v2067, %v2403
    %v2405 = vpop.f32.mrf.mxu0
    %v2406 = vpop.f32.mrf.mxu0
    %v2407 = vadd.f32 %v2070, %v2406
    %v2408 = vpop.f32.mrf.mxu0
    %2409 = vmatprep.mubr.bf16.mxu0 0
    %2410 = vmatmul.mubr.bf16.gmra.mxu0 %v1497
    %v2411 = vpop.f32.mrf.mxu0
    %v2412 = vadd.f32 %v2075, %v2411
    %v2413 = vpop.f32.mrf.mxu0
    %v2414 = vpop.f32.mrf.mxu0
    %v2415 = vadd.f32 %v2078, %v2414
    %v2416 = vpop.f32.mrf.mxu0
    %2417 = vmatprep.mubr.bf16.mxu0 0
    %2418 = vmatmul.mubr.bf16.gmra.mxu0 %v1498
    %v2419 = vpop.f32.mrf.mxu0
    %v2420 = vadd.f32 %v2083, %v2419
    %v2421 = vpop.f32.mrf.mxu0
    %v2422 = vpop.f32.mrf.mxu0
    %v2423 = vadd.f32 %v2086, %v2422
    %v2424 = vpop.f32.mrf.mxu0
    %2425 = vmatprep.mubr.bf16.mxu0 0
    %2426 = vmatmul.mubr.bf16.gmra.mxu0 %v1499
    %v2427 = vpop.f32.mrf.mxu0
    %v2428 = vadd.f32 %v2091, %v2427
    %v2429 = vpop.f32.mrf.mxu0
    %v2430 = vpop.f32.mrf.mxu0
    %v2431 = vadd.f32 %v2094, %v2430
    %v2432 = vpop.f32.mrf.mxu0
    %2433 = vmatprep.mubr.bf16.mxu0 0
    %2434 = vmatmul.mubr.bf16.gmra.mxu0 %v1500
    %v2435 = vpop.f32.mrf.mxu0
    %v2436 = vadd.f32 %v2099, %v2435
    %v2437 = vpop.f32.mrf.mxu0
    %v2438 = vpop.f32.mrf.mxu0
    %v2439 = vadd.f32 %v2102, %v2438
    %v2440 = vpop.f32.mrf.mxu0
    %2441 = vmatprep.mubr.bf16.mxu0 0
    %2442 = vmatmul.mubr.bf16.gmra.mxu0 %v1501
    %v2443 = vpop.f32.mrf.mxu0
    %v2444 = vadd.f32 %v2107, %v2443
    %v2445 = vpop.f32.mrf.mxu0
    %v2446 = vpop.f32.mrf.mxu0
    %v2447 = vadd.f32 %v2110, %v2446
    %v2448 = vpop.f32.mrf.mxu0
    %2449 = vmatprep.mubr.bf16.mxu0 0
    %2450 = vmatmul.mubr.bf16.gmra.mxu0 %v1502
    %v2451 = vpop.f32.mrf.mxu0
    %v2452 = vadd.f32 %v2115, %v2451
    %v2453 = vpop.f32.mrf.mxu0
    %v2454 = vpop.f32.mrf.mxu0
    %v2455 = vadd.f32 %v2118, %v2454
    %v2456 = vpop.f32.mrf.mxu0
    %2457 = vmatprep.mubr.bf16.mxu0 0
    %2458 = vmatmul.mubr.bf16.gmra.mxu0 %v1503
    %v2459 = vpop.f32.mrf.mxu0
    %v2460 = vadd.f32 %v2123, %v2459
    %v2461 = vpop.f32.mrf.mxu0
    %v2462 = vpop.f32.mrf.mxu0
    %v2463 = vadd.f32 %v2126, %v2462
    %v2464 = vpop.f32.mrf.mxu0
    %2465 = vmatprep.mubr.bf16.mxu0 0
    %2466 = vmatmul.mubr.bf16.gmra.mxu0 %v1504
    %v2467 = vpop.f32.mrf.mxu0
    %v2468 = vadd.f32 %v2131, %v2467
    %v2469 = vpop.f32.mrf.mxu0
    %v2470 = vpop.f32.mrf.mxu0
    %v2471 = vadd.f32 %v2134, %v2470
    %v2472 = vpop.f32.mrf.mxu0
    %2473 = vmatprep.mubr.bf16.mxu0 0
    %2474 = vmatmul.mubr.bf16.gmra.mxu0 %v1505
    %v2475 = vpop.f32.mrf.mxu0
    %v2476 = vadd.f32 %v2139, %v2475
    %v2477 = vpop.f32.mrf.mxu0
    %v2478 = vpop.f32.mrf.mxu0
    %v2479 = vadd.f32 %v2142, %v2478
    %v2480 = vpop.f32.mrf.mxu0
    %2481 = vmatprep.mubr.bf16.mxu0 0
    %2482 = vmatmul.mubr.bf16.gmra.mxu0 %v1506
    %v2483 = vpop.f32.mrf.mxu0
    %v2484 = vadd.f32 %v2147, %v2483
    %v2485 = vpop.f32.mrf.mxu0
    %v2486 = vpop.f32.mrf.mxu0
    %v2487 = vadd.f32 %v2150, %v2486
    %v2488 = vpop.f32.mrf.mxu0
    %2489 = vmatprep.mubr.bf16.mxu0 0
    %2490 = vmatmul.mubr.bf16.gmra.mxu0 %v1507
    %v2491 = vpop.f32.mrf.mxu0
    %v2492 = vadd.f32 %v2155, %v2491
    %v2493 = vpop.f32.mrf.mxu0
    %v2494 = vpop.f32.mrf.mxu0
    %v2495 = vadd.f32 %v2158, %v2494
    %v2496 = vpop.f32.mrf.mxu0
    %2497 = vmatprep.mubr.bf16.mxu0 0
    %2498 = vmatmul.mubr.bf16.gmra.mxu0 %v1508
    %v2499 = vpop.f32.mrf.mxu0
    %v2500 = vadd.f32 %v2163, %v2499
    %v2501 = vpop.f32.mrf.mxu0
    %v2502 = vpop.f32.mrf.mxu0
    %v2503 = vadd.f32 %v2166, %v2502
    %v2504 = vpop.f32.mrf.mxu0
    %2505 = vmatprep.mubr.bf16.mxu0 0
    %2506 = vmatmul.mubr.bf16.gmra.mxu0 %v1509
    %v2507 = vpop.f32.mrf.mxu0
    %v2508 = vadd.f32 %v2171, %v2507
    %v2509 = vpop.f32.mrf.mxu0
    %v2510 = vpop.f32.mrf.mxu0
    %v2511 = vadd.f32 %v2174, %v2510
    %v2512 = vpop.f32.mrf.mxu0
    %2513 = vmatprep.mubr.bf16.mxu0 0
    %2514 = vmatmul.mubr.bf16.gmra.mxu0 %v1510
    %v2515 = vpop.f32.mrf.mxu0
    %v2516 = vadd.f32 %v2179, %v2515
    %v2517 = vpop.f32.mrf.mxu0
    %v2518 = vpop.f32.mrf.mxu0
    %v2519 = vadd.f32 %v2182, %v2518
    %v2520 = vpop.f32.mrf.mxu0
    %2521 = vmatprep.mubr.bf16.mxu0 0
    %2522 = vmatmul.mubr.bf16.gmra.mxu0 %v1511
    %v2523 = vpop.f32.mrf.mxu0
    %v2524 = vadd.f32 %v2187, %v2523
    %v2525 = vpop.f32.mrf.mxu0
    %v2526 = vpop.f32.mrf.mxu0
    %v2527 = vadd.f32 %v2190, %v2526
    %v2528 = vpop.f32.mrf.mxu0
    %2529 = vmatprep.mubr.bf16.mxu0 0
    %2530 = vmatmul.mubr.bf16.gmra.mxu0 %v1512
    %v2531 = vpop.f32.mrf.mxu0
    %v2532 = vadd.f32 %v2195, %v2531
    %v2533 = vpop.f32.mrf.mxu0
    %v2534 = vpop.f32.mrf.mxu0
    %v2535 = vadd.f32 %v2198, %v2534
    %v2536 = vpop.f32.mrf.mxu0
    %2537 = vmatprep.mubr.bf16.mxu0 0
    %2538 = vmatmul.mubr.bf16.gmra.mxu0 %v1513
    %v2539 = vpop.f32.mrf.mxu0
    %v2540 = vadd.f32 %v2203, %v2539
    %v2541 = vpop.f32.mrf.mxu0
    %v2542 = vpop.f32.mrf.mxu0
    %v2543 = vadd.f32 %v2206, %v2542
    %v2544 = vpop.f32.mrf.mxu0
    %2545 = vmatprep.mubr.bf16.mxu0 0
    %2546 = vmatmul.mubr.bf16.gmra.mxu0 %v1514
    %v2547 = vpop.f32.mrf.mxu0
    %v2548 = vadd.f32 %v2211, %v2547
    %v2549 = vpop.f32.mrf.mxu0
    %v2550 = vpop.f32.mrf.mxu0
    %v2551 = vadd.f32 %v2214, %v2550
    %v2552 = vpop.f32.mrf.mxu0
    %2553 = vmatprep.mubr.bf16.mxu0 0
    %2554 = vmatmul.mubr.bf16.gmra.mxu0 %v1515
    %v2555 = vpop.f32.mrf.mxu0
    %v2556 = vadd.f32 %v2219, %v2555
    %v2557 = vpop.f32.mrf.mxu0
    %v2558 = vpop.f32.mrf.mxu0
    %v2559 = vadd.f32 %v2222, %v2558
    %v2560 = vpop.f32.mrf.mxu0
    %2561 = vmatprep.mubr.bf16.mxu0 0
    %2562 = vmatmul.mubr.bf16.gmra.mxu0 %v1516
    %v2563 = vpop.f32.mrf.mxu0
    %v2564 = vadd.f32 %v2227, %v2563
    %v2565 = vpop.f32.mrf.mxu0
    %v2566 = vpop.f32.mrf.mxu0
    %v2567 = vadd.f32 %v2230, %v2566
    %v2568 = vpop.f32.mrf.mxu0
    %2569 = vmatprep.mubr.bf16.mxu0 0
    %2570 = vmatmul.mubr.bf16.gmra.mxu0 %v1517
    %v2571 = vpop.f32.mrf.mxu0
    %v2572 = vadd.f32 %v2235, %v2571
    %v2573 = vpop.f32.mrf.mxu0
    %v2574 = vpop.f32.mrf.mxu0
    %v2575 = vadd.f32 %v2238, %v2574
    %v2576 = vpop.f32.mrf.mxu0
    %2577 = vmatprep.mubr.bf16.mxu0 0
    %2578 = vmatmul.mubr.bf16.gmra.mxu0 %v1518
    %v2579 = vpop.f32.mrf.mxu0
    %v2580 = vadd.f32 %v2243, %v2579
    %v2581 = vpop.f32.mrf.mxu0
    %v2582 = vpop.f32.mrf.mxu0
    %v2583 = vadd.f32 %v2246, %v2582
    %v2584 = vpop.f32.mrf.mxu0
    %2585 = vmatprep.mubr.bf16.mxu0 0
    %2586 = vmatmul.mubr.bf16.gmra.mxu0 %v1519
    %v2587 = vpop.f32.mrf.mxu0
    %v2588 = vadd.f32 %v2251, %v2587
    %v2589 = vpop.f32.mrf.mxu0
    %v2590 = vpop.f32.mrf.mxu0
    %v2591 = vadd.f32 %v2254, %v2590
    %v2592 = vpop.f32.mrf.mxu0
    %2593 = vmatprep.mubr.bf16.mxu0 0
    %2594 = vmatmul.mubr.bf16.gmra.mxu0 %v1520
    %v2595 = vpop.f32.mrf.mxu0
    %v2596 = vadd.f32 %v2259, %v2595
    %v2597 = vpop.f32.mrf.mxu0
    %v2598 = vpop.f32.mrf.mxu0
    %v2599 = vadd.f32 %v2262, %v2598
    %v2600 = vpop.f32.mrf.mxu0
    %2601 = vmatprep.mubr.bf16.mxu0 0
    %2602 = vmatmul.mubr.bf16.gmra.mxu0 %v1521
    %v2603 = vpop.f32.mrf.mxu0
    %v2604 = vadd.f32 %v2267, %v2603
    %v2605 = vpop.f32.mrf.mxu0
    %v2606 = vpop.f32.mrf.mxu0
    %v2607 = vadd.f32 %v2270, %v2606
    %v2608 = vpop.f32.mrf.mxu0
    %2609 = vmatprep.mubr.bf16.mxu0 0
    %2610 = vmatmul.mubr.bf16.gmra.mxu0 %v1522
    %v2611 = vpop.f32.mrf.mxu0
    %v2612 = vadd.f32 %v2275, %v2611
    %v2613 = vpop.f32.mrf.mxu0
    %v2614 = vpop.f32.mrf.mxu0
    %v2615 = vadd.f32 %v2278, %v2614
    %v2616 = vpop.f32.mrf.mxu0
    %2617 = vmatprep.mubr.bf16.mxu0 0
    %2618 = vmatmul.mubr.bf16.gmra.mxu0 %v1523
    %v2619 = vpop.f32.mrf.mxu0
    %v2620 = vadd.f32 %v2283, %v2619
    %v2621 = vpop.f32.mrf.mxu0
    %v2622 = vpop.f32.mrf.mxu0
    %v2623 = vadd.f32 %v2286, %v2622
    %v2624 = vpop.f32.mrf.mxu0
    %2625 = vmatprep.mubr.bf16.mxu0 0
    %2626 = vmatmul.mubr.bf16.gmra.mxu0 %v1524
    %v2627 = vpop.f32.mrf.mxu0
    %v2628 = vadd.f32 %v2291, %v2627
    %v2629 = vpop.f32.mrf.mxu0
    %v2630 = vpop.f32.mrf.mxu0
    %v2631 = vadd.f32 %v2294, %v2630
    %v2632 = vpop.f32.mrf.mxu0
    %2633 = vmatprep.mubr.bf16.mxu0 0
    %2634 = vmatmul.mubr.bf16.gmra.mxu0 %v1525
    %v2635 = vpop.f32.mrf.mxu0
    %v2636 = vadd.f32 %v2299, %v2635
    %v2637 = vpop.f32.mrf.mxu0
    %v2638 = vpop.f32.mrf.mxu0
    %v2639 = vadd.f32 %v2302, %v2638
    %v2640 = vpop.f32.mrf.mxu0
    %2641 = vmatprep.mubr.bf16.mxu0 0
    %2642 = vmatmul.mubr.bf16.gmra.mxu0 %v1526
    %v2643 = vpop.f32.mrf.mxu0
    %v2644 = vadd.f32 %v2307, %v2643
    %v2645 = vpop.f32.mrf.mxu0
    %v2646 = vpop.f32.mrf.mxu0
    %v2647 = vadd.f32 %v2310, %v2646
    %v2648 = vpop.f32.mrf.mxu0
    %2649 = vdwg.mxu0
    %v2650 = vld [vmem:[#allocation2 + $0x9] sm:$0xff]
    %v2651 = vld [vmem:[#allocation2 + $0x11] sm:$0xff]
    %v2652 = vld [vmem:[#allocation2 + $0x19] sm:$0xff]
    %v2653 = vld [vmem:[#allocation2 + $0x21] sm:$0xff]
    %v2654 = vld [vmem:[#allocation2 + $0x29] sm:$0xff]
    %v2655 = vld [vmem:[#allocation2 + $0x31] sm:$0xff]
    %v2656 = vld [vmem:[#allocation2 + $0x39] sm:$0xff]
    %v2657 = vld [vmem:[#allocation2 + $0x41] sm:$0xff]
    %v2658 = vld [vmem:[#allocation2 + $0x49] sm:$0xff]
    %v2659 = vld [vmem:[#allocation2 + $0x51] sm:$0xff]
    %v2660 = vld [vmem:[#allocation2 + $0x59] sm:$0xff]
    %v2661 = vld [vmem:[#allocation2 + $0x61] sm:$0xff]
    %v2662 = vld [vmem:[#allocation2 + $0x69] sm:$0xff]
    %v2663 = vld [vmem:[#allocation2 + $0x71] sm:$0xff]
    %v2664 = vld [vmem:[#allocation2 + $0x79] sm:$0xff]
    %v2665 = vld [vmem:[#allocation2 + $0x81] sm:$0xff]
    %v2666 = vld [vmem:[#allocation2 + $0x89] sm:$0xff]
    %v2667 = vld [vmem:[#allocation2 + $0x91] sm:$0xff]
    %v2668 = vld [vmem:[#allocation2 + $0x99] sm:$0xff]
    %v2669 = vld [vmem:[#allocation2 + $0xa1] sm:$0xff]
    %v2670 = vld [vmem:[#allocation2 + $0xa9] sm:$0xff]
    %v2671 = vld [vmem:[#allocation2 + $0xb1] sm:$0xff]
    %v2672 = vld [vmem:[#allocation2 + $0xb9] sm:$0xff]
    %v2673 = vld [vmem:[#allocation2 + $0xc1] sm:$0xff]
    %v2674 = vld [vmem:[#allocation2 + $0xc9] sm:$0xff]
    %v2675 = vld [vmem:[#allocation2 + $0xd1] sm:$0xff]
    %v2676 = vld [vmem:[#allocation2 + $0xd9] sm:$0xff]
    %v2677 = vld [vmem:[#allocation2 + $0xe1] sm:$0xff]
    %v2678 = vld [vmem:[#allocation2 + $0xe9] sm:$0xff]
    %v2679 = vld [vmem:[#allocation2 + $0xf1] sm:$0xff]
    %v2680 = vld [vmem:[#allocation2 + $0xf9] sm:$0xff]
    %v2681 = vld [vmem:[#allocation2 + $0x101] sm:$0xff]
    %v2682 = vld [vmem:[#allocation2 + $0x109] sm:$0xff]
    %v2683 = vld [vmem:[#allocation2 + $0x111] sm:$0xff]
    %v2684 = vld [vmem:[#allocation2 + $0x119] sm:$0xff]
    %v2685 = vld [vmem:[#allocation2 + $0x121] sm:$0xff]
    %v2686 = vld [vmem:[#allocation2 + $0x129] sm:$0xff]
    %v2687 = vld [vmem:[#allocation2 + $0x131] sm:$0xff]
    %v2688 = vld [vmem:[#allocation2 + $0x139] sm:$0xff]
    %v2689 = vld [vmem:[#allocation2 + $0x141] sm:$0xff]
    %v2690 = vld [vmem:[#allocation2 + $0x149] sm:$0xff]
    %v2691 = vld [vmem:[#allocation2 + $0x151] sm:$0xff]
    %v2692 = vld [vmem:[#allocation2 + $0x159] sm:$0xff]
    %v2693 = vld [vmem:[#allocation2 + $0x161] sm:$0xff]
    %v2694 = vld [vmem:[#allocation2 + $0x169] sm:$0xff]
    %v2695 = vld [vmem:[#allocation2 + $0x171] sm:$0xff]
    %v2696 = vld [vmem:[#allocation2 + $0x179] sm:$0xff]
    %v2697 = vld [vmem:[#allocation2 + $0x181] sm:$0xff]
    %v2698 = vld [vmem:[#allocation2 + $0x189] sm:$0xff]
    %v2699 = vld [vmem:[#allocation2 + $0x191] sm:$0xff]
    %v2700 = vld [vmem:[#allocation2 + $0x199] sm:$0xff]
    %v2701 = vld [vmem:[#allocation2 + $0x1a1] sm:$0xff]
    %v2702 = vld [vmem:[#allocation2 + $0x1a9] sm:$0xff]
    %v2703 = vld [vmem:[#allocation2 + $0x1b1] sm:$0xff]
    %v2704 = vld [vmem:[#allocation2 + $0x1b9] sm:$0xff]
    %v2705 = vld [vmem:[#allocation2 + $0x1c1] sm:$0xff]
    %v2706 = vld [vmem:[#allocation2 + $0x1c9] sm:$0xff]
    %v2707 = vld [vmem:[#allocation2 + $0x1d1] sm:$0xff]
    %v2708 = vld [vmem:[#allocation2 + $0x1d9] sm:$0xff]
    %v2709 = vld [vmem:[#allocation2 + $0x1e1] sm:$0xff]
    %v2710 = vld [vmem:[#allocation2 + $0x1e9] sm:$0xff]
    %v2711 = vld [vmem:[#allocation2 + $0x1f1] sm:$0xff]
    %v2712 = vld [vmem:[#allocation2 + $0x1f9] sm:$0xff]
    %v2713 = vld [vmem:[#allocation2 + $0x201] sm:$0xff]
    %2714 = vset.pattern.permute.xlu0 16
    %2715 = vperm.xlu0 %2714, %v1047
    %v2716 = vpop.permute.xlu0 %2715
    %2718 = vset.pattern.permute.xlu0 16
    %2719 = vperm.xlu0 %2718, %v1048
    %v2720 = vpop.permute.xlu0 %2719
    %2722 = vset.pattern.permute.xlu0 16
    %2723 = vperm.xlu0 %2722, %v1049
    %v2724 = vpop.permute.xlu0 %2723
    %2726 = vset.pattern.permute.xlu0 16
    %2727 = vperm.xlu0 %2726, %v1050
    %v2728 = vpop.permute.xlu0 %2727
    %2730 = vset.pattern.permute.xlu0 16
    %2731 = vperm.xlu0 %2730, %v1051
    %v2732 = vpop.permute.xlu0 %2731
    %2734 = vset.pattern.permute.xlu0 16
    %2735 = vperm.xlu0 %2734, %v1052
    %v2736 = vpop.permute.xlu0 %2735
    %2738 = vset.pattern.permute.xlu0 16
    %2739 = vperm.xlu0 %2738, %v1053
    %v2740 = vpop.permute.xlu0 %2739
    %2742 = vset.pattern.permute.xlu0 16
    %2743 = vperm.xlu0 %2742, %v1054
    %v2744 = vpop.permute.xlu0 %2743
    %2746 = vset.pattern.permute.xlu0 16
    %2747 = vperm.xlu0 %2746, %v1055
    %v2748 = vpop.permute.xlu0 %2747
    %2750 = vset.pattern.permute.xlu0 16
    %2751 = vperm.xlu0 %2750, %v1056
    %v2752 = vpop.permute.xlu0 %2751
    %2754 = vset.pattern.permute.xlu0 16
    %2755 = vperm.xlu0 %2754, %v1057
    %v2756 = vpop.permute.xlu0 %2755
    %2758 = vset.pattern.permute.xlu0 16
    %2759 = vperm.xlu0 %2758, %v1058
    %v2760 = vpop.permute.xlu0 %2759
    %2762 = vset.pattern.permute.xlu0 16
    %2763 = vperm.xlu0 %2762, %v1059
    %v2764 = vpop.permute.xlu0 %2763
    %2766 = vset.pattern.permute.xlu0 16
    %2767 = vperm.xlu0 %2766, %v1060
    %v2768 = vpop.permute.xlu0 %2767
    %2770 = vset.pattern.permute.xlu0 16
    %2771 = vperm.xlu0 %2770, %v1061
    %v2772 = vpop.permute.xlu0 %2771
    %2774 = vset.pattern.permute.xlu0 16
    %2775 = vperm.xlu0 %2774, %v1062
    %v2776 = vpop.permute.xlu0 %2775
    %2778 = vset.pattern.permute.xlu0 16
    %2779 = vperm.xlu0 %2778, %v1063
    %v2780 = vpop.permute.xlu0 %2779
    %2782 = vset.pattern.permute.xlu0 16
    %2783 = vperm.xlu0 %2782, %v1064
    %v2784 = vpop.permute.xlu0 %2783
    %2786 = vset.pattern.permute.xlu0 16
    %2787 = vperm.xlu0 %2786, %v1065
    %v2788 = vpop.permute.xlu0 %2787
    %2790 = vset.pattern.permute.xlu0 16
    %2791 = vperm.xlu0 %2790, %v1066
    %v2792 = vpop.permute.xlu0 %2791
    %2794 = vset.pattern.permute.xlu0 16
    %2795 = vperm.xlu0 %2794, %v1067
    %v2796 = vpop.permute.xlu0 %2795
    %2798 = vset.pattern.permute.xlu0 16
    %2799 = vperm.xlu0 %2798, %v1068
    %v2800 = vpop.permute.xlu0 %2799
    %2802 = vset.pattern.permute.xlu0 16
    %2803 = vperm.xlu0 %2802, %v1069
    %v2804 = vpop.permute.xlu0 %2803
    %2806 = vset.pattern.permute.xlu0 16
    %2807 = vperm.xlu0 %2806, %v1070
    %v2808 = vpop.permute.xlu0 %2807
    %2810 = vset.pattern.permute.xlu0 16
    %2811 = vperm.xlu0 %2810, %v1071
    %v2812 = vpop.permute.xlu0 %2811
    %2814 = vset.pattern.permute.xlu0 16
    %2815 = vperm.xlu0 %2814, %v1072
    %v2816 = vpop.permute.xlu0 %2815
    %2818 = vset.pattern.permute.xlu0 16
    %2819 = vperm.xlu0 %2818, %v1073
    %v2820 = vpop.permute.xlu0 %2819
    %2822 = vset.pattern.permute.xlu0 16
    %2823 = vperm.xlu0 %2822, %v1074
    %v2824 = vpop.permute.xlu0 %2823
    %2826 = vset.pattern.permute.xlu0 16
    %2827 = vperm.xlu0 %2826, %v1075
    %v2828 = vpop.permute.xlu0 %2827
    %2830 = vset.pattern.permute.xlu0 16
    %2831 = vperm.xlu0 %2830, %v1076
    %v2832 = vpop.permute.xlu0 %2831
    %2834 = vset.pattern.permute.xlu0 16
    %2835 = vperm.xlu0 %2834, %v1077
    %v2836 = vpop.permute.xlu0 %2835
    %2838 = vset.pattern.permute.xlu0 16
    %2839 = vperm.xlu0 %2838, %v1078
    %v2840 = vpop.permute.xlu0 %2839
    %2842 = vset.pattern.permute.xlu0 16
    %2843 = vperm.xlu0 %2842, %v1079
    %v2844 = vpop.permute.xlu0 %2843
    %2846 = vset.pattern.permute.xlu0 16
    %2847 = vperm.xlu0 %2846, %v1080
    %v2848 = vpop.permute.xlu0 %2847
    %2850 = vset.pattern.permute.xlu0 16
    %2851 = vperm.xlu0 %2850, %v1081
    %v2852 = vpop.permute.xlu0 %2851
    %2854 = vset.pattern.permute.xlu0 16
    %2855 = vperm.xlu0 %2854, %v1082
    %v2856 = vpop.permute.xlu0 %2855
    %2858 = vset.pattern.permute.xlu0 16
    %2859 = vperm.xlu0 %2858, %v1083
    %v2860 = vpop.permute.xlu0 %2859
    %2862 = vset.pattern.permute.xlu0 16
    %2863 = vperm.xlu0 %2862, %v1084
    %v2864 = vpop.permute.xlu0 %2863
    %2866 = vset.pattern.permute.xlu0 16
    %2867 = vperm.xlu0 %2866, %v1085
    %v2868 = vpop.permute.xlu0 %2867
    %2870 = vset.pattern.permute.xlu0 16
    %2871 = vperm.xlu0 %2870, %v1086
    %v2872 = vpop.permute.xlu0 %2871
    %2874 = vset.pattern.permute.xlu0 16
    %2875 = vperm.xlu0 %2874, %v1087
    %v2876 = vpop.permute.xlu0 %2875
    %2878 = vset.pattern.permute.xlu0 16
    %2879 = vperm.xlu0 %2878, %v1088
    %v2880 = vpop.permute.xlu0 %2879
    %2882 = vset.pattern.permute.xlu0 16
    %2883 = vperm.xlu0 %2882, %v1089
    %v2884 = vpop.permute.xlu0 %2883
    %2886 = vset.pattern.permute.xlu0 16
    %2887 = vperm.xlu0 %2886, %v1090
    %v2888 = vpop.permute.xlu0 %2887
    %2890 = vset.pattern.permute.xlu0 16
    %2891 = vperm.xlu0 %2890, %v1091
    %v2892 = vpop.permute.xlu0 %2891
    %2894 = vset.pattern.permute.xlu0 16
    %2895 = vperm.xlu0 %2894, %v1092
    %v2896 = vpop.permute.xlu0 %2895
    %2898 = vset.pattern.permute.xlu0 16
    %2899 = vperm.xlu0 %2898, %v1093
    %v2900 = vpop.permute.xlu0 %2899
    %2902 = vset.pattern.permute.xlu0 16
    %2903 = vperm.xlu0 %2902, %v1094
    %v2904 = vpop.permute.xlu0 %2903
    %2906 = vset.pattern.permute.xlu0 16
    %2907 = vperm.xlu0 %2906, %v1095
    %v2908 = vpop.permute.xlu0 %2907
    %2910 = vset.pattern.permute.xlu0 16
    %2911 = vperm.xlu0 %2910, %v1096
    %v2912 = vpop.permute.xlu0 %2911
    %2914 = vset.pattern.permute.xlu0 16
    %2915 = vperm.xlu0 %2914, %v1097
    %v2916 = vpop.permute.xlu0 %2915
    %2918 = vset.pattern.permute.xlu0 16
    %2919 = vperm.xlu0 %2918, %v1098
    %v2920 = vpop.permute.xlu0 %2919
    %2922 = vset.pattern.permute.xlu0 16
    %2923 = vperm.xlu0 %2922, %v1099
    %v2924 = vpop.permute.xlu0 %2923
    %2926 = vset.pattern.permute.xlu0 16
    %2927 = vperm.xlu0 %2926, %v1100
    %v2928 = vpop.permute.xlu0 %2927
    %2930 = vset.pattern.permute.xlu0 16
    %2931 = vperm.xlu0 %2930, %v1101
    %v2932 = vpop.permute.xlu0 %2931
    %2934 = vset.pattern.permute.xlu0 16
    %2935 = vperm.xlu0 %2934, %v1102
    %v2936 = vpop.permute.xlu0 %2935
    %2938 = vset.pattern.permute.xlu0 16
    %2939 = vperm.xlu0 %2938, %v1103
    %v2940 = vpop.permute.xlu0 %2939
    %2942 = vset.pattern.permute.xlu0 16
    %2943 = vperm.xlu0 %2942, %v1104
    %v2944 = vpop.permute.xlu0 %2943
    %2946 = vset.pattern.permute.xlu0 16
    %2947 = vperm.xlu0 %2946, %v1105
    %v2948 = vpop.permute.xlu0 %2947
    %2950 = vset.pattern.permute.xlu0 16
    %2951 = vperm.xlu0 %2950, %v1106
    %v2952 = vpop.permute.xlu0 %2951
    %2954 = vset.pattern.permute.xlu0 16
    %2955 = vperm.xlu0 %2954, %v1107
    %v2956 = vpop.permute.xlu0 %2955
    %2958 = vset.pattern.permute.xlu0 16
    %2959 = vperm.xlu0 %2958, %v1108
    %v2960 = vpop.permute.xlu0 %2959
    %2962 = vset.pattern.permute.xlu0 16
    %2963 = vperm.xlu0 %2962, %v1109
    %v2964 = vpop.permute.xlu0 %2963
    %2966 = vset.pattern.permute.xlu0 16
    %2967 = vperm.xlu0 %2966, %v1110
    %v2968 = vpop.permute.xlu0 %2967
    %v2970 = vmul.f32 %v2650, %v2716
    %v2971 = vmul.f32 %v2651, %v2720
    %v2972 = vmul.f32 %v2652, %v2724
    %v2973 = vmul.f32 %v2653, %v2728
    %v2974 = vmul.f32 %v2654, %v2732
    %v2975 = vmul.f32 %v2655, %v2736
    %v2976 = vmul.f32 %v2656, %v2740
    %v2977 = vmul.f32 %v2657, %v2744
    %v2978 = vmul.f32 %v2658, %v2748
    %v2979 = vmul.f32 %v2659, %v2752
    %v2980 = vmul.f32 %v2660, %v2756
    %v2981 = vmul.f32 %v2661, %v2760
    %v2982 = vmul.f32 %v2662, %v2764
    %v2983 = vmul.f32 %v2663, %v2768
    %v2984 = vmul.f32 %v2664, %v2772
    %v2985 = vmul.f32 %v2665, %v2776
    %v2986 = vmul.f32 %v2666, %v2780
    %v2987 = vmul.f32 %v2667, %v2784
    %v2988 = vmul.f32 %v2668, %v2788
    %v2989 = vmul.f32 %v2669, %v2792
    %v2990 = vmul.f32 %v2670, %v2796
    %v2991 = vmul.f32 %v2671, %v2800
    %v2992 = vmul.f32 %v2672, %v2804
    %v2993 = vmul.f32 %v2673, %v2808
    %v2994 = vmul.f32 %v2674, %v2812
    %v2995 = vmul.f32 %v2675, %v2816
    %v2996 = vmul.f32 %v2676, %v2820
    %v2997 = vmul.f32 %v2677, %v2824
    %v2998 = vmul.f32 %v2678, %v2828
    %v2999 = vmul.f32 %v2679, %v2832
    %v3000 = vmul.f32 %v2680, %v2836
    %v3001 = vmul.f32 %v2681, %v2840
    %v3002 = vmul.f32 %v2682, %v2844
    %v3003 = vmul.f32 %v2683, %v2848
    %v3004 = vmul.f32 %v2684, %v2852
    %v3005 = vmul.f32 %v2685, %v2856
    %v3006 = vmul.f32 %v2686, %v2860
    %v3007 = vmul.f32 %v2687, %v2864
    %v3008 = vmul.f32 %v2688, %v2868
    %v3009 = vmul.f32 %v2689, %v2872
    %v3010 = vmul.f32 %v2690, %v2876
    %v3011 = vmul.f32 %v2691, %v2880
    %v3012 = vmul.f32 %v2692, %v2884
    %v3013 = vmul.f32 %v2693, %v2888
    %v3014 = vmul.f32 %v2694, %v2892
    %v3015 = vmul.f32 %v2695, %v2896
    %v3016 = vmul.f32 %v2696, %v2900
    %v3017 = vmul.f32 %v2697, %v2904
    %v3018 = vmul.f32 %v2698, %v2908
    %v3019 = vmul.f32 %v2699, %v2912
    %v3020 = vmul.f32 %v2700, %v2916
    %v3021 = vmul.f32 %v2701, %v2920
    %v3022 = vmul.f32 %v2702, %v2924
    %v3023 = vmul.f32 %v2703, %v2928
    %v3024 = vmul.f32 %v2704, %v2932
    %v3025 = vmul.f32 %v2705, %v2936
    %v3026 = vmul.f32 %v2706, %v2940
    %v3027 = vmul.f32 %v2707, %v2944
    %v3028 = vmul.f32 %v2708, %v2948
    %v3029 = vmul.f32 %v2709, %v2952
    %v3030 = vmul.f32 %v2710, %v2956
    %v3031 = vmul.f32 %v2711, %v2960
    %v3032 = vmul.f32 %v2712, %v2964
    %v3033 = vmul.f32 %v2713, %v2968
    %v3034 = vpack.c.bf16 %v2971, %v2970
    %v3035 = vpack.c.bf16 %v2973, %v2972
    %v3036 = vpack.c.bf16 %v2975, %v2974
    %v3037 = vpack.c.bf16 %v2977, %v2976
    %v3038 = vpack.c.bf16 %v2979, %v2978
    %v3039 = vpack.c.bf16 %v2981, %v2980
    %v3040 = vpack.c.bf16 %v2983, %v2982
    %v3041 = vpack.c.bf16 %v2985, %v2984
    %v3042 = vpack.c.bf16 %v2987, %v2986
    %v3043 = vpack.c.bf16 %v2989, %v2988
    %v3044 = vpack.c.bf16 %v2991, %v2990
    %v3045 = vpack.c.bf16 %v2993, %v2992
    %v3046 = vpack.c.bf16 %v2995, %v2994
    %v3047 = vpack.c.bf16 %v2997, %v2996
    %v3048 = vpack.c.bf16 %v2999, %v2998
    %v3049 = vpack.c.bf16 %v3001, %v3000
    %v3050 = vpack.c.bf16 %v3003, %v3002
    %v3051 = vpack.c.bf16 %v3005, %v3004
    %v3052 = vpack.c.bf16 %v3007, %v3006
    %v3053 = vpack.c.bf16 %v3009, %v3008
    %v3054 = vpack.c.bf16 %v3011, %v3010
    %v3055 = vpack.c.bf16 %v3013, %v3012
    %v3056 = vpack.c.bf16 %v3015, %v3014
    %v3057 = vpack.c.bf16 %v3017, %v3016
    %v3058 = vpack.c.bf16 %v3019, %v3018
    %v3059 = vpack.c.bf16 %v3021, %v3020
    %v3060 = vpack.c.bf16 %v3023, %v3022
    %v3061 = vpack.c.bf16 %v3025, %v3024
    %v3062 = vpack.c.bf16 %v3027, %v3026
    %v3063 = vpack.c.bf16 %v3029, %v3028
    %v3064 = vpack.c.bf16 %v3031, %v3030
    %v3065 = vpack.c.bf16 %v3033, %v3032
    %s3066 = scalar_lea.vmem [#allocation12], 128
    %v3067 = vld [vmem:[%s3066] sm:$0xf]
    %v3068 = vld [vmem:[%s3066 + $0x4] sm:$0xf]
    %v3069 = vld [vmem:[%s3066 + $0x8] sm:$0xf]
    %v3070 = vld [vmem:[%s3066 + $0xc] sm:$0xf]
    %v3071 = vld [vmem:[%s3066 + $0x10] sm:$0xf]
    %v3072 = vld [vmem:[%s3066 + $0x14] sm:$0xf]
    %v3073 = vld [vmem:[%s3066 + $0x18] sm:$0xf]
    %v3074 = vld [vmem:[%s3066 + $0x1c] sm:$0xf]
    %v3075 = vld [vmem:[%s3066 + $0x20] sm:$0xf]
    %v3076 = vld [vmem:[%s3066 + $0x24] sm:$0xf]
    %v3077 = vld [vmem:[%s3066 + $0x28] sm:$0xf]
    %v3078 = vld [vmem:[%s3066 + $0x2c] sm:$0xf]
    %v3079 = vld [vmem:[%s3066 + $0x30] sm:$0xf]
    %v3080 = vld [vmem:[%s3066 + $0x34] sm:$0xf]
    %v3081 = vld [vmem:[%s3066 + $0x38] sm:$0xf]
    %v3082 = vld [vmem:[%s3066 + $0x3c] sm:$0xf]
    %v3099 = vunpack.c.l.b16 %v3067
    %v3100 = vunpack.c.l.b16 %v3068
    %v3101 = vunpack.c.l.b16 %v3069
    %v3102 = vunpack.c.l.b16 %v3070
    %v3103 = vunpack.c.l.b16 %v3071
    %v3104 = vunpack.c.l.b16 %v3072
    %v3105 = vunpack.c.l.b16 %v3073
    %v3106 = vunpack.c.l.b16 %v3074
    %v3107 = vunpack.c.l.b16 %v3075
    %v3108 = vunpack.c.l.b16 %v3076
    %v3109 = vunpack.c.l.b16 %v3077
    %v3110 = vunpack.c.l.b16 %v3078
    %v3111 = vunpack.c.l.b16 %v3079
    %v3112 = vunpack.c.l.b16 %v3080
    %v3113 = vunpack.c.l.b16 %v3081
    %v3114 = vunpack.c.l.b16 %v3082
    %v3115 = vpack.c.b16 %v3100, %v3099
    %v3116 = vpack.c.b16 %v3102, %v3101
    %v3117 = vpack.c.b16 %v3104, %v3103
    %v3118 = vpack.c.b16 %v3106, %v3105
    %v3119 = vpack.c.b16 %v3108, %v3107
    %v3120 = vpack.c.b16 %v3110, %v3109
    %v3121 = vpack.c.b16 %v3112, %v3111
    %v3122 = vpack.c.b16 %v3114, %v3113
    %3131 = vmatprep.subr.bf16.mxu0 0
    %3132 = vmatpush1.bf16.msra.mxu0 %v3122
    %3133 = vmatprep.subr.bf16.mxu0 0
    %3134 = vmatpush1.bf16.msra.mxu0 %v3121
    %3135 = vmatprep.subr.bf16.mxu0 0
    %3136 = vmatpush1.bf16.msra.mxu0 %v3120
    %3137 = vmatprep.subr.bf16.mxu0 0
    %3138 = vmatpush1.bf16.msra.mxu0 %v3119
    %3139 = vmatprep.subr.bf16.mxu0 0
    %3140 = vmatpush1.bf16.msra.mxu0 %v3118
    %3141 = vmatprep.subr.bf16.mxu0 0
    %3142 = vmatpush1.bf16.msra.mxu0 %v3117
    %3143 = vmatprep.subr.bf16.mxu0 0
    %3144 = vmatpush1.bf16.msra.mxu0 %v3116
    %3145 = vmatprep.subr.bf16.mxu0 0
    %3146 = vmatpush1.bf16.msra.mxu0 %v3115
    %3147 = vmatprep.subr.bf16.mxu0 0
    %3148 = vmatpush2.bf16.msra.mxu0 0
    %3149 = vmatprep.subr.bf16.mxu0 0
    %3150 = vmatpush2.bf16.msra.mxu0 0
    %3151 = vmatprep.subr.bf16.mxu0 0
    %3152 = vmatpush2.bf16.msra.mxu0 0
    %3153 = vmatprep.subr.bf16.mxu0 0
    %3154 = vmatpush2.bf16.msra.mxu0 0
    %3155 = vmatprep.subr.bf16.mxu0 0
    %3156 = vmatpush2.bf16.msra.mxu0 0
    %3157 = vmatprep.subr.bf16.mxu0 0
    %3158 = vmatpush2.bf16.msra.mxu0 0
    %3159 = vmatprep.subr.bf16.mxu0 0
    %3160 = vmatpush2.bf16.msra.mxu0 0
    %3161 = vmatprep.subr.bf16.mxu0 0
    %3162 = vmatpush2.bf16.msra.mxu0 0
    %3163 = vmatprep.mubr.bf16.mxu0 0
    %3164 = vmatmul.mubr.bf16.gmra.mxu0 %v3034
    %v3165 = vpop.f32.mrf.mxu0
    %v3166 = vadd.f32 0.0, %v3165
    %v3167 = vpop.f32.mrf.mxu0
    %v3168 = vpop.f32.mrf.mxu0
    %v3169 = vadd.f32 0.0, %v3168
    %v3170 = vpop.f32.mrf.mxu0
    %3171 = vmatprep.mubr.bf16.mxu0 0
    %3172 = vmatmul.mubr.bf16.gmra.mxu0 %v3035
    %v3173 = vpop.f32.mrf.mxu0
    %v3174 = vadd.f32 0.0, %v3173
    %v3175 = vpop.f32.mrf.mxu0
    %v3176 = vpop.f32.mrf.mxu0
    %v3177 = vadd.f32 0.0, %v3176
    %v3178 = vpop.f32.mrf.mxu0
    %3179 = vmatprep.mubr.bf16.mxu0 0
    %3180 = vmatmul.mubr.bf16.gmra.mxu0 %v3036
    %v3181 = vpop.f32.mrf.mxu0
    %v3182 = vadd.f32 0.0, %v3181
    %v3183 = vpop.f32.mrf.mxu0
    %v3184 = vpop.f32.mrf.mxu0
    %v3185 = vadd.f32 0.0, %v3184
    %v3186 = vpop.f32.mrf.mxu0
    %3187 = vmatprep.mubr.bf16.mxu0 0
    %3188 = vmatmul.mubr.bf16.gmra.mxu0 %v3037
    %v3189 = vpop.f32.mrf.mxu0
    %v3190 = vadd.f32 0.0, %v3189
    %v3191 = vpop.f32.mrf.mxu0
    %v3192 = vpop.f32.mrf.mxu0
    %v3193 = vadd.f32 0.0, %v3192
    %v3194 = vpop.f32.mrf.mxu0
    %3195 = vmatprep.mubr.bf16.mxu0 0
    %3196 = vmatmul.mubr.bf16.gmra.mxu0 %v3038
    %v3197 = vpop.f32.mrf.mxu0
    %v3198 = vadd.f32 0.0, %v3197
    %v3199 = vpop.f32.mrf.mxu0
    %v3200 = vpop.f32.mrf.mxu0
    %v3201 = vadd.f32 0.0, %v3200
    %v3202 = vpop.f32.mrf.mxu0
    %3203 = vmatprep.mubr.bf16.mxu0 0
    %3204 = vmatmul.mubr.bf16.gmra.mxu0 %v3039
    %v3205 = vpop.f32.mrf.mxu0
    %v3206 = vadd.f32 0.0, %v3205
    %v3207 = vpop.f32.mrf.mxu0
    %v3208 = vpop.f32.mrf.mxu0
    %v3209 = vadd.f32 0.0, %v3208
    %v3210 = vpop.f32.mrf.mxu0
    %3211 = vmatprep.mubr.bf16.mxu0 0
    %3212 = vmatmul.mubr.bf16.gmra.mxu0 %v3040
    %v3213 = vpop.f32.mrf.mxu0
    %v3214 = vadd.f32 0.0, %v3213
    %v3215 = vpop.f32.mrf.mxu0
    %v3216 = vpop.f32.mrf.mxu0
    %v3217 = vadd.f32 0.0, %v3216
    %v3218 = vpop.f32.mrf.mxu0
    %3219 = vmatprep.mubr.bf16.mxu0 0
    %3220 = vmatmul.mubr.bf16.gmra.mxu0 %v3041
    %v3221 = vpop.f32.mrf.mxu0
    %v3222 = vadd.f32 0.0, %v3221
    %v3223 = vpop.f32.mrf.mxu0
    %v3224 = vpop.f32.mrf.mxu0
    %v3225 = vadd.f32 0.0, %v3224
    %v3226 = vpop.f32.mrf.mxu0
    %3227 = vmatprep.mubr.bf16.mxu0 0
    %3228 = vmatmul.mubr.bf16.gmra.mxu0 %v3042
    %v3229 = vpop.f32.mrf.mxu0
    %v3230 = vadd.f32 0.0, %v3229
    %v3231 = vpop.f32.mrf.mxu0
    %v3232 = vpop.f32.mrf.mxu0
    %v3233 = vadd.f32 0.0, %v3232
    %v3234 = vpop.f32.mrf.mxu0
    %3235 = vmatprep.mubr.bf16.mxu0 0
    %3236 = vmatmul.mubr.bf16.gmra.mxu0 %v3043
    %v3237 = vpop.f32.mrf.mxu0
    %v3238 = vadd.f32 0.0, %v3237
    %v3239 = vpop.f32.mrf.mxu0
    %v3240 = vpop.f32.mrf.mxu0
    %v3241 = vadd.f32 0.0, %v3240
    %v3242 = vpop.f32.mrf.mxu0
    %3243 = vmatprep.mubr.bf16.mxu0 0
    %3244 = vmatmul.mubr.bf16.gmra.mxu0 %v3044
    %v3245 = vpop.f32.mrf.mxu0
    %v3246 = vadd.f32 0.0, %v3245
    %v3247 = vpop.f32.mrf.mxu0
    %v3248 = vpop.f32.mrf.mxu0
    %v3249 = vadd.f32 0.0, %v3248
    %v3250 = vpop.f32.mrf.mxu0
    %3251 = vmatprep.mubr.bf16.mxu0 0
    %3252 = vmatmul.mubr.bf16.gmra.mxu0 %v3045
    %v3253 = vpop.f32.mrf.mxu0
    %v3254 = vadd.f32 0.0, %v3253
    %v3255 = vpop.f32.mrf.mxu0
    %v3256 = vpop.f32.mrf.mxu0
    %v3257 = vadd.f32 0.0, %v3256
    %v3258 = vpop.f32.mrf.mxu0
    %3259 = vmatprep.mubr.bf16.mxu0 0
    %3260 = vmatmul.mubr.bf16.gmra.mxu0 %v3046
    %v3261 = vpop.f32.mrf.mxu0
    %v3262 = vadd.f32 0.0, %v3261
    %v3263 = vpop.f32.mrf.mxu0
    %v3264 = vpop.f32.mrf.mxu0
    %v3265 = vadd.f32 0.0, %v3264
    %v3266 = vpop.f32.mrf.mxu0
    %3267 = vmatprep.mubr.bf16.mxu0 0
    %3268 = vmatmul.mubr.bf16.gmra.mxu0 %v3047
    %v3269 = vpop.f32.mrf.mxu0
    %v3270 = vadd.f32 0.0, %v3269
    %v3271 = vpop.f32.mrf.mxu0
    %v3272 = vpop.f32.mrf.mxu0
    %v3273 = vadd.f32 0.0, %v3272
    %v3274 = vpop.f32.mrf.mxu0
    %3275 = vmatprep.mubr.bf16.mxu0 0
    %3276 = vmatmul.mubr.bf16.gmra.mxu0 %v3048
    %v3277 = vpop.f32.mrf.mxu0
    %v3278 = vadd.f32 0.0, %v3277
    %v3279 = vpop.f32.mrf.mxu0
    %v3280 = vpop.f32.mrf.mxu0
    %v3281 = vadd.f32 0.0, %v3280
    %v3282 = vpop.f32.mrf.mxu0
    %3283 = vmatprep.mubr.bf16.mxu0 0
    %3284 = vmatmul.mubr.bf16.gmra.mxu0 %v3049
    %v3285 = vpop.f32.mrf.mxu0
    %v3286 = vadd.f32 0.0, %v3285
    %v3287 = vpop.f32.mrf.mxu0
    %v3288 = vpop.f32.mrf.mxu0
    %v3289 = vadd.f32 0.0, %v3288
    %v3290 = vpop.f32.mrf.mxu0
    %3291 = vmatprep.mubr.bf16.mxu0 0
    %3292 = vmatmul.mubr.bf16.gmra.mxu0 %v3050
    %v3293 = vpop.f32.mrf.mxu0
    %v3294 = vadd.f32 0.0, %v3293
    %v3295 = vpop.f32.mrf.mxu0
    %v3296 = vpop.f32.mrf.mxu0
    %v3297 = vadd.f32 0.0, %v3296
    %v3298 = vpop.f32.mrf.mxu0
    %3299 = vmatprep.mubr.bf16.mxu0 0
    %3300 = vmatmul.mubr.bf16.gmra.mxu0 %v3051
    %v3301 = vpop.f32.mrf.mxu0
    %v3302 = vadd.f32 0.0, %v3301
    %v3303 = vpop.f32.mrf.mxu0
    %v3304 = vpop.f32.mrf.mxu0
    %v3305 = vadd.f32 0.0, %v3304
    %v3306 = vpop.f32.mrf.mxu0
    %3307 = vmatprep.mubr.bf16.mxu0 0
    %3308 = vmatmul.mubr.bf16.gmra.mxu0 %v3052
    %v3309 = vpop.f32.mrf.mxu0
    %v3310 = vadd.f32 0.0, %v3309
    %v3311 = vpop.f32.mrf.mxu0
    %v3312 = vpop.f32.mrf.mxu0
    %v3313 = vadd.f32 0.0, %v3312
    %v3314 = vpop.f32.mrf.mxu0
    %3315 = vmatprep.mubr.bf16.mxu0 0
    %3316 = vmatmul.mubr.bf16.gmra.mxu0 %v3053
    %v3317 = vpop.f32.mrf.mxu0
    %v3318 = vadd.f32 0.0, %v3317
    %v3319 = vpop.f32.mrf.mxu0
    %v3320 = vpop.f32.mrf.mxu0
    %v3321 = vadd.f32 0.0, %v3320
    %v3322 = vpop.f32.mrf.mxu0
    %3323 = vmatprep.mubr.bf16.mxu0 0
    %3324 = vmatmul.mubr.bf16.gmra.mxu0 %v3054
    %v3325 = vpop.f32.mrf.mxu0
    %v3326 = vadd.f32 0.0, %v3325
    %v3327 = vpop.f32.mrf.mxu0
    %v3328 = vpop.f32.mrf.mxu0
    %v3329 = vadd.f32 0.0, %v3328
    %v3330 = vpop.f32.mrf.mxu0
    %3331 = vmatprep.mubr.bf16.mxu0 0
    %3332 = vmatmul.mubr.bf16.gmra.mxu0 %v3055
    %v3333 = vpop.f32.mrf.mxu0
    %v3334 = vadd.f32 0.0, %v3333
    %v3335 = vpop.f32.mrf.mxu0
    %v3336 = vpop.f32.mrf.mxu0
    %v3337 = vadd.f32 0.0, %v3336
    %v3338 = vpop.f32.mrf.mxu0
    %3339 = vmatprep.mubr.bf16.mxu0 0
    %3340 = vmatmul.mubr.bf16.gmra.mxu0 %v3056
    %v3341 = vpop.f32.mrf.mxu0
    %v3342 = vadd.f32 0.0, %v3341
    %v3343 = vpop.f32.mrf.mxu0
    %v3344 = vpop.f32.mrf.mxu0
    %v3345 = vadd.f32 0.0, %v3344
    %v3346 = vpop.f32.mrf.mxu0
    %3347 = vmatprep.mubr.bf16.mxu0 0
    %3348 = vmatmul.mubr.bf16.gmra.mxu0 %v3057
    %v3349 = vpop.f32.mrf.mxu0
    %v3350 = vadd.f32 0.0, %v3349
    %v3351 = vpop.f32.mrf.mxu0
    %v3352 = vpop.f32.mrf.mxu0
    %v3353 = vadd.f32 0.0, %v3352
    %v3354 = vpop.f32.mrf.mxu0
    %3355 = vmatprep.mubr.bf16.mxu0 0
    %3356 = vmatmul.mubr.bf16.gmra.mxu0 %v3058
    %v3357 = vpop.f32.mrf.mxu0
    %v3358 = vadd.f32 0.0, %v3357
    %v3359 = vpop.f32.mrf.mxu0
    %v3360 = vpop.f32.mrf.mxu0
    %v3361 = vadd.f32 0.0, %v3360
    %v3362 = vpop.f32.mrf.mxu0
    %3363 = vmatprep.mubr.bf16.mxu0 0
    %3364 = vmatmul.mubr.bf16.gmra.mxu0 %v3059
    %v3365 = vpop.f32.mrf.mxu0
    %v3366 = vadd.f32 0.0, %v3365
    %v3367 = vpop.f32.mrf.mxu0
    %v3368 = vpop.f32.mrf.mxu0
    %v3369 = vadd.f32 0.0, %v3368
    %v3370 = vpop.f32.mrf.mxu0
    %3371 = vmatprep.mubr.bf16.mxu0 0
    %3372 = vmatmul.mubr.bf16.gmra.mxu0 %v3060
    %v3373 = vpop.f32.mrf.mxu0
    %v3374 = vadd.f32 0.0, %v3373
    %v3375 = vpop.f32.mrf.mxu0
    %v3376 = vpop.f32.mrf.mxu0
    %v3377 = vadd.f32 0.0, %v3376
    %v3378 = vpop.f32.mrf.mxu0
    %3379 = vmatprep.mubr.bf16.mxu0 0
    %3380 = vmatmul.mubr.bf16.gmra.mxu0 %v3061
    %v3381 = vpop.f32.mrf.mxu0
    %v3382 = vadd.f32 0.0, %v3381
    %v3383 = vpop.f32.mrf.mxu0
    %v3384 = vpop.f32.mrf.mxu0
    %v3385 = vadd.f32 0.0, %v3384
    %v3386 = vpop.f32.mrf.mxu0
    %3387 = vmatprep.mubr.bf16.mxu0 0
    %3388 = vmatmul.mubr.bf16.gmra.mxu0 %v3062
    %v3389 = vpop.f32.mrf.mxu0
    %v3390 = vadd.f32 0.0, %v3389
    %v3391 = vpop.f32.mrf.mxu0
    %v3392 = vpop.f32.mrf.mxu0
    %v3393 = vadd.f32 0.0, %v3392
    %v3394 = vpop.f32.mrf.mxu0
    %3395 = vmatprep.mubr.bf16.mxu0 0
    %3396 = vmatmul.mubr.bf16.gmra.mxu0 %v3063
    %v3397 = vpop.f32.mrf.mxu0
    %v3398 = vadd.f32 0.0, %v3397
    %v3399 = vpop.f32.mrf.mxu0
    %v3400 = vpop.f32.mrf.mxu0
    %v3401 = vadd.f32 0.0, %v3400
    %v3402 = vpop.f32.mrf.mxu0
    %3403 = vmatprep.mubr.bf16.mxu0 0
    %3404 = vmatmul.mubr.bf16.gmra.mxu0 %v3064
    %v3405 = vpop.f32.mrf.mxu0
    %v3406 = vadd.f32 0.0, %v3405
    %v3407 = vpop.f32.mrf.mxu0
    %v3408 = vpop.f32.mrf.mxu0
    %v3409 = vadd.f32 0.0, %v3408
    %v3410 = vpop.f32.mrf.mxu0
    %3411 = vmatprep.mubr.bf16.mxu0 0
    %3412 = vmatmul.mubr.bf16.gmra.mxu0 %v3065
    %v3413 = vpop.f32.mrf.mxu0
    %v3414 = vadd.f32 0.0, %v3413
    %v3415 = vpop.f32.mrf.mxu0
    %v3416 = vpop.f32.mrf.mxu0
    %v3417 = vadd.f32 0.0, %v3416
    %v3418 = vpop.f32.mrf.mxu0
    %3419 = vdwg.mxu0
    %v3420 = vadd.f32 %v2396, %v3166
    %v3421 = vadd.f32 %v2399, %v3169
    %v3422 = vadd.f32 %v2404, %v3174
    %v3423 = vadd.f32 %v2407, %v3177
    %v3424 = vadd.f32 %v2412, %v3182
    %v3425 = vadd.f32 %v2415, %v3185
    %v3426 = vadd.f32 %v2420, %v3190
    %v3427 = vadd.f32 %v2423, %v3193
    %v3428 = vadd.f32 %v2428, %v3198
    %v3429 = vadd.f32 %v2431, %v3201
    %v3430 = vadd.f32 %v2436, %v3206
    %v3431 = vadd.f32 %v2439, %v3209
    %v3432 = vadd.f32 %v2444, %v3214
    %v3433 = vadd.f32 %v2447, %v3217
    %v3434 = vadd.f32 %v2452, %v3222
    %v3435 = vadd.f32 %v2455, %v3225
    %v3436 = vadd.f32 %v2460, %v3230
    %v3437 = vadd.f32 %v2463, %v3233
    %v3438 = vadd.f32 %v2468, %v3238
    %v3439 = vadd.f32 %v2471, %v3241
    %v3440 = vadd.f32 %v2476, %v3246
    %v3441 = vadd.f32 %v2479, %v3249
    %v3442 = vadd.f32 %v2484, %v3254
    %v3443 = vadd.f32 %v2487, %v3257
    %v3444 = vadd.f32 %v2492, %v3262
    %v3445 = vadd.f32 %v2495, %v3265
    %v3446 = vadd.f32 %v2500, %v3270
    %v3447 = vadd.f32 %v2503, %v3273
    %v3448 = vadd.f32 %v2508, %v3278
    %v3449 = vadd.f32 %v2511, %v3281
    %v3450 = vadd.f32 %v2516, %v3286
    %v3451 = vadd.f32 %v2519, %v3289
    %v3452 = vadd.f32 %v2524, %v3294
    %v3453 = vadd.f32 %v2527, %v3297
    %v3454 = vadd.f32 %v2532, %v3302
    %v3455 = vadd.f32 %v2535, %v3305
    %v3456 = vadd.f32 %v2540, %v3310
    %v3457 = vadd.f32 %v2543, %v3313
    %v3458 = vadd.f32 %v2548, %v3318
    %v3459 = vadd.f32 %v2551, %v3321
    %v3460 = vadd.f32 %v2556, %v3326
    %v3461 = vadd.f32 %v2559, %v3329
    %v3462 = vadd.f32 %v2564, %v3334
    %v3463 = vadd.f32 %v2567, %v3337
    %v3464 = vadd.f32 %v2572, %v3342
    %v3465 = vadd.f32 %v2575, %v3345
    %v3466 = vadd.f32 %v2580, %v3350
    %v3467 = vadd.f32 %v2583, %v3353
    %v3468 = vadd.f32 %v2588, %v3358
    %v3469 = vadd.f32 %v2591, %v3361
    %v3470 = vadd.f32 %v2596, %v3366
    %v3471 = vadd.f32 %v2599, %v3369
    %v3472 = vadd.f32 %v2604, %v3374
    %v3473 = vadd.f32 %v2607, %v3377
    %v3474 = vadd.f32 %v2612, %v3382
    %v3475 = vadd.f32 %v2615, %v3385
    %v3476 = vadd.f32 %v2620, %v3390
    %v3477 = vadd.f32 %v2623, %v3393
    %v3478 = vadd.f32 %v2628, %v3398
    %v3479 = vadd.f32 %v2631, %v3401
    %v3480 = vadd.f32 %v2636, %v3406
    %v3481 = vadd.f32 %v2639, %v3409
    %v3482 = vadd.f32 %v2644, %v3414
    %v3483 = vadd.f32 %v2647, %v3417
    %v3484 = vld [vmem:[#allocation2 + $0x17] sm:$0xff]
    %v3485 = vld [vmem:[#allocation2 + $0x1f] sm:$0xff]
    %v3486 = vld [vmem:[#allocation2 + $0x27] sm:$0xff]
    %v3487 = vld [vmem:[#allocation2 + $0x2f] sm:$0xff]
    %v3488 = vld [vmem:[#allocation2 + $0x37] sm:$0xff]
    %v3489 = vld [vmem:[#allocation2 + $0x3f] sm:$0xff]
    %v3490 = vld [vmem:[#allocation2 + $0x47] sm:$0xff]
    %v3491 = vld [vmem:[#allocation2 + $0x4f] sm:$0xff]
    %v3492 = vld [vmem:[#allocation2 + $0x57] sm:$0xff]
    %v3493 = vld [vmem:[#allocation2 + $0x5f] sm:$0xff]
    %v3494 = vld [vmem:[#allocation2 + $0x67] sm:$0xff]
    %v3495 = vld [vmem:[#allocation2 + $0x6f] sm:$0xff]
    %v3496 = vld [vmem:[#allocation2 + $0x77] sm:$0xff]
    %v3497 = vld [vmem:[#allocation2 + $0x7f] sm:$0xff]
    %v3498 = vld [vmem:[#allocation2 + $0x87] sm:$0xff]
    %v3499 = vld [vmem:[#allocation2 + $0x8f] sm:$0xff]
    %v3500 = vld [vmem:[#allocation2 + $0x97] sm:$0xff]
    %v3501 = vld [vmem:[#allocation2 + $0x9f] sm:$0xff]
    %v3502 = vld [vmem:[#allocation2 + $0xa7] sm:$0xff]
    %v3503 = vld [vmem:[#allocation2 + $0xaf] sm:$0xff]
    %v3504 = vld [vmem:[#allocation2 + $0xb7] sm:$0xff]
    %v3505 = vld [vmem:[#allocation2 + $0xbf] sm:$0xff]
    %v3506 = vld [vmem:[#allocation2 + $0xc7] sm:$0xff]
    %v3507 = vld [vmem:[#allocation2 + $0xcf] sm:$0xff]
    %v3508 = vld [vmem:[#allocation2 + $0xd7] sm:$0xff]
    %v3509 = vld [vmem:[#allocation2 + $0xdf] sm:$0xff]
    %v3510 = vld [vmem:[#allocation2 + $0xe7] sm:$0xff]
    %v3511 = vld [vmem:[#allocation2 + $0xef] sm:$0xff]
    %v3512 = vld [vmem:[#allocation2 + $0xf7] sm:$0xff]
    %v3513 = vld [vmem:[#allocation2 + $0xff] sm:$0xff]
    %v3514 = vld [vmem:[#allocation2 + $0x107] sm:$0xff]
    %v3515 = vld [vmem:[#allocation2 + $0x10f] sm:$0xff]
    %v3516 = vld [vmem:[#allocation2 + $0x117] sm:$0xff]
    %v3517 = vld [vmem:[#allocation2 + $0x11f] sm:$0xff]
    %v3518 = vld [vmem:[#allocation2 + $0x127] sm:$0xff]
    %v3519 = vld [vmem:[#allocation2 + $0x12f] sm:$0xff]
    %v3520 = vld [vmem:[#allocation2 + $0x137] sm:$0xff]
    %v3521 = vld [vmem:[#allocation2 + $0x13f] sm:$0xff]
    %v3522 = vld [vmem:[#allocation2 + $0x147] sm:$0xff]
    %v3523 = vld [vmem:[#allocation2 + $0x14f] sm:$0xff]
    %v3524 = vld [vmem:[#allocation2 + $0x157] sm:$0xff]
    %v3525 = vld [vmem:[#allocation2 + $0x15f] sm:$0xff]
    %v3526 = vld [vmem:[#allocation2 + $0x167] sm:$0xff]
    %v3527 = vld [vmem:[#allocation2 + $0x16f] sm:$0xff]
    %v3528 = vld [vmem:[#allocation2 + $0x177] sm:$0xff]
    %v3529 = vld [vmem:[#allocation2 + $0x17f] sm:$0xff]
    %v3530 = vld [vmem:[#allocation2 + $0x187] sm:$0xff]
    %v3531 = vld [vmem:[#allocation2 + $0x18f] sm:$0xff]
    %v3532 = vld [vmem:[#allocation2 + $0x197] sm:$0xff]
    %v3533 = vld [vmem:[#allocation2 + $0x19f] sm:$0xff]
    %v3534 = vld [vmem:[#allocation2 + $0x1a7] sm:$0xff]
    %v3535 = vld [vmem:[#allocation2 + $0x1af] sm:$0xff]
    %v3536 = vld [vmem:[#allocation2 + $0x1b7] sm:$0xff]
    %v3537 = vld [vmem:[#allocation2 + $0x1bf] sm:$0xff]
    %v3538 = vld [vmem:[#allocation2 + $0x1c7] sm:$0xff]
    %v3539 = vld [vmem:[#allocation2 + $0x1cf] sm:$0xff]
    %v3540 = vld [vmem:[#allocation2 + $0x1d7] sm:$0xff]
    %v3541 = vld [vmem:[#allocation2 + $0x1df] sm:$0xff]
    %v3542 = vld [vmem:[#allocation2 + $0x1e7] sm:$0xff]
    %v3543 = vld [vmem:[#allocation2 + $0x1ef] sm:$0xff]
    %v3544 = vld [vmem:[#allocation2 + $0x1f7] sm:$0xff]
    %v3545 = vld [vmem:[#allocation2 + $0x1ff] sm:$0xff]
    %v3546 = vld [vmem:[#allocation2 + $0x207] sm:$0xff]
    %v3547 = vld [vmem:[#allocation2 + $0x20f] sm:$0xff]
    %3548 = vset.pattern.permute.xlu0 24
    %3549 = vperm.xlu0 %3548, %v1047
    %v3550 = vpop.permute.xlu0 %3549
    %3552 = vset.pattern.permute.xlu0 24
    %3553 = vperm.xlu0 %3552, %v1048
    %v3554 = vpop.permute.xlu0 %3553
    %3556 = vset.pattern.permute.xlu0 24
    %3557 = vperm.xlu0 %3556, %v1049
    %v3558 = vpop.permute.xlu0 %3557
    %3560 = vset.pattern.permute.xlu0 24
    %3561 = vperm.xlu0 %3560, %v1050
    %v3562 = vpop.permute.xlu0 %3561
    %3564 = vset.pattern.permute.xlu0 24
    %3565 = vperm.xlu0 %3564, %v1051
    %v3566 = vpop.permute.xlu0 %3565
    %3568 = vset.pattern.permute.xlu0 24
    %3569 = vperm.xlu0 %3568, %v1052
    %v3570 = vpop.permute.xlu0 %3569
    %3572 = vset.pattern.permute.xlu0 24
    %3573 = vperm.xlu0 %3572, %v1053
    %v3574 = vpop.permute.xlu0 %3573
    %3576 = vset.pattern.permute.xlu0 24
    %3577 = vperm.xlu0 %3576, %v1054
    %v3578 = vpop.permute.xlu0 %3577
    %3580 = vset.pattern.permute.xlu0 24
    %3581 = vperm.xlu0 %3580, %v1055
    %v3582 = vpop.permute.xlu0 %3581
    %3584 = vset.pattern.permute.xlu0 24
    %3585 = vperm.xlu0 %3584, %v1056
    %v3586 = vpop.permute.xlu0 %3585
    %3588 = vset.pattern.permute.xlu0 24
    %3589 = vperm.xlu0 %3588, %v1057
    %v3590 = vpop.permute.xlu0 %3589
    %3592 = vset.pattern.permute.xlu0 24
    %3593 = vperm.xlu0 %3592, %v1058
    %v3594 = vpop.permute.xlu0 %3593
    %3596 = vset.pattern.permute.xlu0 24
    %3597 = vperm.xlu0 %3596, %v1059
    %v3598 = vpop.permute.xlu0 %3597
    %3600 = vset.pattern.permute.xlu0 24
    %3601 = vperm.xlu0 %3600, %v1060
    %v3602 = vpop.permute.xlu0 %3601
    %3604 = vset.pattern.permute.xlu0 24
    %3605 = vperm.xlu0 %3604, %v1061
    %v3606 = vpop.permute.xlu0 %3605
    %3608 = vset.pattern.permute.xlu0 24
    %3609 = vperm.xlu0 %3608, %v1062
    %v3610 = vpop.permute.xlu0 %3609
    %3612 = vset.pattern.permute.xlu0 24
    %3613 = vperm.xlu0 %3612, %v1063
    %v3614 = vpop.permute.xlu0 %3613
    %3616 = vset.pattern.permute.xlu0 24
    %3617 = vperm.xlu0 %3616, %v1064
    %v3618 = vpop.permute.xlu0 %3617
    %3620 = vset.pattern.permute.xlu0 24
    %3621 = vperm.xlu0 %3620, %v1065
    %v3622 = vpop.permute.xlu0 %3621
    %3624 = vset.pattern.permute.xlu0 24
    %3625 = vperm.xlu0 %3624, %v1066
    %v3626 = vpop.permute.xlu0 %3625
    %3628 = vset.pattern.permute.xlu0 24
    %3629 = vperm.xlu0 %3628, %v1067
    %v3630 = vpop.permute.xlu0 %3629
    %3632 = vset.pattern.permute.xlu0 24
    %3633 = vperm.xlu0 %3632, %v1068
    %v3634 = vpop.permute.xlu0 %3633
    %3636 = vset.pattern.permute.xlu0 24
    %3637 = vperm.xlu0 %3636, %v1069
    %v3638 = vpop.permute.xlu0 %3637
    %3640 = vset.pattern.permute.xlu0 24
    %3641 = vperm.xlu0 %3640, %v1070
    %v3642 = vpop.permute.xlu0 %3641
    %3644 = vset.pattern.permute.xlu0 24
    %3645 = vperm.xlu0 %3644, %v1071
    %v3646 = vpop.permute.xlu0 %3645
    %3648 = vset.pattern.permute.xlu0 24
    %3649 = vperm.xlu0 %3648, %v1072
    %v3650 = vpop.permute.xlu0 %3649
    %3652 = vset.pattern.permute.xlu0 24
    %3653 = vperm.xlu0 %3652, %v1073
    %v3654 = vpop.permute.xlu0 %3653
    %3656 = vset.pattern.permute.xlu0 24
    %3657 = vperm.xlu0 %3656, %v1074
    %v3658 = vpop.permute.xlu0 %3657
    %3660 = vset.pattern.permute.xlu0 24
    %3661 = vperm.xlu0 %3660, %v1075
    %v3662 = vpop.permute.xlu0 %3661
    %3664 = vset.pattern.permute.xlu0 24
    %3665 = vperm.xlu0 %3664, %v1076
    %v3666 = vpop.permute.xlu0 %3665
    %3668 = vset.pattern.permute.xlu0 24
    %3669 = vperm.xlu0 %3668, %v1077
    %v3670 = vpop.permute.xlu0 %3669
    %3672 = vset.pattern.permute.xlu0 24
    %3673 = vperm.xlu0 %3672, %v1078
    %v3674 = vpop.permute.xlu0 %3673
    %3676 = vset.pattern.permute.xlu0 24
    %3677 = vperm.xlu0 %3676, %v1079
    %v3678 = vpop.permute.xlu0 %3677
    %3680 = vset.pattern.permute.xlu0 24
    %3681 = vperm.xlu0 %3680, %v1080
    %v3682 = vpop.permute.xlu0 %3681
    %3684 = vset.pattern.permute.xlu0 24
    %3685 = vperm.xlu0 %3684, %v1081
    %v3686 = vpop.permute.xlu0 %3685
    %3688 = vset.pattern.permute.xlu0 24
    %3689 = vperm.xlu0 %3688, %v1082
    %v3690 = vpop.permute.xlu0 %3689
    %3692 = vset.pattern.permute.xlu0 24
    %3693 = vperm.xlu0 %3692, %v1083
    %v3694 = vpop.permute.xlu0 %3693
    %3696 = vset.pattern.permute.xlu0 24
    %3697 = vperm.xlu0 %3696, %v1084
    %v3698 = vpop.permute.xlu0 %3697
    %3700 = vset.pattern.permute.xlu0 24
    %3701 = vperm.xlu0 %3700, %v1085
    %v3702 = vpop.permute.xlu0 %3701
    %3704 = vset.pattern.permute.xlu0 24
    %3705 = vperm.xlu0 %3704, %v1086
    %v3706 = vpop.permute.xlu0 %3705
    %3708 = vset.pattern.permute.xlu0 24
    %3709 = vperm.xlu0 %3708, %v1087
    %v3710 = vpop.permute.xlu0 %3709
    %3712 = vset.pattern.permute.xlu0 24
    %3713 = vperm.xlu0 %3712, %v1088
    %v3714 = vpop.permute.xlu0 %3713
    %3716 = vset.pattern.permute.xlu0 24
    %3717 = vperm.xlu0 %3716, %v1089
    %v3718 = vpop.permute.xlu0 %3717
    %3720 = vset.pattern.permute.xlu0 24
    %3721 = vperm.xlu0 %3720, %v1090
    %v3722 = vpop.permute.xlu0 %3721
    %3724 = vset.pattern.permute.xlu0 24
    %3725 = vperm.xlu0 %3724, %v1091
    %v3726 = vpop.permute.xlu0 %3725
    %3728 = vset.pattern.permute.xlu0 24
    %3729 = vperm.xlu0 %3728, %v1092
    %v3730 = vpop.permute.xlu0 %3729
    %3732 = vset.pattern.permute.xlu0 24
    %3733 = vperm.xlu0 %3732, %v1093
    %v3734 = vpop.permute.xlu0 %3733
    %3736 = vset.pattern.permute.xlu0 24
    %3737 = vperm.xlu0 %3736, %v1094
    %v3738 = vpop.permute.xlu0 %3737
    %3740 = vset.pattern.permute.xlu0 24
    %3741 = vperm.xlu0 %3740, %v1095
    %v3742 = vpop.permute.xlu0 %3741
    %3744 = vset.pattern.permute.xlu0 24
    %3745 = vperm.xlu0 %3744, %v1096
    %v3746 = vpop.permute.xlu0 %3745
    %3748 = vset.pattern.permute.xlu0 24
    %3749 = vperm.xlu0 %3748, %v1097
    %v3750 = vpop.permute.xlu0 %3749
    %3752 = vset.pattern.permute.xlu0 24
    %3753 = vperm.xlu0 %3752, %v1098
    %v3754 = vpop.permute.xlu0 %3753
    %3756 = vset.pattern.permute.xlu0 24
    %3757 = vperm.xlu0 %3756, %v1099
    %v3758 = vpop.permute.xlu0 %3757
    %3760 = vset.pattern.permute.xlu0 24
    %3761 = vperm.xlu0 %3760, %v1100
    %v3762 = vpop.permute.xlu0 %3761
    %3764 = vset.pattern.permute.xlu0 24
    %3765 = vperm.xlu0 %3764, %v1101
    %v3766 = vpop.permute.xlu0 %3765
    %3768 = vset.pattern.permute.xlu0 24
    %3769 = vperm.xlu0 %3768, %v1102
    %v3770 = vpop.permute.xlu0 %3769
    %3772 = vset.pattern.permute.xlu0 24
    %3773 = vperm.xlu0 %3772, %v1103
    %v3774 = vpop.permute.xlu0 %3773
    %3776 = vset.pattern.permute.xlu0 24
    %3777 = vperm.xlu0 %3776, %v1104
    %v3778 = vpop.permute.xlu0 %3777
    %3780 = vset.pattern.permute.xlu0 24
    %3781 = vperm.xlu0 %3780, %v1105
    %v3782 = vpop.permute.xlu0 %3781
    %3784 = vset.pattern.permute.xlu0 24
    %3785 = vperm.xlu0 %3784, %v1106
    %v3786 = vpop.permute.xlu0 %3785
    %3788 = vset.pattern.permute.xlu0 24
    %3789 = vperm.xlu0 %3788, %v1107
    %v3790 = vpop.permute.xlu0 %3789
    %3792 = vset.pattern.permute.xlu0 24
    %3793 = vperm.xlu0 %3792, %v1108
    %v3794 = vpop.permute.xlu0 %3793
    %3796 = vset.pattern.permute.xlu0 24
    %3797 = vperm.xlu0 %3796, %v1109
    %v3798 = vpop.permute.xlu0 %3797
    %3800 = vset.pattern.permute.xlu0 24
    %3801 = vperm.xlu0 %3800, %v1110
    %v3802 = vpop.permute.xlu0 %3801
    %v3804 = vmul.f32 %v3484, %v3550
    %v3805 = vmul.f32 %v3485, %v3554
    %v3806 = vmul.f32 %v3486, %v3558
    %v3807 = vmul.f32 %v3487, %v3562
    %v3808 = vmul.f32 %v3488, %v3566
    %v3809 = vmul.f32 %v3489, %v3570
    %v3810 = vmul.f32 %v3490, %v3574
    %v3811 = vmul.f32 %v3491, %v3578
    %v3812 = vmul.f32 %v3492, %v3582
    %v3813 = vmul.f32 %v3493, %v3586
    %v3814 = vmul.f32 %v3494, %v3590
    %v3815 = vmul.f32 %v3495, %v3594
    %v3816 = vmul.f32 %v3496, %v3598
    %v3817 = vmul.f32 %v3497, %v3602
    %v3818 = vmul.f32 %v3498, %v3606
    %v3819 = vmul.f32 %v3499, %v3610
    %v3820 = vmul.f32 %v3500, %v3614
    %v3821 = vmul.f32 %v3501, %v3618
    %v3822 = vmul.f32 %v3502, %v3622
    %v3823 = vmul.f32 %v3503, %v3626
    %v3824 = vmul.f32 %v3504, %v3630
    %v3825 = vmul.f32 %v3505, %v3634
    %v3826 = vmul.f32 %v3506, %v3638
    %v3827 = vmul.f32 %v3507, %v3642
    %v3828 = vmul.f32 %v3508, %v3646
    %v3829 = vmul.f32 %v3509, %v3650
    %v3830 = vmul.f32 %v3510, %v3654
    %v3831 = vmul.f32 %v3511, %v3658
    %v3832 = vmul.f32 %v3512, %v3662
    %v3833 = vmul.f32 %v3513, %v3666
    %v3834 = vmul.f32 %v3514, %v3670
    %v3835 = vmul.f32 %v3515, %v3674
    %v3836 = vmul.f32 %v3516, %v3678
    %v3837 = vmul.f32 %v3517, %v3682
    %v3838 = vmul.f32 %v3518, %v3686
    %v3839 = vmul.f32 %v3519, %v3690
    %v3840 = vmul.f32 %v3520, %v3694
    %v3841 = vmul.f32 %v3521, %v3698
    %v3842 = vmul.f32 %v3522, %v3702
    %v3843 = vmul.f32 %v3523, %v3706
    %v3844 = vmul.f32 %v3524, %v3710
    %v3845 = vmul.f32 %v3525, %v3714
    %v3846 = vmul.f32 %v3526, %v3718
    %v3847 = vmul.f32 %v3527, %v3722
    %v3848 = vmul.f32 %v3528, %v3726
    %v3849 = vmul.f32 %v3529, %v3730
    %v3850 = vmul.f32 %v3530, %v3734
    %v3851 = vmul.f32 %v3531, %v3738
    %v3852 = vmul.f32 %v3532, %v3742
    %v3853 = vmul.f32 %v3533, %v3746
    %v3854 = vmul.f32 %v3534, %v3750
    %v3855 = vmul.f32 %v3535, %v3754
    %v3856 = vmul.f32 %v3536, %v3758
    %v3857 = vmul.f32 %v3537, %v3762
    %v3858 = vmul.f32 %v3538, %v3766
    %v3859 = vmul.f32 %v3539, %v3770
    %v3860 = vmul.f32 %v3540, %v3774
    %v3861 = vmul.f32 %v3541, %v3778
    %v3862 = vmul.f32 %v3542, %v3782
    %v3863 = vmul.f32 %v3543, %v3786
    %v3864 = vmul.f32 %v3544, %v3790
    %v3865 = vmul.f32 %v3545, %v3794
    %v3866 = vmul.f32 %v3546, %v3798
    %v3867 = vmul.f32 %v3547, %v3802
    %v3868 = vpack.c.bf16 %v3805, %v3804
    %v3869 = vpack.c.bf16 %v3807, %v3806
    %v3870 = vpack.c.bf16 %v3809, %v3808
    %v3871 = vpack.c.bf16 %v3811, %v3810
    %v3872 = vpack.c.bf16 %v3813, %v3812
    %v3873 = vpack.c.bf16 %v3815, %v3814
    %v3874 = vpack.c.bf16 %v3817, %v3816
    %v3875 = vpack.c.bf16 %v3819, %v3818
    %v3876 = vpack.c.bf16 %v3821, %v3820
    %v3877 = vpack.c.bf16 %v3823, %v3822
    %v3878 = vpack.c.bf16 %v3825, %v3824
    %v3879 = vpack.c.bf16 %v3827, %v3826
    %v3880 = vpack.c.bf16 %v3829, %v3828
    %v3881 = vpack.c.bf16 %v3831, %v3830
    %v3882 = vpack.c.bf16 %v3833, %v3832
    %v3883 = vpack.c.bf16 %v3835, %v3834
    %v3884 = vpack.c.bf16 %v3837, %v3836
    %v3885 = vpack.c.bf16 %v3839, %v3838
    %v3886 = vpack.c.bf16 %v3841, %v3840
    %v3887 = vpack.c.bf16 %v3843, %v3842
    %v3888 = vpack.c.bf16 %v3845, %v3844
    %v3889 = vpack.c.bf16 %v3847, %v3846
    %v3890 = vpack.c.bf16 %v3849, %v3848
    %v3891 = vpack.c.bf16 %v3851, %v3850
    %v3892 = vpack.c.bf16 %v3853, %v3852
    %v3893 = vpack.c.bf16 %v3855, %v3854
    %v3894 = vpack.c.bf16 %v3857, %v3856
    %v3895 = vpack.c.bf16 %v3859, %v3858
    %v3896 = vpack.c.bf16 %v3861, %v3860
    %v3897 = vpack.c.bf16 %v3863, %v3862
    %v3898 = vpack.c.bf16 %v3865, %v3864
    %v3899 = vpack.c.bf16 %v3867, %v3866
    %s3900 = scalar_lea.vmem [#allocation12], 192
    %v3901 = vld [vmem:[%s3900] sm:$0xf]
    %v3902 = vld [vmem:[%s3900 + $0x4] sm:$0xf]
    %v3903 = vld [vmem:[%s3900 + $0x8] sm:$0xf]
    %v3904 = vld [vmem:[%s3900 + $0xc] sm:$0xf]
    %v3905 = vld [vmem:[%s3900 + $0x10] sm:$0xf]
    %v3906 = vld [vmem:[%s3900 + $0x14] sm:$0xf]
    %v3907 = vld [vmem:[%s3900 + $0x18] sm:$0xf]
    %v3908 = vld [vmem:[%s3900 + $0x1c] sm:$0xf]
    %v3909 = vld [vmem:[%s3900 + $0x20] sm:$0xf]
    %v3910 = vld [vmem:[%s3900 + $0x24] sm:$0xf]
    %v3911 = vld [vmem:[%s3900 + $0x28] sm:$0xf]
    %v3912 = vld [vmem:[%s3900 + $0x2c] sm:$0xf]
    %v3913 = vld [vmem:[%s3900 + $0x30] sm:$0xf]
    %v3914 = vld [vmem:[%s3900 + $0x34] sm:$0xf]
    %v3915 = vld [vmem:[%s3900 + $0x38] sm:$0xf]
    %v3916 = vld [vmem:[%s3900 + $0x3c] sm:$0xf]
    %v3933 = vunpack.c.l.b16 %v3901
    %v3934 = vunpack.c.l.b16 %v3902
    %v3935 = vunpack.c.l.b16 %v3903
    %v3936 = vunpack.c.l.b16 %v3904
    %v3937 = vunpack.c.l.b16 %v3905
    %v3938 = vunpack.c.l.b16 %v3906
    %v3939 = vunpack.c.l.b16 %v3907
    %v3940 = vunpack.c.l.b16 %v3908
    %v3941 = vunpack.c.l.b16 %v3909
    %v3942 = vunpack.c.l.b16 %v3910
    %v3943 = vunpack.c.l.b16 %v3911
    %v3944 = vunpack.c.l.b16 %v3912
    %v3945 = vunpack.c.l.b16 %v3913
    %v3946 = vunpack.c.l.b16 %v3914
    %v3947 = vunpack.c.l.b16 %v3915
    %v3948 = vunpack.c.l.b16 %v3916
    %v3949 = vpack.c.b16 %v3934, %v3933
    %v3950 = vpack.c.b16 %v3936, %v3935
    %v3951 = vpack.c.b16 %v3938, %v3937
    %v3952 = vpack.c.b16 %v3940, %v3939
    %v3953 = vpack.c.b16 %v3942, %v3941
    %v3954 = vpack.c.b16 %v3944, %v3943
    %v3955 = vpack.c.b16 %v3946, %v3945
    %v3956 = vpack.c.b16 %v3948, %v3947
    %3965 = vmatprep.subr.bf16.mxu0 0
    %3966 = vmatpush1.bf16.msra.mxu0 %v3956
    %3967 = vmatprep.subr.bf16.mxu0 0
    %3968 = vmatpush1.bf16.msra.mxu0 %v3955
    %3969 = vmatprep.subr.bf16.mxu0 0
    %3970 = vmatpush1.bf16.msra.mxu0 %v3954
    %3971 = vmatprep.subr.bf16.mxu0 0
    %3972 = vmatpush1.bf16.msra.mxu0 %v3953
    %3973 = vmatprep.subr.bf16.mxu0 0
    %3974 = vmatpush1.bf16.msra.mxu0 %v3952
    %3975 = vmatprep.subr.bf16.mxu0 0
    %3976 = vmatpush1.bf16.msra.mxu0 %v3951
    %3977 = vmatprep.subr.bf16.mxu0 0
    %3978 = vmatpush1.bf16.msra.mxu0 %v3950
    %3979 = vmatprep.subr.bf16.mxu0 0
    %3980 = vmatpush1.bf16.msra.mxu0 %v3949
    %3981 = vmatprep.subr.bf16.mxu0 0
    %3982 = vmatpush2.bf16.msra.mxu0 0
    %3983 = vmatprep.subr.bf16.mxu0 0
    %3984 = vmatpush2.bf16.msra.mxu0 0
    %3985 = vmatprep.subr.bf16.mxu0 0
    %3986 = vmatpush2.bf16.msra.mxu0 0
    %3987 = vmatprep.subr.bf16.mxu0 0
    %3988 = vmatpush2.bf16.msra.mxu0 0
    %3989 = vmatprep.subr.bf16.mxu0 0
    %3990 = vmatpush2.bf16.msra.mxu0 0
    %3991 = vmatprep.subr.bf16.mxu0 0
    %3992 = vmatpush2.bf16.msra.mxu0 0
    %3993 = vmatprep.subr.bf16.mxu0 0
    %3994 = vmatpush2.bf16.msra.mxu0 0
    %3995 = vmatprep.subr.bf16.mxu0 0
    %3996 = vmatpush2.bf16.msra.mxu0 0
    %3997 = vmatprep.mubr.bf16.mxu0 0
    %3998 = vmatmul.mubr.bf16.gmra.mxu0 %v3868
    %v3999 = vpop.f32.mrf.mxu0
    %v4000 = vadd.f32 0.0, %v3999
    %v4001 = vpop.f32.mrf.mxu0
    %v4002 = vpop.f32.mrf.mxu0
    %v4003 = vadd.f32 0.0, %v4002
    %v4004 = vpop.f32.mrf.mxu0
    %4005 = vmatprep.mubr.bf16.mxu0 0
    %4006 = vmatmul.mubr.bf16.gmra.mxu0 %v3869
    %v4007 = vpop.f32.mrf.mxu0
    %v4008 = vadd.f32 0.0, %v4007
    %v4009 = vpop.f32.mrf.mxu0
    %v4010 = vpop.f32.mrf.mxu0
    %v4011 = vadd.f32 0.0, %v4010
    %v4012 = vpop.f32.mrf.mxu0
    %4013 = vmatprep.mubr.bf16.mxu0 0
    %4014 = vmatmul.mubr.bf16.gmra.mxu0 %v3870
    %v4015 = vpop.f32.mrf.mxu0
    %v4016 = vadd.f32 0.0, %v4015
    %v4017 = vpop.f32.mrf.mxu0
    %v4018 = vpop.f32.mrf.mxu0
    %v4019 = vadd.f32 0.0, %v4018
    %v4020 = vpop.f32.mrf.mxu0
    %4021 = vmatprep.mubr.bf16.mxu0 0
    %4022 = vmatmul.mubr.bf16.gmra.mxu0 %v3871
    %v4023 = vpop.f32.mrf.mxu0
    %v4024 = vadd.f32 0.0, %v4023
    %v4025 = vpop.f32.mrf.mxu0
    %v4026 = vpop.f32.mrf.mxu0
    %v4027 = vadd.f32 0.0, %v4026
    %v4028 = vpop.f32.mrf.mxu0
    %4029 = vmatprep.mubr.bf16.mxu0 0
    %4030 = vmatmul.mubr.bf16.gmra.mxu0 %v3872
    %v4031 = vpop.f32.mrf.mxu0
    %v4032 = vadd.f32 0.0, %v4031
    %v4033 = vpop.f32.mrf.mxu0
    %v4034 = vpop.f32.mrf.mxu0
    %v4035 = vadd.f32 0.0, %v4034
    %v4036 = vpop.f32.mrf.mxu0
    %4037 = vmatprep.mubr.bf16.mxu0 0
    %4038 = vmatmul.mubr.bf16.gmra.mxu0 %v3873
    %v4039 = vpop.f32.mrf.mxu0
    %v4040 = vadd.f32 0.0, %v4039
    %v4041 = vpop.f32.mrf.mxu0
    %v4042 = vpop.f32.mrf.mxu0
    %v4043 = vadd.f32 0.0, %v4042
    %v4044 = vpop.f32.mrf.mxu0
    %4045 = vmatprep.mubr.bf16.mxu0 0
    %4046 = vmatmul.mubr.bf16.gmra.mxu0 %v3874
    %v4047 = vpop.f32.mrf.mxu0
    %v4048 = vadd.f32 0.0, %v4047
    %v4049 = vpop.f32.mrf.mxu0
    %v4050 = vpop.f32.mrf.mxu0
    %v4051 = vadd.f32 0.0, %v4050
    %v4052 = vpop.f32.mrf.mxu0
    %4053 = vmatprep.mubr.bf16.mxu0 0
    %4054 = vmatmul.mubr.bf16.gmra.mxu0 %v3875
    %v4055 = vpop.f32.mrf.mxu0
    %v4056 = vadd.f32 0.0, %v4055
    %v4057 = vpop.f32.mrf.mxu0
    %v4058 = vpop.f32.mrf.mxu0
    %v4059 = vadd.f32 0.0, %v4058
    %v4060 = vpop.f32.mrf.mxu0
    %4061 = vmatprep.mubr.bf16.mxu0 0
    %4062 = vmatmul.mubr.bf16.gmra.mxu0 %v3876
    %v4063 = vpop.f32.mrf.mxu0
    %v4064 = vadd.f32 0.0, %v4063
    %v4065 = vpop.f32.mrf.mxu0
    %v4066 = vpop.f32.mrf.mxu0
    %v4067 = vadd.f32 0.0, %v4066
    %v4068 = vpop.f32.mrf.mxu0
    %4069 = vmatprep.mubr.bf16.mxu0 0
    %4070 = vmatmul.mubr.bf16.gmra.mxu0 %v3877
    %v4071 = vpop.f32.mrf.mxu0
    %v4072 = vadd.f32 0.0, %v4071
    %v4073 = vpop.f32.mrf.mxu0
    %v4074 = vpop.f32.mrf.mxu0
    %v4075 = vadd.f32 0.0, %v4074
    %v4076 = vpop.f32.mrf.mxu0
    %4077 = vmatprep.mubr.bf16.mxu0 0
    %4078 = vmatmul.mubr.bf16.gmra.mxu0 %v3878
    %v4079 = vpop.f32.mrf.mxu0
    %v4080 = vadd.f32 0.0, %v4079
    %v4081 = vpop.f32.mrf.mxu0
    %v4082 = vpop.f32.mrf.mxu0
    %v4083 = vadd.f32 0.0, %v4082
    %v4084 = vpop.f32.mrf.mxu0
    %4085 = vmatprep.mubr.bf16.mxu0 0
    %4086 = vmatmul.mubr.bf16.gmra.mxu0 %v3879
    %v4087 = vpop.f32.mrf.mxu0
    %v4088 = vadd.f32 0.0, %v4087
    %v4089 = vpop.f32.mrf.mxu0
    %v4090 = vpop.f32.mrf.mxu0
    %v4091 = vadd.f32 0.0, %v4090
    %v4092 = vpop.f32.mrf.mxu0
    %4093 = vmatprep.mubr.bf16.mxu0 0
    %4094 = vmatmul.mubr.bf16.gmra.mxu0 %v3880
    %v4095 = vpop.f32.mrf.mxu0
    %v4096 = vadd.f32 0.0, %v4095
    %v4097 = vpop.f32.mrf.mxu0
    %v4098 = vpop.f32.mrf.mxu0
    %v4099 = vadd.f32 0.0, %v4098
    %v4100 = vpop.f32.mrf.mxu0
    %4101 = vmatprep.mubr.bf16.mxu0 0
    %4102 = vmatmul.mubr.bf16.gmra.mxu0 %v3881
    %v4103 = vpop.f32.mrf.mxu0
    %v4104 = vadd.f32 0.0, %v4103
    %v4105 = vpop.f32.mrf.mxu0
    %v4106 = vpop.f32.mrf.mxu0
    %v4107 = vadd.f32 0.0, %v4106
    %v4108 = vpop.f32.mrf.mxu0
    %4109 = vmatprep.mubr.bf16.mxu0 0
    %4110 = vmatmul.mubr.bf16.gmra.mxu0 %v3882
    %v4111 = vpop.f32.mrf.mxu0
    %v4112 = vadd.f32 0.0, %v4111
    %v4113 = vpop.f32.mrf.mxu0
    %v4114 = vpop.f32.mrf.mxu0
    %v4115 = vadd.f32 0.0, %v4114
    %v4116 = vpop.f32.mrf.mxu0
    %4117 = vmatprep.mubr.bf16.mxu0 0
    %4118 = vmatmul.mubr.bf16.gmra.mxu0 %v3883
    %v4119 = vpop.f32.mrf.mxu0
    %v4120 = vadd.f32 0.0, %v4119
    %v4121 = vpop.f32.mrf.mxu0
    %v4122 = vpop.f32.mrf.mxu0
    %v4123 = vadd.f32 0.0, %v4122
    %v4124 = vpop.f32.mrf.mxu0
    %4125 = vmatprep.mubr.bf16.mxu0 0
    %4126 = vmatmul.mubr.bf16.gmra.mxu0 %v3884
    %v4127 = vpop.f32.mrf.mxu0
    %v4128 = vadd.f32 0.0, %v4127
    %v4129 = vpop.f32.mrf.mxu0
    %v4130 = vpop.f32.mrf.mxu0
    %v4131 = vadd.f32 0.0, %v4130
    %v4132 = vpop.f32.mrf.mxu0
    %4133 = vmatprep.mubr.bf16.mxu0 0
    %4134 = vmatmul.mubr.bf16.gmra.mxu0 %v3885
    %v4135 = vpop.f32.mrf.mxu0
    %v4136 = vadd.f32 0.0, %v4135
    %v4137 = vpop.f32.mrf.mxu0
    %v4138 = vpop.f32.mrf.mxu0
    %v4139 = vadd.f32 0.0, %v4138
    %v4140 = vpop.f32.mrf.mxu0
    %4141 = vmatprep.mubr.bf16.mxu0 0
    %4142 = vmatmul.mubr.bf16.gmra.mxu0 %v3886
    %v4143 = vpop.f32.mrf.mxu0
    %v4144 = vadd.f32 0.0, %v4143
    %v4145 = vpop.f32.mrf.mxu0
    %v4146 = vpop.f32.mrf.mxu0
    %v4147 = vadd.f32 0.0, %v4146
    %v4148 = vpop.f32.mrf.mxu0
    %4149 = vmatprep.mubr.bf16.mxu0 0
    %4150 = vmatmul.mubr.bf16.gmra.mxu0 %v3887
    %v4151 = vpop.f32.mrf.mxu0
    %v4152 = vadd.f32 0.0, %v4151
    %v4153 = vpop.f32.mrf.mxu0
    %v4154 = vpop.f32.mrf.mxu0
    %v4155 = vadd.f32 0.0, %v4154
    %v4156 = vpop.f32.mrf.mxu0
    %4157 = vmatprep.mubr.bf16.mxu0 0
    %4158 = vmatmul.mubr.bf16.gmra.mxu0 %v3888
    %v4159 = vpop.f32.mrf.mxu0
    %v4160 = vadd.f32 0.0, %v4159
    %v4161 = vpop.f32.mrf.mxu0
    %v4162 = vpop.f32.mrf.mxu0
    %v4163 = vadd.f32 0.0, %v4162
    %v4164 = vpop.f32.mrf.mxu0
    %4165 = vmatprep.mubr.bf16.mxu0 0
    %4166 = vmatmul.mubr.bf16.gmra.mxu0 %v3889
    %v4167 = vpop.f32.mrf.mxu0
    %v4168 = vadd.f32 0.0, %v4167
    %v4169 = vpop.f32.mrf.mxu0
    %v4170 = vpop.f32.mrf.mxu0
    %v4171 = vadd.f32 0.0, %v4170
    %v4172 = vpop.f32.mrf.mxu0
    %4173 = vmatprep.mubr.bf16.mxu0 0
    %4174 = vmatmul.mubr.bf16.gmra.mxu0 %v3890
    %v4175 = vpop.f32.mrf.mxu0
    %v4176 = vadd.f32 0.0, %v4175
    %v4177 = vpop.f32.mrf.mxu0
    %v4178 = vpop.f32.mrf.mxu0
    %v4179 = vadd.f32 0.0, %v4178
    %v4180 = vpop.f32.mrf.mxu0
    %4181 = vmatprep.mubr.bf16.mxu0 0
    %4182 = vmatmul.mubr.bf16.gmra.mxu0 %v3891
    %v4183 = vpop.f32.mrf.mxu0
    %v4184 = vadd.f32 0.0, %v4183
    %v4185 = vpop.f32.mrf.mxu0
    %v4186 = vpop.f32.mrf.mxu0
    %v4187 = vadd.f32 0.0, %v4186
    %v4188 = vpop.f32.mrf.mxu0
    %4189 = vmatprep.mubr.bf16.mxu0 0
    %4190 = vmatmul.mubr.bf16.gmra.mxu0 %v3892
    %v4191 = vpop.f32.mrf.mxu0
    %v4192 = vadd.f32 0.0, %v4191
    %v4193 = vpop.f32.mrf.mxu0
    %v4194 = vpop.f32.mrf.mxu0
    %v4195 = vadd.f32 0.0, %v4194
    %v4196 = vpop.f32.mrf.mxu0
    %4197 = vmatprep.mubr.bf16.mxu0 0
    %4198 = vmatmul.mubr.bf16.gmra.mxu0 %v3893
    %v4199 = vpop.f32.mrf.mxu0
    %v4200 = vadd.f32 0.0, %v4199
    %v4201 = vpop.f32.mrf.mxu0
    %v4202 = vpop.f32.mrf.mxu0
    %v4203 = vadd.f32 0.0, %v4202
    %v4204 = vpop.f32.mrf.mxu0
    %4205 = vmatprep.mubr.bf16.mxu0 0
    %4206 = vmatmul.mubr.bf16.gmra.mxu0 %v3894
    %v4207 = vpop.f32.mrf.mxu0
    %v4208 = vadd.f32 0.0, %v4207
    %v4209 = vpop.f32.mrf.mxu0
    %v4210 = vpop.f32.mrf.mxu0
    %v4211 = vadd.f32 0.0, %v4210
    %v4212 = vpop.f32.mrf.mxu0
    %4213 = vmatprep.mubr.bf16.mxu0 0
    %4214 = vmatmul.mubr.bf16.gmra.mxu0 %v3895
    %v4215 = vpop.f32.mrf.mxu0
    %v4216 = vadd.f32 0.0, %v4215
    %v4217 = vpop.f32.mrf.mxu0
    %v4218 = vpop.f32.mrf.mxu0
    %v4219 = vadd.f32 0.0, %v4218
    %v4220 = vpop.f32.mrf.mxu0
    %4221 = vmatprep.mubr.bf16.mxu0 0
    %4222 = vmatmul.mubr.bf16.gmra.mxu0 %v3896
    %v4223 = vpop.f32.mrf.mxu0
    %v4224 = vadd.f32 0.0, %v4223
    %v4225 = vpop.f32.mrf.mxu0
    %v4226 = vpop.f32.mrf.mxu0
    %v4227 = vadd.f32 0.0, %v4226
    %v4228 = vpop.f32.mrf.mxu0
    %4229 = vmatprep.mubr.bf16.mxu0 0
    %4230 = vmatmul.mubr.bf16.gmra.mxu0 %v3897
    %v4231 = vpop.f32.mrf.mxu0
    %v4232 = vadd.f32 0.0, %v4231
    %v4233 = vpop.f32.mrf.mxu0
    %v4234 = vpop.f32.mrf.mxu0
    %v4235 = vadd.f32 0.0, %v4234
    %v4236 = vpop.f32.mrf.mxu0
    %4237 = vmatprep.mubr.bf16.mxu0 0
    %4238 = vmatmul.mubr.bf16.gmra.mxu0 %v3898
    %v4239 = vpop.f32.mrf.mxu0
    %v4240 = vadd.f32 0.0, %v4239
    %v4241 = vpop.f32.mrf.mxu0
    %v4242 = vpop.f32.mrf.mxu0
    %v4243 = vadd.f32 0.0, %v4242
    %v4244 = vpop.f32.mrf.mxu0
    %4245 = vmatprep.mubr.bf16.mxu0 0
    %4246 = vmatmul.mubr.bf16.gmra.mxu0 %v3899
    %v4247 = vpop.f32.mrf.mxu0
    %v4248 = vadd.f32 0.0, %v4247
    %v4249 = vpop.f32.mrf.mxu0
    %v4250 = vpop.f32.mrf.mxu0
    %v4251 = vadd.f32 0.0, %v4250
    %v4252 = vpop.f32.mrf.mxu0
    %4253 = vdwg.mxu0
    %v4254 = vadd.f32 %v3420, %v4000
    %v4255 = vadd.f32 %v3421, %v4003
    %v4256 = vadd.f32 %v3422, %v4008
    %v4257 = vadd.f32 %v3423, %v4011
    %v4258 = vadd.f32 %v3424, %v4016
    %v4259 = vadd.f32 %v3425, %v4019
    %v4260 = vadd.f32 %v3426, %v4024
    %v4261 = vadd.f32 %v3427, %v4027
    %v4262 = vadd.f32 %v3428, %v4032
    %v4263 = vadd.f32 %v3429, %v4035
    %v4264 = vadd.f32 %v3430, %v4040
    %v4265 = vadd.f32 %v3431, %v4043
    %v4266 = vadd.f32 %v3432, %v4048
    %v4267 = vadd.f32 %v3433, %v4051
    %v4268 = vadd.f32 %v3434, %v4056
    %v4269 = vadd.f32 %v3435, %v4059
    %v4270 = vadd.f32 %v3436, %v4064
    %v4271 = vadd.f32 %v3437, %v4067
    %v4272 = vadd.f32 %v3438, %v4072
    %v4273 = vadd.f32 %v3439, %v4075
    %v4274 = vadd.f32 %v3440, %v4080
    %v4275 = vadd.f32 %v3441, %v4083
    %v4276 = vadd.f32 %v3442, %v4088
    %v4277 = vadd.f32 %v3443, %v4091
    %v4278 = vadd.f32 %v3444, %v4096
    %v4279 = vadd.f32 %v3445, %v4099
    %v4280 = vadd.f32 %v3446, %v4104
    %v4281 = vadd.f32 %v3447, %v4107
    %v4282 = vadd.f32 %v3448, %v4112
    %v4283 = vadd.f32 %v3449, %v4115
    %v4284 = vadd.f32 %v3450, %v4120
    %v4285 = vadd.f32 %v3451, %v4123
    %v4286 = vadd.f32 %v3452, %v4128
    %v4287 = vadd.f32 %v3453, %v4131
    %v4288 = vadd.f32 %v3454, %v4136
    %v4289 = vadd.f32 %v3455, %v4139
    %v4290 = vadd.f32 %v3456, %v4144
    %v4291 = vadd.f32 %v3457, %v4147
    %v4292 = vadd.f32 %v3458, %v4152
    %v4293 = vadd.f32 %v3459, %v4155
    %v4294 = vadd.f32 %v3460, %v4160
    %v4295 = vadd.f32 %v3461, %v4163
    %v4296 = vadd.f32 %v3462, %v4168
    %v4297 = vadd.f32 %v3463, %v4171
    %v4298 = vadd.f32 %v3464, %v4176
    %v4299 = vadd.f32 %v3465, %v4179
    %v4300 = vadd.f32 %v3466, %v4184
    %v4301 = vadd.f32 %v3467, %v4187
    %v4302 = vadd.f32 %v3468, %v4192
    %v4303 = vadd.f32 %v3469, %v4195
    %v4304 = vadd.f32 %v3470, %v4200
    %v4305 = vadd.f32 %v3471, %v4203
    %v4306 = vadd.f32 %v3472, %v4208
    %v4307 = vadd.f32 %v3473, %v4211
    %v4308 = vadd.f32 %v3474, %v4216
    %v4309 = vadd.f32 %v3475, %v4219
    %v4310 = vadd.f32 %v3476, %v4224
    %v4311 = vadd.f32 %v3477, %v4227
    %v4312 = vadd.f32 %v3478, %v4232
    %v4313 = vadd.f32 %v3479, %v4235
    %v4314 = vadd.f32 %v3480, %v4240
    %v4315 = vadd.f32 %v3481, %v4243
    %v4316 = vadd.f32 %v3482, %v4248
    %v4317 = vadd.f32 %v3483, %v4251
    %v4318 = vld [vmem:[#allocation2 + $0x18] sm:$0xff]
    %v4319 = vld [vmem:[#allocation2 + $0x20] sm:$0xff]
    %v4320 = vld [vmem:[#allocation2 + $0x28] sm:$0xff]
    %v4321 = vld [vmem:[#allocation2 + $0x30] sm:$0xff]
    %v4322 = vld [vmem:[#allocation2 + $0x38] sm:$0xff]
    %v4323 = vld [vmem:[#allocation2 + $0x40] sm:$0xff]
    %v4324 = vld [vmem:[#allocation2 + $0x48] sm:$0xff]
    %v4325 = vld [vmem:[#allocation2 + $0x50] sm:$0xff]
    %v4326 = vld [vmem:[#allocation2 + $0x58] sm:$0xff]
    %v4327 = vld [vmem:[#allocation2 + $0x60] sm:$0xff]
    %v4328 = vld [vmem:[#allocation2 + $0x68] sm:$0xff]
    %v4329 = vld [vmem:[#allocation2 + $0x70] sm:$0xff]
    %v4330 = vld [vmem:[#allocation2 + $0x78] sm:$0xff]
    %v4331 = vld [vmem:[#allocation2 + $0x80] sm:$0xff]
    %v4332 = vld [vmem:[#allocation2 + $0x88] sm:$0xff]
    %v4333 = vld [vmem:[#allocation2 + $0x90] sm:$0xff]
    %v4334 = vld [vmem:[#allocation2 + $0x98] sm:$0xff]
    %v4335 = vld [vmem:[#allocation2 + $0xa0] sm:$0xff]
    %v4336 = vld [vmem:[#allocation2 + $0xa8] sm:$0xff]
    %v4337 = vld [vmem:[#allocation2 + $0xb0] sm:$0xff]
    %v4338 = vld [vmem:[#allocation2 + $0xb8] sm:$0xff]
    %v4339 = vld [vmem:[#allocation2 + $0xc0] sm:$0xff]
    %v4340 = vld [vmem:[#allocation2 + $0xc8] sm:$0xff]
    %v4341 = vld [vmem:[#allocation2 + $0xd0] sm:$0xff]
    %v4342 = vld [vmem:[#allocation2 + $0xd8] sm:$0xff]
    %v4343 = vld [vmem:[#allocation2 + $0xe0] sm:$0xff]
    %v4344 = vld [vmem:[#allocation2 + $0xe8] sm:$0xff]
    %v4345 = vld [vmem:[#allocation2 + $0xf0] sm:$0xff]
    %v4346 = vld [vmem:[#allocation2 + $0xf8] sm:$0xff]
    %v4347 = vld [vmem:[#allocation2 + $0x100] sm:$0xff]
    %v4348 = vld [vmem:[#allocation2 + $0x108] sm:$0xff]
    %v4349 = vld [vmem:[#allocation2 + $0x110] sm:$0xff]
    %v4350 = vld [vmem:[#allocation2 + $0x118] sm:$0xff]
    %v4351 = vld [vmem:[#allocation2 + $0x120] sm:$0xff]
    %v4352 = vld [vmem:[#allocation2 + $0x128] sm:$0xff]
    %v4353 = vld [vmem:[#allocation2 + $0x130] sm:$0xff]
    %v4354 = vld [vmem:[#allocation2 + $0x138] sm:$0xff]
    %v4355 = vld [vmem:[#allocation2 + $0x140] sm:$0xff]
    %v4356 = vld [vmem:[#allocation2 + $0x148] sm:$0xff]
    %v4357 = vld [vmem:[#allocation2 + $0x150] sm:$0xff]
    %v4358 = vld [vmem:[#allocation2 + $0x158] sm:$0xff]
    %v4359 = vld [vmem:[#allocation2 + $0x160] sm:$0xff]
    %v4360 = vld [vmem:[#allocation2 + $0x168] sm:$0xff]
    %v4361 = vld [vmem:[#allocation2 + $0x170] sm:$0xff]
    %v4362 = vld [vmem:[#allocation2 + $0x178] sm:$0xff]
    %v4363 = vld [vmem:[#allocation2 + $0x180] sm:$0xff]
    %v4364 = vld [vmem:[#allocation2 + $0x188] sm:$0xff]
    %v4365 = vld [vmem:[#allocation2 + $0x190] sm:$0xff]
    %v4366 = vld [vmem:[#allocation2 + $0x198] sm:$0xff]
    %v4367 = vld [vmem:[#allocation2 + $0x1a0] sm:$0xff]
    %v4368 = vld [vmem:[#allocation2 + $0x1a8] sm:$0xff]
    %v4369 = vld [vmem:[#allocation2 + $0x1b0] sm:$0xff]
    %v4370 = vld [vmem:[#allocation2 + $0x1b8] sm:$0xff]
    %v4371 = vld [vmem:[#allocation2 + $0x1c0] sm:$0xff]
    %v4372 = vld [vmem:[#allocation2 + $0x1c8] sm:$0xff]
    %v4373 = vld [vmem:[#allocation2 + $0x1d0] sm:$0xff]
    %v4374 = vld [vmem:[#allocation2 + $0x1d8] sm:$0xff]
    %v4375 = vld [vmem:[#allocation2 + $0x1e0] sm:$0xff]
    %v4376 = vld [vmem:[#allocation2 + $0x1e8] sm:$0xff]
    %v4377 = vld [vmem:[#allocation2 + $0x1f0] sm:$0xff]
    %v4378 = vld [vmem:[#allocation2 + $0x1f8] sm:$0xff]
    %v4379 = vld [vmem:[#allocation2 + $0x200] sm:$0xff]
    %v4380 = vld [vmem:[#allocation2 + $0x208] sm:$0xff]
    %v4381 = vld [vmem:[#allocation2 + $0x210] sm:$0xff]
    %v4382 = vpack.c.bf16 %v4319, %v4318
    %v4383 = vpack.c.bf16 %v4321, %v4320
    %v4384 = vpack.c.bf16 %v4323, %v4322
    %v4385 = vpack.c.bf16 %v4325, %v4324
    %v4386 = vpack.c.bf16 %v4327, %v4326
    %v4387 = vpack.c.bf16 %v4329, %v4328
    %v4388 = vpack.c.bf16 %v4331, %v4330
    %v4389 = vpack.c.bf16 %v4333, %v4332
    %v4390 = vpack.c.bf16 %v4335, %v4334
    %v4391 = vpack.c.bf16 %v4337, %v4336
    %v4392 = vpack.c.bf16 %v4339, %v4338
    %v4393 = vpack.c.bf16 %v4341, %v4340
    %v4394 = vpack.c.bf16 %v4343, %v4342
    %v4395 = vpack.c.bf16 %v4345, %v4344
    %v4396 = vpack.c.bf16 %v4347, %v4346
    %v4397 = vpack.c.bf16 %v4349, %v4348
    %v4398 = vpack.c.bf16 %v4351, %v4350
    %v4399 = vpack.c.bf16 %v4353, %v4352
    %v4400 = vpack.c.bf16 %v4355, %v4354
    %v4401 = vpack.c.bf16 %v4357, %v4356
    %v4402 = vpack.c.bf16 %v4359, %v4358
    %v4403 = vpack.c.bf16 %v4361, %v4360
    %v4404 = vpack.c.bf16 %v4363, %v4362
    %v4405 = vpack.c.bf16 %v4365, %v4364
    %v4406 = vpack.c.bf16 %v4367, %v4366
    %v4407 = vpack.c.bf16 %v4369, %v4368
    %v4408 = vpack.c.bf16 %v4371, %v4370
    %v4409 = vpack.c.bf16 %v4373, %v4372
    %v4410 = vpack.c.bf16 %v4375, %v4374
    %v4411 = vpack.c.bf16 %v4377, %v4376
    %v4412 = vpack.c.bf16 %v4379, %v4378
    %v4413 = vpack.c.bf16 %v4381, %v4380
    %s4414 = scalar_lea.vmem [#allocation12], 256
    %v4415 = vld [vmem:[%s4414] sm:$0xf]
    %v4416 = vld [vmem:[%s4414 + $0x4] sm:$0xf]
    %v4417 = vld [vmem:[%s4414 + $0x8] sm:$0xf]
    %v4418 = vld [vmem:[%s4414 + $0xc] sm:$0xf]
    %v4419 = vld [vmem:[%s4414 + $0x10] sm:$0xf]
    %v4420 = vld [vmem:[%s4414 + $0x14] sm:$0xf]
    %v4421 = vld [vmem:[%s4414 + $0x18] sm:$0xf]
    %v4422 = vld [vmem:[%s4414 + $0x1c] sm:$0xf]
    %v4423 = vld [vmem:[%s4414 + $0x20] sm:$0xf]
    %v4424 = vld [vmem:[%s4414 + $0x24] sm:$0xf]
    %v4425 = vld [vmem:[%s4414 + $0x28] sm:$0xf]
    %v4426 = vld [vmem:[%s4414 + $0x2c] sm:$0xf]
    %v4427 = vld [vmem:[%s4414 + $0x30] sm:$0xf]
    %v4428 = vld [vmem:[%s4414 + $0x34] sm:$0xf]
    %v4429 = vld [vmem:[%s4414 + $0x38] sm:$0xf]
    %v4430 = vld [vmem:[%s4414 + $0x3c] sm:$0xf]
    %v4447 = vunpack.c.l.b16 %v4415
    %v4448 = vunpack.c.l.b16 %v4416
    %v4449 = vunpack.c.l.b16 %v4417
    %v4450 = vunpack.c.l.b16 %v4418
    %v4451 = vunpack.c.l.b16 %v4419
    %v4452 = vunpack.c.l.b16 %v4420
    %v4453 = vunpack.c.l.b16 %v4421
    %v4454 = vunpack.c.l.b16 %v4422
    %v4455 = vunpack.c.l.b16 %v4423
    %v4456 = vunpack.c.l.b16 %v4424
    %v4457 = vunpack.c.l.b16 %v4425
    %v4458 = vunpack.c.l.b16 %v4426
    %v4459 = vunpack.c.l.b16 %v4427
    %v4460 = vunpack.c.l.b16 %v4428
    %v4461 = vunpack.c.l.b16 %v4429
    %v4462 = vunpack.c.l.b16 %v4430
    %v4463 = vpack.c.b16 %v4448, %v4447
    %v4464 = vpack.c.b16 %v4450, %v4449
    %v4465 = vpack.c.b16 %v4452, %v4451
    %v4466 = vpack.c.b16 %v4454, %v4453
    %v4467 = vpack.c.b16 %v4456, %v4455
    %v4468 = vpack.c.b16 %v4458, %v4457
    %v4469 = vpack.c.b16 %v4460, %v4459
    %v4470 = vpack.c.b16 %v4462, %v4461
    %4479 = vmatprep.subr.bf16.mxu0 0
    %4480 = vmatpush1.bf16.msra.mxu0 %v4470
    %4481 = vmatprep.subr.bf16.mxu0 0
    %4482 = vmatpush1.bf16.msra.mxu0 %v4469
    %4483 = vmatprep.subr.bf16.mxu0 0
    %4484 = vmatpush1.bf16.msra.mxu0 %v4468
    %4485 = vmatprep.subr.bf16.mxu0 0
    %4486 = vmatpush1.bf16.msra.mxu0 %v4467
    %4487 = vmatprep.subr.bf16.mxu0 0
    %4488 = vmatpush1.bf16.msra.mxu0 %v4466
    %4489 = vmatprep.subr.bf16.mxu0 0
    %4490 = vmatpush1.bf16.msra.mxu0 %v4465
    %4491 = vmatprep.subr.bf16.mxu0 0
    %4492 = vmatpush1.bf16.msra.mxu0 %v4464
    %4493 = vmatprep.subr.bf16.mxu0 0
    %4494 = vmatpush1.bf16.msra.mxu0 %v4463
    %4495 = vmatprep.subr.bf16.mxu0 0
    %4496 = vmatpush2.bf16.msra.mxu0 0
    %4497 = vmatprep.subr.bf16.mxu0 0
    %4498 = vmatpush2.bf16.msra.mxu0 0
    %4499 = vmatprep.subr.bf16.mxu0 0
    %4500 = vmatpush2.bf16.msra.mxu0 0
    %4501 = vmatprep.subr.bf16.mxu0 0
    %4502 = vmatpush2.bf16.msra.mxu0 0
    %4503 = vmatprep.subr.bf16.mxu0 0
    %4504 = vmatpush2.bf16.msra.mxu0 0
    %4505 = vmatprep.subr.bf16.mxu0 0
    %4506 = vmatpush2.bf16.msra.mxu0 0
    %4507 = vmatprep.subr.bf16.mxu0 0
    %4508 = vmatpush2.bf16.msra.mxu0 0
    %4509 = vmatprep.subr.bf16.mxu0 0
    %4510 = vmatpush2.bf16.msra.mxu0 0
    %4511 = vmatprep.mubr.bf16.mxu0 0
    %4512 = vmatmul.mubr.bf16.gmra.mxu0 %v4382
    %v4513 = vpop.f32.mrf.mxu0
    %v4514 = vadd.f32 0.0, %v4513
    %v4515 = vpop.f32.mrf.mxu0
    %v4516 = vpop.f32.mrf.mxu0
    %v4517 = vadd.f32 0.0, %v4516
    %v4518 = vpop.f32.mrf.mxu0
    %4519 = vmatprep.mubr.bf16.mxu0 0
    %4520 = vmatmul.mubr.bf16.gmra.mxu0 %v4383
    %v4521 = vpop.f32.mrf.mxu0
    %v4522 = vadd.f32 0.0, %v4521
    %v4523 = vpop.f32.mrf.mxu0
    %v4524 = vpop.f32.mrf.mxu0
    %v4525 = vadd.f32 0.0, %v4524
    %v4526 = vpop.f32.mrf.mxu0
    %4527 = vmatprep.mubr.bf16.mxu0 0
    %4528 = vmatmul.mubr.bf16.gmra.mxu0 %v4384
    %v4529 = vpop.f32.mrf.mxu0
    %v4530 = vadd.f32 0.0, %v4529
    %v4531 = vpop.f32.mrf.mxu0
    %v4532 = vpop.f32.mrf.mxu0
    %v4533 = vadd.f32 0.0, %v4532
    %v4534 = vpop.f32.mrf.mxu0
    %4535 = vmatprep.mubr.bf16.mxu0 0
    %4536 = vmatmul.mubr.bf16.gmra.mxu0 %v4385
    %v4537 = vpop.f32.mrf.mxu0
    %v4538 = vadd.f32 0.0, %v4537
    %v4539 = vpop.f32.mrf.mxu0
    %v4540 = vpop.f32.mrf.mxu0
    %v4541 = vadd.f32 0.0, %v4540
    %v4542 = vpop.f32.mrf.mxu0
    %4543 = vmatprep.mubr.bf16.mxu0 0
    %4544 = vmatmul.mubr.bf16.gmra.mxu0 %v4386
    %v4545 = vpop.f32.mrf.mxu0
    %v4546 = vadd.f32 0.0, %v4545
    %v4547 = vpop.f32.mrf.mxu0
    %v4548 = vpop.f32.mrf.mxu0
    %v4549 = vadd.f32 0.0, %v4548
    %v4550 = vpop.f32.mrf.mxu0
    %4551 = vmatprep.mubr.bf16.mxu0 0
    %4552 = vmatmul.mubr.bf16.gmra.mxu0 %v4387
    %v4553 = vpop.f32.mrf.mxu0
    %v4554 = vadd.f32 0.0, %v4553
    %v4555 = vpop.f32.mrf.mxu0
    %v4556 = vpop.f32.mrf.mxu0
    %v4557 = vadd.f32 0.0, %v4556
    %v4558 = vpop.f32.mrf.mxu0
    %4559 = vmatprep.mubr.bf16.mxu0 0
    %4560 = vmatmul.mubr.bf16.gmra.mxu0 %v4388
    %v4561 = vpop.f32.mrf.mxu0
    %v4562 = vadd.f32 0.0, %v4561
    %v4563 = vpop.f32.mrf.mxu0
    %v4564 = vpop.f32.mrf.mxu0
    %v4565 = vadd.f32 0.0, %v4564
    %v4566 = vpop.f32.mrf.mxu0
    %4567 = vmatprep.mubr.bf16.mxu0 0
    %4568 = vmatmul.mubr.bf16.gmra.mxu0 %v4389
    %v4569 = vpop.f32.mrf.mxu0
    %v4570 = vadd.f32 0.0, %v4569
    %v4571 = vpop.f32.mrf.mxu0
    %v4572 = vpop.f32.mrf.mxu0
    %v4573 = vadd.f32 0.0, %v4572
    %v4574 = vpop.f32.mrf.mxu0
    %4575 = vmatprep.mubr.bf16.mxu0 0
    %4576 = vmatmul.mubr.bf16.gmra.mxu0 %v4390
    %v4577 = vpop.f32.mrf.mxu0
    %v4578 = vadd.f32 0.0, %v4577
    %v4579 = vpop.f32.mrf.mxu0
    %v4580 = vpop.f32.mrf.mxu0
    %v4581 = vadd.f32 0.0, %v4580
    %v4582 = vpop.f32.mrf.mxu0
    %4583 = vmatprep.mubr.bf16.mxu0 0
    %4584 = vmatmul.mubr.bf16.gmra.mxu0 %v4391
    %v4585 = vpop.f32.mrf.mxu0
    %v4586 = vadd.f32 0.0, %v4585
    %v4587 = vpop.f32.mrf.mxu0
    %v4588 = vpop.f32.mrf.mxu0
    %v4589 = vadd.f32 0.0, %v4588
    %v4590 = vpop.f32.mrf.mxu0
    %4591 = vmatprep.mubr.bf16.mxu0 0
    %4592 = vmatmul.mubr.bf16.gmra.mxu0 %v4392
    %v4593 = vpop.f32.mrf.mxu0
    %v4594 = vadd.f32 0.0, %v4593
    %v4595 = vpop.f32.mrf.mxu0
    %v4596 = vpop.f32.mrf.mxu0
    %v4597 = vadd.f32 0.0, %v4596
    %v4598 = vpop.f32.mrf.mxu0
    %4599 = vmatprep.mubr.bf16.mxu0 0
    %4600 = vmatmul.mubr.bf16.gmra.mxu0 %v4393
    %v4601 = vpop.f32.mrf.mxu0
    %v4602 = vadd.f32 0.0, %v4601
    %v4603 = vpop.f32.mrf.mxu0
    %v4604 = vpop.f32.mrf.mxu0
    %v4605 = vadd.f32 0.0, %v4604
    %v4606 = vpop.f32.mrf.mxu0
    %4607 = vmatprep.mubr.bf16.mxu0 0
    %4608 = vmatmul.mubr.bf16.gmra.mxu0 %v4394
    %v4609 = vpop.f32.mrf.mxu0
    %v4610 = vadd.f32 0.0, %v4609
    %v4611 = vpop.f32.mrf.mxu0
    %v4612 = vpop.f32.mrf.mxu0
    %v4613 = vadd.f32 0.0, %v4612
    %v4614 = vpop.f32.mrf.mxu0
    %4615 = vmatprep.mubr.bf16.mxu0 0
    %4616 = vmatmul.mubr.bf16.gmra.mxu0 %v4395
    %v4617 = vpop.f32.mrf.mxu0
    %v4618 = vadd.f32 0.0, %v4617
    %v4619 = vpop.f32.mrf.mxu0
    %v4620 = vpop.f32.mrf.mxu0
    %v4621 = vadd.f32 0.0, %v4620
    %v4622 = vpop.f32.mrf.mxu0
    %4623 = vmatprep.mubr.bf16.mxu0 0
    %4624 = vmatmul.mubr.bf16.gmra.mxu0 %v4396
    %v4625 = vpop.f32.mrf.mxu0
    %v4626 = vadd.f32 0.0, %v4625
    %v4627 = vpop.f32.mrf.mxu0
    %v4628 = vpop.f32.mrf.mxu0
    %v4629 = vadd.f32 0.0, %v4628
    %v4630 = vpop.f32.mrf.mxu0
    %4631 = vmatprep.mubr.bf16.mxu0 0
    %4632 = vmatmul.mubr.bf16.gmra.mxu0 %v4397
    %v4633 = vpop.f32.mrf.mxu0
    %v4634 = vadd.f32 0.0, %v4633
    %v4635 = vpop.f32.mrf.mxu0
    %v4636 = vpop.f32.mrf.mxu0
    %v4637 = vadd.f32 0.0, %v4636
    %v4638 = vpop.f32.mrf.mxu0
    %4639 = vmatprep.mubr.bf16.mxu0 0
    %4640 = vmatmul.mubr.bf16.gmra.mxu0 %v4398
    %v4641 = vpop.f32.mrf.mxu0
    %v4642 = vadd.f32 0.0, %v4641
    %v4643 = vpop.f32.mrf.mxu0
    %v4644 = vpop.f32.mrf.mxu0
    %v4645 = vadd.f32 0.0, %v4644
    %v4646 = vpop.f32.mrf.mxu0
    %4647 = vmatprep.mubr.bf16.mxu0 0
    %4648 = vmatmul.mubr.bf16.gmra.mxu0 %v4399
    %v4649 = vpop.f32.mrf.mxu0
    %v4650 = vadd.f32 0.0, %v4649
    %v4651 = vpop.f32.mrf.mxu0
    %v4652 = vpop.f32.mrf.mxu0
    %v4653 = vadd.f32 0.0, %v4652
    %v4654 = vpop.f32.mrf.mxu0
    %4655 = vmatprep.mubr.bf16.mxu0 0
    %4656 = vmatmul.mubr.bf16.gmra.mxu0 %v4400
    %v4657 = vpop.f32.mrf.mxu0
    %v4658 = vadd.f32 0.0, %v4657
    %v4659 = vpop.f32.mrf.mxu0
    %v4660 = vpop.f32.mrf.mxu0
    %v4661 = vadd.f32 0.0, %v4660
    %v4662 = vpop.f32.mrf.mxu0
    %4663 = vmatprep.mubr.bf16.mxu0 0
    %4664 = vmatmul.mubr.bf16.gmra.mxu0 %v4401
    %v4665 = vpop.f32.mrf.mxu0
    %v4666 = vadd.f32 0.0, %v4665
    %v4667 = vpop.f32.mrf.mxu0
    %v4668 = vpop.f32.mrf.mxu0
    %v4669 = vadd.f32 0.0, %v4668
    %v4670 = vpop.f32.mrf.mxu0
    %4671 = vmatprep.mubr.bf16.mxu0 0
    %4672 = vmatmul.mubr.bf16.gmra.mxu0 %v4402
    %v4673 = vpop.f32.mrf.mxu0
    %v4674 = vadd.f32 0.0, %v4673
    %v4675 = vpop.f32.mrf.mxu0
    %v4676 = vpop.f32.mrf.mxu0
    %v4677 = vadd.f32 0.0, %v4676
    %v4678 = vpop.f32.mrf.mxu0
    %4679 = vmatprep.mubr.bf16.mxu0 0
    %4680 = vmatmul.mubr.bf16.gmra.mxu0 %v4403
    %v4681 = vpop.f32.mrf.mxu0
    %v4682 = vadd.f32 0.0, %v4681
    %v4683 = vpop.f32.mrf.mxu0
    %v4684 = vpop.f32.mrf.mxu0
    %v4685 = vadd.f32 0.0, %v4684
    %v4686 = vpop.f32.mrf.mxu0
    %4687 = vmatprep.mubr.bf16.mxu0 0
    %4688 = vmatmul.mubr.bf16.gmra.mxu0 %v4404
    %v4689 = vpop.f32.mrf.mxu0
    %v4690 = vadd.f32 0.0, %v4689
    %v4691 = vpop.f32.mrf.mxu0
    %v4692 = vpop.f32.mrf.mxu0
    %v4693 = vadd.f32 0.0, %v4692
    %v4694 = vpop.f32.mrf.mxu0
    %4695 = vmatprep.mubr.bf16.mxu0 0
    %4696 = vmatmul.mubr.bf16.gmra.mxu0 %v4405
    %v4697 = vpop.f32.mrf.mxu0
    %v4698 = vadd.f32 0.0, %v4697
    %v4699 = vpop.f32.mrf.mxu0
    %v4700 = vpop.f32.mrf.mxu0
    %v4701 = vadd.f32 0.0, %v4700
    %v4702 = vpop.f32.mrf.mxu0
    %4703 = vmatprep.mubr.bf16.mxu0 0
    %4704 = vmatmul.mubr.bf16.gmra.mxu0 %v4406
    %v4705 = vpop.f32.mrf.mxu0
    %v4706 = vadd.f32 0.0, %v4705
    %v4707 = vpop.f32.mrf.mxu0
    %v4708 = vpop.f32.mrf.mxu0
    %v4709 = vadd.f32 0.0, %v4708
    %v4710 = vpop.f32.mrf.mxu0
    %4711 = vmatprep.mubr.bf16.mxu0 0
    %4712 = vmatmul.mubr.bf16.gmra.mxu0 %v4407
    %v4713 = vpop.f32.mrf.mxu0
    %v4714 = vadd.f32 0.0, %v4713
    %v4715 = vpop.f32.mrf.mxu0
    %v4716 = vpop.f32.mrf.mxu0
    %v4717 = vadd.f32 0.0, %v4716
    %v4718 = vpop.f32.mrf.mxu0
    %4719 = vmatprep.mubr.bf16.mxu0 0
    %4720 = vmatmul.mubr.bf16.gmra.mxu0 %v4408
    %v4721 = vpop.f32.mrf.mxu0
    %v4722 = vadd.f32 0.0, %v4721
    %v4723 = vpop.f32.mrf.mxu0
    %v4724 = vpop.f32.mrf.mxu0
    %v4725 = vadd.f32 0.0, %v4724
    %v4726 = vpop.f32.mrf.mxu0
    %4727 = vmatprep.mubr.bf16.mxu0 0
    %4728 = vmatmul.mubr.bf16.gmra.mxu0 %v4409
    %v4729 = vpop.f32.mrf.mxu0
    %v4730 = vadd.f32 0.0, %v4729
    %v4731 = vpop.f32.mrf.mxu0
    %v4732 = vpop.f32.mrf.mxu0
    %v4733 = vadd.f32 0.0, %v4732
    %v4734 = vpop.f32.mrf.mxu0
    %4735 = vmatprep.mubr.bf16.mxu0 0
    %4736 = vmatmul.mubr.bf16.gmra.mxu0 %v4410
    %v4737 = vpop.f32.mrf.mxu0
    %v4738 = vadd.f32 0.0, %v4737
    %v4739 = vpop.f32.mrf.mxu0
    %v4740 = vpop.f32.mrf.mxu0
    %v4741 = vadd.f32 0.0, %v4740
    %v4742 = vpop.f32.mrf.mxu0
    %4743 = vmatprep.mubr.bf16.mxu0 0
    %4744 = vmatmul.mubr.bf16.gmra.mxu0 %v4411
    %v4745 = vpop.f32.mrf.mxu0
    %v4746 = vadd.f32 0.0, %v4745
    %v4747 = vpop.f32.mrf.mxu0
    %v4748 = vpop.f32.mrf.mxu0
    %v4749 = vadd.f32 0.0, %v4748
    %v4750 = vpop.f32.mrf.mxu0
    %4751 = vmatprep.mubr.bf16.mxu0 0
    %4752 = vmatmul.mubr.bf16.gmra.mxu0 %v4412
    %v4753 = vpop.f32.mrf.mxu0
    %v4754 = vadd.f32 0.0, %v4753
    %v4755 = vpop.f32.mrf.mxu0
    %v4756 = vpop.f32.mrf.mxu0
    %v4757 = vadd.f32 0.0, %v4756
    %v4758 = vpop.f32.mrf.mxu0
    %4759 = vmatprep.mubr.bf16.mxu0 0
    %4760 = vmatmul.mubr.bf16.gmra.mxu0 %v4413
    %v4761 = vpop.f32.mrf.mxu0
    %v4762 = vadd.f32 0.0, %v4761
    %v4763 = vpop.f32.mrf.mxu0
    %v4764 = vpop.f32.mrf.mxu0
    %v4765 = vadd.f32 0.0, %v4764
    %v4766 = vpop.f32.mrf.mxu0
    %4767 = vdwg.mxu0
    %v4768 = vadd.f32 %v4254, %v4514
    %v4769 = vadd.f32 %v4255, %v4517
    %v4770 = vadd.f32 %v4256, %v4522
    %v4771 = vadd.f32 %v4257, %v4525
    %v4772 = vadd.f32 %v4258, %v4530
    %v4773 = vadd.f32 %v4259, %v4533
    %v4774 = vadd.f32 %v4260, %v4538
    %v4775 = vadd.f32 %v4261, %v4541
    %v4776 = vadd.f32 %v4262, %v4546
    %v4777 = vadd.f32 %v4263, %v4549
    %v4778 = vadd.f32 %v4264, %v4554
    %v4779 = vadd.f32 %v4265, %v4557
    %v4780 = vadd.f32 %v4266, %v4562
    %v4781 = vadd.f32 %v4267, %v4565
    %v4782 = vadd.f32 %v4268, %v4570
    %v4783 = vadd.f32 %v4269, %v4573
    %v4784 = vadd.f32 %v4270, %v4578
    %v4785 = vadd.f32 %v4271, %v4581
    %v4786 = vadd.f32 %v4272, %v4586
    %v4787 = vadd.f32 %v4273, %v4589
    %v4788 = vadd.f32 %v4274, %v4594
    %v4789 = vadd.f32 %v4275, %v4597
    %v4790 = vadd.f32 %v4276, %v4602
    %v4791 = vadd.f32 %v4277, %v4605
    %v4792 = vadd.f32 %v4278, %v4610
    %v4793 = vadd.f32 %v4279, %v4613
    %v4794 = vadd.f32 %v4280, %v4618
    %v4795 = vadd.f32 %v4281, %v4621
    %v4796 = vadd.f32 %v4282, %v4626
    %v4797 = vadd.f32 %v4283, %v4629
    %v4798 = vadd.f32 %v4284, %v4634
    %v4799 = vadd.f32 %v4285, %v4637
    %v4800 = vadd.f32 %v4286, %v4642
    %v4801 = vadd.f32 %v4287, %v4645
    %v4802 = vadd.f32 %v4288, %v4650
    %v4803 = vadd.f32 %v4289, %v4653
    %v4804 = vadd.f32 %v4290, %v4658
    %v4805 = vadd.f32 %v4291, %v4661
    %v4806 = vadd.f32 %v4292, %v4666
    %v4807 = vadd.f32 %v4293, %v4669
    %v4808 = vadd.f32 %v4294, %v4674
    %v4809 = vadd.f32 %v4295, %v4677
    %v4810 = vadd.f32 %v4296, %v4682
    %v4811 = vadd.f32 %v4297, %v4685
    %v4812 = vadd.f32 %v4298, %v4690
    %v4813 = vadd.f32 %v4299, %v4693
    %v4814 = vadd.f32 %v4300, %v4698
    %v4815 = vadd.f32 %v4301, %v4701
    %v4816 = vadd.f32 %v4302, %v4706
    %v4817 = vadd.f32 %v4303, %v4709
    %v4818 = vadd.f32 %v4304, %v4714
    %v4819 = vadd.f32 %v4305, %v4717
    %v4820 = vadd.f32 %v4306, %v4722
    %v4821 = vadd.f32 %v4307, %v4725
    %v4822 = vadd.f32 %v4308, %v4730
    %v4823 = vadd.f32 %v4309, %v4733
    %v4824 = vadd.f32 %v4310, %v4738
    %v4825 = vadd.f32 %v4311, %v4741
    %v4826 = vadd.f32 %v4312, %v4746
    %v4827 = vadd.f32 %v4313, %v4749
    %v4828 = vadd.f32 %v4314, %v4754
    %v4829 = vadd.f32 %v4315, %v4757
    %v4830 = vadd.f32 %v4316, %v4762
    %v4831 = vadd.f32 %v4317, %v4765
    %v4832 = vld [vmem:[#allocation2 + $0x19] sm:$0xff]
    %v4833 = vld [vmem:[#allocation2 + $0x21] sm:$0xff]
    %v4834 = vld [vmem:[#allocation2 + $0x29] sm:$0xff]
    %v4835 = vld [vmem:[#allocation2 + $0x31] sm:$0xff]
    %v4836 = vld [vmem:[#allocation2 + $0x39] sm:$0xff]
    %v4837 = vld [vmem:[#allocation2 + $0x41] sm:$0xff]
    %v4838 = vld [vmem:[#allocation2 + $0x49] sm:$0xff]
    %v4839 = vld [vmem:[#allocation2 + $0x51] sm:$0xff]
    %v4840 = vld [vmem:[#allocation2 + $0x59] sm:$0xff]
    %v4841 = vld [vmem:[#allocation2 + $0x61] sm:$0xff]
    %v4842 = vld [vmem:[#allocation2 + $0x69] sm:$0xff]
    %v4843 = vld [vmem:[#allocation2 + $0x71] sm:$0xff]
    %v4844 = vld [vmem:[#allocation2 + $0x79] sm:$0xff]
    %v4845 = vld [vmem:[#allocation2 + $0x81] sm:$0xff]
    %v4846 = vld [vmem:[#allocation2 + $0x89] sm:$0xff]
    %v4847 = vld [vmem:[#allocation2 + $0x91] sm:$0xff]
    %v4848 = vld [vmem:[#allocation2 + $0x99] sm:$0xff]
    %v4849 = vld [vmem:[#allocation2 + $0xa1] sm:$0xff]
    %v4850 = vld [vmem:[#allocation2 + $0xa9] sm:$0xff]
    %v4851 = vld [vmem:[#allocation2 + $0xb1] sm:$0xff]
    %v4852 = vld [vmem:[#allocation2 + $0xb9] sm:$0xff]
    %v4853 = vld [vmem:[#allocation2 + $0xc1] sm:$0xff]
    %v4854 = vld [vmem:[#allocation2 + $0xc9] sm:$0xff]
    %v4855 = vld [vmem:[#allocation2 + $0xd1] sm:$0xff]
    %v4856 = vld [vmem:[#allocation2 + $0xd9] sm:$0xff]
    %v4857 = vld [vmem:[#allocation2 + $0xe1] sm:$0xff]
    %v4858 = vld [vmem:[#allocation2 + $0xe9] sm:$0xff]
    %v4859 = vld [vmem:[#allocation2 + $0xf1] sm:$0xff]
    %v4860 = vld [vmem:[#allocation2 + $0xf9] sm:$0xff]
    %v4861 = vld [vmem:[#allocation2 + $0x101] sm:$0xff]
    %v4862 = vld [vmem:[#allocation2 + $0x109] sm:$0xff]
    %v4863 = vld [vmem:[#allocation2 + $0x111] sm:$0xff]
    %v4864 = vld [vmem:[#allocation2 + $0x119] sm:$0xff]
    %v4865 = vld [vmem:[#allocation2 + $0x121] sm:$0xff]
    %v4866 = vld [vmem:[#allocation2 + $0x129] sm:$0xff]
    %v4867 = vld [vmem:[#allocation2 + $0x131] sm:$0xff]
    %v4868 = vld [vmem:[#allocation2 + $0x139] sm:$0xff]
    %v4869 = vld [vmem:[#allocation2 + $0x141] sm:$0xff]
    %v4870 = vld [vmem:[#allocation2 + $0x149] sm:$0xff]
    %v4871 = vld [vmem:[#allocation2 + $0x151] sm:$0xff]
    %v4872 = vld [vmem:[#allocation2 + $0x159] sm:$0xff]
    %v4873 = vld [vmem:[#allocation2 + $0x161] sm:$0xff]
    %v4874 = vld [vmem:[#allocation2 + $0x169] sm:$0xff]
    %v4875 = vld [vmem:[#allocation2 + $0x171] sm:$0xff]
    %v4876 = vld [vmem:[#allocation2 + $0x179] sm:$0xff]
    %v4877 = vld [vmem:[#allocation2 + $0x181] sm:$0xff]
    %v4878 = vld [vmem:[#allocation2 + $0x189] sm:$0xff]
    %v4879 = vld [vmem:[#allocation2 + $0x191] sm:$0xff]
    %v4880 = vld [vmem:[#allocation2 + $0x199] sm:$0xff]
    %v4881 = vld [vmem:[#allocation2 + $0x1a1] sm:$0xff]
    %v4882 = vld [vmem:[#allocation2 + $0x1a9] sm:$0xff]
    %v4883 = vld [vmem:[#allocation2 + $0x1b1] sm:$0xff]
    %v4884 = vld [vmem:[#allocation2 + $0x1b9] sm:$0xff]
    %v4885 = vld [vmem:[#allocation2 + $0x1c1] sm:$0xff]
    %v4886 = vld [vmem:[#allocation2 + $0x1c9] sm:$0xff]
    %v4887 = vld [vmem:[#allocation2 + $0x1d1] sm:$0xff]
    %v4888 = vld [vmem:[#allocation2 + $0x1d9] sm:$0xff]
    %v4889 = vld [vmem:[#allocation2 + $0x1e1] sm:$0xff]
    %v4890 = vld [vmem:[#allocation2 + $0x1e9] sm:$0xff]
    %v4891 = vld [vmem:[#allocation2 + $0x1f1] sm:$0xff]
    %v4892 = vld [vmem:[#allocation2 + $0x1f9] sm:$0xff]
    %v4893 = vld [vmem:[#allocation2 + $0x201] sm:$0xff]
    %v4894 = vld [vmem:[#allocation2 + $0x209] sm:$0xff]
    %v4895 = vld [vmem:[#allocation2 + $0x211] sm:$0xff]
    %4896 = vset.pattern.permute.xlu0 40
    %4897 = vperm.xlu0 %4896, %v1047
    %v4898 = vpop.permute.xlu0 %4897
    %4900 = vset.pattern.permute.xlu0 40
    %4901 = vperm.xlu0 %4900, %v1048
    %v4902 = vpop.permute.xlu0 %4901
    %4904 = vset.pattern.permute.xlu0 40
    %4905 = vperm.xlu0 %4904, %v1049
    %v4906 = vpop.permute.xlu0 %4905
    %4908 = vset.pattern.permute.xlu0 40
    %4909 = vperm.xlu0 %4908, %v1050
    %v4910 = vpop.permute.xlu0 %4909
    %4912 = vset.pattern.permute.xlu0 40
    %4913 = vperm.xlu0 %4912, %v1051
    %v4914 = vpop.permute.xlu0 %4913
    %4916 = vset.pattern.permute.xlu0 40
    %4917 = vperm.xlu0 %4916, %v1052
    %v4918 = vpop.permute.xlu0 %4917
    %4920 = vset.pattern.permute.xlu0 40
    %4921 = vperm.xlu0 %4920, %v1053
    %v4922 = vpop.permute.xlu0 %4921
    %4924 = vset.pattern.permute.xlu0 40
    %4925 = vperm.xlu0 %4924, %v1054
    %v4926 = vpop.permute.xlu0 %4925
    %4928 = vset.pattern.permute.xlu0 40
    %4929 = vperm.xlu0 %4928, %v1055
    %v4930 = vpop.permute.xlu0 %4929
    %4932 = vset.pattern.permute.xlu0 40
    %4933 = vperm.xlu0 %4932, %v1056
    %v4934 = vpop.permute.xlu0 %4933
    %4936 = vset.pattern.permute.xlu0 40
    %4937 = vperm.xlu0 %4936, %v1057
    %v4938 = vpop.permute.xlu0 %4937
    %4940 = vset.pattern.permute.xlu0 40
    %4941 = vperm.xlu0 %4940, %v1058
    %v4942 = vpop.permute.xlu0 %4941
    %4944 = vset.pattern.permute.xlu0 40
    %4945 = vperm.xlu0 %4944, %v1059
    %v4946 = vpop.permute.xlu0 %4945
    %4948 = vset.pattern.permute.xlu0 40
    %4949 = vperm.xlu0 %4948, %v1060
    %v4950 = vpop.permute.xlu0 %4949
    %4952 = vset.pattern.permute.xlu0 40
    %4953 = vperm.xlu0 %4952, %v1061
    %v4954 = vpop.permute.xlu0 %4953
    %4956 = vset.pattern.permute.xlu0 40
    %4957 = vperm.xlu0 %4956, %v1062
    %v4958 = vpop.permute.xlu0 %4957
    %4960 = vset.pattern.permute.xlu0 40
    %4961 = vperm.xlu0 %4960, %v1063
    %v4962 = vpop.permute.xlu0 %4961
    %4964 = vset.pattern.permute.xlu0 40
    %4965 = vperm.xlu0 %4964, %v1064
    %v4966 = vpop.permute.xlu0 %4965
    %4968 = vset.pattern.permute.xlu0 40
    %4969 = vperm.xlu0 %4968, %v1065
    %v4970 = vpop.permute.xlu0 %4969
    %4972 = vset.pattern.permute.xlu0 40
    %4973 = vperm.xlu0 %4972, %v1066
    %v4974 = vpop.permute.xlu0 %4973
    %4976 = vset.pattern.permute.xlu0 40
    %4977 = vperm.xlu0 %4976, %v1067
    %v4978 = vpop.permute.xlu0 %4977
    %4980 = vset.pattern.permute.xlu0 40
    %4981 = vperm.xlu0 %4980, %v1068
    %v4982 = vpop.permute.xlu0 %4981
    %4984 = vset.pattern.permute.xlu0 40
    %4985 = vperm.xlu0 %4984, %v1069
    %v4986 = vpop.permute.xlu0 %4985
    %4988 = vset.pattern.permute.xlu0 40
    %4989 = vperm.xlu0 %4988, %v1070
    %v4990 = vpop.permute.xlu0 %4989
    %4992 = vset.pattern.permute.xlu0 40
    %4993 = vperm.xlu0 %4992, %v1071
    %v4994 = vpop.permute.xlu0 %4993
    %4996 = vset.pattern.permute.xlu0 40
    %4997 = vperm.xlu0 %4996, %v1072
    %v4998 = vpop.permute.xlu0 %4997
    %5000 = vset.pattern.permute.xlu0 40
    %5001 = vperm.xlu0 %5000, %v1073
    %v5002 = vpop.permute.xlu0 %5001
    %5004 = vset.pattern.permute.xlu0 40
    %5005 = vperm.xlu0 %5004, %v1074
    %v5006 = vpop.permute.xlu0 %5005
    %5008 = vset.pattern.permute.xlu0 40
    %5009 = vperm.xlu0 %5008, %v1075
    %v5010 = vpop.permute.xlu0 %5009
    %5012 = vset.pattern.permute.xlu0 40
    %5013 = vperm.xlu0 %5012, %v1076
    %v5014 = vpop.permute.xlu0 %5013
    %5016 = vset.pattern.permute.xlu0 40
    %5017 = vperm.xlu0 %5016, %v1077
    %v5018 = vpop.permute.xlu0 %5017
    %5020 = vset.pattern.permute.xlu0 40
    %5021 = vperm.xlu0 %5020, %v1078
    %v5022 = vpop.permute.xlu0 %5021
    %5024 = vset.pattern.permute.xlu0 40
    %5025 = vperm.xlu0 %5024, %v1079
    %v5026 = vpop.permute.xlu0 %5025
    %5028 = vset.pattern.permute.xlu0 40
    %5029 = vperm.xlu0 %5028, %v1080
    %v5030 = vpop.permute.xlu0 %5029
    %5032 = vset.pattern.permute.xlu0 40
    %5033 = vperm.xlu0 %5032, %v1081
    %v5034 = vpop.permute.xlu0 %5033
    %5036 = vset.pattern.permute.xlu0 40
    %5037 = vperm.xlu0 %5036, %v1082
    %v5038 = vpop.permute.xlu0 %5037
    %5040 = vset.pattern.permute.xlu0 40
    %5041 = vperm.xlu0 %5040, %v1083
    %v5042 = vpop.permute.xlu0 %5041
    %5044 = vset.pattern.permute.xlu0 40
    %5045 = vperm.xlu0 %5044, %v1084
    %v5046 = vpop.permute.xlu0 %5045
    %5048 = vset.pattern.permute.xlu0 40
    %5049 = vperm.xlu0 %5048, %v1085
    %v5050 = vpop.permute.xlu0 %5049
    %5052 = vset.pattern.permute.xlu0 40
    %5053 = vperm.xlu0 %5052, %v1086
    %v5054 = vpop.permute.xlu0 %5053
    %5056 = vset.pattern.permute.xlu0 40
    %5057 = vperm.xlu0 %5056, %v1087
    %v5058 = vpop.permute.xlu0 %5057
    %5060 = vset.pattern.permute.xlu0 40
    %5061 = vperm.xlu0 %5060, %v1088
    %v5062 = vpop.permute.xlu0 %5061
    %5064 = vset.pattern.permute.xlu0 40
    %5065 = vperm.xlu0 %5064, %v1089
    %v5066 = vpop.permute.xlu0 %5065
    %5068 = vset.pattern.permute.xlu0 40
    %5069 = vperm.xlu0 %5068, %v1090
    %v5070 = vpop.permute.xlu0 %5069
    %5072 = vset.pattern.permute.xlu0 40
    %5073 = vperm.xlu0 %5072, %v1091
    %v5074 = vpop.permute.xlu0 %5073
    %5076 = vset.pattern.permute.xlu0 40
    %5077 = vperm.xlu0 %5076, %v1092
    %v5078 = vpop.permute.xlu0 %5077
    %5080 = vset.pattern.permute.xlu0 40
    %5081 = vperm.xlu0 %5080, %v1093
    %v5082 = vpop.permute.xlu0 %5081
    %5084 = vset.pattern.permute.xlu0 40
    %5085 = vperm.xlu0 %5084, %v1094
    %v5086 = vpop.permute.xlu0 %5085
    %5088 = vset.pattern.permute.xlu0 40
    %5089 = vperm.xlu0 %5088, %v1095
    %v5090 = vpop.permute.xlu0 %5089
    %5092 = vset.pattern.permute.xlu0 40
    %5093 = vperm.xlu0 %5092, %v1096
    %v5094 = vpop.permute.xlu0 %5093
    %5096 = vset.pattern.permute.xlu0 40
    %5097 = vperm.xlu0 %5096, %v1097
    %v5098 = vpop.permute.xlu0 %5097
    %5100 = vset.pattern.permute.xlu0 40
    %5101 = vperm.xlu0 %5100, %v1098
    %v5102 = vpop.permute.xlu0 %5101
    %5104 = vset.pattern.permute.xlu0 40
    %5105 = vperm.xlu0 %5104, %v1099
    %v5106 = vpop.permute.xlu0 %5105
    %5108 = vset.pattern.permute.xlu0 40
    %5109 = vperm.xlu0 %5108, %v1100
    %v5110 = vpop.permute.xlu0 %5109
    %5112 = vset.pattern.permute.xlu0 40
    %5113 = vperm.xlu0 %5112, %v1101
    %v5114 = vpop.permute.xlu0 %5113
    %5116 = vset.pattern.permute.xlu0 40
    %5117 = vperm.xlu0 %5116, %v1102
    %v5118 = vpop.permute.xlu0 %5117
    %5120 = vset.pattern.permute.xlu0 40
    %5121 = vperm.xlu0 %5120, %v1103
    %v5122 = vpop.permute.xlu0 %5121
    %5124 = vset.pattern.permute.xlu0 40
    %5125 = vperm.xlu0 %5124, %v1104
    %v5126 = vpop.permute.xlu0 %5125
    %5128 = vset.pattern.permute.xlu0 40
    %5129 = vperm.xlu0 %5128, %v1105
    %v5130 = vpop.permute.xlu0 %5129
    %5132 = vset.pattern.permute.xlu0 40
    %5133 = vperm.xlu0 %5132, %v1106
    %v5134 = vpop.permute.xlu0 %5133
    %5136 = vset.pattern.permute.xlu0 40
    %5137 = vperm.xlu0 %5136, %v1107
    %v5138 = vpop.permute.xlu0 %5137
    %5140 = vset.pattern.permute.xlu0 40
    %5141 = vperm.xlu0 %5140, %v1108
    %v5142 = vpop.permute.xlu0 %5141
    %5144 = vset.pattern.permute.xlu0 40
    %5145 = vperm.xlu0 %5144, %v1109
    %v5146 = vpop.permute.xlu0 %5145
    %5148 = vset.pattern.permute.xlu0 40
    %5149 = vperm.xlu0 %5148, %v1110
    %v5150 = vpop.permute.xlu0 %5149
    %v5152 = vmul.f32 %v4832, %v4898
    %v5153 = vmul.f32 %v4833, %v4902
    %v5154 = vmul.f32 %v4834, %v4906
    %v5155 = vmul.f32 %v4835, %v4910
    %v5156 = vmul.f32 %v4836, %v4914
    %v5157 = vmul.f32 %v4837, %v4918
    %v5158 = vmul.f32 %v4838, %v4922
    %v5159 = vmul.f32 %v4839, %v4926
    %v5160 = vmul.f32 %v4840, %v4930
    %v5161 = vmul.f32 %v4841, %v4934
    %v5162 = vmul.f32 %v4842, %v4938
    %v5163 = vmul.f32 %v4843, %v4942
    %v5164 = vmul.f32 %v4844, %v4946
    %v5165 = vmul.f32 %v4845, %v4950
    %v5166 = vmul.f32 %v4846, %v4954
    %v5167 = vmul.f32 %v4847, %v4958
    %v5168 = vmul.f32 %v4848, %v4962
    %v5169 = vmul.f32 %v4849, %v4966
    %v5170 = vmul.f32 %v4850, %v4970
    %v5171 = vmul.f32 %v4851, %v4974
    %v5172 = vmul.f32 %v4852, %v4978
    %v5173 = vmul.f32 %v4853, %v4982
    %v5174 = vmul.f32 %v4854, %v4986
    %v5175 = vmul.f32 %v4855, %v4990
    %v5176 = vmul.f32 %v4856, %v4994
    %v5177 = vmul.f32 %v4857, %v4998
    %v5178 = vmul.f32 %v4858, %v5002
    %v5179 = vmul.f32 %v4859, %v5006
    %v5180 = vmul.f32 %v4860, %v5010
    %v5181 = vmul.f32 %v4861, %v5014
    %v5182 = vmul.f32 %v4862, %v5018
    %v5183 = vmul.f32 %v4863, %v5022
    %v5184 = vmul.f32 %v4864, %v5026
    %v5185 = vmul.f32 %v4865, %v5030
    %v5186 = vmul.f32 %v4866, %v5034
    %v5187 = vmul.f32 %v4867, %v5038
    %v5188 = vmul.f32 %v4868, %v5042
    %v5189 = vmul.f32 %v4869, %v5046
    %v5190 = vmul.f32 %v4870, %v5050
    %v5191 = vmul.f32 %v4871, %v5054
    %v5192 = vmul.f32 %v4872, %v5058
    %v5193 = vmul.f32 %v4873, %v5062
    %v5194 = vmul.f32 %v4874, %v5066
    %v5195 = vmul.f32 %v4875, %v5070
    %v5196 = vmul.f32 %v4876, %v5074
    %v5197 = vmul.f32 %v4877, %v5078
    %v5198 = vmul.f32 %v4878, %v5082
    %v5199 = vmul.f32 %v4879, %v5086
    %v5200 = vmul.f32 %v4880, %v5090
    %v5201 = vmul.f32 %v4881, %v5094
    %v5202 = vmul.f32 %v4882, %v5098
    %v5203 = vmul.f32 %v4883, %v5102
    %v5204 = vmul.f32 %v4884, %v5106
    %v5205 = vmul.f32 %v4885, %v5110
    %v5206 = vmul.f32 %v4886, %v5114
    %v5207 = vmul.f32 %v4887, %v5118
    %v5208 = vmul.f32 %v4888, %v5122
    %v5209 = vmul.f32 %v4889, %v5126
    %v5210 = vmul.f32 %v4890, %v5130
    %v5211 = vmul.f32 %v4891, %v5134
    %v5212 = vmul.f32 %v4892, %v5138
    %v5213 = vmul.f32 %v4893, %v5142
    %v5214 = vmul.f32 %v4894, %v5146
    %v5215 = vmul.f32 %v4895, %v5150
    %v5216 = vpack.c.bf16 %v5153, %v5152
    %v5217 = vpack.c.bf16 %v5155, %v5154
    %v5218 = vpack.c.bf16 %v5157, %v5156
    %v5219 = vpack.c.bf16 %v5159, %v5158
    %v5220 = vpack.c.bf16 %v5161, %v5160
    %v5221 = vpack.c.bf16 %v5163, %v5162
    %v5222 = vpack.c.bf16 %v5165, %v5164
    %v5223 = vpack.c.bf16 %v5167, %v5166
    %v5224 = vpack.c.bf16 %v5169, %v5168
    %v5225 = vpack.c.bf16 %v5171, %v5170
    %v5226 = vpack.c.bf16 %v5173, %v5172
    %v5227 = vpack.c.bf16 %v5175, %v5174
    %v5228 = vpack.c.bf16 %v5177, %v5176
    %v5229 = vpack.c.bf16 %v5179, %v5178
    %v5230 = vpack.c.bf16 %v5181, %v5180
    %v5231 = vpack.c.bf16 %v5183, %v5182
    %v5232 = vpack.c.bf16 %v5185, %v5184
    %v5233 = vpack.c.bf16 %v5187, %v5186
    %v5234 = vpack.c.bf16 %v5189, %v5188
    %v5235 = vpack.c.bf16 %v5191, %v5190
    %v5236 = vpack.c.bf16 %v5193, %v5192
    %v5237 = vpack.c.bf16 %v5195, %v5194
    %v5238 = vpack.c.bf16 %v5197, %v5196
    %v5239 = vpack.c.bf16 %v5199, %v5198
    %v5240 = vpack.c.bf16 %v5201, %v5200
    %v5241 = vpack.c.bf16 %v5203, %v5202
    %v5242 = vpack.c.bf16 %v5205, %v5204
    %v5243 = vpack.c.bf16 %v5207, %v5206
    %v5244 = vpack.c.bf16 %v5209, %v5208
    %v5245 = vpack.c.bf16 %v5211, %v5210
    %v5246 = vpack.c.bf16 %v5213, %v5212
    %v5247 = vpack.c.bf16 %v5215, %v5214
    %s5248 = scalar_lea.vmem [#allocation12], 320
    %v5249 = vld [vmem:[%s5248] sm:$0xf]
    %v5250 = vld [vmem:[%s5248 + $0x4] sm:$0xf]
    %v5251 = vld [vmem:[%s5248 + $0x8] sm:$0xf]
    %v5252 = vld [vmem:[%s5248 + $0xc] sm:$0xf]
    %v5253 = vld [vmem:[%s5248 + $0x10] sm:$0xf]
    %v5254 = vld [vmem:[%s5248 + $0x14] sm:$0xf]
    %v5255 = vld [vmem:[%s5248 + $0x18] sm:$0xf]
    %v5256 = vld [vmem:[%s5248 + $0x1c] sm:$0xf]
    %v5257 = vld [vmem:[%s5248 + $0x20] sm:$0xf]
    %v5258 = vld [vmem:[%s5248 + $0x24] sm:$0xf]
    %v5259 = vld [vmem:[%s5248 + $0x28] sm:$0xf]
    %v5260 = vld [vmem:[%s5248 + $0x2c] sm:$0xf]
    %v5261 = vld [vmem:[%s5248 + $0x30] sm:$0xf]
    %v5262 = vld [vmem:[%s5248 + $0x34] sm:$0xf]
    %v5263 = vld [vmem:[%s5248 + $0x38] sm:$0xf]
    %v5264 = vld [vmem:[%s5248 + $0x3c] sm:$0xf]
    %v5281 = vunpack.c.l.b16 %v5249
    %v5282 = vunpack.c.l.b16 %v5250
    %v5283 = vunpack.c.l.b16 %v5251
    %v5284 = vunpack.c.l.b16 %v5252
    %v5285 = vunpack.c.l.b16 %v5253
    %v5286 = vunpack.c.l.b16 %v5254
    %v5287 = vunpack.c.l.b16 %v5255
    %v5288 = vunpack.c.l.b16 %v5256
    %v5289 = vunpack.c.l.b16 %v5257
    %v5290 = vunpack.c.l.b16 %v5258
    %v5291 = vunpack.c.l.b16 %v5259
    %v5292 = vunpack.c.l.b16 %v5260
    %v5293 = vunpack.c.l.b16 %v5261
    %v5294 = vunpack.c.l.b16 %v5262
    %v5295 = vunpack.c.l.b16 %v5263
    %v5296 = vunpack.c.l.b16 %v5264
    %v5297 = vpack.c.b16 %v5282, %v5281
    %v5298 = vpack.c.b16 %v5284, %v5283
    %v5299 = vpack.c.b16 %v5286, %v5285
    %v5300 = vpack.c.b16 %v5288, %v5287
    %v5301 = vpack.c.b16 %v5290, %v5289
    %v5302 = vpack.c.b16 %v5292, %v5291
    %v5303 = vpack.c.b16 %v5294, %v5293
    %v5304 = vpack.c.b16 %v5296, %v5295
    %5313 = vmatprep.subr.bf16.mxu0 0
    %5314 = vmatpush1.bf16.msra.mxu0 %v5304
    %5315 = vmatprep.subr.bf16.mxu0 0
    %5316 = vmatpush1.bf16.msra.mxu0 %v5303
    %5317 = vmatprep.subr.bf16.mxu0 0
    %5318 = vmatpush1.bf16.msra.mxu0 %v5302
    %5319 = vmatprep.subr.bf16.mxu0 0
    %5320 = vmatpush1.bf16.msra.mxu0 %v5301
    %5321 = vmatprep.subr.bf16.mxu0 0
    %5322 = vmatpush1.bf16.msra.mxu0 %v5300
    %5323 = vmatprep.subr.bf16.mxu0 0
    %5324 = vmatpush1.bf16.msra.mxu0 %v5299
    %5325 = vmatprep.subr.bf16.mxu0 0
    %5326 = vmatpush1.bf16.msra.mxu0 %v5298
    %5327 = vmatprep.subr.bf16.mxu0 0
    %5328 = vmatpush1.bf16.msra.mxu0 %v5297
    %5329 = vmatprep.subr.bf16.mxu0 0
    %5330 = vmatpush2.bf16.msra.mxu0 0
    %5331 = vmatprep.subr.bf16.mxu0 0
    %5332 = vmatpush2.bf16.msra.mxu0 0
    %5333 = vmatprep.subr.bf16.mxu0 0
    %5334 = vmatpush2.bf16.msra.mxu0 0
    %5335 = vmatprep.subr.bf16.mxu0 0
    %5336 = vmatpush2.bf16.msra.mxu0 0
    %5337 = vmatprep.subr.bf16.mxu0 0
    %5338 = vmatpush2.bf16.msra.mxu0 0
    %5339 = vmatprep.subr.bf16.mxu0 0
    %5340 = vmatpush2.bf16.msra.mxu0 0
    %5341 = vmatprep.subr.bf16.mxu0 0
    %5342 = vmatpush2.bf16.msra.mxu0 0
    %5343 = vmatprep.subr.bf16.mxu0 0
    %5344 = vmatpush2.bf16.msra.mxu0 0
    %5345 = vmatprep.mubr.bf16.mxu0 0
    %5346 = vmatmul.mubr.bf16.gmra.mxu0 %v5216
    %v5347 = vpop.f32.mrf.mxu0
    %v5348 = vadd.f32 0.0, %v5347
    %v5349 = vpop.f32.mrf.mxu0
    %v5350 = vpop.f32.mrf.mxu0
    %v5351 = vadd.f32 0.0, %v5350
    %v5352 = vpop.f32.mrf.mxu0
    %5353 = vmatprep.mubr.bf16.mxu0 0
    %5354 = vmatmul.mubr.bf16.gmra.mxu0 %v5217
    %v5355 = vpop.f32.mrf.mxu0
    %v5356 = vadd.f32 0.0, %v5355
    %v5357 = vpop.f32.mrf.mxu0
    %v5358 = vpop.f32.mrf.mxu0
    %v5359 = vadd.f32 0.0, %v5358
    %v5360 = vpop.f32.mrf.mxu0
    %5361 = vmatprep.mubr.bf16.mxu0 0
    %5362 = vmatmul.mubr.bf16.gmra.mxu0 %v5218
    %v5363 = vpop.f32.mrf.mxu0
    %v5364 = vadd.f32 0.0, %v5363
    %v5365 = vpop.f32.mrf.mxu0
    %v5366 = vpop.f32.mrf.mxu0
    %v5367 = vadd.f32 0.0, %v5366
    %v5368 = vpop.f32.mrf.mxu0
    %5369 = vmatprep.mubr.bf16.mxu0 0
    %5370 = vmatmul.mubr.bf16.gmra.mxu0 %v5219
    %v5371 = vpop.f32.mrf.mxu0
    %v5372 = vadd.f32 0.0, %v5371
    %v5373 = vpop.f32.mrf.mxu0
    %v5374 = vpop.f32.mrf.mxu0
    %v5375 = vadd.f32 0.0, %v5374
    %v5376 = vpop.f32.mrf.mxu0
    %5377 = vmatprep.mubr.bf16.mxu0 0
    %5378 = vmatmul.mubr.bf16.gmra.mxu0 %v5220
    %v5379 = vpop.f32.mrf.mxu0
    %v5380 = vadd.f32 0.0, %v5379
    %v5381 = vpop.f32.mrf.mxu0
    %v5382 = vpop.f32.mrf.mxu0
    %v5383 = vadd.f32 0.0, %v5382
    %v5384 = vpop.f32.mrf.mxu0
    %5385 = vmatprep.mubr.bf16.mxu0 0
    %5386 = vmatmul.mubr.bf16.gmra.mxu0 %v5221
    %v5387 = vpop.f32.mrf.mxu0
    %v5388 = vadd.f32 0.0, %v5387
    %v5389 = vpop.f32.mrf.mxu0
    %v5390 = vpop.f32.mrf.mxu0
    %v5391 = vadd.f32 0.0, %v5390
    %v5392 = vpop.f32.mrf.mxu0
    %5393 = vmatprep.mubr.bf16.mxu0 0
    %5394 = vmatmul.mubr.bf16.gmra.mxu0 %v5222
    %v5395 = vpop.f32.mrf.mxu0
    %v5396 = vadd.f32 0.0, %v5395
    %v5397 = vpop.f32.mrf.mxu0
    %v5398 = vpop.f32.mrf.mxu0
    %v5399 = vadd.f32 0.0, %v5398
    %v5400 = vpop.f32.mrf.mxu0
    %5401 = vmatprep.mubr.bf16.mxu0 0
    %5402 = vmatmul.mubr.bf16.gmra.mxu0 %v5223
    %v5403 = vpop.f32.mrf.mxu0
    %v5404 = vadd.f32 0.0, %v5403
    %v5405 = vpop.f32.mrf.mxu0
    %v5406 = vpop.f32.mrf.mxu0
    %v5407 = vadd.f32 0.0, %v5406
    %v5408 = vpop.f32.mrf.mxu0
    %5409 = vmatprep.mubr.bf16.mxu0 0
    %5410 = vmatmul.mubr.bf16.gmra.mxu0 %v5224
    %v5411 = vpop.f32.mrf.mxu0
    %v5412 = vadd.f32 0.0, %v5411
    %v5413 = vpop.f32.mrf.mxu0
    %v5414 = vpop.f32.mrf.mxu0
    %v5415 = vadd.f32 0.0, %v5414
    %v5416 = vpop.f32.mrf.mxu0
    %5417 = vmatprep.mubr.bf16.mxu0 0
    %5418 = vmatmul.mubr.bf16.gmra.mxu0 %v5225
    %v5419 = vpop.f32.mrf.mxu0
    %v5420 = vadd.f32 0.0, %v5419
    %v5421 = vpop.f32.mrf.mxu0
    %v5422 = vpop.f32.mrf.mxu0
    %v5423 = vadd.f32 0.0, %v5422
    %v5424 = vpop.f32.mrf.mxu0
    %5425 = vmatprep.mubr.bf16.mxu0 0
    %5426 = vmatmul.mubr.bf16.gmra.mxu0 %v5226
    %v5427 = vpop.f32.mrf.mxu0
    %v5428 = vadd.f32 0.0, %v5427
    %v5429 = vpop.f32.mrf.mxu0
    %v5430 = vpop.f32.mrf.mxu0
    %v5431 = vadd.f32 0.0, %v5430
    %v5432 = vpop.f32.mrf.mxu0
    %5433 = vmatprep.mubr.bf16.mxu0 0
    %5434 = vmatmul.mubr.bf16.gmra.mxu0 %v5227
    %v5435 = vpop.f32.mrf.mxu0
    %v5436 = vadd.f32 0.0, %v5435
    %v5437 = vpop.f32.mrf.mxu0
    %v5438 = vpop.f32.mrf.mxu0
    %v5439 = vadd.f32 0.0, %v5438
    %v5440 = vpop.f32.mrf.mxu0
    %5441 = vmatprep.mubr.bf16.mxu0 0
    %5442 = vmatmul.mubr.bf16.gmra.mxu0 %v5228
    %v5443 = vpop.f32.mrf.mxu0
    %v5444 = vadd.f32 0.0, %v5443
    %v5445 = vpop.f32.mrf.mxu0
    %v5446 = vpop.f32.mrf.mxu0
    %v5447 = vadd.f32 0.0, %v5446
    %v5448 = vpop.f32.mrf.mxu0
    %5449 = vmatprep.mubr.bf16.mxu0 0
    %5450 = vmatmul.mubr.bf16.gmra.mxu0 %v5229
    %v5451 = vpop.f32.mrf.mxu0
    %v5452 = vadd.f32 0.0, %v5451
    %v5453 = vpop.f32.mrf.mxu0
    %v5454 = vpop.f32.mrf.mxu0
    %v5455 = vadd.f32 0.0, %v5454
    %v5456 = vpop.f32.mrf.mxu0
    %5457 = vmatprep.mubr.bf16.mxu0 0
    %5458 = vmatmul.mubr.bf16.gmra.mxu0 %v5230
    %v5459 = vpop.f32.mrf.mxu0
    %v5460 = vadd.f32 0.0, %v5459
    %v5461 = vpop.f32.mrf.mxu0
    %v5462 = vpop.f32.mrf.mxu0
    %v5463 = vadd.f32 0.0, %v5462
    %v5464 = vpop.f32.mrf.mxu0
    %5465 = vmatprep.mubr.bf16.mxu0 0
    %5466 = vmatmul.mubr.bf16.gmra.mxu0 %v5231
    %v5467 = vpop.f32.mrf.mxu0
    %v5468 = vadd.f32 0.0, %v5467
    %v5469 = vpop.f32.mrf.mxu0
    %v5470 = vpop.f32.mrf.mxu0
    %v5471 = vadd.f32 0.0, %v5470
    %v5472 = vpop.f32.mrf.mxu0
    %5473 = vmatprep.mubr.bf16.mxu0 0
    %5474 = vmatmul.mubr.bf16.gmra.mxu0 %v5232
    %v5475 = vpop.f32.mrf.mxu0
    %v5476 = vadd.f32 0.0, %v5475
    %v5477 = vpop.f32.mrf.mxu0
    %v5478 = vpop.f32.mrf.mxu0
    %v5479 = vadd.f32 0.0, %v5478
    %v5480 = vpop.f32.mrf.mxu0
    %5481 = vmatprep.mubr.bf16.mxu0 0
    %5482 = vmatmul.mubr.bf16.gmra.mxu0 %v5233
    %v5483 = vpop.f32.mrf.mxu0
    %v5484 = vadd.f32 0.0, %v5483
    %v5485 = vpop.f32.mrf.mxu0
    %v5486 = vpop.f32.mrf.mxu0
    %v5487 = vadd.f32 0.0, %v5486
    %v5488 = vpop.f32.mrf.mxu0
    %5489 = vmatprep.mubr.bf16.mxu0 0
    %5490 = vmatmul.mubr.bf16.gmra.mxu0 %v5234
    %v5491 = vpop.f32.mrf.mxu0
    %v5492 = vadd.f32 0.0, %v5491
    %v5493 = vpop.f32.mrf.mxu0
    %v5494 = vpop.f32.mrf.mxu0
    %v5495 = vadd.f32 0.0, %v5494
    %v5496 = vpop.f32.mrf.mxu0
    %5497 = vmatprep.mubr.bf16.mxu0 0
    %5498 = vmatmul.mubr.bf16.gmra.mxu0 %v5235
    %v5499 = vpop.f32.mrf.mxu0
    %v5500 = vadd.f32 0.0, %v5499
    %v5501 = vpop.f32.mrf.mxu0
    %v5502 = vpop.f32.mrf.mxu0
    %v5503 = vadd.f32 0.0, %v5502
    %v5504 = vpop.f32.mrf.mxu0
    %5505 = vmatprep.mubr.bf16.mxu0 0
    %5506 = vmatmul.mubr.bf16.gmra.mxu0 %v5236
    %v5507 = vpop.f32.mrf.mxu0
    %v5508 = vadd.f32 0.0, %v5507
    %v5509 = vpop.f32.mrf.mxu0
    %v5510 = vpop.f32.mrf.mxu0
    %v5511 = vadd.f32 0.0, %v5510
    %v5512 = vpop.f32.mrf.mxu0
    %5513 = vmatprep.mubr.bf16.mxu0 0
    %5514 = vmatmul.mubr.bf16.gmra.mxu0 %v5237
    %v5515 = vpop.f32.mrf.mxu0
    %v5516 = vadd.f32 0.0, %v5515
    %v5517 = vpop.f32.mrf.mxu0
    %v5518 = vpop.f32.mrf.mxu0
    %v5519 = vadd.f32 0.0, %v5518
    %v5520 = vpop.f32.mrf.mxu0
    %5521 = vmatprep.mubr.bf16.mxu0 0
    %5522 = vmatmul.mubr.bf16.gmra.mxu0 %v5238
    %v5523 = vpop.f32.mrf.mxu0
    %v5524 = vadd.f32 0.0, %v5523
    %v5525 = vpop.f32.mrf.mxu0
    %v5526 = vpop.f32.mrf.mxu0
    %v5527 = vadd.f32 0.0, %v5526
    %v5528 = vpop.f32.mrf.mxu0
    %5529 = vmatprep.mubr.bf16.mxu0 0
    %5530 = vmatmul.mubr.bf16.gmra.mxu0 %v5239
    %v5531 = vpop.f32.mrf.mxu0
    %v5532 = vadd.f32 0.0, %v5531
    %v5533 = vpop.f32.mrf.mxu0
    %v5534 = vpop.f32.mrf.mxu0
    %v5535 = vadd.f32 0.0, %v5534
    %v5536 = vpop.f32.mrf.mxu0
    %5537 = vmatprep.mubr.bf16.mxu0 0
    %5538 = vmatmul.mubr.bf16.gmra.mxu0 %v5240
    %v5539 = vpop.f32.mrf.mxu0
    %v5540 = vadd.f32 0.0, %v5539
    %v5541 = vpop.f32.mrf.mxu0
    %v5542 = vpop.f32.mrf.mxu0
    %v5543 = vadd.f32 0.0, %v5542
    %v5544 = vpop.f32.mrf.mxu0
    %5545 = vmatprep.mubr.bf16.mxu0 0
    %5546 = vmatmul.mubr.bf16.gmra.mxu0 %v5241
    %v5547 = vpop.f32.mrf.mxu0
    %v5548 = vadd.f32 0.0, %v5547
    %v5549 = vpop.f32.mrf.mxu0
    %v5550 = vpop.f32.mrf.mxu0
    %v5551 = vadd.f32 0.0, %v5550
    %v5552 = vpop.f32.mrf.mxu0
    %5553 = vmatprep.mubr.bf16.mxu0 0
    %5554 = vmatmul.mubr.bf16.gmra.mxu0 %v5242
    %v5555 = vpop.f32.mrf.mxu0
    %v5556 = vadd.f32 0.0, %v5555
    %v5557 = vpop.f32.mrf.mxu0
    %v5558 = vpop.f32.mrf.mxu0
    %v5559 = vadd.f32 0.0, %v5558
    %v5560 = vpop.f32.mrf.mxu0
    %5561 = vmatprep.mubr.bf16.mxu0 0
    %5562 = vmatmul.mubr.bf16.gmra.mxu0 %v5243
    %v5563 = vpop.f32.mrf.mxu0
    %v5564 = vadd.f32 0.0, %v5563
    %v5565 = vpop.f32.mrf.mxu0
    %v5566 = vpop.f32.mrf.mxu0
    %v5567 = vadd.f32 0.0, %v5566
    %v5568 = vpop.f32.mrf.mxu0
    %5569 = vmatprep.mubr.bf16.mxu0 0
    %5570 = vmatmul.mubr.bf16.gmra.mxu0 %v5244
    %v5571 = vpop.f32.mrf.mxu0
    %v5572 = vadd.f32 0.0, %v5571
    %v5573 = vpop.f32.mrf.mxu0
    %v5574 = vpop.f32.mrf.mxu0
    %v5575 = vadd.f32 0.0, %v5574
    %v5576 = vpop.f32.mrf.mxu0
    %5577 = vmatprep.mubr.bf16.mxu0 0
    %5578 = vmatmul.mubr.bf16.gmra.mxu0 %v5245
    %v5579 = vpop.f32.mrf.mxu0
    %v5580 = vadd.f32 0.0, %v5579
    %v5581 = vpop.f32.mrf.mxu0
    %v5582 = vpop.f32.mrf.mxu0
    %v5583 = vadd.f32 0.0, %v5582
    %v5584 = vpop.f32.mrf.mxu0
    %5585 = vmatprep.mubr.bf16.mxu0 0
    %5586 = vmatmul.mubr.bf16.gmra.mxu0 %v5246
    %v5587 = vpop.f32.mrf.mxu0
    %v5588 = vadd.f32 0.0, %v5587
    %v5589 = vpop.f32.mrf.mxu0
    %v5590 = vpop.f32.mrf.mxu0
    %v5591 = vadd.f32 0.0, %v5590
    %v5592 = vpop.f32.mrf.mxu0
    %5593 = vmatprep.mubr.bf16.mxu0 0
    %5594 = vmatmul.mubr.bf16.gmra.mxu0 %v5247
    %v5595 = vpop.f32.mrf.mxu0
    %v5596 = vadd.f32 0.0, %v5595
    %v5597 = vpop.f32.mrf.mxu0
    %v5598 = vpop.f32.mrf.mxu0
    %v5599 = vadd.f32 0.0, %v5598
    %v5600 = vpop.f32.mrf.mxu0
    %5601 = vdwg.mxu0
    %v5602 = vadd.f32 %v4768, %v5348
    %v5603 = vadd.f32 %v4769, %v5351
    %v5604 = vadd.f32 %v4770, %v5356
    %v5605 = vadd.f32 %v4771, %v5359
    %v5606 = vadd.f32 %v4772, %v5364
    %v5607 = vadd.f32 %v4773, %v5367
    %v5608 = vadd.f32 %v4774, %v5372
    %v5609 = vadd.f32 %v4775, %v5375
    %v5610 = vadd.f32 %v4776, %v5380
    %v5611 = vadd.f32 %v4777, %v5383
    %v5612 = vadd.f32 %v4778, %v5388
    %v5613 = vadd.f32 %v4779, %v5391
    %v5614 = vadd.f32 %v4780, %v5396
    %v5615 = vadd.f32 %v4781, %v5399
    %v5616 = vadd.f32 %v4782, %v5404
    %v5617 = vadd.f32 %v4783, %v5407
    %v5618 = vadd.f32 %v4784, %v5412
    %v5619 = vadd.f32 %v4785, %v5415
    %v5620 = vadd.f32 %v4786, %v5420
    %v5621 = vadd.f32 %v4787, %v5423
    %v5622 = vadd.f32 %v4788, %v5428
    %v5623 = vadd.f32 %v4789, %v5431
    %v5624 = vadd.f32 %v4790, %v5436
    %v5625 = vadd.f32 %v4791, %v5439
    %v5626 = vadd.f32 %v4792, %v5444
    %v5627 = vadd.f32 %v4793, %v5447
    %v5628 = vadd.f32 %v4794, %v5452
    %v5629 = vadd.f32 %v4795, %v5455
    %v5630 = vadd.f32 %v4796, %v5460
    %v5631 = vadd.f32 %v4797, %v5463
    %v5632 = vadd.f32 %v4798, %v5468
    %v5633 = vadd.f32 %v4799, %v5471
    %v5634 = vadd.f32 %v4800, %v5476
    %v5635 = vadd.f32 %v4801, %v5479
    %v5636 = vadd.f32 %v4802, %v5484
    %v5637 = vadd.f32 %v4803, %v5487
    %v5638 = vadd.f32 %v4804, %v5492
    %v5639 = vadd.f32 %v4805, %v5495
    %v5640 = vadd.f32 %v4806, %v5500
    %v5641 = vadd.f32 %v4807, %v5503
    %v5642 = vadd.f32 %v4808, %v5508
    %v5643 = vadd.f32 %v4809, %v5511
    %v5644 = vadd.f32 %v4810, %v5516
    %v5645 = vadd.f32 %v4811, %v5519
    %v5646 = vadd.f32 %v4812, %v5524
    %v5647 = vadd.f32 %v4813, %v5527
    %v5648 = vadd.f32 %v4814, %v5532
    %v5649 = vadd.f32 %v4815, %v5535
    %v5650 = vadd.f32 %v4816, %v5540
    %v5651 = vadd.f32 %v4817, %v5543
    %v5652 = vadd.f32 %v4818, %v5548
    %v5653 = vadd.f32 %v4819, %v5551
    %v5654 = vadd.f32 %v4820, %v5556
    %v5655 = vadd.f32 %v4821, %v5559
    %v5656 = vadd.f32 %v4822, %v5564
    %v5657 = vadd.f32 %v4823, %v5567
    %v5658 = vadd.f32 %v4824, %v5572
    %v5659 = vadd.f32 %v4825, %v5575
    %v5660 = vadd.f32 %v4826, %v5580
    %v5661 = vadd.f32 %v4827, %v5583
    %v5662 = vadd.f32 %v4828, %v5588
    %v5663 = vadd.f32 %v4829, %v5591
    %v5664 = vadd.f32 %v4830, %v5596
    %v5665 = vadd.f32 %v4831, %v5599
    %v5666 = vld [vmem:[#allocation2 + $0x27] sm:$0xff]
    %v5667 = vld [vmem:[#allocation2 + $0x2f] sm:$0xff]
    %v5668 = vld [vmem:[#allocation2 + $0x37] sm:$0xff]
    %v5669 = vld [vmem:[#allocation2 + $0x3f] sm:$0xff]
    %v5670 = vld [vmem:[#allocation2 + $0x47] sm:$0xff]
    %v5671 = vld [vmem:[#allocation2 + $0x4f] sm:$0xff]
    %v5672 = vld [vmem:[#allocation2 + $0x57] sm:$0xff]
    %v5673 = vld [vmem:[#allocation2 + $0x5f] sm:$0xff]
    %v5674 = vld [vmem:[#allocation2 + $0x67] sm:$0xff]
    %v5675 = vld [vmem:[#allocation2 + $0x6f] sm:$0xff]
    %v5676 = vld [vmem:[#allocation2 + $0x77] sm:$0xff]
    %v5677 = vld [vmem:[#allocation2 + $0x7f] sm:$0xff]
    %v5678 = vld [vmem:[#allocation2 + $0x87] sm:$0xff]
    %v5679 = vld [vmem:[#allocation2 + $0x8f] sm:$0xff]
    %v5680 = vld [vmem:[#allocation2 + $0x97] sm:$0xff]
    %v5681 = vld [vmem:[#allocation2 + $0x9f] sm:$0xff]
    %v5682 = vld [vmem:[#allocation2 + $0xa7] sm:$0xff]
    %v5683 = vld [vmem:[#allocation2 + $0xaf] sm:$0xff]
    %v5684 = vld [vmem:[#allocation2 + $0xb7] sm:$0xff]
    %v5685 = vld [vmem:[#allocation2 + $0xbf] sm:$0xff]
    %v5686 = vld [vmem:[#allocation2 + $0xc7] sm:$0xff]
    %v5687 = vld [vmem:[#allocation2 + $0xcf] sm:$0xff]
    %v5688 = vld [vmem:[#allocation2 + $0xd7] sm:$0xff]
    %v5689 = vld [vmem:[#allocation2 + $0xdf] sm:$0xff]
    %v5690 = vld [vmem:[#allocation2 + $0xe7] sm:$0xff]
    %v5691 = vld [vmem:[#allocation2 + $0xef] sm:$0xff]
    %v5692 = vld [vmem:[#allocation2 + $0xf7] sm:$0xff]
    %v5693 = vld [vmem:[#allocation2 + $0xff] sm:$0xff]
    %v5694 = vld [vmem:[#allocation2 + $0x107] sm:$0xff]
    %v5695 = vld [vmem:[#allocation2 + $0x10f] sm:$0xff]
    %v5696 = vld [vmem:[#allocation2 + $0x117] sm:$0xff]
    %v5697 = vld [vmem:[#allocation2 + $0x11f] sm:$0xff]
    %v5698 = vld [vmem:[#allocation2 + $0x127] sm:$0xff]
    %v5699 = vld [vmem:[#allocation2 + $0x12f] sm:$0xff]
    %v5700 = vld [vmem:[#allocation2 + $0x137] sm:$0xff]
    %v5701 = vld [vmem:[#allocation2 + $0x13f] sm:$0xff]
    %v5702 = vld [vmem:[#allocation2 + $0x147] sm:$0xff]
    %v5703 = vld [vmem:[#allocation2 + $0x14f] sm:$0xff]
    %v5704 = vld [vmem:[#allocation2 + $0x157] sm:$0xff]
    %v5705 = vld [vmem:[#allocation2 + $0x15f] sm:$0xff]
    %v5706 = vld [vmem:[#allocation2 + $0x167] sm:$0xff]
    %v5707 = vld [vmem:[#allocation2 + $0x16f] sm:$0xff]
    %v5708 = vld [vmem:[#allocation2 + $0x177] sm:$0xff]
    %v5709 = vld [vmem:[#allocation2 + $0x17f] sm:$0xff]
    %v5710 = vld [vmem:[#allocation2 + $0x187] sm:$0xff]
    %v5711 = vld [vmem:[#allocation2 + $0x18f] sm:$0xff]
    %v5712 = vld [vmem:[#allocation2 + $0x197] sm:$0xff]
    %v5713 = vld [vmem:[#allocation2 + $0x19f] sm:$0xff]
    %v5714 = vld [vmem:[#allocation2 + $0x1a7] sm:$0xff]
    %v5715 = vld [vmem:[#allocation2 + $0x1af] sm:$0xff]
    %v5716 = vld [vmem:[#allocation2 + $0x1b7] sm:$0xff]
    %v5717 = vld [vmem:[#allocation2 + $0x1bf] sm:$0xff]
    %v5718 = vld [vmem:[#allocation2 + $0x1c7] sm:$0xff]
    %v5719 = vld [vmem:[#allocation2 + $0x1cf] sm:$0xff]
    %v5720 = vld [vmem:[#allocation2 + $0x1d7] sm:$0xff]
    %v5721 = vld [vmem:[#allocation2 + $0x1df] sm:$0xff]
    %v5722 = vld [vmem:[#allocation2 + $0x1e7] sm:$0xff]
    %v5723 = vld [vmem:[#allocation2 + $0x1ef] sm:$0xff]
    %v5724 = vld [vmem:[#allocation2 + $0x1f7] sm:$0xff]
    %v5725 = vld [vmem:[#allocation2 + $0x1ff] sm:$0xff]
    %v5726 = vld [vmem:[#allocation2 + $0x207] sm:$0xff]
    %v5727 = vld [vmem:[#allocation2 + $0x20f] sm:$0xff]
    %v5728 = vld [vmem:[#allocation2 + $0x217] sm:$0xff]
    %v5729 = vld [vmem:[#allocation2 + $0x21f] sm:$0xff]
    %5730 = vset.pattern.permute.xlu0 48
    %5731 = vperm.xlu0 %5730, %v1047
    %v5732 = vpop.permute.xlu0 %5731
    %5734 = vset.pattern.permute.xlu0 48
    %5735 = vperm.xlu0 %5734, %v1048
    %v5736 = vpop.permute.xlu0 %5735
    %5738 = vset.pattern.permute.xlu0 48
    %5739 = vperm.xlu0 %5738, %v1049
    %v5740 = vpop.permute.xlu0 %5739
    %5742 = vset.pattern.permute.xlu0 48
    %5743 = vperm.xlu0 %5742, %v1050
    %v5744 = vpop.permute.xlu0 %5743
    %5746 = vset.pattern.permute.xlu0 48
    %5747 = vperm.xlu0 %5746, %v1051
    %v5748 = vpop.permute.xlu0 %5747
    %5750 = vset.pattern.permute.xlu0 48
    %5751 = vperm.xlu0 %5750, %v1052
    %v5752 = vpop.permute.xlu0 %5751
    %5754 = vset.pattern.permute.xlu0 48
    %5755 = vperm.xlu0 %5754, %v1053
    %v5756 = vpop.permute.xlu0 %5755
    %5758 = vset.pattern.permute.xlu0 48
    %5759 = vperm.xlu0 %5758, %v1054
    %v5760 = vpop.permute.xlu0 %5759
    %5762 = vset.pattern.permute.xlu0 48
    %5763 = vperm.xlu0 %5762, %v1055
    %v5764 = vpop.permute.xlu0 %5763
    %5766 = vset.pattern.permute.xlu0 48
    %5767 = vperm.xlu0 %5766, %v1056
    %v5768 = vpop.permute.xlu0 %5767
    %5770 = vset.pattern.permute.xlu0 48
    %5771 = vperm.xlu0 %5770, %v1057
    %v5772 = vpop.permute.xlu0 %5771
    %5774 = vset.pattern.permute.xlu0 48
    %5775 = vperm.xlu0 %5774, %v1058
    %v5776 = vpop.permute.xlu0 %5775
    %5778 = vset.pattern.permute.xlu0 48
    %5779 = vperm.xlu0 %5778, %v1059
    %v5780 = vpop.permute.xlu0 %5779
    %5782 = vset.pattern.permute.xlu0 48
    %5783 = vperm.xlu0 %5782, %v1060
    %v5784 = vpop.permute.xlu0 %5783
    %5786 = vset.pattern.permute.xlu0 48
    %5787 = vperm.xlu0 %5786, %v1061
    %v5788 = vpop.permute.xlu0 %5787
    %5790 = vset.pattern.permute.xlu0 48
    %5791 = vperm.xlu0 %5790, %v1062
    %v5792 = vpop.permute.xlu0 %5791
    %5794 = vset.pattern.permute.xlu0 48
    %5795 = vperm.xlu0 %5794, %v1063
    %v5796 = vpop.permute.xlu0 %5795
    %5798 = vset.pattern.permute.xlu0 48
    %5799 = vperm.xlu0 %5798, %v1064
    %v5800 = vpop.permute.xlu0 %5799
    %5802 = vset.pattern.permute.xlu0 48
    %5803 = vperm.xlu0 %5802, %v1065
    %v5804 = vpop.permute.xlu0 %5803
    %5806 = vset.pattern.permute.xlu0 48
    %5807 = vperm.xlu0 %5806, %v1066
    %v5808 = vpop.permute.xlu0 %5807
    %5810 = vset.pattern.permute.xlu0 48
    %5811 = vperm.xlu0 %5810, %v1067
    %v5812 = vpop.permute.xlu0 %5811
    %5814 = vset.pattern.permute.xlu0 48
    %5815 = vperm.xlu0 %5814, %v1068
    %v5816 = vpop.permute.xlu0 %5815
    %5818 = vset.pattern.permute.xlu0 48
    %5819 = vperm.xlu0 %5818, %v1069
    %v5820 = vpop.permute.xlu0 %5819
    %5822 = vset.pattern.permute.xlu0 48
    %5823 = vperm.xlu0 %5822, %v1070
    %v5824 = vpop.permute.xlu0 %5823
    %5826 = vset.pattern.permute.xlu0 48
    %5827 = vperm.xlu0 %5826, %v1071
    %v5828 = vpop.permute.xlu0 %5827
    %5830 = vset.pattern.permute.xlu0 48
    %5831 = vperm.xlu0 %5830, %v1072
    %v5832 = vpop.permute.xlu0 %5831
    %5834 = vset.pattern.permute.xlu0 48
    %5835 = vperm.xlu0 %5834, %v1073
    %v5836 = vpop.permute.xlu0 %5835
    %5838 = vset.pattern.permute.xlu0 48
    %5839 = vperm.xlu0 %5838, %v1074
    %v5840 = vpop.permute.xlu0 %5839
    %5842 = vset.pattern.permute.xlu0 48
    %5843 = vperm.xlu0 %5842, %v1075
    %v5844 = vpop.permute.xlu0 %5843
    %5846 = vset.pattern.permute.xlu0 48
    %5847 = vperm.xlu0 %5846, %v1076
    %v5848 = vpop.permute.xlu0 %5847
    %5850 = vset.pattern.permute.xlu0 48
    %5851 = vperm.xlu0 %5850, %v1077
    %v5852 = vpop.permute.xlu0 %5851
    %5854 = vset.pattern.permute.xlu0 48
    %5855 = vperm.xlu0 %5854, %v1078
    %v5856 = vpop.permute.xlu0 %5855
    %5858 = vset.pattern.permute.xlu0 48
    %5859 = vperm.xlu0 %5858, %v1079
    %v5860 = vpop.permute.xlu0 %5859
    %5862 = vset.pattern.permute.xlu0 48
    %5863 = vperm.xlu0 %5862, %v1080
    %v5864 = vpop.permute.xlu0 %5863
    %5866 = vset.pattern.permute.xlu0 48
    %5867 = vperm.xlu0 %5866, %v1081
    %v5868 = vpop.permute.xlu0 %5867
    %5870 = vset.pattern.permute.xlu0 48
    %5871 = vperm.xlu0 %5870, %v1082
    %v5872 = vpop.permute.xlu0 %5871
    %5874 = vset.pattern.permute.xlu0 48
    %5875 = vperm.xlu0 %5874, %v1083
    %v5876 = vpop.permute.xlu0 %5875
    %5878 = vset.pattern.permute.xlu0 48
    %5879 = vperm.xlu0 %5878, %v1084
    %v5880 = vpop.permute.xlu0 %5879
    %5882 = vset.pattern.permute.xlu0 48
    %5883 = vperm.xlu0 %5882, %v1085
    %v5884 = vpop.permute.xlu0 %5883
    %5886 = vset.pattern.permute.xlu0 48
    %5887 = vperm.xlu0 %5886, %v1086
    %v5888 = vpop.permute.xlu0 %5887
    %5890 = vset.pattern.permute.xlu0 48
    %5891 = vperm.xlu0 %5890, %v1087
    %v5892 = vpop.permute.xlu0 %5891
    %5894 = vset.pattern.permute.xlu0 48
    %5895 = vperm.xlu0 %5894, %v1088
    %v5896 = vpop.permute.xlu0 %5895
    %5898 = vset.pattern.permute.xlu0 48
    %5899 = vperm.xlu0 %5898, %v1089
    %v5900 = vpop.permute.xlu0 %5899
    %5902 = vset.pattern.permute.xlu0 48
    %5903 = vperm.xlu0 %5902, %v1090
    %v5904 = vpop.permute.xlu0 %5903
    %5906 = vset.pattern.permute.xlu0 48
    %5907 = vperm.xlu0 %5906, %v1091
    %v5908 = vpop.permute.xlu0 %5907
    %5910 = vset.pattern.permute.xlu0 48
    %5911 = vperm.xlu0 %5910, %v1092
    %v5912 = vpop.permute.xlu0 %5911
    %5914 = vset.pattern.permute.xlu0 48
    %5915 = vperm.xlu0 %5914, %v1093
    %v5916 = vpop.permute.xlu0 %5915
    %5918 = vset.pattern.permute.xlu0 48
    %5919 = vperm.xlu0 %5918, %v1094
    %v5920 = vpop.permute.xlu0 %5919
    %5922 = vset.pattern.permute.xlu0 48
    %5923 = vperm.xlu0 %5922, %v1095
    %v5924 = vpop.permute.xlu0 %5923
    %5926 = vset.pattern.permute.xlu0 48
    %5927 = vperm.xlu0 %5926, %v1096
    %v5928 = vpop.permute.xlu0 %5927
    %5930 = vset.pattern.permute.xlu0 48
    %5931 = vperm.xlu0 %5930, %v1097
    %v5932 = vpop.permute.xlu0 %5931
    %5934 = vset.pattern.permute.xlu0 48
    %5935 = vperm.xlu0 %5934, %v1098
    %v5936 = vpop.permute.xlu0 %5935
    %5938 = vset.pattern.permute.xlu0 48
    %5939 = vperm.xlu0 %5938, %v1099
    %v5940 = vpop.permute.xlu0 %5939
    %5942 = vset.pattern.permute.xlu0 48
    %5943 = vperm.xlu0 %5942, %v1100
    %v5944 = vpop.permute.xlu0 %5943
    %5946 = vset.pattern.permute.xlu0 48
    %5947 = vperm.xlu0 %5946, %v1101
    %v5948 = vpop.permute.xlu0 %5947
    %5950 = vset.pattern.permute.xlu0 48
    %5951 = vperm.xlu0 %5950, %v1102
    %v5952 = vpop.permute.xlu0 %5951
    %5954 = vset.pattern.permute.xlu0 48
    %5955 = vperm.xlu0 %5954, %v1103
    %v5956 = vpop.permute.xlu0 %5955
    %5958 = vset.pattern.permute.xlu0 48
    %5959 = vperm.xlu0 %5958, %v1104
    %v5960 = vpop.permute.xlu0 %5959
    %5962 = vset.pattern.permute.xlu0 48
    %5963 = vperm.xlu0 %5962, %v1105
    %v5964 = vpop.permute.xlu0 %5963
    %5966 = vset.pattern.permute.xlu0 48
    %5967 = vperm.xlu0 %5966, %v1106
    %v5968 = vpop.permute.xlu0 %5967
    %5970 = vset.pattern.permute.xlu0 48
    %5971 = vperm.xlu0 %5970, %v1107
    %v5972 = vpop.permute.xlu0 %5971
    %5974 = vset.pattern.permute.xlu0 48
    %5975 = vperm.xlu0 %5974, %v1108
    %v5976 = vpop.permute.xlu0 %5975
    %5978 = vset.pattern.permute.xlu0 48
    %5979 = vperm.xlu0 %5978, %v1109
    %v5980 = vpop.permute.xlu0 %5979
    %5982 = vset.pattern.permute.xlu0 48
    %5983 = vperm.xlu0 %5982, %v1110
    %v5984 = vpop.permute.xlu0 %5983
    %v5986 = vmul.f32 %v5666, %v5732
    %v5987 = vmul.f32 %v5667, %v5736
    %v5988 = vmul.f32 %v5668, %v5740
    %v5989 = vmul.f32 %v5669, %v5744
    %v5990 = vmul.f32 %v5670, %v5748
    %v5991 = vmul.f32 %v5671, %v5752
    %v5992 = vmul.f32 %v5672, %v5756
    %v5993 = vmul.f32 %v5673, %v5760
    %v5994 = vmul.f32 %v5674, %v5764
    %v5995 = vmul.f32 %v5675, %v5768
    %v5996 = vmul.f32 %v5676, %v5772
    %v5997 = vmul.f32 %v5677, %v5776
    %v5998 = vmul.f32 %v5678, %v5780
    %v5999 = vmul.f32 %v5679, %v5784
    %v6000 = vmul.f32 %v5680, %v5788
    %v6001 = vmul.f32 %v5681, %v5792
    %v6002 = vmul.f32 %v5682, %v5796
    %v6003 = vmul.f32 %v5683, %v5800
    %v6004 = vmul.f32 %v5684, %v5804
    %v6005 = vmul.f32 %v5685, %v5808
    %v6006 = vmul.f32 %v5686, %v5812
    %v6007 = vmul.f32 %v5687, %v5816
    %v6008 = vmul.f32 %v5688, %v5820
    %v6009 = vmul.f32 %v5689, %v5824
    %v6010 = vmul.f32 %v5690, %v5828
    %v6011 = vmul.f32 %v5691, %v5832
    %v6012 = vmul.f32 %v5692, %v5836
    %v6013 = vmul.f32 %v5693, %v5840
    %v6014 = vmul.f32 %v5694, %v5844
    %v6015 = vmul.f32 %v5695, %v5848
    %v6016 = vmul.f32 %v5696, %v5852
    %v6017 = vmul.f32 %v5697, %v5856
    %v6018 = vmul.f32 %v5698, %v5860
    %v6019 = vmul.f32 %v5699, %v5864
    %v6020 = vmul.f32 %v5700, %v5868
    %v6021 = vmul.f32 %v5701, %v5872
    %v6022 = vmul.f32 %v5702, %v5876
    %v6023 = vmul.f32 %v5703, %v5880
    %v6024 = vmul.f32 %v5704, %v5884
    %v6025 = vmul.f32 %v5705, %v5888
    %v6026 = vmul.f32 %v5706, %v5892
    %v6027 = vmul.f32 %v5707, %v5896
    %v6028 = vmul.f32 %v5708, %v5900
    %v6029 = vmul.f32 %v5709, %v5904
    %v6030 = vmul.f32 %v5710, %v5908
    %v6031 = vmul.f32 %v5711, %v5912
    %v6032 = vmul.f32 %v5712, %v5916
    %v6033 = vmul.f32 %v5713, %v5920
    %v6034 = vmul.f32 %v5714, %v5924
    %v6035 = vmul.f32 %v5715, %v5928
    %v6036 = vmul.f32 %v5716, %v5932
    %v6037 = vmul.f32 %v5717, %v5936
    %v6038 = vmul.f32 %v5718, %v5940
    %v6039 = vmul.f32 %v5719, %v5944
    %v6040 = vmul.f32 %v5720, %v5948
    %v6041 = vmul.f32 %v5721, %v5952
    %v6042 = vmul.f32 %v5722, %v5956
    %v6043 = vmul.f32 %v5723, %v5960
    %v6044 = vmul.f32 %v5724, %v5964
    %v6045 = vmul.f32 %v5725, %v5968
    %v6046 = vmul.f32 %v5726, %v5972
    %v6047 = vmul.f32 %v5727, %v5976
    %v6048 = vmul.f32 %v5728, %v5980
    %v6049 = vmul.f32 %v5729, %v5984
    %v6050 = vpack.c.bf16 %v5987, %v5986
    %v6051 = vpack.c.bf16 %v5989, %v5988
    %v6052 = vpack.c.bf16 %v5991, %v5990
    %v6053 = vpack.c.bf16 %v5993, %v5992
    %v6054 = vpack.c.bf16 %v5995, %v5994
    %v6055 = vpack.c.bf16 %v5997, %v5996
    %v6056 = vpack.c.bf16 %v5999, %v5998
    %v6057 = vpack.c.bf16 %v6001, %v6000
    %v6058 = vpack.c.bf16 %v6003, %v6002
    %v6059 = vpack.c.bf16 %v6005, %v6004
    %v6060 = vpack.c.bf16 %v6007, %v6006
    %v6061 = vpack.c.bf16 %v6009, %v6008
    %v6062 = vpack.c.bf16 %v6011, %v6010
    %v6063 = vpack.c.bf16 %v6013, %v6012
    %v6064 = vpack.c.bf16 %v6015, %v6014
    %v6065 = vpack.c.bf16 %v6017, %v6016
    %v6066 = vpack.c.bf16 %v6019, %v6018
    %v6067 = vpack.c.bf16 %v6021, %v6020
    %v6068 = vpack.c.bf16 %v6023, %v6022
    %v6069 = vpack.c.bf16 %v6025, %v6024
    %v6070 = vpack.c.bf16 %v6027, %v6026
    %v6071 = vpack.c.bf16 %v6029, %v6028
    %v6072 = vpack.c.bf16 %v6031, %v6030
    %v6073 = vpack.c.bf16 %v6033, %v6032
    %v6074 = vpack.c.bf16 %v6035, %v6034
    %v6075 = vpack.c.bf16 %v6037, %v6036
    %v6076 = vpack.c.bf16 %v6039, %v6038
    %v6077 = vpack.c.bf16 %v6041, %v6040
    %v6078 = vpack.c.bf16 %v6043, %v6042
    %v6079 = vpack.c.bf16 %v6045, %v6044
    %v6080 = vpack.c.bf16 %v6047, %v6046
    %v6081 = vpack.c.bf16 %v6049, %v6048
    %s6082 = scalar_lea.vmem [#allocation12], 384
    %v6083 = vld [vmem:[%s6082] sm:$0xf]
    %v6084 = vld [vmem:[%s6082 + $0x4] sm:$0xf]
    %v6085 = vld [vmem:[%s6082 + $0x8] sm:$0xf]
    %v6086 = vld [vmem:[%s6082 + $0xc] sm:$0xf]
    %v6087 = vld [vmem:[%s6082 + $0x10] sm:$0xf]
    %v6088 = vld [vmem:[%s6082 + $0x14] sm:$0xf]
    %v6089 = vld [vmem:[%s6082 + $0x18] sm:$0xf]
    %v6090 = vld [vmem:[%s6082 + $0x1c] sm:$0xf]
    %v6091 = vld [vmem:[%s6082 + $0x20] sm:$0xf]
    %v6092 = vld [vmem:[%s6082 + $0x24] sm:$0xf]
    %v6093 = vld [vmem:[%s6082 + $0x28] sm:$0xf]
    %v6094 = vld [vmem:[%s6082 + $0x2c] sm:$0xf]
    %v6095 = vld [vmem:[%s6082 + $0x30] sm:$0xf]
    %v6096 = vld [vmem:[%s6082 + $0x34] sm:$0xf]
    %v6097 = vld [vmem:[%s6082 + $0x38] sm:$0xf]
    %v6098 = vld [vmem:[%s6082 + $0x3c] sm:$0xf]
    %v6115 = vunpack.c.l.b16 %v6083
    %v6116 = vunpack.c.l.b16 %v6084
    %v6117 = vunpack.c.l.b16 %v6085
    %v6118 = vunpack.c.l.b16 %v6086
    %v6119 = vunpack.c.l.b16 %v6087
    %v6120 = vunpack.c.l.b16 %v6088
    %v6121 = vunpack.c.l.b16 %v6089
    %v6122 = vunpack.c.l.b16 %v6090
    %v6123 = vunpack.c.l.b16 %v6091
    %v6124 = vunpack.c.l.b16 %v6092
    %v6125 = vunpack.c.l.b16 %v6093
    %v6126 = vunpack.c.l.b16 %v6094
    %v6127 = vunpack.c.l.b16 %v6095
    %v6128 = vunpack.c.l.b16 %v6096
    %v6129 = vunpack.c.l.b16 %v6097
    %v6130 = vunpack.c.l.b16 %v6098
    %v6131 = vpack.c.b16 %v6116, %v6115
    %v6132 = vpack.c.b16 %v6118, %v6117
    %v6133 = vpack.c.b16 %v6120, %v6119
    %v6134 = vpack.c.b16 %v6122, %v6121
    %v6135 = vpack.c.b16 %v6124, %v6123
    %v6136 = vpack.c.b16 %v6126, %v6125
    %v6137 = vpack.c.b16 %v6128, %v6127
    %v6138 = vpack.c.b16 %v6130, %v6129
    %6147 = vmatprep.subr.bf16.mxu0 0
    %6148 = vmatpush1.bf16.msra.mxu0 %v6138
    %6149 = vmatprep.subr.bf16.mxu0 0
    %6150 = vmatpush1.bf16.msra.mxu0 %v6137
    %6151 = vmatprep.subr.bf16.mxu0 0
    %6152 = vmatpush1.bf16.msra.mxu0 %v6136
    %6153 = vmatprep.subr.bf16.mxu0 0
    %6154 = vmatpush1.bf16.msra.mxu0 %v6135
    %6155 = vmatprep.subr.bf16.mxu0 0
    %6156 = vmatpush1.bf16.msra.mxu0 %v6134
    %6157 = vmatprep.subr.bf16.mxu0 0
    %6158 = vmatpush1.bf16.msra.mxu0 %v6133
    %6159 = vmatprep.subr.bf16.mxu0 0
    %6160 = vmatpush1.bf16.msra.mxu0 %v6132
    %6161 = vmatprep.subr.bf16.mxu0 0
    %6162 = vmatpush1.bf16.msra.mxu0 %v6131
    %6163 = vmatprep.subr.bf16.mxu0 0
    %6164 = vmatpush2.bf16.msra.mxu0 0
    %6165 = vmatprep.subr.bf16.mxu0 0
    %6166 = vmatpush2.bf16.msra.mxu0 0
    %6167 = vmatprep.subr.bf16.mxu0 0
    %6168 = vmatpush2.bf16.msra.mxu0 0
    %6169 = vmatprep.subr.bf16.mxu0 0
    %6170 = vmatpush2.bf16.msra.mxu0 0
    %6171 = vmatprep.subr.bf16.mxu0 0
    %6172 = vmatpush2.bf16.msra.mxu0 0
    %6173 = vmatprep.subr.bf16.mxu0 0
    %6174 = vmatpush2.bf16.msra.mxu0 0
    %6175 = vmatprep.subr.bf16.mxu0 0
    %6176 = vmatpush2.bf16.msra.mxu0 0
    %6177 = vmatprep.subr.bf16.mxu0 0
    %6178 = vmatpush2.bf16.msra.mxu0 0
    %6179 = vmatprep.mubr.bf16.mxu0 0
    %6180 = vmatmul.mubr.bf16.gmra.mxu0 %v6050
    %v6181 = vpop.f32.mrf.mxu0
    %v6182 = vadd.f32 0.0, %v6181
    %v6183 = vpop.f32.mrf.mxu0
    %v6184 = vpop.f32.mrf.mxu0
    %v6185 = vadd.f32 0.0, %v6184
    %v6186 = vpop.f32.mrf.mxu0
    %6187 = vmatprep.mubr.bf16.mxu0 0
    %6188 = vmatmul.mubr.bf16.gmra.mxu0 %v6051
    %v6189 = vpop.f32.mrf.mxu0
    %v6190 = vadd.f32 0.0, %v6189
    %v6191 = vpop.f32.mrf.mxu0
    %v6192 = vpop.f32.mrf.mxu0
    %v6193 = vadd.f32 0.0, %v6192
    %v6194 = vpop.f32.mrf.mxu0
    %6195 = vmatprep.mubr.bf16.mxu0 0
    %6196 = vmatmul.mubr.bf16.gmra.mxu0 %v6052
    %v6197 = vpop.f32.mrf.mxu0
    %v6198 = vadd.f32 0.0, %v6197
    %v6199 = vpop.f32.mrf.mxu0
    %v6200 = vpop.f32.mrf.mxu0
    %v6201 = vadd.f32 0.0, %v6200
    %v6202 = vpop.f32.mrf.mxu0
    %6203 = vmatprep.mubr.bf16.mxu0 0
    %6204 = vmatmul.mubr.bf16.gmra.mxu0 %v6053
    %v6205 = vpop.f32.mrf.mxu0
    %v6206 = vadd.f32 0.0, %v6205
    %v6207 = vpop.f32.mrf.mxu0
    %v6208 = vpop.f32.mrf.mxu0
    %v6209 = vadd.f32 0.0, %v6208
    %v6210 = vpop.f32.mrf.mxu0
    %6211 = vmatprep.mubr.bf16.mxu0 0
    %6212 = vmatmul.mubr.bf16.gmra.mxu0 %v6054
    %v6213 = vpop.f32.mrf.mxu0
    %v6214 = vadd.f32 0.0, %v6213
    %v6215 = vpop.f32.mrf.mxu0
    %v6216 = vpop.f32.mrf.mxu0
    %v6217 = vadd.f32 0.0, %v6216
    %v6218 = vpop.f32.mrf.mxu0
    %6219 = vmatprep.mubr.bf16.mxu0 0
    %6220 = vmatmul.mubr.bf16.gmra.mxu0 %v6055
    %v6221 = vpop.f32.mrf.mxu0
    %v6222 = vadd.f32 0.0, %v6221
    %v6223 = vpop.f32.mrf.mxu0
    %v6224 = vpop.f32.mrf.mxu0
    %v6225 = vadd.f32 0.0, %v6224
    %v6226 = vpop.f32.mrf.mxu0
    %6227 = vmatprep.mubr.bf16.mxu0 0
    %6228 = vmatmul.mubr.bf16.gmra.mxu0 %v6056
    %v6229 = vpop.f32.mrf.mxu0
    %v6230 = vadd.f32 0.0, %v6229
    %v6231 = vpop.f32.mrf.mxu0
    %v6232 = vpop.f32.mrf.mxu0
    %v6233 = vadd.f32 0.0, %v6232
    %v6234 = vpop.f32.mrf.mxu0
    %6235 = vmatprep.mubr.bf16.mxu0 0
    %6236 = vmatmul.mubr.bf16.gmra.mxu0 %v6057
    %v6237 = vpop.f32.mrf.mxu0
    %v6238 = vadd.f32 0.0, %v6237
    %v6239 = vpop.f32.mrf.mxu0
    %v6240 = vpop.f32.mrf.mxu0
    %v6241 = vadd.f32 0.0, %v6240
    %v6242 = vpop.f32.mrf.mxu0
    %6243 = vmatprep.mubr.bf16.mxu0 0
    %6244 = vmatmul.mubr.bf16.gmra.mxu0 %v6058
    %v6245 = vpop.f32.mrf.mxu0
    %v6246 = vadd.f32 0.0, %v6245
    %v6247 = vpop.f32.mrf.mxu0
    %v6248 = vpop.f32.mrf.mxu0
    %v6249 = vadd.f32 0.0, %v6248
    %v6250 = vpop.f32.mrf.mxu0
    %6251 = vmatprep.mubr.bf16.mxu0 0
    %6252 = vmatmul.mubr.bf16.gmra.mxu0 %v6059
    %v6253 = vpop.f32.mrf.mxu0
    %v6254 = vadd.f32 0.0, %v6253
    %v6255 = vpop.f32.mrf.mxu0
    %v6256 = vpop.f32.mrf.mxu0
    %v6257 = vadd.f32 0.0, %v6256
    %v6258 = vpop.f32.mrf.mxu0
    %6259 = vmatprep.mubr.bf16.mxu0 0
    %6260 = vmatmul.mubr.bf16.gmra.mxu0 %v6060
    %v6261 = vpop.f32.mrf.mxu0
    %v6262 = vadd.f32 0.0, %v6261
    %v6263 = vpop.f32.mrf.mxu0
    %v6264 = vpop.f32.mrf.mxu0
    %v6265 = vadd.f32 0.0, %v6264
    %v6266 = vpop.f32.mrf.mxu0
    %6267 = vmatprep.mubr.bf16.mxu0 0
    %6268 = vmatmul.mubr.bf16.gmra.mxu0 %v6061
    %v6269 = vpop.f32.mrf.mxu0
    %v6270 = vadd.f32 0.0, %v6269
    %v6271 = vpop.f32.mrf.mxu0
    %v6272 = vpop.f32.mrf.mxu0
    %v6273 = vadd.f32 0.0, %v6272
    %v6274 = vpop.f32.mrf.mxu0
    %6275 = vmatprep.mubr.bf16.mxu0 0
    %6276 = vmatmul.mubr.bf16.gmra.mxu0 %v6062
    %v6277 = vpop.f32.mrf.mxu0
    %v6278 = vadd.f32 0.0, %v6277
    %v6279 = vpop.f32.mrf.mxu0
    %v6280 = vpop.f32.mrf.mxu0
    %v6281 = vadd.f32 0.0, %v6280
    %v6282 = vpop.f32.mrf.mxu0
    %6283 = vmatprep.mubr.bf16.mxu0 0
    %6284 = vmatmul.mubr.bf16.gmra.mxu0 %v6063
    %v6285 = vpop.f32.mrf.mxu0
    %v6286 = vadd.f32 0.0, %v6285
    %v6287 = vpop.f32.mrf.mxu0
    %v6288 = vpop.f32.mrf.mxu0
    %v6289 = vadd.f32 0.0, %v6288
    %v6290 = vpop.f32.mrf.mxu0
    %6291 = vmatprep.mubr.bf16.mxu0 0
    %6292 = vmatmul.mubr.bf16.gmra.mxu0 %v6064
    %v6293 = vpop.f32.mrf.mxu0
    %v6294 = vadd.f32 0.0, %v6293
    %v6295 = vpop.f32.mrf.mxu0
    %v6296 = vpop.f32.mrf.mxu0
    %v6297 = vadd.f32 0.0, %v6296
    %v6298 = vpop.f32.mrf.mxu0
    %6299 = vmatprep.mubr.bf16.mxu0 0
    %6300 = vmatmul.mubr.bf16.gmra.mxu0 %v6065
    %v6301 = vpop.f32.mrf.mxu0
    %v6302 = vadd.f32 0.0, %v6301
    %v6303 = vpop.f32.mrf.mxu0
    %v6304 = vpop.f32.mrf.mxu0
    %v6305 = vadd.f32 0.0, %v6304
    %v6306 = vpop.f32.mrf.mxu0
    %6307 = vmatprep.mubr.bf16.mxu0 0
    %6308 = vmatmul.mubr.bf16.gmra.mxu0 %v6066
    %v6309 = vpop.f32.mrf.mxu0
    %v6310 = vadd.f32 0.0, %v6309
    %v6311 = vpop.f32.mrf.mxu0
    %v6312 = vpop.f32.mrf.mxu0
    %v6313 = vadd.f32 0.0, %v6312
    %v6314 = vpop.f32.mrf.mxu0
    %6315 = vmatprep.mubr.bf16.mxu0 0
    %6316 = vmatmul.mubr.bf16.gmra.mxu0 %v6067
    %v6317 = vpop.f32.mrf.mxu0
    %v6318 = vadd.f32 0.0, %v6317
    %v6319 = vpop.f32.mrf.mxu0
    %v6320 = vpop.f32.mrf.mxu0
    %v6321 = vadd.f32 0.0, %v6320
    %v6322 = vpop.f32.mrf.mxu0
    %6323 = vmatprep.mubr.bf16.mxu0 0
    %6324 = vmatmul.mubr.bf16.gmra.mxu0 %v6068
    %v6325 = vpop.f32.mrf.mxu0
    %v6326 = vadd.f32 0.0, %v6325
    %v6327 = vpop.f32.mrf.mxu0
    %v6328 = vpop.f32.mrf.mxu0
    %v6329 = vadd.f32 0.0, %v6328
    %v6330 = vpop.f32.mrf.mxu0
    %6331 = vmatprep.mubr.bf16.mxu0 0
    %6332 = vmatmul.mubr.bf16.gmra.mxu0 %v6069
    %v6333 = vpop.f32.mrf.mxu0
    %v6334 = vadd.f32 0.0, %v6333
    %v6335 = vpop.f32.mrf.mxu0
    %v6336 = vpop.f32.mrf.mxu0
    %v6337 = vadd.f32 0.0, %v6336
    %v6338 = vpop.f32.mrf.mxu0
    %6339 = vmatprep.mubr.bf16.mxu0 0
    %6340 = vmatmul.mubr.bf16.gmra.mxu0 %v6070
    %v6341 = vpop.f32.mrf.mxu0
    %v6342 = vadd.f32 0.0, %v6341
    %v6343 = vpop.f32.mrf.mxu0
    %v6344 = vpop.f32.mrf.mxu0
    %v6345 = vadd.f32 0.0, %v6344
    %v6346 = vpop.f32.mrf.mxu0
    %6347 = vmatprep.mubr.bf16.mxu0 0
    %6348 = vmatmul.mubr.bf16.gmra.mxu0 %v6071
    %v6349 = vpop.f32.mrf.mxu0
    %v6350 = vadd.f32 0.0, %v6349
    %v6351 = vpop.f32.mrf.mxu0
    %v6352 = vpop.f32.mrf.mxu0
    %v6353 = vadd.f32 0.0, %v6352
    %v6354 = vpop.f32.mrf.mxu0
    %6355 = vmatprep.mubr.bf16.mxu0 0
    %6356 = vmatmul.mubr.bf16.gmra.mxu0 %v6072
    %v6357 = vpop.f32.mrf.mxu0
    %v6358 = vadd.f32 0.0, %v6357
    %v6359 = vpop.f32.mrf.mxu0
    %v6360 = vpop.f32.mrf.mxu0
    %v6361 = vadd.f32 0.0, %v6360
    %v6362 = vpop.f32.mrf.mxu0
    %6363 = vmatprep.mubr.bf16.mxu0 0
    %6364 = vmatmul.mubr.bf16.gmra.mxu0 %v6073
    %v6365 = vpop.f32.mrf.mxu0
    %v6366 = vadd.f32 0.0, %v6365
    %v6367 = vpop.f32.mrf.mxu0
    %v6368 = vpop.f32.mrf.mxu0
    %v6369 = vadd.f32 0.0, %v6368
    %v6370 = vpop.f32.mrf.mxu0
    %6371 = vmatprep.mubr.bf16.mxu0 0
    %6372 = vmatmul.mubr.bf16.gmra.mxu0 %v6074
    %v6373 = vpop.f32.mrf.mxu0
    %v6374 = vadd.f32 0.0, %v6373
    %v6375 = vpop.f32.mrf.mxu0
    %v6376 = vpop.f32.mrf.mxu0
    %v6377 = vadd.f32 0.0, %v6376
    %v6378 = vpop.f32.mrf.mxu0
    %6379 = vmatprep.mubr.bf16.mxu0 0
    %6380 = vmatmul.mubr.bf16.gmra.mxu0 %v6075
    %v6381 = vpop.f32.mrf.mxu0
    %v6382 = vadd.f32 0.0, %v6381
    %v6383 = vpop.f32.mrf.mxu0
    %v6384 = vpop.f32.mrf.mxu0
    %v6385 = vadd.f32 0.0, %v6384
    %v6386 = vpop.f32.mrf.mxu0
    %6387 = vmatprep.mubr.bf16.mxu0 0
    %6388 = vmatmul.mubr.bf16.gmra.mxu0 %v6076
    %v6389 = vpop.f32.mrf.mxu0
    %v6390 = vadd.f32 0.0, %v6389
    %v6391 = vpop.f32.mrf.mxu0
    %v6392 = vpop.f32.mrf.mxu0
    %v6393 = vadd.f32 0.0, %v6392
    %v6394 = vpop.f32.mrf.mxu0
    %6395 = vmatprep.mubr.bf16.mxu0 0
    %6396 = vmatmul.mubr.bf16.gmra.mxu0 %v6077
    %v6397 = vpop.f32.mrf.mxu0
    %v6398 = vadd.f32 0.0, %v6397
    %v6399 = vpop.f32.mrf.mxu0
    %v6400 = vpop.f32.mrf.mxu0
    %v6401 = vadd.f32 0.0, %v6400
    %v6402 = vpop.f32.mrf.mxu0
    %6403 = vmatprep.mubr.bf16.mxu0 0
    %6404 = vmatmul.mubr.bf16.gmra.mxu0 %v6078
    %v6405 = vpop.f32.mrf.mxu0
    %v6406 = vadd.f32 0.0, %v6405
    %v6407 = vpop.f32.mrf.mxu0
    %v6408 = vpop.f32.mrf.mxu0
    %v6409 = vadd.f32 0.0, %v6408
    %v6410 = vpop.f32.mrf.mxu0
    %6411 = vmatprep.mubr.bf16.mxu0 0
    %6412 = vmatmul.mubr.bf16.gmra.mxu0 %v6079
    %v6413 = vpop.f32.mrf.mxu0
    %v6414 = vadd.f32 0.0, %v6413
    %v6415 = vpop.f32.mrf.mxu0
    %v6416 = vpop.f32.mrf.mxu0
    %v6417 = vadd.f32 0.0, %v6416
    %v6418 = vpop.f32.mrf.mxu0
    %6419 = vmatprep.mubr.bf16.mxu0 0
    %6420 = vmatmul.mubr.bf16.gmra.mxu0 %v6080
    %v6421 = vpop.f32.mrf.mxu0
    %v6422 = vadd.f32 0.0, %v6421
    %v6423 = vpop.f32.mrf.mxu0
    %v6424 = vpop.f32.mrf.mxu0
    %v6425 = vadd.f32 0.0, %v6424
    %v6426 = vpop.f32.mrf.mxu0
    %6427 = vmatprep.mubr.bf16.mxu0 0
    %6428 = vmatmul.mubr.bf16.gmra.mxu0 %v6081
    %v6429 = vpop.f32.mrf.mxu0
    %v6430 = vadd.f32 0.0, %v6429
    %v6431 = vpop.f32.mrf.mxu0
    %v6432 = vpop.f32.mrf.mxu0
    %v6433 = vadd.f32 0.0, %v6432
    %v6434 = vpop.f32.mrf.mxu0
    %6435 = vdwg.mxu0
    %v6436 = vadd.f32 %v5602, %v6182
    %v6437 = vadd.f32 %v5603, %v6185
    %v6438 = vadd.f32 %v5604, %v6190
    %v6439 = vadd.f32 %v5605, %v6193
    %v6440 = vadd.f32 %v5606, %v6198
    %v6441 = vadd.f32 %v5607, %v6201
    %v6442 = vadd.f32 %v5608, %v6206
    %v6443 = vadd.f32 %v5609, %v6209
    %v6444 = vadd.f32 %v5610, %v6214
    %v6445 = vadd.f32 %v5611, %v6217
    %v6446 = vadd.f32 %v5612, %v6222
    %v6447 = vadd.f32 %v5613, %v6225
    %v6448 = vadd.f32 %v5614, %v6230
    %v6449 = vadd.f32 %v5615, %v6233
    %v6450 = vadd.f32 %v5616, %v6238
    %v6451 = vadd.f32 %v5617, %v6241
    %v6452 = vadd.f32 %v5618, %v6246
    %v6453 = vadd.f32 %v5619, %v6249
    %v6454 = vadd.f32 %v5620, %v6254
    %v6455 = vadd.f32 %v5621, %v6257
    %v6456 = vadd.f32 %v5622, %v6262
    %v6457 = vadd.f32 %v5623, %v6265
    %v6458 = vadd.f32 %v5624, %v6270
    %v6459 = vadd.f32 %v5625, %v6273
    %v6460 = vadd.f32 %v5626, %v6278
    %v6461 = vadd.f32 %v5627, %v6281
    %v6462 = vadd.f32 %v5628, %v6286
    %v6463 = vadd.f32 %v5629, %v6289
    %v6464 = vadd.f32 %v5630, %v6294
    %v6465 = vadd.f32 %v5631, %v6297
    %v6466 = vadd.f32 %v5632, %v6302
    %v6467 = vadd.f32 %v5633, %v6305
    %v6468 = vadd.f32 %v5634, %v6310
    %v6469 = vadd.f32 %v5635, %v6313
    %v6470 = vadd.f32 %v5636, %v6318
    %v6471 = vadd.f32 %v5637, %v6321
    %v6472 = vadd.f32 %v5638, %v6326
    %v6473 = vadd.f32 %v5639, %v6329
    %v6474 = vadd.f32 %v5640, %v6334
    %v6475 = vadd.f32 %v5641, %v6337
    %v6476 = vadd.f32 %v5642, %v6342
    %v6477 = vadd.f32 %v5643, %v6345
    %v6478 = vadd.f32 %v5644, %v6350
    %v6479 = vadd.f32 %v5645, %v6353
    %v6480 = vadd.f32 %v5646, %v6358
    %v6481 = vadd.f32 %v5647, %v6361
    %v6482 = vadd.f32 %v5648, %v6366
    %v6483 = vadd.f32 %v5649, %v6369
    %v6484 = vadd.f32 %v5650, %v6374
    %v6485 = vadd.f32 %v5651, %v6377
    %v6486 = vadd.f32 %v5652, %v6382
    %v6487 = vadd.f32 %v5653, %v6385
    %v6488 = vadd.f32 %v5654, %v6390
    %v6489 = vadd.f32 %v5655, %v6393
    %v6490 = vadd.f32 %v5656, %v6398
    %v6491 = vadd.f32 %v5657, %v6401
    %v6492 = vadd.f32 %v5658, %v6406
    %v6493 = vadd.f32 %v5659, %v6409
    %v6494 = vadd.f32 %v5660, %v6414
    %v6495 = vadd.f32 %v5661, %v6417
    %v6496 = vadd.f32 %v5662, %v6422
    %v6497 = vadd.f32 %v5663, %v6425
    %v6498 = vadd.f32 %v5664, %v6430
    %v6499 = vadd.f32 %v5665, %v6433
    %v6500 = vld [vmem:[#allocation2 + $0x28] sm:$0xff]
    %v6501 = vld [vmem:[#allocation2 + $0x30] sm:$0xff]
    %v6502 = vld [vmem:[#allocation2 + $0x38] sm:$0xff]
    %v6503 = vld [vmem:[#allocation2 + $0x40] sm:$0xff]
    %v6504 = vld [vmem:[#allocation2 + $0x48] sm:$0xff]
    %v6505 = vld [vmem:[#allocation2 + $0x50] sm:$0xff]
    %v6506 = vld [vmem:[#allocation2 + $0x58] sm:$0xff]
    %v6507 = vld [vmem:[#allocation2 + $0x60] sm:$0xff]
    %v6508 = vld [vmem:[#allocation2 + $0x68] sm:$0xff]
    %v6509 = vld [vmem:[#allocation2 + $0x70] sm:$0xff]
    %v6510 = vld [vmem:[#allocation2 + $0x78] sm:$0xff]
    %v6511 = vld [vmem:[#allocation2 + $0x80] sm:$0xff]
    %v6512 = vld [vmem:[#allocation2 + $0x88] sm:$0xff]
    %v6513 = vld [vmem:[#allocation2 + $0x90] sm:$0xff]
    %v6514 = vld [vmem:[#allocation2 + $0x98] sm:$0xff]
    %v6515 = vld [vmem:[#allocation2 + $0xa0] sm:$0xff]
    %v6516 = vld [vmem:[#allocation2 + $0xa8] sm:$0xff]
    %v6517 = vld [vmem:[#allocation2 + $0xb0] sm:$0xff]
    %v6518 = vld [vmem:[#allocation2 + $0xb8] sm:$0xff]
    %v6519 = vld [vmem:[#allocation2 + $0xc0] sm:$0xff]
    %v6520 = vld [vmem:[#allocation2 + $0xc8] sm:$0xff]
    %v6521 = vld [vmem:[#allocation2 + $0xd0] sm:$0xff]
    %v6522 = vld [vmem:[#allocation2 + $0xd8] sm:$0xff]
    %v6523 = vld [vmem:[#allocation2 + $0xe0] sm:$0xff]
    %v6524 = vld [vmem:[#allocation2 + $0xe8] sm:$0xff]
    %v6525 = vld [vmem:[#allocation2 + $0xf0] sm:$0xff]
    %v6526 = vld [vmem:[#allocation2 + $0xf8] sm:$0xff]
    %v6527 = vld [vmem:[#allocation2 + $0x100] sm:$0xff]
    %v6528 = vld [vmem:[#allocation2 + $0x108] sm:$0xff]
    %v6529 = vld [vmem:[#allocation2 + $0x110] sm:$0xff]
    %v6530 = vld [vmem:[#allocation2 + $0x118] sm:$0xff]
    %v6531 = vld [vmem:[#allocation2 + $0x120] sm:$0xff]
    %v6532 = vld [vmem:[#allocation2 + $0x128] sm:$0xff]
    %v6533 = vld [vmem:[#allocation2 + $0x130] sm:$0xff]
    %v6534 = vld [vmem:[#allocation2 + $0x138] sm:$0xff]
    %v6535 = vld [vmem:[#allocation2 + $0x140] sm:$0xff]
    %v6536 = vld [vmem:[#allocation2 + $0x148] sm:$0xff]
    %v6537 = vld [vmem:[#allocation2 + $0x150] sm:$0xff]
    %v6538 = vld [vmem:[#allocation2 + $0x158] sm:$0xff]
    %v6539 = vld [vmem:[#allocation2 + $0x160] sm:$0xff]
    %v6540 = vld [vmem:[#allocation2 + $0x168] sm:$0xff]
    %v6541 = vld [vmem:[#allocation2 + $0x170] sm:$0xff]
    %v6542 = vld [vmem:[#allocation2 + $0x178] sm:$0xff]
    %v6543 = vld [vmem:[#allocation2 + $0x180] sm:$0xff]
    %v6544 = vld [vmem:[#allocation2 + $0x188] sm:$0xff]
    %v6545 = vld [vmem:[#allocation2 + $0x190] sm:$0xff]
    %v6546 = vld [vmem:[#allocation2 + $0x198] sm:$0xff]
    %v6547 = vld [vmem:[#allocation2 + $0x1a0] sm:$0xff]
    %v6548 = vld [vmem:[#allocation2 + $0x1a8] sm:$0xff]
    %v6549 = vld [vmem:[#allocation2 + $0x1b0] sm:$0xff]
    %v6550 = vld [vmem:[#allocation2 + $0x1b8] sm:$0xff]
    %v6551 = vld [vmem:[#allocation2 + $0x1c0] sm:$0xff]
    %v6552 = vld [vmem:[#allocation2 + $0x1c8] sm:$0xff]
    %v6553 = vld [vmem:[#allocation2 + $0x1d0] sm:$0xff]
    %v6554 = vld [vmem:[#allocation2 + $0x1d8] sm:$0xff]
    %v6555 = vld [vmem:[#allocation2 + $0x1e0] sm:$0xff]
    %v6556 = vld [vmem:[#allocation2 + $0x1e8] sm:$0xff]
    %v6557 = vld [vmem:[#allocation2 + $0x1f0] sm:$0xff]
    %v6558 = vld [vmem:[#allocation2 + $0x1f8] sm:$0xff]
    %v6559 = vld [vmem:[#allocation2 + $0x200] sm:$0xff]
    %v6560 = vld [vmem:[#allocation2 + $0x208] sm:$0xff]
    %v6561 = vld [vmem:[#allocation2 + $0x210] sm:$0xff]
    %v6562 = vld [vmem:[#allocation2 + $0x218] sm:$0xff]
    %v6563 = vld [vmem:[#allocation2 + $0x220] sm:$0xff]
    %6564 = vset.pattern.permute.xlu0 56
    %6565 = vperm.xlu0 %6564, %v1047
    %v6566 = vpop.permute.xlu0 %6565
    %6568 = vset.pattern.permute.xlu0 56
    %6569 = vperm.xlu0 %6568, %v1048
    %v6570 = vpop.permute.xlu0 %6569
    %6572 = vset.pattern.permute.xlu0 56
    %6573 = vperm.xlu0 %6572, %v1049
    %v6574 = vpop.permute.xlu0 %6573
    %6576 = vset.pattern.permute.xlu0 56
    %6577 = vperm.xlu0 %6576, %v1050
    %v6578 = vpop.permute.xlu0 %6577
    %6580 = vset.pattern.permute.xlu0 56
    %6581 = vperm.xlu0 %6580, %v1051
    %v6582 = vpop.permute.xlu0 %6581
    %6584 = vset.pattern.permute.xlu0 56
    %6585 = vperm.xlu0 %6584, %v1052
    %v6586 = vpop.permute.xlu0 %6585
    %6588 = vset.pattern.permute.xlu0 56
    %6589 = vperm.xlu0 %6588, %v1053
    %v6590 = vpop.permute.xlu0 %6589
    %6592 = vset.pattern.permute.xlu0 56
    %6593 = vperm.xlu0 %6592, %v1054
    %v6594 = vpop.permute.xlu0 %6593
    %6596 = vset.pattern.permute.xlu0 56
    %6597 = vperm.xlu0 %6596, %v1055
    %v6598 = vpop.permute.xlu0 %6597
    %6600 = vset.pattern.permute.xlu0 56
    %6601 = vperm.xlu0 %6600, %v1056
    %v6602 = vpop.permute.xlu0 %6601
    %6604 = vset.pattern.permute.xlu0 56
    %6605 = vperm.xlu0 %6604, %v1057
    %v6606 = vpop.permute.xlu0 %6605
    %6608 = vset.pattern.permute.xlu0 56
    %6609 = vperm.xlu0 %6608, %v1058
    %v6610 = vpop.permute.xlu0 %6609
    %6612 = vset.pattern.permute.xlu0 56
    %6613 = vperm.xlu0 %6612, %v1059
    %v6614 = vpop.permute.xlu0 %6613
    %6616 = vset.pattern.permute.xlu0 56
    %6617 = vperm.xlu0 %6616, %v1060
    %v6618 = vpop.permute.xlu0 %6617
    %6620 = vset.pattern.permute.xlu0 56
    %6621 = vperm.xlu0 %6620, %v1061
    %v6622 = vpop.permute.xlu0 %6621
    %6624 = vset.pattern.permute.xlu0 56
    %6625 = vperm.xlu0 %6624, %v1062
    %v6626 = vpop.permute.xlu0 %6625
    %6628 = vset.pattern.permute.xlu0 56
    %6629 = vperm.xlu0 %6628, %v1063
    %v6630 = vpop.permute.xlu0 %6629
    %6632 = vset.pattern.permute.xlu0 56
    %6633 = vperm.xlu0 %6632, %v1064
    %v6634 = vpop.permute.xlu0 %6633
    %6636 = vset.pattern.permute.xlu0 56
    %6637 = vperm.xlu0 %6636, %v1065
    %v6638 = vpop.permute.xlu0 %6637
    %6640 = vset.pattern.permute.xlu0 56
    %6641 = vperm.xlu0 %6640, %v1066
    %v6642 = vpop.permute.xlu0 %6641
    %6644 = vset.pattern.permute.xlu0 56
    %6645 = vperm.xlu0 %6644, %v1067
    %v6646 = vpop.permute.xlu0 %6645
    %6648 = vset.pattern.permute.xlu0 56
    %6649 = vperm.xlu0 %6648, %v1068
    %v6650 = vpop.permute.xlu0 %6649
    %6652 = vset.pattern.permute.xlu0 56
    %6653 = vperm.xlu0 %6652, %v1069
    %v6654 = vpop.permute.xlu0 %6653
    %6656 = vset.pattern.permute.xlu0 56
    %6657 = vperm.xlu0 %6656, %v1070
    %v6658 = vpop.permute.xlu0 %6657
    %6660 = vset.pattern.permute.xlu0 56
    %6661 = vperm.xlu0 %6660, %v1071
    %v6662 = vpop.permute.xlu0 %6661
    %6664 = vset.pattern.permute.xlu0 56
    %6665 = vperm.xlu0 %6664, %v1072
    %v6666 = vpop.permute.xlu0 %6665
    %6668 = vset.pattern.permute.xlu0 56
    %6669 = vperm.xlu0 %6668, %v1073
    %v6670 = vpop.permute.xlu0 %6669
    %6672 = vset.pattern.permute.xlu0 56
    %6673 = vperm.xlu0 %6672, %v1074
    %v6674 = vpop.permute.xlu0 %6673
    %6676 = vset.pattern.permute.xlu0 56
    %6677 = vperm.xlu0 %6676, %v1075
    %v6678 = vpop.permute.xlu0 %6677
    %6680 = vset.pattern.permute.xlu0 56
    %6681 = vperm.xlu0 %6680, %v1076
    %v6682 = vpop.permute.xlu0 %6681
    %6684 = vset.pattern.permute.xlu0 56
    %6685 = vperm.xlu0 %6684, %v1077
    %v6686 = vpop.permute.xlu0 %6685
    %6688 = vset.pattern.permute.xlu0 56
    %6689 = vperm.xlu0 %6688, %v1078
    %v6690 = vpop.permute.xlu0 %6689
    %6692 = vset.pattern.permute.xlu0 56
    %6693 = vperm.xlu0 %6692, %v1079
    %v6694 = vpop.permute.xlu0 %6693
    %6696 = vset.pattern.permute.xlu0 56
    %6697 = vperm.xlu0 %6696, %v1080
    %v6698 = vpop.permute.xlu0 %6697
    %6700 = vset.pattern.permute.xlu0 56
    %6701 = vperm.xlu0 %6700, %v1081
    %v6702 = vpop.permute.xlu0 %6701
    %6704 = vset.pattern.permute.xlu0 56
    %6705 = vperm.xlu0 %6704, %v1082
    %v6706 = vpop.permute.xlu0 %6705
    %6708 = vset.pattern.permute.xlu0 56
    %6709 = vperm.xlu0 %6708, %v1083
    %v6710 = vpop.permute.xlu0 %6709
    %6712 = vset.pattern.permute.xlu0 56
    %6713 = vperm.xlu0 %6712, %v1084
    %v6714 = vpop.permute.xlu0 %6713
    %6716 = vset.pattern.permute.xlu0 56
    %6717 = vperm.xlu0 %6716, %v1085
    %v6718 = vpop.permute.xlu0 %6717
    %6720 = vset.pattern.permute.xlu0 56
    %6721 = vperm.xlu0 %6720, %v1086
    %v6722 = vpop.permute.xlu0 %6721
    %6724 = vset.pattern.permute.xlu0 56
    %6725 = vperm.xlu0 %6724, %v1087
    %v6726 = vpop.permute.xlu0 %6725
    %6728 = vset.pattern.permute.xlu0 56
    %6729 = vperm.xlu0 %6728, %v1088
    %v6730 = vpop.permute.xlu0 %6729
    %6732 = vset.pattern.permute.xlu0 56
    %6733 = vperm.xlu0 %6732, %v1089
    %v6734 = vpop.permute.xlu0 %6733
    %6736 = vset.pattern.permute.xlu0 56
    %6737 = vperm.xlu0 %6736, %v1090
    %v6738 = vpop.permute.xlu0 %6737
    %6740 = vset.pattern.permute.xlu0 56
    %6741 = vperm.xlu0 %6740, %v1091
    %v6742 = vpop.permute.xlu0 %6741
    %6744 = vset.pattern.permute.xlu0 56
    %6745 = vperm.xlu0 %6744, %v1092
    %v6746 = vpop.permute.xlu0 %6745
    %6748 = vset.pattern.permute.xlu0 56
    %6749 = vperm.xlu0 %6748, %v1093
    %v6750 = vpop.permute.xlu0 %6749
    %6752 = vset.pattern.permute.xlu0 56
    %6753 = vperm.xlu0 %6752, %v1094
    %v6754 = vpop.permute.xlu0 %6753
    %6756 = vset.pattern.permute.xlu0 56
    %6757 = vperm.xlu0 %6756, %v1095
    %v6758 = vpop.permute.xlu0 %6757
    %6760 = vset.pattern.permute.xlu0 56
    %6761 = vperm.xlu0 %6760, %v1096
    %v6762 = vpop.permute.xlu0 %6761
    %6764 = vset.pattern.permute.xlu0 56
    %6765 = vperm.xlu0 %6764, %v1097
    %v6766 = vpop.permute.xlu0 %6765
    %6768 = vset.pattern.permute.xlu0 56
    %6769 = vperm.xlu0 %6768, %v1098
    %v6770 = vpop.permute.xlu0 %6769
    %6772 = vset.pattern.permute.xlu0 56
    %6773 = vperm.xlu0 %6772, %v1099
    %v6774 = vpop.permute.xlu0 %6773
    %6776 = vset.pattern.permute.xlu0 56
    %6777 = vperm.xlu0 %6776, %v1100
    %v6778 = vpop.permute.xlu0 %6777
    %6780 = vset.pattern.permute.xlu0 56
    %6781 = vperm.xlu0 %6780, %v1101
    %v6782 = vpop.permute.xlu0 %6781
    %6784 = vset.pattern.permute.xlu0 56
    %6785 = vperm.xlu0 %6784, %v1102
    %v6786 = vpop.permute.xlu0 %6785
    %6788 = vset.pattern.permute.xlu0 56
    %6789 = vperm.xlu0 %6788, %v1103
    %v6790 = vpop.permute.xlu0 %6789
    %6792 = vset.pattern.permute.xlu0 56
    %6793 = vperm.xlu0 %6792, %v1104
    %v6794 = vpop.permute.xlu0 %6793
    %6796 = vset.pattern.permute.xlu0 56
    %6797 = vperm.xlu0 %6796, %v1105
    %v6798 = vpop.permute.xlu0 %6797
    %6800 = vset.pattern.permute.xlu0 56
    %6801 = vperm.xlu0 %6800, %v1106
    %v6802 = vpop.permute.xlu0 %6801
    %6804 = vset.pattern.permute.xlu0 56
    %6805 = vperm.xlu0 %6804, %v1107
    %v6806 = vpop.permute.xlu0 %6805
    %6808 = vset.pattern.permute.xlu0 56
    %6809 = vperm.xlu0 %6808, %v1108
    %v6810 = vpop.permute.xlu0 %6809
    %6812 = vset.pattern.permute.xlu0 56
    %6813 = vperm.xlu0 %6812, %v1109
    %v6814 = vpop.permute.xlu0 %6813
    %6816 = vset.pattern.permute.xlu0 56
    %6817 = vperm.xlu0 %6816, %v1110
    %v6818 = vpop.permute.xlu0 %6817
    %v6820 = vmul.f32 %v6500, %v6566
    %v6821 = vmul.f32 %v6501, %v6570
    %v6822 = vmul.f32 %v6502, %v6574
    %v6823 = vmul.f32 %v6503, %v6578
    %v6824 = vmul.f32 %v6504, %v6582
    %v6825 = vmul.f32 %v6505, %v6586
    %v6826 = vmul.f32 %v6506, %v6590
    %v6827 = vmul.f32 %v6507, %v6594
    %v6828 = vmul.f32 %v6508, %v6598
    %v6829 = vmul.f32 %v6509, %v6602
    %v6830 = vmul.f32 %v6510, %v6606
    %v6831 = vmul.f32 %v6511, %v6610
    %v6832 = vmul.f32 %v6512, %v6614
    %v6833 = vmul.f32 %v6513, %v6618
    %v6834 = vmul.f32 %v6514, %v6622
    %v6835 = vmul.f32 %v6515, %v6626
    %v6836 = vmul.f32 %v6516, %v6630
    %v6837 = vmul.f32 %v6517, %v6634
    %v6838 = vmul.f32 %v6518, %v6638
    %v6839 = vmul.f32 %v6519, %v6642
    %v6840 = vmul.f32 %v6520, %v6646
    %v6841 = vmul.f32 %v6521, %v6650
    %v6842 = vmul.f32 %v6522, %v6654
    %v6843 = vmul.f32 %v6523, %v6658
    %v6844 = vmul.f32 %v6524, %v6662
    %v6845 = vmul.f32 %v6525, %v6666
    %v6846 = vmul.f32 %v6526, %v6670
    %v6847 = vmul.f32 %v6527, %v6674
    %v6848 = vmul.f32 %v6528, %v6678
    %v6849 = vmul.f32 %v6529, %v6682
    %v6850 = vmul.f32 %v6530, %v6686
    %v6851 = vmul.f32 %v6531, %v6690
    %v6852 = vmul.f32 %v6532, %v6694
    %v6853 = vmul.f32 %v6533, %v6698
    %v6854 = vmul.f32 %v6534, %v6702
    %v6855 = vmul.f32 %v6535, %v6706
    %v6856 = vmul.f32 %v6536, %v6710
    %v6857 = vmul.f32 %v6537, %v6714
    %v6858 = vmul.f32 %v6538, %v6718
    %v6859 = vmul.f32 %v6539, %v6722
    %v6860 = vmul.f32 %v6540, %v6726
    %v6861 = vmul.f32 %v6541, %v6730
    %v6862 = vmul.f32 %v6542, %v6734
    %v6863 = vmul.f32 %v6543, %v6738
    %v6864 = vmul.f32 %v6544, %v6742
    %v6865 = vmul.f32 %v6545, %v6746
    %v6866 = vmul.f32 %v6546, %v6750
    %v6867 = vmul.f32 %v6547, %v6754
    %v6868 = vmul.f32 %v6548, %v6758
    %v6869 = vmul.f32 %v6549, %v6762
    %v6870 = vmul.f32 %v6550, %v6766
    %v6871 = vmul.f32 %v6551, %v6770
    %v6872 = vmul.f32 %v6552, %v6774
    %v6873 = vmul.f32 %v6553, %v6778
    %v6874 = vmul.f32 %v6554, %v6782
    %v6875 = vmul.f32 %v6555, %v6786
    %v6876 = vmul.f32 %v6556, %v6790
    %v6877 = vmul.f32 %v6557, %v6794
    %v6878 = vmul.f32 %v6558, %v6798
    %v6879 = vmul.f32 %v6559, %v6802
    %v6880 = vmul.f32 %v6560, %v6806
    %v6881 = vmul.f32 %v6561, %v6810
    %v6882 = vmul.f32 %v6562, %v6814
    %v6883 = vmul.f32 %v6563, %v6818
    %v6884 = vpack.c.bf16 %v6821, %v6820
    %v6885 = vpack.c.bf16 %v6823, %v6822
    %v6886 = vpack.c.bf16 %v6825, %v6824
    %v6887 = vpack.c.bf16 %v6827, %v6826
    %v6888 = vpack.c.bf16 %v6829, %v6828
    %v6889 = vpack.c.bf16 %v6831, %v6830
    %v6890 = vpack.c.bf16 %v6833, %v6832
    %v6891 = vpack.c.bf16 %v6835, %v6834
    %v6892 = vpack.c.bf16 %v6837, %v6836
    %v6893 = vpack.c.bf16 %v6839, %v6838
    %v6894 = vpack.c.bf16 %v6841, %v6840
    %v6895 = vpack.c.bf16 %v6843, %v6842
    %v6896 = vpack.c.bf16 %v6845, %v6844
    %v6897 = vpack.c.bf16 %v6847, %v6846
    %v6898 = vpack.c.bf16 %v6849, %v6848
    %v6899 = vpack.c.bf16 %v6851, %v6850
    %v6900 = vpack.c.bf16 %v6853, %v6852
    %v6901 = vpack.c.bf16 %v6855, %v6854
    %v6902 = vpack.c.bf16 %v6857, %v6856
    %v6903 = vpack.c.bf16 %v6859, %v6858
    %v6904 = vpack.c.bf16 %v6861, %v6860
    %v6905 = vpack.c.bf16 %v6863, %v6862
    %v6906 = vpack.c.bf16 %v6865, %v6864
    %v6907 = vpack.c.bf16 %v6867, %v6866
    %v6908 = vpack.c.bf16 %v6869, %v6868
    %v6909 = vpack.c.bf16 %v6871, %v6870
    %v6910 = vpack.c.bf16 %v6873, %v6872
    %v6911 = vpack.c.bf16 %v6875, %v6874
    %v6912 = vpack.c.bf16 %v6877, %v6876
    %v6913 = vpack.c.bf16 %v6879, %v6878
    %v6914 = vpack.c.bf16 %v6881, %v6880
    %v6915 = vpack.c.bf16 %v6883, %v6882
    %s6916 = scalar_lea.vmem [#allocation12], 448
    %v6917 = vld [vmem:[%s6916] sm:$0xf]
    %v6918 = vld [vmem:[%s6916 + $0x4] sm:$0xf]
    %v6919 = vld [vmem:[%s6916 + $0x8] sm:$0xf]
    %v6920 = vld [vmem:[%s6916 + $0xc] sm:$0xf]
    %v6921 = vld [vmem:[%s6916 + $0x10] sm:$0xf]
    %v6922 = vld [vmem:[%s6916 + $0x14] sm:$0xf]
    %v6923 = vld [vmem:[%s6916 + $0x18] sm:$0xf]
    %v6924 = vld [vmem:[%s6916 + $0x1c] sm:$0xf]
    %v6925 = vld [vmem:[%s6916 + $0x20] sm:$0xf]
    %v6926 = vld [vmem:[%s6916 + $0x24] sm:$0xf]
    %v6927 = vld [vmem:[%s6916 + $0x28] sm:$0xf]
    %v6928 = vld [vmem:[%s6916 + $0x2c] sm:$0xf]
    %v6929 = vld [vmem:[%s6916 + $0x30] sm:$0xf]
    %v6930 = vld [vmem:[%s6916 + $0x34] sm:$0xf]
    %v6931 = vld [vmem:[%s6916 + $0x38] sm:$0xf]
    %v6932 = vld [vmem:[%s6916 + $0x3c] sm:$0xf]
    %v6949 = vunpack.c.l.b16 %v6917
    %v6950 = vunpack.c.l.b16 %v6918
    %v6951 = vunpack.c.l.b16 %v6919
    %v6952 = vunpack.c.l.b16 %v6920
    %v6953 = vunpack.c.l.b16 %v6921
    %v6954 = vunpack.c.l.b16 %v6922
    %v6955 = vunpack.c.l.b16 %v6923
    %v6956 = vunpack.c.l.b16 %v6924
    %v6957 = vunpack.c.l.b16 %v6925
    %v6958 = vunpack.c.l.b16 %v6926
    %v6959 = vunpack.c.l.b16 %v6927
    %v6960 = vunpack.c.l.b16 %v6928
    %v6961 = vunpack.c.l.b16 %v6929
    %v6962 = vunpack.c.l.b16 %v6930
    %v6963 = vunpack.c.l.b16 %v6931
    %v6964 = vunpack.c.l.b16 %v6932
    %v6965 = vpack.c.b16 %v6950, %v6949
    %v6966 = vpack.c.b16 %v6952, %v6951
    %v6967 = vpack.c.b16 %v6954, %v6953
    %v6968 = vpack.c.b16 %v6956, %v6955
    %v6969 = vpack.c.b16 %v6958, %v6957
    %v6970 = vpack.c.b16 %v6960, %v6959
    %v6971 = vpack.c.b16 %v6962, %v6961
    %v6972 = vpack.c.b16 %v6964, %v6963
    %6981 = vmatprep.subr.bf16.mxu0 0
    %6982 = vmatpush1.bf16.msra.mxu0 %v6972
    %6983 = vmatprep.subr.bf16.mxu0 0
    %6984 = vmatpush1.bf16.msra.mxu0 %v6971
    %6985 = vmatprep.subr.bf16.mxu0 0
    %6986 = vmatpush1.bf16.msra.mxu0 %v6970
    %6987 = vmatprep.subr.bf16.mxu0 0
    %6988 = vmatpush1.bf16.msra.mxu0 %v6969
    %6989 = vmatprep.subr.bf16.mxu0 0
    %6990 = vmatpush1.bf16.msra.mxu0 %v6968
    %6991 = vmatprep.subr.bf16.mxu0 0
    %6992 = vmatpush1.bf16.msra.mxu0 %v6967
    %6993 = vmatprep.subr.bf16.mxu0 0
    %6994 = vmatpush1.bf16.msra.mxu0 %v6966
    %6995 = vmatprep.subr.bf16.mxu0 0
    %6996 = vmatpush1.bf16.msra.mxu0 %v6965
    %6997 = vmatprep.subr.bf16.mxu0 0
    %6998 = vmatpush2.bf16.msra.mxu0 0
    %6999 = vmatprep.subr.bf16.mxu0 0
    %7000 = vmatpush2.bf16.msra.mxu0 0
    %7001 = vmatprep.subr.bf16.mxu0 0
    %7002 = vmatpush2.bf16.msra.mxu0 0
    %7003 = vmatprep.subr.bf16.mxu0 0
    %7004 = vmatpush2.bf16.msra.mxu0 0
    %7005 = vmatprep.subr.bf16.mxu0 0
    %7006 = vmatpush2.bf16.msra.mxu0 0
    %7007 = vmatprep.subr.bf16.mxu0 0
    %7008 = vmatpush2.bf16.msra.mxu0 0
    %7009 = vmatprep.subr.bf16.mxu0 0
    %7010 = vmatpush2.bf16.msra.mxu0 0
    %7011 = vmatprep.subr.bf16.mxu0 0
    %7012 = vmatpush2.bf16.msra.mxu0 0
    %7013 = vmatprep.mubr.bf16.mxu0 0
    %7014 = vmatmul.mubr.bf16.gmra.mxu0 %v6884
    %v7015 = vpop.f32.mrf.mxu0
    %v7016 = vadd.f32 0.0, %v7015
    %v7017 = vpop.f32.mrf.mxu0
    %v7018 = vpop.f32.mrf.mxu0
    %v7019 = vadd.f32 0.0, %v7018
    %v7020 = vpop.f32.mrf.mxu0
    %7021 = vmatprep.mubr.bf16.mxu0 0
    %7022 = vmatmul.mubr.bf16.gmra.mxu0 %v6885
    %v7023 = vpop.f32.mrf.mxu0
    %v7024 = vadd.f32 0.0, %v7023
    %v7025 = vpop.f32.mrf.mxu0
    %v7026 = vpop.f32.mrf.mxu0
    %v7027 = vadd.f32 0.0, %v7026
    %v7028 = vpop.f32.mrf.mxu0
    %7029 = vmatprep.mubr.bf16.mxu0 0
    %7030 = vmatmul.mubr.bf16.gmra.mxu0 %v6886
    %v7031 = vpop.f32.mrf.mxu0
    %v7032 = vadd.f32 0.0, %v7031
    %v7033 = vpop.f32.mrf.mxu0
    %v7034 = vpop.f32.mrf.mxu0
    %v7035 = vadd.f32 0.0, %v7034
    %v7036 = vpop.f32.mrf.mxu0
    %7037 = vmatprep.mubr.bf16.mxu0 0
    %7038 = vmatmul.mubr.bf16.gmra.mxu0 %v6887
    %v7039 = vpop.f32.mrf.mxu0
    %v7040 = vadd.f32 0.0, %v7039
    %v7041 = vpop.f32.mrf.mxu0
    %v7042 = vpop.f32.mrf.mxu0
    %v7043 = vadd.f32 0.0, %v7042
    %v7044 = vpop.f32.mrf.mxu0
    %7045 = vmatprep.mubr.bf16.mxu0 0
    %7046 = vmatmul.mubr.bf16.gmra.mxu0 %v6888
    %v7047 = vpop.f32.mrf.mxu0
    %v7048 = vadd.f32 0.0, %v7047
    %v7049 = vpop.f32.mrf.mxu0
    %v7050 = vpop.f32.mrf.mxu0
    %v7051 = vadd.f32 0.0, %v7050
    %v7052 = vpop.f32.mrf.mxu0
    %7053 = vmatprep.mubr.bf16.mxu0 0
    %7054 = vmatmul.mubr.bf16.gmra.mxu0 %v6889
    %v7055 = vpop.f32.mrf.mxu0
    %v7056 = vadd.f32 0.0, %v7055
    %v7057 = vpop.f32.mrf.mxu0
    %v7058 = vpop.f32.mrf.mxu0
    %v7059 = vadd.f32 0.0, %v7058
    %v7060 = vpop.f32.mrf.mxu0
    %7061 = vmatprep.mubr.bf16.mxu0 0
    %7062 = vmatmul.mubr.bf16.gmra.mxu0 %v6890
    %v7063 = vpop.f32.mrf.mxu0
    %v7064 = vadd.f32 0.0, %v7063
    %v7065 = vpop.f32.mrf.mxu0
    %v7066 = vpop.f32.mrf.mxu0
    %v7067 = vadd.f32 0.0, %v7066
    %v7068 = vpop.f32.mrf.mxu0
    %7069 = vmatprep.mubr.bf16.mxu0 0
    %7070 = vmatmul.mubr.bf16.gmra.mxu0 %v6891
    %v7071 = vpop.f32.mrf.mxu0
    %v7072 = vadd.f32 0.0, %v7071
    %v7073 = vpop.f32.mrf.mxu0
    %v7074 = vpop.f32.mrf.mxu0
    %v7075 = vadd.f32 0.0, %v7074
    %v7076 = vpop.f32.mrf.mxu0
    %7077 = vmatprep.mubr.bf16.mxu0 0
    %7078 = vmatmul.mubr.bf16.gmra.mxu0 %v6892
    %v7079 = vpop.f32.mrf.mxu0
    %v7080 = vadd.f32 0.0, %v7079
    %v7081 = vpop.f32.mrf.mxu0
    %v7082 = vpop.f32.mrf.mxu0
    %v7083 = vadd.f32 0.0, %v7082
    %v7084 = vpop.f32.mrf.mxu0
    %7085 = vmatprep.mubr.bf16.mxu0 0
    %7086 = vmatmul.mubr.bf16.gmra.mxu0 %v6893
    %v7087 = vpop.f32.mrf.mxu0
    %v7088 = vadd.f32 0.0, %v7087
    %v7089 = vpop.f32.mrf.mxu0
    %v7090 = vpop.f32.mrf.mxu0
    %v7091 = vadd.f32 0.0, %v7090
    %v7092 = vpop.f32.mrf.mxu0
    %7093 = vmatprep.mubr.bf16.mxu0 0
    %7094 = vmatmul.mubr.bf16.gmra.mxu0 %v6894
    %v7095 = vpop.f32.mrf.mxu0
    %v7096 = vadd.f32 0.0, %v7095
    %v7097 = vpop.f32.mrf.mxu0
    %v7098 = vpop.f32.mrf.mxu0
    %v7099 = vadd.f32 0.0, %v7098
    %v7100 = vpop.f32.mrf.mxu0
    %7101 = vmatprep.mubr.bf16.mxu0 0
    %7102 = vmatmul.mubr.bf16.gmra.mxu0 %v6895
    %v7103 = vpop.f32.mrf.mxu0
    %v7104 = vadd.f32 0.0, %v7103
    %v7105 = vpop.f32.mrf.mxu0
    %v7106 = vpop.f32.mrf.mxu0
    %v7107 = vadd.f32 0.0, %v7106
    %v7108 = vpop.f32.mrf.mxu0
    %7109 = vmatprep.mubr.bf16.mxu0 0
    %7110 = vmatmul.mubr.bf16.gmra.mxu0 %v6896
    %v7111 = vpop.f32.mrf.mxu0
    %v7112 = vadd.f32 0.0, %v7111
    %v7113 = vpop.f32.mrf.mxu0
    %v7114 = vpop.f32.mrf.mxu0
    %v7115 = vadd.f32 0.0, %v7114
    %v7116 = vpop.f32.mrf.mxu0
    %7117 = vmatprep.mubr.bf16.mxu0 0
    %7118 = vmatmul.mubr.bf16.gmra.mxu0 %v6897
    %v7119 = vpop.f32.mrf.mxu0
    %v7120 = vadd.f32 0.0, %v7119
    %v7121 = vpop.f32.mrf.mxu0
    %v7122 = vpop.f32.mrf.mxu0
    %v7123 = vadd.f32 0.0, %v7122
    %v7124 = vpop.f32.mrf.mxu0
    %7125 = vmatprep.mubr.bf16.mxu0 0
    %7126 = vmatmul.mubr.bf16.gmra.mxu0 %v6898
    %v7127 = vpop.f32.mrf.mxu0
    %v7128 = vadd.f32 0.0, %v7127
    %v7129 = vpop.f32.mrf.mxu0
    %v7130 = vpop.f32.mrf.mxu0
    %v7131 = vadd.f32 0.0, %v7130
    %v7132 = vpop.f32.mrf.mxu0
    %7133 = vmatprep.mubr.bf16.mxu0 0
    %7134 = vmatmul.mubr.bf16.gmra.mxu0 %v6899
    %v7135 = vpop.f32.mrf.mxu0
    %v7136 = vadd.f32 0.0, %v7135
    %v7137 = vpop.f32.mrf.mxu0
    %v7138 = vpop.f32.mrf.mxu0
    %v7139 = vadd.f32 0.0, %v7138
    %v7140 = vpop.f32.mrf.mxu0
    %7141 = vmatprep.mubr.bf16.mxu0 0
    %7142 = vmatmul.mubr.bf16.gmra.mxu0 %v6900
    %v7143 = vpop.f32.mrf.mxu0
    %v7144 = vadd.f32 0.0, %v7143
    %v7145 = vpop.f32.mrf.mxu0
    %v7146 = vpop.f32.mrf.mxu0
    %v7147 = vadd.f32 0.0, %v7146
    %v7148 = vpop.f32.mrf.mxu0
    %7149 = vmatprep.mubr.bf16.mxu0 0
    %7150 = vmatmul.mubr.bf16.gmra.mxu0 %v6901
    %v7151 = vpop.f32.mrf.mxu0
    %v7152 = vadd.f32 0.0, %v7151
    %v7153 = vpop.f32.mrf.mxu0
    %v7154 = vpop.f32.mrf.mxu0
    %v7155 = vadd.f32 0.0, %v7154
    %v7156 = vpop.f32.mrf.mxu0
    %7157 = vmatprep.mubr.bf16.mxu0 0
    %7158 = vmatmul.mubr.bf16.gmra.mxu0 %v6902
    %v7159 = vpop.f32.mrf.mxu0
    %v7160 = vadd.f32 0.0, %v7159
    %v7161 = vpop.f32.mrf.mxu0
    %v7162 = vpop.f32.mrf.mxu0
    %v7163 = vadd.f32 0.0, %v7162
    %v7164 = vpop.f32.mrf.mxu0
    %7165 = vmatprep.mubr.bf16.mxu0 0
    %7166 = vmatmul.mubr.bf16.gmra.mxu0 %v6903
    %v7167 = vpop.f32.mrf.mxu0
    %v7168 = vadd.f32 0.0, %v7167
    %v7169 = vpop.f32.mrf.mxu0
    %v7170 = vpop.f32.mrf.mxu0
    %v7171 = vadd.f32 0.0, %v7170
    %v7172 = vpop.f32.mrf.mxu0
    %7173 = vmatprep.mubr.bf16.mxu0 0
    %7174 = vmatmul.mubr.bf16.gmra.mxu0 %v6904
    %v7175 = vpop.f32.mrf.mxu0
    %v7176 = vadd.f32 0.0, %v7175
    %v7177 = vpop.f32.mrf.mxu0
    %v7178 = vpop.f32.mrf.mxu0
    %v7179 = vadd.f32 0.0, %v7178
    %v7180 = vpop.f32.mrf.mxu0
    %7181 = vmatprep.mubr.bf16.mxu0 0
    %7182 = vmatmul.mubr.bf16.gmra.mxu0 %v6905
    %v7183 = vpop.f32.mrf.mxu0
    %v7184 = vadd.f32 0.0, %v7183
    %v7185 = vpop.f32.mrf.mxu0
    %v7186 = vpop.f32.mrf.mxu0
    %v7187 = vadd.f32 0.0, %v7186
    %v7188 = vpop.f32.mrf.mxu0
    %7189 = vmatprep.mubr.bf16.mxu0 0
    %7190 = vmatmul.mubr.bf16.gmra.mxu0 %v6906
    %v7191 = vpop.f32.mrf.mxu0
    %v7192 = vadd.f32 0.0, %v7191
    %v7193 = vpop.f32.mrf.mxu0
    %v7194 = vpop.f32.mrf.mxu0
    %v7195 = vadd.f32 0.0, %v7194
    %v7196 = vpop.f32.mrf.mxu0
    %7197 = vmatprep.mubr.bf16.mxu0 0
    %7198 = vmatmul.mubr.bf16.gmra.mxu0 %v6907
    %v7199 = vpop.f32.mrf.mxu0
    %v7200 = vadd.f32 0.0, %v7199
    %v7201 = vpop.f32.mrf.mxu0
    %v7202 = vpop.f32.mrf.mxu0
    %v7203 = vadd.f32 0.0, %v7202
    %v7204 = vpop.f32.mrf.mxu0
    %7205 = vmatprep.mubr.bf16.mxu0 0
    %7206 = vmatmul.mubr.bf16.gmra.mxu0 %v6908
    %v7207 = vpop.f32.mrf.mxu0
    %v7208 = vadd.f32 0.0, %v7207
    %v7209 = vpop.f32.mrf.mxu0
    %v7210 = vpop.f32.mrf.mxu0
    %v7211 = vadd.f32 0.0, %v7210
    %v7212 = vpop.f32.mrf.mxu0
    %7213 = vmatprep.mubr.bf16.mxu0 0
    %7214 = vmatmul.mubr.bf16.gmra.mxu0 %v6909
    %v7215 = vpop.f32.mrf.mxu0
    %v7216 = vadd.f32 0.0, %v7215
    %v7217 = vpop.f32.mrf.mxu0
    %v7218 = vpop.f32.mrf.mxu0
    %v7219 = vadd.f32 0.0, %v7218
    %v7220 = vpop.f32.mrf.mxu0
    %7221 = vmatprep.mubr.bf16.mxu0 0
    %7222 = vmatmul.mubr.bf16.gmra.mxu0 %v6910
    %v7223 = vpop.f32.mrf.mxu0
    %v7224 = vadd.f32 0.0, %v7223
    %v7225 = vpop.f32.mrf.mxu0
    %v7226 = vpop.f32.mrf.mxu0
    %v7227 = vadd.f32 0.0, %v7226
    %v7228 = vpop.f32.mrf.mxu0
    %7229 = vmatprep.mubr.bf16.mxu0 0
    %7230 = vmatmul.mubr.bf16.gmra.mxu0 %v6911
    %v7231 = vpop.f32.mrf.mxu0
    %v7232 = vadd.f32 0.0, %v7231
    %v7233 = vpop.f32.mrf.mxu0
    %v7234 = vpop.f32.mrf.mxu0
    %v7235 = vadd.f32 0.0, %v7234
    %v7236 = vpop.f32.mrf.mxu0
    %7237 = vmatprep.mubr.bf16.mxu0 0
    %7238 = vmatmul.mubr.bf16.gmra.mxu0 %v6912
    %v7239 = vpop.f32.mrf.mxu0
    %v7240 = vadd.f32 0.0, %v7239
    %v7241 = vpop.f32.mrf.mxu0
    %v7242 = vpop.f32.mrf.mxu0
    %v7243 = vadd.f32 0.0, %v7242
    %v7244 = vpop.f32.mrf.mxu0
    %7245 = vmatprep.mubr.bf16.mxu0 0
    %7246 = vmatmul.mubr.bf16.gmra.mxu0 %v6913
    %v7247 = vpop.f32.mrf.mxu0
    %v7248 = vadd.f32 0.0, %v7247
    %v7249 = vpop.f32.mrf.mxu0
    %v7250 = vpop.f32.mrf.mxu0
    %v7251 = vadd.f32 0.0, %v7250
    %v7252 = vpop.f32.mrf.mxu0
    %7253 = vmatprep.mubr.bf16.mxu0 0
    %7254 = vmatmul.mubr.bf16.gmra.mxu0 %v6914
    %v7255 = vpop.f32.mrf.mxu0
    %v7256 = vadd.f32 0.0, %v7255
    %v7257 = vpop.f32.mrf.mxu0
    %v7258 = vpop.f32.mrf.mxu0
    %v7259 = vadd.f32 0.0, %v7258
    %v7260 = vpop.f32.mrf.mxu0
    %7261 = vmatprep.mubr.bf16.mxu0 0
    %7262 = vmatmul.mubr.bf16.gmra.mxu0 %v6915
    %v7263 = vpop.f32.mrf.mxu0
    %v7264 = vadd.f32 0.0, %v7263
    %v7265 = vpop.f32.mrf.mxu0
    %v7266 = vpop.f32.mrf.mxu0
    %v7267 = vadd.f32 0.0, %v7266
    %v7268 = vpop.f32.mrf.mxu0
    %7269 = vdwg.mxu0
    %v7270 = vadd.f32 %v6436, %v7016
    %v7271 = vadd.f32 %v6437, %v7019
    %v7272 = vadd.f32 %v6438, %v7024
    %v7273 = vadd.f32 %v6439, %v7027
    %v7274 = vadd.f32 %v6440, %v7032
    %v7275 = vadd.f32 %v6441, %v7035
    %v7276 = vadd.f32 %v6442, %v7040
    %v7277 = vadd.f32 %v6443, %v7043
    %v7278 = vadd.f32 %v6444, %v7048
    %v7279 = vadd.f32 %v6445, %v7051
    %v7280 = vadd.f32 %v6446, %v7056
    %v7281 = vadd.f32 %v6447, %v7059
    %v7282 = vadd.f32 %v6448, %v7064
    %v7283 = vadd.f32 %v6449, %v7067
    %v7284 = vadd.f32 %v6450, %v7072
    %v7285 = vadd.f32 %v6451, %v7075
    %v7286 = vadd.f32 %v6452, %v7080
    %v7287 = vadd.f32 %v6453, %v7083
    %v7288 = vadd.f32 %v6454, %v7088
    %v7289 = vadd.f32 %v6455, %v7091
    %v7290 = vadd.f32 %v6456, %v7096
    %v7291 = vadd.f32 %v6457, %v7099
    %v7292 = vadd.f32 %v6458, %v7104
    %v7293 = vadd.f32 %v6459, %v7107
    %v7294 = vadd.f32 %v6460, %v7112
    %v7295 = vadd.f32 %v6461, %v7115
    %v7296 = vadd.f32 %v6462, %v7120
    %v7297 = vadd.f32 %v6463, %v7123
    %v7298 = vadd.f32 %v6464, %v7128
    %v7299 = vadd.f32 %v6465, %v7131
    %v7300 = vadd.f32 %v6466, %v7136
    %v7301 = vadd.f32 %v6467, %v7139
    %v7302 = vadd.f32 %v6468, %v7144
    %v7303 = vadd.f32 %v6469, %v7147
    %v7304 = vadd.f32 %v6470, %v7152
    %v7305 = vadd.f32 %v6471, %v7155
    %v7306 = vadd.f32 %v6472, %v7160
    %v7307 = vadd.f32 %v6473, %v7163
    %v7308 = vadd.f32 %v6474, %v7168
    %v7309 = vadd.f32 %v6475, %v7171
    %v7310 = vadd.f32 %v6476, %v7176
    %v7311 = vadd.f32 %v6477, %v7179
    %v7312 = vadd.f32 %v6478, %v7184
    %v7313 = vadd.f32 %v6479, %v7187
    %v7314 = vadd.f32 %v6480, %v7192
    %v7315 = vadd.f32 %v6481, %v7195
    %v7316 = vadd.f32 %v6482, %v7200
    %v7317 = vadd.f32 %v6483, %v7203
    %v7318 = vadd.f32 %v6484, %v7208
    %v7319 = vadd.f32 %v6485, %v7211
    %v7320 = vadd.f32 %v6486, %v7216
    %v7321 = vadd.f32 %v6487, %v7219
    %v7322 = vadd.f32 %v6488, %v7224
    %v7323 = vadd.f32 %v6489, %v7227
    %v7324 = vadd.f32 %v6490, %v7232
    %v7325 = vadd.f32 %v6491, %v7235
    %v7326 = vadd.f32 %v6492, %v7240
    %v7327 = vadd.f32 %v6493, %v7243
    %v7328 = vadd.f32 %v6494, %v7248
    %v7329 = vadd.f32 %v6495, %v7251
    %v7330 = vadd.f32 %v6496, %v7256
    %v7331 = vadd.f32 %v6497, %v7259
    %v7332 = vadd.f32 %v6498, %v7264
    %v7333 = vadd.f32 %v6499, %v7267
    %v7334 = vld [vmem:[#allocation2 + $0x29] sm:$0xff]
    %v7335 = vld [vmem:[#allocation2 + $0x31] sm:$0xff]
    %v7336 = vld [vmem:[#allocation2 + $0x39] sm:$0xff]
    %v7337 = vld [vmem:[#allocation2 + $0x41] sm:$0xff]
    %v7338 = vld [vmem:[#allocation2 + $0x49] sm:$0xff]
    %v7339 = vld [vmem:[#allocation2 + $0x51] sm:$0xff]
    %v7340 = vld [vmem:[#allocation2 + $0x59] sm:$0xff]
    %v7341 = vld [vmem:[#allocation2 + $0x61] sm:$0xff]
    %v7342 = vld [vmem:[#allocation2 + $0x69] sm:$0xff]
    %v7343 = vld [vmem:[#allocation2 + $0x71] sm:$0xff]
    %v7344 = vld [vmem:[#allocation2 + $0x79] sm:$0xff]
    %v7345 = vld [vmem:[#allocation2 + $0x81] sm:$0xff]
    %v7346 = vld [vmem:[#allocation2 + $0x89] sm:$0xff]
    %v7347 = vld [vmem:[#allocation2 + $0x91] sm:$0xff]
    %v7348 = vld [vmem:[#allocation2 + $0x99] sm:$0xff]
    %v7349 = vld [vmem:[#allocation2 + $0xa1] sm:$0xff]
    %v7350 = vld [vmem:[#allocation2 + $0xa9] sm:$0xff]
    %v7351 = vld [vmem:[#allocation2 + $0xb1] sm:$0xff]
    %v7352 = vld [vmem:[#allocation2 + $0xb9] sm:$0xff]
    %v7353 = vld [vmem:[#allocation2 + $0xc1] sm:$0xff]
    %v7354 = vld [vmem:[#allocation2 + $0xc9] sm:$0xff]
    %v7355 = vld [vmem:[#allocation2 + $0xd1] sm:$0xff]
    %v7356 = vld [vmem:[#allocation2 + $0xd9] sm:$0xff]
    %v7357 = vld [vmem:[#allocation2 + $0xe1] sm:$0xff]
    %v7358 = vld [vmem:[#allocation2 + $0xe9] sm:$0xff]
    %v7359 = vld [vmem:[#allocation2 + $0xf1] sm:$0xff]
    %v7360 = vld [vmem:[#allocation2 + $0xf9] sm:$0xff]
    %v7361 = vld [vmem:[#allocation2 + $0x101] sm:$0xff]
    %v7362 = vld [vmem:[#allocation2 + $0x109] sm:$0xff]
    %v7363 = vld [vmem:[#allocation2 + $0x111] sm:$0xff]
    %v7364 = vld [vmem:[#allocation2 + $0x119] sm:$0xff]
    %v7365 = vld [vmem:[#allocation2 + $0x121] sm:$0xff]
    %v7366 = vld [vmem:[#allocation2 + $0x129] sm:$0xff]
    %v7367 = vld [vmem:[#allocation2 + $0x131] sm:$0xff]
    %v7368 = vld [vmem:[#allocation2 + $0x139] sm:$0xff]
    %v7369 = vld [vmem:[#allocation2 + $0x141] sm:$0xff]
    %v7370 = vld [vmem:[#allocation2 + $0x149] sm:$0xff]
    %v7371 = vld [vmem:[#allocation2 + $0x151] sm:$0xff]
    %v7372 = vld [vmem:[#allocation2 + $0x159] sm:$0xff]
    %v7373 = vld [vmem:[#allocation2 + $0x161] sm:$0xff]
    %v7374 = vld [vmem:[#allocation2 + $0x169] sm:$0xff]
    %v7375 = vld [vmem:[#allocation2 + $0x171] sm:$0xff]
    %v7376 = vld [vmem:[#allocation2 + $0x179] sm:$0xff]
    %v7377 = vld [vmem:[#allocation2 + $0x181] sm:$0xff]
    %v7378 = vld [vmem:[#allocation2 + $0x189] sm:$0xff]
    %v7379 = vld [vmem:[#allocation2 + $0x191] sm:$0xff]
    %v7380 = vld [vmem:[#allocation2 + $0x199] sm:$0xff]
    %v7381 = vld [vmem:[#allocation2 + $0x1a1] sm:$0xff]
    %v7382 = vld [vmem:[#allocation2 + $0x1a9] sm:$0xff]
    %v7383 = vld [vmem:[#allocation2 + $0x1b1] sm:$0xff]
    %v7384 = vld [vmem:[#allocation2 + $0x1b9] sm:$0xff]
    %v7385 = vld [vmem:[#allocation2 + $0x1c1] sm:$0xff]
    %v7386 = vld [vmem:[#allocation2 + $0x1c9] sm:$0xff]
    %v7387 = vld [vmem:[#allocation2 + $0x1d1] sm:$0xff]
    %v7388 = vld [vmem:[#allocation2 + $0x1d9] sm:$0xff]
    %v7389 = vld [vmem:[#allocation2 + $0x1e1] sm:$0xff]
    %v7390 = vld [vmem:[#allocation2 + $0x1e9] sm:$0xff]
    %v7391 = vld [vmem:[#allocation2 + $0x1f1] sm:$0xff]
    %v7392 = vld [vmem:[#allocation2 + $0x1f9] sm:$0xff]
    %v7393 = vld [vmem:[#allocation2 + $0x201] sm:$0xff]
    %v7394 = vld [vmem:[#allocation2 + $0x209] sm:$0xff]
    %v7395 = vld [vmem:[#allocation2 + $0x211] sm:$0xff]
    %v7396 = vld [vmem:[#allocation2 + $0x219] sm:$0xff]
    %v7397 = vld [vmem:[#allocation2 + $0x221] sm:$0xff]
    %7398 = vset.pattern.permute.xlu0 64
    %7399 = vperm.xlu0 %7398, %v1047
    %v7400 = vpop.permute.xlu0 %7399
    %7402 = vset.pattern.permute.xlu0 64
    %7403 = vperm.xlu0 %7402, %v1048
    %v7404 = vpop.permute.xlu0 %7403
    %7406 = vset.pattern.permute.xlu0 64
    %7407 = vperm.xlu0 %7406, %v1049
    %v7408 = vpop.permute.xlu0 %7407
    %7410 = vset.pattern.permute.xlu0 64
    %7411 = vperm.xlu0 %7410, %v1050
    %v7412 = vpop.permute.xlu0 %7411
    %7414 = vset.pattern.permute.xlu0 64
    %7415 = vperm.xlu0 %7414, %v1051
    %v7416 = vpop.permute.xlu0 %7415
    %7418 = vset.pattern.permute.xlu0 64
    %7419 = vperm.xlu0 %7418, %v1052
    %v7420 = vpop.permute.xlu0 %7419
    %7422 = vset.pattern.permute.xlu0 64
    %7423 = vperm.xlu0 %7422, %v1053
    %v7424 = vpop.permute.xlu0 %7423
    %7426 = vset.pattern.permute.xlu0 64
    %7427 = vperm.xlu0 %7426, %v1054
    %v7428 = vpop.permute.xlu0 %7427
    %7430 = vset.pattern.permute.xlu0 64
    %7431 = vperm.xlu0 %7430, %v1055
    %v7432 = vpop.permute.xlu0 %7431
    %7434 = vset.pattern.permute.xlu0 64
    %7435 = vperm.xlu0 %7434, %v1056
    %v7436 = vpop.permute.xlu0 %7435
    %7438 = vset.pattern.permute.xlu0 64
    %7439 = vperm.xlu0 %7438, %v1057
    %v7440 = vpop.permute.xlu0 %7439
    %7442 = vset.pattern.permute.xlu0 64
    %7443 = vperm.xlu0 %7442, %v1058
    %v7444 = vpop.permute.xlu0 %7443
    %7446 = vset.pattern.permute.xlu0 64
    %7447 = vperm.xlu0 %7446, %v1059
    %v7448 = vpop.permute.xlu0 %7447
    %7450 = vset.pattern.permute.xlu0 64
    %7451 = vperm.xlu0 %7450, %v1060
    %v7452 = vpop.permute.xlu0 %7451
    %7454 = vset.pattern.permute.xlu0 64
    %7455 = vperm.xlu0 %7454, %v1061
    %v7456 = vpop.permute.xlu0 %7455
    %7458 = vset.pattern.permute.xlu0 64
    %7459 = vperm.xlu0 %7458, %v1062
    %v7460 = vpop.permute.xlu0 %7459
    %7462 = vset.pattern.permute.xlu0 64
    %7463 = vperm.xlu0 %7462, %v1063
    %v7464 = vpop.permute.xlu0 %7463
    %7466 = vset.pattern.permute.xlu0 64
    %7467 = vperm.xlu0 %7466, %v1064
    %v7468 = vpop.permute.xlu0 %7467
    %7470 = vset.pattern.permute.xlu0 64
    %7471 = vperm.xlu0 %7470, %v1065
    %v7472 = vpop.permute.xlu0 %7471
    %7474 = vset.pattern.permute.xlu0 64
    %7475 = vperm.xlu0 %7474, %v1066
    %v7476 = vpop.permute.xlu0 %7475
    %7478 = vset.pattern.permute.xlu0 64
    %7479 = vperm.xlu0 %7478, %v1067
    %v7480 = vpop.permute.xlu0 %7479
    %7482 = vset.pattern.permute.xlu0 64
    %7483 = vperm.xlu0 %7482, %v1068
    %v7484 = vpop.permute.xlu0 %7483
    %7486 = vset.pattern.permute.xlu0 64
    %7487 = vperm.xlu0 %7486, %v1069
    %v7488 = vpop.permute.xlu0 %7487
    %7490 = vset.pattern.permute.xlu0 64
    %7491 = vperm.xlu0 %7490, %v1070
    %v7492 = vpop.permute.xlu0 %7491
    %7494 = vset.pattern.permute.xlu0 64
    %7495 = vperm.xlu0 %7494, %v1071
    %v7496 = vpop.permute.xlu0 %7495
    %7498 = vset.pattern.permute.xlu0 64
    %7499 = vperm.xlu0 %7498, %v1072
    %v7500 = vpop.permute.xlu0 %7499
    %7502 = vset.pattern.permute.xlu0 64
    %7503 = vperm.xlu0 %7502, %v1073
    %v7504 = vpop.permute.xlu0 %7503
    %7506 = vset.pattern.permute.xlu0 64
    %7507 = vperm.xlu0 %7506, %v1074
    %v7508 = vpop.permute.xlu0 %7507
    %7510 = vset.pattern.permute.xlu0 64
    %7511 = vperm.xlu0 %7510, %v1075
    %v7512 = vpop.permute.xlu0 %7511
    %7514 = vset.pattern.permute.xlu0 64
    %7515 = vperm.xlu0 %7514, %v1076
    %v7516 = vpop.permute.xlu0 %7515
    %7518 = vset.pattern.permute.xlu0 64
    %7519 = vperm.xlu0 %7518, %v1077
    %v7520 = vpop.permute.xlu0 %7519
    %7522 = vset.pattern.permute.xlu0 64
    %7523 = vperm.xlu0 %7522, %v1078
    %v7524 = vpop.permute.xlu0 %7523
    %7526 = vset.pattern.permute.xlu0 64
    %7527 = vperm.xlu0 %7526, %v1079
    %v7528 = vpop.permute.xlu0 %7527
    %7530 = vset.pattern.permute.xlu0 64
    %7531 = vperm.xlu0 %7530, %v1080
    %v7532 = vpop.permute.xlu0 %7531
    %7534 = vset.pattern.permute.xlu0 64
    %7535 = vperm.xlu0 %7534, %v1081
    %v7536 = vpop.permute.xlu0 %7535
    %7538 = vset.pattern.permute.xlu0 64
    %7539 = vperm.xlu0 %7538, %v1082
    %v7540 = vpop.permute.xlu0 %7539
    %7542 = vset.pattern.permute.xlu0 64
    %7543 = vperm.xlu0 %7542, %v1083
    %v7544 = vpop.permute.xlu0 %7543
    %7546 = vset.pattern.permute.xlu0 64
    %7547 = vperm.xlu0 %7546, %v1084
    %v7548 = vpop.permute.xlu0 %7547
    %7550 = vset.pattern.permute.xlu0 64
    %7551 = vperm.xlu0 %7550, %v1085
    %v7552 = vpop.permute.xlu0 %7551
    %7554 = vset.pattern.permute.xlu0 64
    %7555 = vperm.xlu0 %7554, %v1086
    %v7556 = vpop.permute.xlu0 %7555
    %7558 = vset.pattern.permute.xlu0 64
    %7559 = vperm.xlu0 %7558, %v1087
    %v7560 = vpop.permute.xlu0 %7559
    %7562 = vset.pattern.permute.xlu0 64
    %7563 = vperm.xlu0 %7562, %v1088
    %v7564 = vpop.permute.xlu0 %7563
    %7566 = vset.pattern.permute.xlu0 64
    %7567 = vperm.xlu0 %7566, %v1089
    %v7568 = vpop.permute.xlu0 %7567
    %7570 = vset.pattern.permute.xlu0 64
    %7571 = vperm.xlu0 %7570, %v1090
    %v7572 = vpop.permute.xlu0 %7571
    %7574 = vset.pattern.permute.xlu0 64
    %7575 = vperm.xlu0 %7574, %v1091
    %v7576 = vpop.permute.xlu0 %7575
    %7578 = vset.pattern.permute.xlu0 64
    %7579 = vperm.xlu0 %7578, %v1092
    %v7580 = vpop.permute.xlu0 %7579
    %7582 = vset.pattern.permute.xlu0 64
    %7583 = vperm.xlu0 %7582, %v1093
    %v7584 = vpop.permute.xlu0 %7583
    %7586 = vset.pattern.permute.xlu0 64
    %7587 = vperm.xlu0 %7586, %v1094
    %v7588 = vpop.permute.xlu0 %7587
    %7590 = vset.pattern.permute.xlu0 64
    %7591 = vperm.xlu0 %7590, %v1095
    %v7592 = vpop.permute.xlu0 %7591
    %7594 = vset.pattern.permute.xlu0 64
    %7595 = vperm.xlu0 %7594, %v1096
    %v7596 = vpop.permute.xlu0 %7595
    %7598 = vset.pattern.permute.xlu0 64
    %7599 = vperm.xlu0 %7598, %v1097
    %v7600 = vpop.permute.xlu0 %7599
    %7602 = vset.pattern.permute.xlu0 64
    %7603 = vperm.xlu0 %7602, %v1098
    %v7604 = vpop.permute.xlu0 %7603
    %7606 = vset.pattern.permute.xlu0 64
    %7607 = vperm.xlu0 %7606, %v1099
    %v7608 = vpop.permute.xlu0 %7607
    %7610 = vset.pattern.permute.xlu0 64
    %7611 = vperm.xlu0 %7610, %v1100
    %v7612 = vpop.permute.xlu0 %7611
    %7614 = vset.pattern.permute.xlu0 64
    %7615 = vperm.xlu0 %7614, %v1101
    %v7616 = vpop.permute.xlu0 %7615
    %7618 = vset.pattern.permute.xlu0 64
    %7619 = vperm.xlu0 %7618, %v1102
    %v7620 = vpop.permute.xlu0 %7619
    %7622 = vset.pattern.permute.xlu0 64
    %7623 = vperm.xlu0 %7622, %v1103
    %v7624 = vpop.permute.xlu0 %7623
    %7626 = vset.pattern.permute.xlu0 64
    %7627 = vperm.xlu0 %7626, %v1104
    %v7628 = vpop.permute.xlu0 %7627
    %7630 = vset.pattern.permute.xlu0 64
    %7631 = vperm.xlu0 %7630, %v1105
    %v7632 = vpop.permute.xlu0 %7631
    %7634 = vset.pattern.permute.xlu0 64
    %7635 = vperm.xlu0 %7634, %v1106
    %v7636 = vpop.permute.xlu0 %7635
    %7638 = vset.pattern.permute.xlu0 64
    %7639 = vperm.xlu0 %7638, %v1107
    %v7640 = vpop.permute.xlu0 %7639
    %7642 = vset.pattern.permute.xlu0 64
    %7643 = vperm.xlu0 %7642, %v1108
    %v7644 = vpop.permute.xlu0 %7643
    %7646 = vset.pattern.permute.xlu0 64
    %7647 = vperm.xlu0 %7646, %v1109
    %v7648 = vpop.permute.xlu0 %7647
    %7650 = vset.pattern.permute.xlu0 64
    %7651 = vperm.xlu0 %7650, %v1110
    %v7652 = vpop.permute.xlu0 %7651
    %v7654 = vmul.f32 %v7334, %v7400
    %v7655 = vmul.f32 %v7335, %v7404
    %v7656 = vmul.f32 %v7336, %v7408
    %v7657 = vmul.f32 %v7337, %v7412
    %v7658 = vmul.f32 %v7338, %v7416
    %v7659 = vmul.f32 %v7339, %v7420
    %v7660 = vmul.f32 %v7340, %v7424
    %v7661 = vmul.f32 %v7341, %v7428
    %v7662 = vmul.f32 %v7342, %v7432
    %v7663 = vmul.f32 %v7343, %v7436
    %v7664 = vmul.f32 %v7344, %v7440
    %v7665 = vmul.f32 %v7345, %v7444
    %v7666 = vmul.f32 %v7346, %v7448
    %v7667 = vmul.f32 %v7347, %v7452
    %v7668 = vmul.f32 %v7348, %v7456
    %v7669 = vmul.f32 %v7349, %v7460
    %v7670 = vmul.f32 %v7350, %v7464
    %v7671 = vmul.f32 %v7351, %v7468
    %v7672 = vmul.f32 %v7352, %v7472
    %v7673 = vmul.f32 %v7353, %v7476
    %v7674 = vmul.f32 %v7354, %v7480
    %v7675 = vmul.f32 %v7355, %v7484
    %v7676 = vmul.f32 %v7356, %v7488
    %v7677 = vmul.f32 %v7357, %v7492
    %v7678 = vmul.f32 %v7358, %v7496
    %v7679 = vmul.f32 %v7359, %v7500
    %v7680 = vmul.f32 %v7360, %v7504
    %v7681 = vmul.f32 %v7361, %v7508
    %v7682 = vmul.f32 %v7362, %v7512
    %v7683 = vmul.f32 %v7363, %v7516
    %v7684 = vmul.f32 %v7364, %v7520
    %v7685 = vmul.f32 %v7365, %v7524
    %v7686 = vmul.f32 %v7366, %v7528
    %v7687 = vmul.f32 %v7367, %v7532
    %v7688 = vmul.f32 %v7368, %v7536
    %v7689 = vmul.f32 %v7369, %v7540
    %v7690 = vmul.f32 %v7370, %v7544
    %v7691 = vmul.f32 %v7371, %v7548
    %v7692 = vmul.f32 %v7372, %v7552
    %v7693 = vmul.f32 %v7373, %v7556
    %v7694 = vmul.f32 %v7374, %v7560
    %v7695 = vmul.f32 %v7375, %v7564
    %v7696 = vmul.f32 %v7376, %v7568
    %v7697 = vmul.f32 %v7377, %v7572
    %v7698 = vmul.f32 %v7378, %v7576
    %v7699 = vmul.f32 %v7379, %v7580
    %v7700 = vmul.f32 %v7380, %v7584
    %v7701 = vmul.f32 %v7381, %v7588
    %v7702 = vmul.f32 %v7382, %v7592
    %v7703 = vmul.f32 %v7383, %v7596
    %v7704 = vmul.f32 %v7384, %v7600
    %v7705 = vmul.f32 %v7385, %v7604
    %v7706 = vmul.f32 %v7386, %v7608
    %v7707 = vmul.f32 %v7387, %v7612
    %v7708 = vmul.f32 %v7388, %v7616
    %v7709 = vmul.f32 %v7389, %v7620
    %v7710 = vmul.f32 %v7390, %v7624
    %v7711 = vmul.f32 %v7391, %v7628
    %v7712 = vmul.f32 %v7392, %v7632
    %v7713 = vmul.f32 %v7393, %v7636
    %v7714 = vmul.f32 %v7394, %v7640
    %v7715 = vmul.f32 %v7395, %v7644
    %v7716 = vmul.f32 %v7396, %v7648
    %v7717 = vmul.f32 %v7397, %v7652
    %v7718 = vpack.c.bf16 %v7655, %v7654
    %v7719 = vpack.c.bf16 %v7657, %v7656
    %v7720 = vpack.c.bf16 %v7659, %v7658
    %v7721 = vpack.c.bf16 %v7661, %v7660
    %v7722 = vpack.c.bf16 %v7663, %v7662
    %v7723 = vpack.c.bf16 %v7665, %v7664
    %v7724 = vpack.c.bf16 %v7667, %v7666
    %v7725 = vpack.c.bf16 %v7669, %v7668
    %v7726 = vpack.c.bf16 %v7671, %v7670
    %v7727 = vpack.c.bf16 %v7673, %v7672
    %v7728 = vpack.c.bf16 %v7675, %v7674
    %v7729 = vpack.c.bf16 %v7677, %v7676
    %v7730 = vpack.c.bf16 %v7679, %v7678
    %v7731 = vpack.c.bf16 %v7681, %v7680
    %v7732 = vpack.c.bf16 %v7683, %v7682
    %v7733 = vpack.c.bf16 %v7685, %v7684
    %v7734 = vpack.c.bf16 %v7687, %v7686
    %v7735 = vpack.c.bf16 %v7689, %v7688
    %v7736 = vpack.c.bf16 %v7691, %v7690
    %v7737 = vpack.c.bf16 %v7693, %v7692
    %v7738 = vpack.c.bf16 %v7695, %v7694
    %v7739 = vpack.c.bf16 %v7697, %v7696
    %v7740 = vpack.c.bf16 %v7699, %v7698
    %v7741 = vpack.c.bf16 %v7701, %v7700
    %v7742 = vpack.c.bf16 %v7703, %v7702
    %v7743 = vpack.c.bf16 %v7705, %v7704
    %v7744 = vpack.c.bf16 %v7707, %v7706
    %v7745 = vpack.c.bf16 %v7709, %v7708
    %v7746 = vpack.c.bf16 %v7711, %v7710
    %v7747 = vpack.c.bf16 %v7713, %v7712
    %v7748 = vpack.c.bf16 %v7715, %v7714
    %v7749 = vpack.c.bf16 %v7717, %v7716
    %s7750 = scalar_lea.vmem [#allocation12], 512
    %v7751 = vld [vmem:[%s7750] sm:$0xf]
    %v7752 = vld [vmem:[%s7750 + $0x4] sm:$0xf]
    %v7753 = vld [vmem:[%s7750 + $0x8] sm:$0xf]
    %v7754 = vld [vmem:[%s7750 + $0xc] sm:$0xf]
    %v7755 = vld [vmem:[%s7750 + $0x10] sm:$0xf]
    %v7756 = vld [vmem:[%s7750 + $0x14] sm:$0xf]
    %v7757 = vld [vmem:[%s7750 + $0x18] sm:$0xf]
    %v7758 = vld [vmem:[%s7750 + $0x1c] sm:$0xf]
    %v7759 = vld [vmem:[%s7750 + $0x20] sm:$0xf]
    %v7760 = vld [vmem:[%s7750 + $0x24] sm:$0xf]
    %v7761 = vld [vmem:[%s7750 + $0x28] sm:$0xf]
    %v7762 = vld [vmem:[%s7750 + $0x2c] sm:$0xf]
    %v7763 = vld [vmem:[%s7750 + $0x30] sm:$0xf]
    %v7764 = vld [vmem:[%s7750 + $0x34] sm:$0xf]
    %v7765 = vld [vmem:[%s7750 + $0x38] sm:$0xf]
    %v7766 = vld [vmem:[%s7750 + $0x3c] sm:$0xf]
    %v7783 = vunpack.c.l.b16 %v7751
    %v7784 = vunpack.c.l.b16 %v7752
    %v7785 = vunpack.c.l.b16 %v7753
    %v7786 = vunpack.c.l.b16 %v7754
    %v7787 = vunpack.c.l.b16 %v7755
    %v7788 = vunpack.c.l.b16 %v7756
    %v7789 = vunpack.c.l.b16 %v7757
    %v7790 = vunpack.c.l.b16 %v7758
    %v7791 = vunpack.c.l.b16 %v7759
    %v7792 = vunpack.c.l.b16 %v7760
    %v7793 = vunpack.c.l.b16 %v7761
    %v7794 = vunpack.c.l.b16 %v7762
    %v7795 = vunpack.c.l.b16 %v7763
    %v7796 = vunpack.c.l.b16 %v7764
    %v7797 = vunpack.c.l.b16 %v7765
    %v7798 = vunpack.c.l.b16 %v7766
    %v7799 = vpack.c.b16 %v7784, %v7783
    %v7800 = vpack.c.b16 %v7786, %v7785
    %v7801 = vpack.c.b16 %v7788, %v7787
    %v7802 = vpack.c.b16 %v7790, %v7789
    %v7803 = vpack.c.b16 %v7792, %v7791
    %v7804 = vpack.c.b16 %v7794, %v7793
    %v7805 = vpack.c.b16 %v7796, %v7795
    %v7806 = vpack.c.b16 %v7798, %v7797
    %7815 = vmatprep.subr.bf16.mxu0 0
    %7816 = vmatpush1.bf16.msra.mxu0 %v7806
    %7817 = vmatprep.subr.bf16.mxu0 0
    %7818 = vmatpush1.bf16.msra.mxu0 %v7805
    %7819 = vmatprep.subr.bf16.mxu0 0
    %7820 = vmatpush1.bf16.msra.mxu0 %v7804
    %7821 = vmatprep.subr.bf16.mxu0 0
    %7822 = vmatpush1.bf16.msra.mxu0 %v7803
    %7823 = vmatprep.subr.bf16.mxu0 0
    %7824 = vmatpush1.bf16.msra.mxu0 %v7802
    %7825 = vmatprep.subr.bf16.mxu0 0
    %7826 = vmatpush1.bf16.msra.mxu0 %v7801
    %7827 = vmatprep.subr.bf16.mxu0 0
    %7828 = vmatpush1.bf16.msra.mxu0 %v7800
    %7829 = vmatprep.subr.bf16.mxu0 0
    %7830 = vmatpush1.bf16.msra.mxu0 %v7799
    %7831 = vmatprep.subr.bf16.mxu0 0
    %7832 = vmatpush2.bf16.msra.mxu0 0
    %7833 = vmatprep.subr.bf16.mxu0 0
    %7834 = vmatpush2.bf16.msra.mxu0 0
    %7835 = vmatprep.subr.bf16.mxu0 0
    %7836 = vmatpush2.bf16.msra.mxu0 0
    %7837 = vmatprep.subr.bf16.mxu0 0
    %7838 = vmatpush2.bf16.msra.mxu0 0
    %7839 = vmatprep.subr.bf16.mxu0 0
    %7840 = vmatpush2.bf16.msra.mxu0 0
    %7841 = vmatprep.subr.bf16.mxu0 0
    %7842 = vmatpush2.bf16.msra.mxu0 0
    %7843 = vmatprep.subr.bf16.mxu0 0
    %7844 = vmatpush2.bf16.msra.mxu0 0
    %7845 = vmatprep.subr.bf16.mxu0 0
    %7846 = vmatpush2.bf16.msra.mxu0 0
    %7847 = vmatprep.mubr.bf16.mxu0 0
    %7848 = vmatmul.mubr.bf16.gmra.mxu0 %v7718
    %v7849 = vpop.f32.mrf.mxu0
    %v7850 = vadd.f32 0.0, %v7849
    %v7851 = vpop.f32.mrf.mxu0
    %v7852 = vpop.f32.mrf.mxu0
    %v7853 = vadd.f32 0.0, %v7852
    %v7854 = vpop.f32.mrf.mxu0
    %7855 = vmatprep.mubr.bf16.mxu0 0
    %7856 = vmatmul.mubr.bf16.gmra.mxu0 %v7719
    %v7857 = vpop.f32.mrf.mxu0
    %v7858 = vadd.f32 0.0, %v7857
    %v7859 = vpop.f32.mrf.mxu0
    %v7860 = vpop.f32.mrf.mxu0
    %v7861 = vadd.f32 0.0, %v7860
    %v7862 = vpop.f32.mrf.mxu0
    %7863 = vmatprep.mubr.bf16.mxu0 0
    %7864 = vmatmul.mubr.bf16.gmra.mxu0 %v7720
    %v7865 = vpop.f32.mrf.mxu0
    %v7866 = vadd.f32 0.0, %v7865
    %v7867 = vpop.f32.mrf.mxu0
    %v7868 = vpop.f32.mrf.mxu0
    %v7869 = vadd.f32 0.0, %v7868
    %v7870 = vpop.f32.mrf.mxu0
    %7871 = vmatprep.mubr.bf16.mxu0 0
    %7872 = vmatmul.mubr.bf16.gmra.mxu0 %v7721
    %v7873 = vpop.f32.mrf.mxu0
    %v7874 = vadd.f32 0.0, %v7873
    %v7875 = vpop.f32.mrf.mxu0
    %v7876 = vpop.f32.mrf.mxu0
    %v7877 = vadd.f32 0.0, %v7876
    %v7878 = vpop.f32.mrf.mxu0
    %7879 = vmatprep.mubr.bf16.mxu0 0
    %7880 = vmatmul.mubr.bf16.gmra.mxu0 %v7722
    %v7881 = vpop.f32.mrf.mxu0
    %v7882 = vadd.f32 0.0, %v7881
    %v7883 = vpop.f32.mrf.mxu0
    %v7884 = vpop.f32.mrf.mxu0
    %v7885 = vadd.f32 0.0, %v7884
    %v7886 = vpop.f32.mrf.mxu0
    %7887 = vmatprep.mubr.bf16.mxu0 0
    %7888 = vmatmul.mubr.bf16.gmra.mxu0 %v7723
    %v7889 = vpop.f32.mrf.mxu0
    %v7890 = vadd.f32 0.0, %v7889
    %v7891 = vpop.f32.mrf.mxu0
    %v7892 = vpop.f32.mrf.mxu0
    %v7893 = vadd.f32 0.0, %v7892
    %v7894 = vpop.f32.mrf.mxu0
    %7895 = vmatprep.mubr.bf16.mxu0 0
    %7896 = vmatmul.mubr.bf16.gmra.mxu0 %v7724
    %v7897 = vpop.f32.mrf.mxu0
    %v7898 = vadd.f32 0.0, %v7897
    %v7899 = vpop.f32.mrf.mxu0
    %v7900 = vpop.f32.mrf.mxu0
    %v7901 = vadd.f32 0.0, %v7900
    %v7902 = vpop.f32.mrf.mxu0
    %7903 = vmatprep.mubr.bf16.mxu0 0
    %7904 = vmatmul.mubr.bf16.gmra.mxu0 %v7725
    %v7905 = vpop.f32.mrf.mxu0
    %v7906 = vadd.f32 0.0, %v7905
    %v7907 = vpop.f32.mrf.mxu0
    %v7908 = vpop.f32.mrf.mxu0
    %v7909 = vadd.f32 0.0, %v7908
    %v7910 = vpop.f32.mrf.mxu0
    %7911 = vmatprep.mubr.bf16.mxu0 0
    %7912 = vmatmul.mubr.bf16.gmra.mxu0 %v7726
    %v7913 = vpop.f32.mrf.mxu0
    %v7914 = vadd.f32 0.0, %v7913
    %v7915 = vpop.f32.mrf.mxu0
    %v7916 = vpop.f32.mrf.mxu0
    %v7917 = vadd.f32 0.0, %v7916
    %v7918 = vpop.f32.mrf.mxu0
    %7919 = vmatprep.mubr.bf16.mxu0 0
    %7920 = vmatmul.mubr.bf16.gmra.mxu0 %v7727
    %v7921 = vpop.f32.mrf.mxu0
    %v7922 = vadd.f32 0.0, %v7921
    %v7923 = vpop.f32.mrf.mxu0
    %v7924 = vpop.f32.mrf.mxu0
    %v7925 = vadd.f32 0.0, %v7924
    %v7926 = vpop.f32.mrf.mxu0
    %7927 = vmatprep.mubr.bf16.mxu0 0
    %7928 = vmatmul.mubr.bf16.gmra.mxu0 %v7728
    %v7929 = vpop.f32.mrf.mxu0
    %v7930 = vadd.f32 0.0, %v7929
    %v7931 = vpop.f32.mrf.mxu0
    %v7932 = vpop.f32.mrf.mxu0
    %v7933 = vadd.f32 0.0, %v7932
    %v7934 = vpop.f32.mrf.mxu0
    %7935 = vmatprep.mubr.bf16.mxu0 0
    %7936 = vmatmul.mubr.bf16.gmra.mxu0 %v7729
    %v7937 = vpop.f32.mrf.mxu0
    %v7938 = vadd.f32 0.0, %v7937
    %v7939 = vpop.f32.mrf.mxu0
    %v7940 = vpop.f32.mrf.mxu0
    %v7941 = vadd.f32 0.0, %v7940
    %v7942 = vpop.f32.mrf.mxu0
    %7943 = vmatprep.mubr.bf16.mxu0 0
    %7944 = vmatmul.mubr.bf16.gmra.mxu0 %v7730
    %v7945 = vpop.f32.mrf.mxu0
    %v7946 = vadd.f32 0.0, %v7945
    %v7947 = vpop.f32.mrf.mxu0
    %v7948 = vpop.f32.mrf.mxu0
    %v7949 = vadd.f32 0.0, %v7948
    %v7950 = vpop.f32.mrf.mxu0
    %7951 = vmatprep.mubr.bf16.mxu0 0
    %7952 = vmatmul.mubr.bf16.gmra.mxu0 %v7731
    %v7953 = vpop.f32.mrf.mxu0
    %v7954 = vadd.f32 0.0, %v7953
    %v7955 = vpop.f32.mrf.mxu0
    %v7956 = vpop.f32.mrf.mxu0
    %v7957 = vadd.f32 0.0, %v7956
    %v7958 = vpop.f32.mrf.mxu0
    %7959 = vmatprep.mubr.bf16.mxu0 0
    %7960 = vmatmul.mubr.bf16.gmra.mxu0 %v7732
    %v7961 = vpop.f32.mrf.mxu0
    %v7962 = vadd.f32 0.0, %v7961
    %v7963 = vpop.f32.mrf.mxu0
    %v7964 = vpop.f32.mrf.mxu0
    %v7965 = vadd.f32 0.0, %v7964
    %v7966 = vpop.f32.mrf.mxu0
    %7967 = vmatprep.mubr.bf16.mxu0 0
    %7968 = vmatmul.mubr.bf16.gmra.mxu0 %v7733
    %v7969 = vpop.f32.mrf.mxu0
    %v7970 = vadd.f32 0.0, %v7969
    %v7971 = vpop.f32.mrf.mxu0
    %v7972 = vpop.f32.mrf.mxu0
    %v7973 = vadd.f32 0.0, %v7972
    %v7974 = vpop.f32.mrf.mxu0
    %7975 = vmatprep.mubr.bf16.mxu0 0
    %7976 = vmatmul.mubr.bf16.gmra.mxu0 %v7734
    %v7977 = vpop.f32.mrf.mxu0
    %v7978 = vadd.f32 0.0, %v7977
    %v7979 = vpop.f32.mrf.mxu0
    %v7980 = vpop.f32.mrf.mxu0
    %v7981 = vadd.f32 0.0, %v7980
    %v7982 = vpop.f32.mrf.mxu0
    %7983 = vmatprep.mubr.bf16.mxu0 0
    %7984 = vmatmul.mubr.bf16.gmra.mxu0 %v7735
    %v7985 = vpop.f32.mrf.mxu0
    %v7986 = vadd.f32 0.0, %v7985
    %v7987 = vpop.f32.mrf.mxu0
    %v7988 = vpop.f32.mrf.mxu0
    %v7989 = vadd.f32 0.0, %v7988
    %v7990 = vpop.f32.mrf.mxu0
    %7991 = vmatprep.mubr.bf16.mxu0 0
    %7992 = vmatmul.mubr.bf16.gmra.mxu0 %v7736
    %v7993 = vpop.f32.mrf.mxu0
    %v7994 = vadd.f32 0.0, %v7993
    %v7995 = vpop.f32.mrf.mxu0
    %v7996 = vpop.f32.mrf.mxu0
    %v7997 = vadd.f32 0.0, %v7996
    %v7998 = vpop.f32.mrf.mxu0
    %7999 = vmatprep.mubr.bf16.mxu0 0
    %8000 = vmatmul.mubr.bf16.gmra.mxu0 %v7737
    %v8001 = vpop.f32.mrf.mxu0
    %v8002 = vadd.f32 0.0, %v8001
    %v8003 = vpop.f32.mrf.mxu0
    %v8004 = vpop.f32.mrf.mxu0
    %v8005 = vadd.f32 0.0, %v8004
    %v8006 = vpop.f32.mrf.mxu0
    %8007 = vmatprep.mubr.bf16.mxu0 0
    %8008 = vmatmul.mubr.bf16.gmra.mxu0 %v7738
    %v8009 = vpop.f32.mrf.mxu0
    %v8010 = vadd.f32 0.0, %v8009
    %v8011 = vpop.f32.mrf.mxu0
    %v8012 = vpop.f32.mrf.mxu0
    %v8013 = vadd.f32 0.0, %v8012
    %v8014 = vpop.f32.mrf.mxu0
    %8015 = vmatprep.mubr.bf16.mxu0 0
    %8016 = vmatmul.mubr.bf16.gmra.mxu0 %v7739
    %v8017 = vpop.f32.mrf.mxu0
    %v8018 = vadd.f32 0.0, %v8017
    %v8019 = vpop.f32.mrf.mxu0
    %v8020 = vpop.f32.mrf.mxu0
    %v8021 = vadd.f32 0.0, %v8020
    %v8022 = vpop.f32.mrf.mxu0
    %8023 = vmatprep.mubr.bf16.mxu0 0
    %8024 = vmatmul.mubr.bf16.gmra.mxu0 %v7740
    %v8025 = vpop.f32.mrf.mxu0
    %v8026 = vadd.f32 0.0, %v8025
    %v8027 = vpop.f32.mrf.mxu0
    %v8028 = vpop.f32.mrf.mxu0
    %v8029 = vadd.f32 0.0, %v8028
    %v8030 = vpop.f32.mrf.mxu0
    %8031 = vmatprep.mubr.bf16.mxu0 0
    %8032 = vmatmul.mubr.bf16.gmra.mxu0 %v7741
    %v8033 = vpop.f32.mrf.mxu0
    %v8034 = vadd.f32 0.0, %v8033
    %v8035 = vpop.f32.mrf.mxu0
    %v8036 = vpop.f32.mrf.mxu0
    %v8037 = vadd.f32 0.0, %v8036
    %v8038 = vpop.f32.mrf.mxu0
    %8039 = vmatprep.mubr.bf16.mxu0 0
    %8040 = vmatmul.mubr.bf16.gmra.mxu0 %v7742
    %v8041 = vpop.f32.mrf.mxu0
    %v8042 = vadd.f32 0.0, %v8041
    %v8043 = vpop.f32.mrf.mxu0
    %v8044 = vpop.f32.mrf.mxu0
    %v8045 = vadd.f32 0.0, %v8044
    %v8046 = vpop.f32.mrf.mxu0
    %8047 = vmatprep.mubr.bf16.mxu0 0
    %8048 = vmatmul.mubr.bf16.gmra.mxu0 %v7743
    %v8049 = vpop.f32.mrf.mxu0
    %v8050 = vadd.f32 0.0, %v8049
    %v8051 = vpop.f32.mrf.mxu0
    %v8052 = vpop.f32.mrf.mxu0
    %v8053 = vadd.f32 0.0, %v8052
    %v8054 = vpop.f32.mrf.mxu0
    %8055 = vmatprep.mubr.bf16.mxu0 0
    %8056 = vmatmul.mubr.bf16.gmra.mxu0 %v7744
    %v8057 = vpop.f32.mrf.mxu0
    %v8058 = vadd.f32 0.0, %v8057
    %v8059 = vpop.f32.mrf.mxu0
    %v8060 = vpop.f32.mrf.mxu0
    %v8061 = vadd.f32 0.0, %v8060
    %v8062 = vpop.f32.mrf.mxu0
    %8063 = vmatprep.mubr.bf16.mxu0 0
    %8064 = vmatmul.mubr.bf16.gmra.mxu0 %v7745
    %v8065 = vpop.f32.mrf.mxu0
    %v8066 = vadd.f32 0.0, %v8065
    %v8067 = vpop.f32.mrf.mxu0
    %v8068 = vpop.f32.mrf.mxu0
    %v8069 = vadd.f32 0.0, %v8068
    %v8070 = vpop.f32.mrf.mxu0
    %8071 = vmatprep.mubr.bf16.mxu0 0
    %8072 = vmatmul.mubr.bf16.gmra.mxu0 %v7746
    %v8073 = vpop.f32.mrf.mxu0
    %v8074 = vadd.f32 0.0, %v8073
    %v8075 = vpop.f32.mrf.mxu0
    %v8076 = vpop.f32.mrf.mxu0
    %v8077 = vadd.f32 0.0, %v8076
    %v8078 = vpop.f32.mrf.mxu0
    %8079 = vmatprep.mubr.bf16.mxu0 0
    %8080 = vmatmul.mubr.bf16.gmra.mxu0 %v7747
    %v8081 = vpop.f32.mrf.mxu0
    %v8082 = vadd.f32 0.0, %v8081
    %v8083 = vpop.f32.mrf.mxu0
    %v8084 = vpop.f32.mrf.mxu0
    %v8085 = vadd.f32 0.0, %v8084
    %v8086 = vpop.f32.mrf.mxu0
    %8087 = vmatprep.mubr.bf16.mxu0 0
    %8088 = vmatmul.mubr.bf16.gmra.mxu0 %v7748
    %v8089 = vpop.f32.mrf.mxu0
    %v8090 = vadd.f32 0.0, %v8089
    %v8091 = vpop.f32.mrf.mxu0
    %v8092 = vpop.f32.mrf.mxu0
    %v8093 = vadd.f32 0.0, %v8092
    %v8094 = vpop.f32.mrf.mxu0
    %8095 = vmatprep.mubr.bf16.mxu0 0
    %8096 = vmatmul.mubr.bf16.gmra.mxu0 %v7749
    %v8097 = vpop.f32.mrf.mxu0
    %v8098 = vadd.f32 0.0, %v8097
    %v8099 = vpop.f32.mrf.mxu0
    %v8100 = vpop.f32.mrf.mxu0
    %v8101 = vadd.f32 0.0, %v8100
    %v8102 = vpop.f32.mrf.mxu0
    %8103 = vdwg.mxu0
    %v8104 = vadd.f32 %v7270, %v7850
    %v8105 = vadd.f32 %v7271, %v7853
    %v8106 = vadd.f32 %v7272, %v7858
    %v8107 = vadd.f32 %v7273, %v7861
    %v8108 = vadd.f32 %v7274, %v7866
    %v8109 = vadd.f32 %v7275, %v7869
    %v8110 = vadd.f32 %v7276, %v7874
    %v8111 = vadd.f32 %v7277, %v7877
    %v8112 = vadd.f32 %v7278, %v7882
    %v8113 = vadd.f32 %v7279, %v7885
    %v8114 = vadd.f32 %v7280, %v7890
    %v8115 = vadd.f32 %v7281, %v7893
    %v8116 = vadd.f32 %v7282, %v7898
    %v8117 = vadd.f32 %v7283, %v7901
    %v8118 = vadd.f32 %v7284, %v7906
    %v8119 = vadd.f32 %v7285, %v7909
    %v8120 = vadd.f32 %v7286, %v7914
    %v8121 = vadd.f32 %v7287, %v7917
    %v8122 = vadd.f32 %v7288, %v7922
    %v8123 = vadd.f32 %v7289, %v7925
    %v8124 = vadd.f32 %v7290, %v7930
    %v8125 = vadd.f32 %v7291, %v7933
    %v8126 = vadd.f32 %v7292, %v7938
    %v8127 = vadd.f32 %v7293, %v7941
    %v8128 = vadd.f32 %v7294, %v7946
    %v8129 = vadd.f32 %v7295, %v7949
    %v8130 = vadd.f32 %v7296, %v7954
    %v8131 = vadd.f32 %v7297, %v7957
    %v8132 = vadd.f32 %v7298, %v7962
    %v8133 = vadd.f32 %v7299, %v7965
    %v8134 = vadd.f32 %v7300, %v7970
    %v8135 = vadd.f32 %v7301, %v7973
    %v8136 = vadd.f32 %v7302, %v7978
    %v8137 = vadd.f32 %v7303, %v7981
    %v8138 = vadd.f32 %v7304, %v7986
    %v8139 = vadd.f32 %v7305, %v7989
    %v8140 = vadd.f32 %v7306, %v7994
    %v8141 = vadd.f32 %v7307, %v7997
    %v8142 = vadd.f32 %v7308, %v8002
    %v8143 = vadd.f32 %v7309, %v8005
    %v8144 = vadd.f32 %v7310, %v8010
    %v8145 = vadd.f32 %v7311, %v8013
    %v8146 = vadd.f32 %v7312, %v8018
    %v8147 = vadd.f32 %v7313, %v8021
    %v8148 = vadd.f32 %v7314, %v8026
    %v8149 = vadd.f32 %v7315, %v8029
    %v8150 = vadd.f32 %v7316, %v8034
    %v8151 = vadd.f32 %v7317, %v8037
    %v8152 = vadd.f32 %v7318, %v8042
    %v8153 = vadd.f32 %v7319, %v8045
    %v8154 = vadd.f32 %v7320, %v8050
    %v8155 = vadd.f32 %v7321, %v8053
    %v8156 = vadd.f32 %v7322, %v8058
    %v8157 = vadd.f32 %v7323, %v8061
    %v8158 = vadd.f32 %v7324, %v8066
    %v8159 = vadd.f32 %v7325, %v8069
    %v8160 = vadd.f32 %v7326, %v8074
    %v8161 = vadd.f32 %v7327, %v8077
    %v8162 = vadd.f32 %v7328, %v8082
    %v8163 = vadd.f32 %v7329, %v8085
    %v8164 = vadd.f32 %v7330, %v8090
    %v8165 = vadd.f32 %v7331, %v8093
    %v8166 = vadd.f32 %v7332, %v8098
    %v8167 = vadd.f32 %v7333, %v8101
    %v8168 = vld [vmem:[%s7] sm:$0x1]
    %v8170 = vlaneseq
    %v8171 = vshrl.u32 %v8170, 7
    %v8172 = vsub.s32 0, %v8171
    %v8173 = vrot.slane %v8168, %v8172
    %v8175 = vadd.f32 %v8104, %v8173
    %v8176 = vadd.f32 %v8105, %v8173
    %v8177 = vadd.f32 %v8106, %v8173
    %v8178 = vadd.f32 %v8107, %v8173
    %v8179 = vadd.f32 %v8108, %v8173
    %v8180 = vadd.f32 %v8109, %v8173
    %v8181 = vadd.f32 %v8110, %v8173
    %v8182 = vadd.f32 %v8111, %v8173
    %v8183 = vadd.f32 %v8112, %v8173
    %v8184 = vadd.f32 %v8113, %v8173
    %v8185 = vadd.f32 %v8114, %v8173
    %v8186 = vadd.f32 %v8115, %v8173
    %v8187 = vadd.f32 %v8116, %v8173
    %v8188 = vadd.f32 %v8117, %v8173
    %v8189 = vadd.f32 %v8118, %v8173
    %v8190 = vadd.f32 %v8119, %v8173
    %v8191 = vadd.f32 %v8120, %v8173
    %v8192 = vadd.f32 %v8121, %v8173
    %v8193 = vadd.f32 %v8122, %v8173
    %v8194 = vadd.f32 %v8123, %v8173
    %v8195 = vadd.f32 %v8124, %v8173
    %v8196 = vadd.f32 %v8125, %v8173
    %v8197 = vadd.f32 %v8126, %v8173
    %v8198 = vadd.f32 %v8127, %v8173
    %v8199 = vadd.f32 %v8128, %v8173
    %v8200 = vadd.f32 %v8129, %v8173
    %v8201 = vadd.f32 %v8130, %v8173
    %v8202 = vadd.f32 %v8131, %v8173
    %v8203 = vadd.f32 %v8132, %v8173
    %v8204 = vadd.f32 %v8133, %v8173
    %v8205 = vadd.f32 %v8134, %v8173
    %v8206 = vadd.f32 %v8135, %v8173
    %v8207 = vadd.f32 %v8136, %v8173
    %v8208 = vadd.f32 %v8137, %v8173
    %v8209 = vadd.f32 %v8138, %v8173
    %v8210 = vadd.f32 %v8139, %v8173
    %v8211 = vadd.f32 %v8140, %v8173
    %v8212 = vadd.f32 %v8141, %v8173
    %v8213 = vadd.f32 %v8142, %v8173
    %v8214 = vadd.f32 %v8143, %v8173
    %v8215 = vadd.f32 %v8144, %v8173
    %v8216 = vadd.f32 %v8145, %v8173
    %v8217 = vadd.f32 %v8146, %v8173
    %v8218 = vadd.f32 %v8147, %v8173
    %v8219 = vadd.f32 %v8148, %v8173
    %v8220 = vadd.f32 %v8149, %v8173
    %v8221 = vadd.f32 %v8150, %v8173
    %v8222 = vadd.f32 %v8151, %v8173
    %v8223 = vadd.f32 %v8152, %v8173
    %v8224 = vadd.f32 %v8153, %v8173
    %v8225 = vadd.f32 %v8154, %v8173
    %v8226 = vadd.f32 %v8155, %v8173
    %v8227 = vadd.f32 %v8156, %v8173
    %v8228 = vadd.f32 %v8157, %v8173
    %v8229 = vadd.f32 %v8158, %v8173
    %v8230 = vadd.f32 %v8159, %v8173
    %v8231 = vadd.f32 %v8160, %v8173
    %v8232 = vadd.f32 %v8161, %v8173
    %v8233 = vadd.f32 %v8162, %v8173
    %v8234 = vadd.f32 %v8163, %v8173
    %v8235 = vadd.f32 %v8164, %v8173
    %v8236 = vadd.f32 %v8165, %v8173
    %v8237 = vadd.f32 %v8166, %v8173
    %v8238 = vadd.f32 %v8167, %v8173
    %v8239 = vmax.f32 %v8175, 0.0
    %v8240 = vmax.f32 %v8176, 0.0
    %v8241 = vmax.f32 %v8177, 0.0
    %v8242 = vmax.f32 %v8178, 0.0
    %v8243 = vmax.f32 %v8179, 0.0
    %v8244 = vmax.f32 %v8180, 0.0
    %v8245 = vmax.f32 %v8181, 0.0
    %v8246 = vmax.f32 %v8182, 0.0
    %v8247 = vmax.f32 %v8183, 0.0
    %v8248 = vmax.f32 %v8184, 0.0
    %v8249 = vmax.f32 %v8185, 0.0
    %v8250 = vmax.f32 %v8186, 0.0
    %v8251 = vmax.f32 %v8187, 0.0
    %v8252 = vmax.f32 %v8188, 0.0
    %v8253 = vmax.f32 %v8189, 0.0
    %v8254 = vmax.f32 %v8190, 0.0
    %v8255 = vmax.f32 %v8191, 0.0
    %v8256 = vmax.f32 %v8192, 0.0
    %v8257 = vmax.f32 %v8193, 0.0
    %v8258 = vmax.f32 %v8194, 0.0
    %v8259 = vmax.f32 %v8195, 0.0
    %v8260 = vmax.f32 %v8196, 0.0
    %v8261 = vmax.f32 %v8197, 0.0
    %v8262 = vmax.f32 %v8198, 0.0
    %v8263 = vmax.f32 %v8199, 0.0
    %v8264 = vmax.f32 %v8200, 0.0
    %v8265 = vmax.f32 %v8201, 0.0
    %v8266 = vmax.f32 %v8202, 0.0
    %v8267 = vmax.f32 %v8203, 0.0
    %v8268 = vmax.f32 %v8204, 0.0
    %v8269 = vmax.f32 %v8205, 0.0
    %v8270 = vmax.f32 %v8206, 0.0
    %v8271 = vmax.f32 %v8207, 0.0
    %v8272 = vmax.f32 %v8208, 0.0
    %v8273 = vmax.f32 %v8209, 0.0
    %v8274 = vmax.f32 %v8210, 0.0
    %v8275 = vmax.f32 %v8211, 0.0
    %v8276 = vmax.f32 %v8212, 0.0
    %v8277 = vmax.f32 %v8213, 0.0
    %v8278 = vmax.f32 %v8214, 0.0
    %v8279 = vmax.f32 %v8215, 0.0
    %v8280 = vmax.f32 %v8216, 0.0
    %v8281 = vmax.f32 %v8217, 0.0
    %v8282 = vmax.f32 %v8218, 0.0
    %v8283 = vmax.f32 %v8219, 0.0
    %v8284 = vmax.f32 %v8220, 0.0
    %v8285 = vmax.f32 %v8221, 0.0
    %v8286 = vmax.f32 %v8222, 0.0
    %v8287 = vmax.f32 %v8223, 0.0
    %v8288 = vmax.f32 %v8224, 0.0
    %v8289 = vmax.f32 %v8225, 0.0
    %v8290 = vmax.f32 %v8226, 0.0
    %v8291 = vmax.f32 %v8227, 0.0
    %v8292 = vmax.f32 %v8228, 0.0
    %v8293 = vmax.f32 %v8229, 0.0
    %v8294 = vmax.f32 %v8230, 0.0
    %v8295 = vmax.f32 %v8231, 0.0
    %v8296 = vmax.f32 %v8232, 0.0
    %v8297 = vmax.f32 %v8233, 0.0
    %v8298 = vmax.f32 %v8234, 0.0
    %v8299 = vmax.f32 %v8235, 0.0
    %v8300 = vmax.f32 %v8236, 0.0
    %v8301 = vmax.f32 %v8237, 0.0
    %v8302 = vmax.f32 %v8238, 0.0
    %v8303 = vpack.c.bf16 %v8240, %v8239
    %v8304 = vpack.c.bf16 %v8242, %v8241
    %v8305 = vpack.c.bf16 %v8244, %v8243
    %v8306 = vpack.c.bf16 %v8246, %v8245
    %v8307 = vpack.c.bf16 %v8248, %v8247
    %v8308 = vpack.c.bf16 %v8250, %v8249
    %v8309 = vpack.c.bf16 %v8252, %v8251
    %v8310 = vpack.c.bf16 %v8254, %v8253
    %v8311 = vpack.c.bf16 %v8256, %v8255
    %v8312 = vpack.c.bf16 %v8258, %v8257
    %v8313 = vpack.c.bf16 %v8260, %v8259
    %v8314 = vpack.c.bf16 %v8262, %v8261
    %v8315 = vpack.c.bf16 %v8264, %v8263
    %v8316 = vpack.c.bf16 %v8266, %v8265
    %v8317 = vpack.c.bf16 %v8268, %v8267
    %v8318 = vpack.c.bf16 %v8270, %v8269
    %v8319 = vpack.c.bf16 %v8272, %v8271
    %v8320 = vpack.c.bf16 %v8274, %v8273
    %v8321 = vpack.c.bf16 %v8276, %v8275
    %v8322 = vpack.c.bf16 %v8278, %v8277
    %v8323 = vpack.c.bf16 %v8280, %v8279
    %v8324 = vpack.c.bf16 %v8282, %v8281
    %v8325 = vpack.c.bf16 %v8284, %v8283
    %v8326 = vpack.c.bf16 %v8286, %v8285
    %v8327 = vpack.c.bf16 %v8288, %v8287
    %v8328 = vpack.c.bf16 %v8290, %v8289
    %v8329 = vpack.c.bf16 %v8292, %v8291
    %v8330 = vpack.c.bf16 %v8294, %v8293
    %v8331 = vpack.c.bf16 %v8296, %v8295
    %v8332 = vpack.c.bf16 %v8298, %v8297
    %v8333 = vpack.c.bf16 %v8300, %v8299
    %v8334 = vpack.c.bf16 %v8302, %v8301
    %v8335 = vld [vmem:[#allocation14] sm:$0xf]
    %v8336 = vld [vmem:[#allocation14 + $0x4] sm:$0xf]
    %v8337 = vld [vmem:[#allocation14 + $0x8] sm:$0xf]
    %v8338 = vld [vmem:[#allocation14 + $0xc] sm:$0xf]
    %v8339 = vld [vmem:[#allocation14 + $0x10] sm:$0xf]
    %v8340 = vld [vmem:[#allocation14 + $0x14] sm:$0xf]
    %v8341 = vld [vmem:[#allocation14 + $0x18] sm:$0xf]
    %v8342 = vld [vmem:[#allocation14 + $0x1c] sm:$0xf]
    %v8343 = vld [vmem:[#allocation14 + $0x20] sm:$0xf]
    %v8344 = vld [vmem:[#allocation14 + $0x24] sm:$0xf]
    %v8345 = vld [vmem:[#allocation14 + $0x28] sm:$0xf]
    %v8346 = vld [vmem:[#allocation14 + $0x2c] sm:$0xf]
    %v8347 = vld [vmem:[#allocation14 + $0x30] sm:$0xf]
    %v8348 = vld [vmem:[#allocation14 + $0x34] sm:$0xf]
    %v8349 = vld [vmem:[#allocation14 + $0x38] sm:$0xf]
    %v8350 = vld [vmem:[#allocation14 + $0x3c] sm:$0xf]
    %v8351 = vld [vmem:[%s9] sm:$0x1]
    %v8353 = vlaneseq
    %v8354 = vshrl.u32 %v8353, 7
    %v8355 = vsub.s32 0, %v8354
    %v8356 = vrot.slane %v8351, %v8355
    %v8374 = vunpack.c.l.b16 %v8335
    %v8375 = vunpack.c.l.b16 %v8336
    %v8376 = vunpack.c.l.b16 %v8337
    %v8377 = vunpack.c.l.b16 %v8338
    %v8378 = vunpack.c.l.b16 %v8339
    %v8379 = vunpack.c.l.b16 %v8340
    %v8380 = vunpack.c.l.b16 %v8341
    %v8381 = vunpack.c.l.b16 %v8342
    %v8382 = vunpack.c.l.b16 %v8343
    %v8383 = vunpack.c.l.b16 %v8344
    %v8384 = vunpack.c.l.b16 %v8345
    %v8385 = vunpack.c.l.b16 %v8346
    %v8386 = vunpack.c.l.b16 %v8347
    %v8387 = vunpack.c.l.b16 %v8348
    %v8388 = vunpack.c.l.b16 %v8349
    %v8389 = vunpack.c.l.b16 %v8350
    %v8390 = vpack.c.b16 %v8375, %v8374
    %v8391 = vpack.c.b16 %v8377, %v8376
    %v8392 = vpack.c.b16 %v8379, %v8378
    %v8393 = vpack.c.b16 %v8381, %v8380
    %v8394 = vpack.c.b16 %v8383, %v8382
    %v8395 = vpack.c.b16 %v8385, %v8384
    %v8396 = vpack.c.b16 %v8387, %v8386
    %v8397 = vpack.c.b16 %v8389, %v8388
    %8406 = vmatprep.subr.bf16.mxu0 0
    %8407 = vmatpush1.bf16.msra.mxu0 %v8397
    %8408 = vmatprep.subr.bf16.mxu0 0
    %8409 = vmatpush1.bf16.msra.mxu0 %v8396
    %8410 = vmatprep.subr.bf16.mxu0 0
    %8411 = vmatpush1.bf16.msra.mxu0 %v8395
    %8412 = vmatprep.subr.bf16.mxu0 0
    %8413 = vmatpush1.bf16.msra.mxu0 %v8394
    %8414 = vmatprep.subr.bf16.mxu0 0
    %8415 = vmatpush1.bf16.msra.mxu0 %v8393
    %8416 = vmatprep.subr.bf16.mxu0 0
    %8417 = vmatpush1.bf16.msra.mxu0 %v8392
    %8418 = vmatprep.subr.bf16.mxu0 0
    %8419 = vmatpush1.bf16.msra.mxu0 %v8391
    %8420 = vmatprep.subr.bf16.mxu0 0
    %8421 = vmatpush1.bf16.msra.mxu0 %v8390
    %8422 = vmatprep.subr.bf16.mxu0 0
    %8423 = vmatpush2.bf16.msra.mxu0 0
    %8424 = vmatprep.subr.bf16.mxu0 0
    %8425 = vmatpush2.bf16.msra.mxu0 0
    %8426 = vmatprep.subr.bf16.mxu0 0
    %8427 = vmatpush2.bf16.msra.mxu0 0
    %8428 = vmatprep.subr.bf16.mxu0 0
    %8429 = vmatpush2.bf16.msra.mxu0 0
    %8430 = vmatprep.subr.bf16.mxu0 0
    %8431 = vmatpush2.bf16.msra.mxu0 0
    %8432 = vmatprep.subr.bf16.mxu0 0
    %8433 = vmatpush2.bf16.msra.mxu0 0
    %8434 = vmatprep.subr.bf16.mxu0 0
    %8435 = vmatpush2.bf16.msra.mxu0 0
    %8436 = vmatprep.subr.bf16.mxu0 0
    %8437 = vmatpush2.bf16.msra.mxu0 0
    %8438 = vmatprep.mubr.bf16.mxu0 0
    %8439 = vmatmul.mubr.bf16.gmra.mxu0 %v8303
    %v8440 = vpop.f32.mrf.mxu0
    %v8441 = vadd.f32 %v8356, %v8440
    %v8442 = vpop.f32.mrf.mxu0
    %v8443 = vpop.f32.mrf.mxu0
    %v8444 = vadd.f32 %v8356, %v8443
    %v8445 = vpop.f32.mrf.mxu0
    %8446 = vmatprep.mubr.bf16.mxu0 0
    %8447 = vmatmul.mubr.bf16.gmra.mxu0 %v8304
    %v8448 = vpop.f32.mrf.mxu0
    %v8449 = vadd.f32 %v8356, %v8448
    %v8450 = vpop.f32.mrf.mxu0
    %v8451 = vpop.f32.mrf.mxu0
    %v8452 = vadd.f32 %v8356, %v8451
    %v8453 = vpop.f32.mrf.mxu0
    %8454 = vmatprep.mubr.bf16.mxu0 0
    %8455 = vmatmul.mubr.bf16.gmra.mxu0 %v8305
    %v8456 = vpop.f32.mrf.mxu0
    %v8457 = vadd.f32 %v8356, %v8456
    %v8458 = vpop.f32.mrf.mxu0
    %v8459 = vpop.f32.mrf.mxu0
    %v8460 = vadd.f32 %v8356, %v8459
    %v8461 = vpop.f32.mrf.mxu0
    %8462 = vmatprep.mubr.bf16.mxu0 0
    %8463 = vmatmul.mubr.bf16.gmra.mxu0 %v8306
    %v8464 = vpop.f32.mrf.mxu0
    %v8465 = vadd.f32 %v8356, %v8464
    %v8466 = vpop.f32.mrf.mxu0
    %v8467 = vpop.f32.mrf.mxu0
    %v8468 = vadd.f32 %v8356, %v8467
    %v8469 = vpop.f32.mrf.mxu0
    %8470 = vmatprep.mubr.bf16.mxu0 0
    %8471 = vmatmul.mubr.bf16.gmra.mxu0 %v8307
    %v8472 = vpop.f32.mrf.mxu0
    %v8473 = vadd.f32 %v8356, %v8472
    %v8474 = vpop.f32.mrf.mxu0
    %v8475 = vpop.f32.mrf.mxu0
    %v8476 = vadd.f32 %v8356, %v8475
    %v8477 = vpop.f32.mrf.mxu0
    %8478 = vmatprep.mubr.bf16.mxu0 0
    %8479 = vmatmul.mubr.bf16.gmra.mxu0 %v8308
    %v8480 = vpop.f32.mrf.mxu0
    %v8481 = vadd.f32 %v8356, %v8480
    %v8482 = vpop.f32.mrf.mxu0
    %v8483 = vpop.f32.mrf.mxu0
    %v8484 = vadd.f32 %v8356, %v8483
    %v8485 = vpop.f32.mrf.mxu0
    %8486 = vmatprep.mubr.bf16.mxu0 0
    %8487 = vmatmul.mubr.bf16.gmra.mxu0 %v8309
    %v8488 = vpop.f32.mrf.mxu0
    %v8489 = vadd.f32 %v8356, %v8488
    %v8490 = vpop.f32.mrf.mxu0
    %v8491 = vpop.f32.mrf.mxu0
    %v8492 = vadd.f32 %v8356, %v8491
    %v8493 = vpop.f32.mrf.mxu0
    %8494 = vmatprep.mubr.bf16.mxu0 0
    %8495 = vmatmul.mubr.bf16.gmra.mxu0 %v8310
    %v8496 = vpop.f32.mrf.mxu0
    %v8497 = vadd.f32 %v8356, %v8496
    %v8498 = vpop.f32.mrf.mxu0
    %v8499 = vpop.f32.mrf.mxu0
    %v8500 = vadd.f32 %v8356, %v8499
    %v8501 = vpop.f32.mrf.mxu0
    %8502 = vmatprep.mubr.bf16.mxu0 0
    %8503 = vmatmul.mubr.bf16.gmra.mxu0 %v8311
    %v8504 = vpop.f32.mrf.mxu0
    %v8505 = vadd.f32 %v8356, %v8504
    %v8506 = vpop.f32.mrf.mxu0
    %v8507 = vpop.f32.mrf.mxu0
    %v8508 = vadd.f32 %v8356, %v8507
    %v8509 = vpop.f32.mrf.mxu0
    %8510 = vmatprep.mubr.bf16.mxu0 0
    %8511 = vmatmul.mubr.bf16.gmra.mxu0 %v8312
    %v8512 = vpop.f32.mrf.mxu0
    %v8513 = vadd.f32 %v8356, %v8512
    %v8514 = vpop.f32.mrf.mxu0
    %v8515 = vpop.f32.mrf.mxu0
    %v8516 = vadd.f32 %v8356, %v8515
    %v8517 = vpop.f32.mrf.mxu0
    %8518 = vmatprep.mubr.bf16.mxu0 0
    %8519 = vmatmul.mubr.bf16.gmra.mxu0 %v8313
    %v8520 = vpop.f32.mrf.mxu0
    %v8521 = vadd.f32 %v8356, %v8520
    %v8522 = vpop.f32.mrf.mxu0
    %v8523 = vpop.f32.mrf.mxu0
    %v8524 = vadd.f32 %v8356, %v8523
    %v8525 = vpop.f32.mrf.mxu0
    %8526 = vmatprep.mubr.bf16.mxu0 0
    %8527 = vmatmul.mubr.bf16.gmra.mxu0 %v8314
    %v8528 = vpop.f32.mrf.mxu0
    %v8529 = vadd.f32 %v8356, %v8528
    %v8530 = vpop.f32.mrf.mxu0
    %v8531 = vpop.f32.mrf.mxu0
    %v8532 = vadd.f32 %v8356, %v8531
    %v8533 = vpop.f32.mrf.mxu0
    %8534 = vmatprep.mubr.bf16.mxu0 0
    %8535 = vmatmul.mubr.bf16.gmra.mxu0 %v8315
    %v8536 = vpop.f32.mrf.mxu0
    %v8537 = vadd.f32 %v8356, %v8536
    %v8538 = vpop.f32.mrf.mxu0
    %v8539 = vpop.f32.mrf.mxu0
    %v8540 = vadd.f32 %v8356, %v8539
    %v8541 = vpop.f32.mrf.mxu0
    %8542 = vmatprep.mubr.bf16.mxu0 0
    %8543 = vmatmul.mubr.bf16.gmra.mxu0 %v8316
    %v8544 = vpop.f32.mrf.mxu0
    %v8545 = vadd.f32 %v8356, %v8544
    %v8546 = vpop.f32.mrf.mxu0
    %v8547 = vpop.f32.mrf.mxu0
    %v8548 = vadd.f32 %v8356, %v8547
    %v8549 = vpop.f32.mrf.mxu0
    %8550 = vmatprep.mubr.bf16.mxu0 0
    %8551 = vmatmul.mubr.bf16.gmra.mxu0 %v8317
    %v8552 = vpop.f32.mrf.mxu0
    %v8553 = vadd.f32 %v8356, %v8552
    %v8554 = vpop.f32.mrf.mxu0
    %v8555 = vpop.f32.mrf.mxu0
    %v8556 = vadd.f32 %v8356, %v8555
    %v8557 = vpop.f32.mrf.mxu0
    %8558 = vmatprep.mubr.bf16.mxu0 0
    %8559 = vmatmul.mubr.bf16.gmra.mxu0 %v8318
    %v8560 = vpop.f32.mrf.mxu0
    %v8561 = vadd.f32 %v8356, %v8560
    %v8562 = vpop.f32.mrf.mxu0
    %v8563 = vpop.f32.mrf.mxu0
    %v8564 = vadd.f32 %v8356, %v8563
    %v8565 = vpop.f32.mrf.mxu0
    %8566 = vmatprep.mubr.bf16.mxu0 0
    %8567 = vmatmul.mubr.bf16.gmra.mxu0 %v8319
    %v8568 = vpop.f32.mrf.mxu0
    %v8569 = vadd.f32 %v8356, %v8568
    %v8570 = vpop.f32.mrf.mxu0
    %v8571 = vpop.f32.mrf.mxu0
    %v8572 = vadd.f32 %v8356, %v8571
    %v8573 = vpop.f32.mrf.mxu0
    %8574 = vmatprep.mubr.bf16.mxu0 0
    %8575 = vmatmul.mubr.bf16.gmra.mxu0 %v8320
    %v8576 = vpop.f32.mrf.mxu0
    %v8577 = vadd.f32 %v8356, %v8576
    %v8578 = vpop.f32.mrf.mxu0
    %v8579 = vpop.f32.mrf.mxu0
    %v8580 = vadd.f32 %v8356, %v8579
    %v8581 = vpop.f32.mrf.mxu0
    %8582 = vmatprep.mubr.bf16.mxu0 0
    %8583 = vmatmul.mubr.bf16.gmra.mxu0 %v8321
    %v8584 = vpop.f32.mrf.mxu0
    %v8585 = vadd.f32 %v8356, %v8584
    %v8586 = vpop.f32.mrf.mxu0
    %v8587 = vpop.f32.mrf.mxu0
    %v8588 = vadd.f32 %v8356, %v8587
    %v8589 = vpop.f32.mrf.mxu0
    %8590 = vmatprep.mubr.bf16.mxu0 0
    %8591 = vmatmul.mubr.bf16.gmra.mxu0 %v8322
    %v8592 = vpop.f32.mrf.mxu0
    %v8593 = vadd.f32 %v8356, %v8592
    %v8594 = vpop.f32.mrf.mxu0
    %v8595 = vpop.f32.mrf.mxu0
    %v8596 = vadd.f32 %v8356, %v8595
    %v8597 = vpop.f32.mrf.mxu0
    %8598 = vmatprep.mubr.bf16.mxu0 0
    %8599 = vmatmul.mubr.bf16.gmra.mxu0 %v8323
    %v8600 = vpop.f32.mrf.mxu0
    %v8601 = vadd.f32 %v8356, %v8600
    %v8602 = vpop.f32.mrf.mxu0
    %v8603 = vpop.f32.mrf.mxu0
    %v8604 = vadd.f32 %v8356, %v8603
    %v8605 = vpop.f32.mrf.mxu0
    %8606 = vmatprep.mubr.bf16.mxu0 0
    %8607 = vmatmul.mubr.bf16.gmra.mxu0 %v8324
    %v8608 = vpop.f32.mrf.mxu0
    %v8609 = vadd.f32 %v8356, %v8608
    %v8610 = vpop.f32.mrf.mxu0
    %v8611 = vpop.f32.mrf.mxu0
    %v8612 = vadd.f32 %v8356, %v8611
    %v8613 = vpop.f32.mrf.mxu0
    %8614 = vmatprep.mubr.bf16.mxu0 0
    %8615 = vmatmul.mubr.bf16.gmra.mxu0 %v8325
    %v8616 = vpop.f32.mrf.mxu0
    %v8617 = vadd.f32 %v8356, %v8616
    %v8618 = vpop.f32.mrf.mxu0
    %v8619 = vpop.f32.mrf.mxu0
    %v8620 = vadd.f32 %v8356, %v8619
    %v8621 = vpop.f32.mrf.mxu0
    %8622 = vmatprep.mubr.bf16.mxu0 0
    %8623 = vmatmul.mubr.bf16.gmra.mxu0 %v8326
    %v8624 = vpop.f32.mrf.mxu0
    %v8625 = vadd.f32 %v8356, %v8624
    %v8626 = vpop.f32.mrf.mxu0
    %v8627 = vpop.f32.mrf.mxu0
    %v8628 = vadd.f32 %v8356, %v8627
    %v8629 = vpop.f32.mrf.mxu0
    %8630 = vmatprep.mubr.bf16.mxu0 0
    %8631 = vmatmul.mubr.bf16.gmra.mxu0 %v8327
    %v8632 = vpop.f32.mrf.mxu0
    %v8633 = vadd.f32 %v8356, %v8632
    %v8634 = vpop.f32.mrf.mxu0
    %v8635 = vpop.f32.mrf.mxu0
    %v8636 = vadd.f32 %v8356, %v8635
    %v8637 = vpop.f32.mrf.mxu0
    %8638 = vmatprep.mubr.bf16.mxu0 0
    %8639 = vmatmul.mubr.bf16.gmra.mxu0 %v8328
    %v8640 = vpop.f32.mrf.mxu0
    %v8641 = vadd.f32 %v8356, %v8640
    %v8642 = vpop.f32.mrf.mxu0
    %v8643 = vpop.f32.mrf.mxu0
    %v8644 = vadd.f32 %v8356, %v8643
    %v8645 = vpop.f32.mrf.mxu0
    %8646 = vmatprep.mubr.bf16.mxu0 0
    %8647 = vmatmul.mubr.bf16.gmra.mxu0 %v8329
    %v8648 = vpop.f32.mrf.mxu0
    %v8649 = vadd.f32 %v8356, %v8648
    %v8650 = vpop.f32.mrf.mxu0
    %v8651 = vpop.f32.mrf.mxu0
    %v8652 = vadd.f32 %v8356, %v8651
    %v8653 = vpop.f32.mrf.mxu0
    %8654 = vmatprep.mubr.bf16.mxu0 0
    %8655 = vmatmul.mubr.bf16.gmra.mxu0 %v8330
    %v8656 = vpop.f32.mrf.mxu0
    %v8657 = vadd.f32 %v8356, %v8656
    %v8658 = vpop.f32.mrf.mxu0
    %v8659 = vpop.f32.mrf.mxu0
    %v8660 = vadd.f32 %v8356, %v8659
    %v8661 = vpop.f32.mrf.mxu0
    %8662 = vmatprep.mubr.bf16.mxu0 0
    %8663 = vmatmul.mubr.bf16.gmra.mxu0 %v8331
    %v8664 = vpop.f32.mrf.mxu0
    %v8665 = vadd.f32 %v8356, %v8664
    %v8666 = vpop.f32.mrf.mxu0
    %v8667 = vpop.f32.mrf.mxu0
    %v8668 = vadd.f32 %v8356, %v8667
    %v8669 = vpop.f32.mrf.mxu0
    %8670 = vmatprep.mubr.bf16.mxu0 0
    %8671 = vmatmul.mubr.bf16.gmra.mxu0 %v8332
    %v8672 = vpop.f32.mrf.mxu0
    %v8673 = vadd.f32 %v8356, %v8672
    %v8674 = vpop.f32.mrf.mxu0
    %v8675 = vpop.f32.mrf.mxu0
    %v8676 = vadd.f32 %v8356, %v8675
    %v8677 = vpop.f32.mrf.mxu0
    %8678 = vmatprep.mubr.bf16.mxu0 0
    %8679 = vmatmul.mubr.bf16.gmra.mxu0 %v8333
    %v8680 = vpop.f32.mrf.mxu0
    %v8681 = vadd.f32 %v8356, %v8680
    %v8682 = vpop.f32.mrf.mxu0
    %v8683 = vpop.f32.mrf.mxu0
    %v8684 = vadd.f32 %v8356, %v8683
    %v8685 = vpop.f32.mrf.mxu0
    %8686 = vmatprep.mubr.bf16.mxu0 0
    %8687 = vmatmul.mubr.bf16.gmra.mxu0 %v8334
    %v8688 = vpop.f32.mrf.mxu0
    %v8689 = vadd.f32 %v8356, %v8688
    %v8690 = vpop.f32.mrf.mxu0
    %v8691 = vpop.f32.mrf.mxu0
    %v8692 = vadd.f32 %v8356, %v8691
    %v8693 = vpop.f32.mrf.mxu0
    %8694 = vdwg.mxu0
    %v8695 = vld [vmem:[#allocation8] sm:$0xff]
    %v8697 = vcombine.high %v8695, %v8695
    %v8699 = vunpack.c.l.s4 1983009808
    %v8700 = vunpack.c.0.s8 %v8699
    %v8701 = vlaneseq
    %v8702 = vshrl.u32 %v8701, 7
    %v8703 = vsub.s32 %v8700, %v8702
    %v8704 = vrot.slane %v8695, %v8703
    %v8706 = vunpack.c.l.s4 1983009808
    %v8707 = vunpack.c.0.s8 %v8706
    %v8708 = vlaneseq
    %v8709 = vshrl.u32 %v8708, 7
    %v8710 = vsub.s32 %v8707, %v8709
    %v8711 = vrot.slane %v8697, %v8710
    %v8712 = vcombine.high %v8704, %v8704
    %v8713 = vcombine.high %v8711, %v8711
    %8718 = vmatprep.subr.mxu0 0.0
    %8719 = vmatpush1.msra.mxu0 %v8500
    %8720 = vmatprep.subr.mxu0 0.0
    %8721 = vmatpush1.msra.mxu0 %v8497
    %8722 = vmatprep.subr.mxu0 0.0
    %8723 = vmatpush1.msra.mxu0 %v8492
    %8724 = vmatprep.subr.mxu0 0.0
    %8725 = vmatpush1.msra.mxu0 %v8489
    %8726 = vmatprep.subr.mxu0 0.0
    %8727 = vmatpush1.msra.mxu0 %v8484
    %8728 = vmatprep.subr.mxu0 0.0
    %8729 = vmatpush1.msra.mxu0 %v8481
    %8730 = vmatprep.subr.mxu0 0.0
    %8731 = vmatpush1.msra.mxu0 %v8476
    %8732 = vmatprep.subr.mxu0 0.0
    %8733 = vmatpush1.msra.mxu0 %v8473
    %8734 = vmatprep.subr.mxu0 0.0
    %8735 = vmatpush1.msra.mxu0 %v8468
    %8736 = vmatprep.subr.mxu0 0.0
    %8737 = vmatpush1.msra.mxu0 %v8465
    %8738 = vmatprep.subr.mxu0 0.0
    %8739 = vmatpush1.msra.mxu0 %v8460
    %8740 = vmatprep.subr.mxu0 0.0
    %8741 = vmatpush1.msra.mxu0 %v8457
    %8742 = vmatprep.subr.mxu0 0.0
    %8743 = vmatpush1.msra.mxu0 %v8452
    %8744 = vmatprep.subr.mxu0 0.0
    %8745 = vmatpush1.msra.mxu0 %v8449
    %8746 = vmatprep.subr.mxu0 0.0
    %8747 = vmatpush1.msra.mxu0 %v8444
    %8748 = vmatprep.subr.mxu0 0.0
    %8749 = vmatpush1.msra.mxu0 %v8441
    %8750 = vmatprep.subr.mxu0 0.0
    %8751 = vmatpush2.msra.mxu0 %v8564
    %8752 = vmatprep.subr.mxu0 0.0
    %8753 = vmatpush2.msra.mxu0 %v8561
    %8754 = vmatprep.subr.mxu0 0.0
    %8755 = vmatpush2.msra.mxu0 %v8556
    %8756 = vmatprep.subr.mxu0 0.0
    %8757 = vmatpush2.msra.mxu0 %v8553
    %8758 = vmatprep.subr.mxu0 0.0
    %8759 = vmatpush2.msra.mxu0 %v8548
    %8760 = vmatprep.subr.mxu0 0.0
    %8761 = vmatpush2.msra.mxu0 %v8545
    %8762 = vmatprep.subr.mxu0 0.0
    %8763 = vmatpush2.msra.mxu0 %v8540
    %8764 = vmatprep.subr.mxu0 0.0
    %8765 = vmatpush2.msra.mxu0 %v8537
    %8766 = vmatprep.subr.mxu0 0.0
    %8767 = vmatpush2.msra.mxu0 %v8532
    %8768 = vmatprep.subr.mxu0 0.0
    %8769 = vmatpush2.msra.mxu0 %v8529
    %8770 = vmatprep.subr.mxu0 0.0
    %8771 = vmatpush2.msra.mxu0 %v8524
    %8772 = vmatprep.subr.mxu0 0.0
    %8773 = vmatpush2.msra.mxu0 %v8521
    %8774 = vmatprep.subr.mxu0 0.0
    %8775 = vmatpush2.msra.mxu0 %v8516
    %8776 = vmatprep.subr.mxu0 0.0
    %8777 = vmatpush2.msra.mxu0 %v8513
    %8778 = vmatprep.subr.mxu0 0.0
    %8779 = vmatpush2.msra.mxu0 %v8508
    %8780 = vmatprep.subr.mxu0 0.0
    %8781 = vmatpush2.msra.mxu0 %v8505
    %8782 = vmatprep.mubr.f32.mxu0 %v8712
    %8783 = vmatmul.mubr.f32.gmra.mxu0 %v8704
    %v8784 = vpop.f32.mrf.mxu0
    %v8785 = vadd.f32 0.0, %v8784
    %v8786 = vpop.f32.mrf.mxu0
    %8787 = vdwg.mxu0
    %8788 = vmatprep.subr.mxu0 0.0
    %8789 = vmatpush1.msra.mxu0 %v8628
    %8790 = vmatprep.subr.mxu0 0.0
    %8791 = vmatpush1.msra.mxu0 %v8625
    %8792 = vmatprep.subr.mxu0 0.0
    %8793 = vmatpush1.msra.mxu0 %v8620
    %8794 = vmatprep.subr.mxu0 0.0
    %8795 = vmatpush1.msra.mxu0 %v8617
    %8796 = vmatprep.subr.mxu0 0.0
    %8797 = vmatpush1.msra.mxu0 %v8612
    %8798 = vmatprep.subr.mxu0 0.0
    %8799 = vmatpush1.msra.mxu0 %v8609
    %8800 = vmatprep.subr.mxu0 0.0
    %8801 = vmatpush1.msra.mxu0 %v8604
    %8802 = vmatprep.subr.mxu0 0.0
    %8803 = vmatpush1.msra.mxu0 %v8601
    %8804 = vmatprep.subr.mxu0 0.0
    %8805 = vmatpush1.msra.mxu0 %v8596
    %8806 = vmatprep.subr.mxu0 0.0
    %8807 = vmatpush1.msra.mxu0 %v8593
    %8808 = vmatprep.subr.mxu0 0.0
    %8809 = vmatpush1.msra.mxu0 %v8588
    %8810 = vmatprep.subr.mxu0 0.0
    %8811 = vmatpush1.msra.mxu0 %v8585
    %8812 = vmatprep.subr.mxu0 0.0
    %8813 = vmatpush1.msra.mxu0 %v8580
    %8814 = vmatprep.subr.mxu0 0.0
    %8815 = vmatpush1.msra.mxu0 %v8577
    %8816 = vmatprep.subr.mxu0 0.0
    %8817 = vmatpush1.msra.mxu0 %v8572
    %8818 = vmatprep.subr.mxu0 0.0
    %8819 = vmatpush1.msra.mxu0 %v8569
    %8820 = vmatprep.subr.mxu0 0.0
    %8821 = vmatpush2.msra.mxu0 %v8692
    %8822 = vmatprep.subr.mxu0 0.0
    %8823 = vmatpush2.msra.mxu0 %v8689
    %8824 = vmatprep.subr.mxu0 0.0
    %8825 = vmatpush2.msra.mxu0 %v8684
    %8826 = vmatprep.subr.mxu0 0.0
    %8827 = vmatpush2.msra.mxu0 %v8681
    %8828 = vmatprep.subr.mxu0 0.0
    %8829 = vmatpush2.msra.mxu0 %v8676
    %8830 = vmatprep.subr.mxu0 0.0
    %8831 = vmatpush2.msra.mxu0 %v8673
    %8832 = vmatprep.subr.mxu0 0.0
    %8833 = vmatpush2.msra.mxu0 %v8668
    %8834 = vmatprep.subr.mxu0 0.0
    %8835 = vmatpush2.msra.mxu0 %v8665
    %8836 = vmatprep.subr.mxu0 0.0
    %8837 = vmatpush2.msra.mxu0 %v8660
    %8838 = vmatprep.subr.mxu0 0.0
    %8839 = vmatpush2.msra.mxu0 %v8657
    %8840 = vmatprep.subr.mxu0 0.0
    %8841 = vmatpush2.msra.mxu0 %v8652
    %8842 = vmatprep.subr.mxu0 0.0
    %8843 = vmatpush2.msra.mxu0 %v8649
    %8844 = vmatprep.subr.mxu0 0.0
    %8845 = vmatpush2.msra.mxu0 %v8644
    %8846 = vmatprep.subr.mxu0 0.0
    %8847 = vmatpush2.msra.mxu0 %v8641
    %8848 = vmatprep.subr.mxu0 0.0
    %8849 = vmatpush2.msra.mxu0 %v8636
    %8850 = vmatprep.subr.mxu0 0.0
    %8851 = vmatpush2.msra.mxu0 %v8633
    %8852 = vmatprep.mubr.f32.mxu0 %v8713
    %8853 = vmatmul.mubr.f32.gmra.mxu0 %v8711
    %v8854 = vpop.f32.mrf.mxu0
    %v8855 = vadd.f32 %v8785, %v8854
    %v8856 = vpop.f32.mrf.mxu0
    %8857 = vdwg.mxu0
    %v8858 = vpack.c.bf16 %v8855, %v8855
    %v8859 = vld [vmem:[#allocation15] sm:$0xf]
    %v8860 = vld [vmem:[#allocation15 + $0x4] sm:$0xf]
    %v8861 = vld [vmem:[#allocation15 + $0x8] sm:$0xf]
    %v8862 = vld [vmem:[#allocation15 + $0xc] sm:$0xf]
    %v8863 = vld [vmem:[#allocation15 + $0x10] sm:$0xf]
    %v8864 = vld [vmem:[#allocation15 + $0x14] sm:$0xf]
    %v8865 = vld [vmem:[#allocation15 + $0x18] sm:$0xf]
    %v8866 = vld [vmem:[#allocation15 + $0x1c] sm:$0xf]
    %v8867 = vld [vmem:[#allocation15 + $0x20] sm:$0xf]
    %v8868 = vld [vmem:[#allocation15 + $0x24] sm:$0xf]
    %v8869 = vld [vmem:[#allocation15 + $0x28] sm:$0xf]
    %v8870 = vld [vmem:[#allocation15 + $0x2c] sm:$0xf]
    %v8871 = vld [vmem:[#allocation15 + $0x30] sm:$0xf]
    %v8872 = vld [vmem:[#allocation15 + $0x34] sm:$0xf]
    %v8873 = vld [vmem:[#allocation15 + $0x38] sm:$0xf]
    %v8874 = vld [vmem:[#allocation15 + $0x3c] sm:$0xf]
    %v8875 = vld [vmem:[%s11] sm:$0x1]
    %v8877 = vlaneseq
    %v8878 = vshrl.u32 %v8877, 7
    %v8879 = vsub.s32 0, %v8878
    %v8880 = vrot.slane %v8875, %v8879
    %v8898 = vunpack.c.l.b16 %v8859
    %v8899 = vunpack.c.l.b16 %v8860
    %v8900 = vunpack.c.l.b16 %v8861
    %v8901 = vunpack.c.l.b16 %v8862
    %v8902 = vunpack.c.l.b16 %v8863
    %v8903 = vunpack.c.l.b16 %v8864
    %v8904 = vunpack.c.l.b16 %v8865
    %v8905 = vunpack.c.l.b16 %v8866
    %v8906 = vunpack.c.l.b16 %v8867
    %v8907 = vunpack.c.l.b16 %v8868
    %v8908 = vunpack.c.l.b16 %v8869
    %v8909 = vunpack.c.l.b16 %v8870
    %v8910 = vunpack.c.l.b16 %v8871
    %v8911 = vunpack.c.l.b16 %v8872
    %v8912 = vunpack.c.l.b16 %v8873
    %v8913 = vunpack.c.l.b16 %v8874
    %v8914 = vpack.c.b16 %v8899, %v8898
    %v8915 = vpack.c.b16 %v8901, %v8900
    %v8916 = vpack.c.b16 %v8903, %v8902
    %v8917 = vpack.c.b16 %v8905, %v8904
    %v8918 = vpack.c.b16 %v8907, %v8906
    %v8919 = vpack.c.b16 %v8909, %v8908
    %v8920 = vpack.c.b16 %v8911, %v8910
    %v8921 = vpack.c.b16 %v8913, %v8912
    %8930 = vmatprep.subr.bf16.mxu0 0
    %8931 = vmatpush1.bf16.msra.mxu0 %v8921
    %8932 = vmatprep.subr.bf16.mxu0 0
    %8933 = vmatpush1.bf16.msra.mxu0 %v8920
    %8934 = vmatprep.subr.bf16.mxu0 0
    %8935 = vmatpush1.bf16.msra.mxu0 %v8919
    %8936 = vmatprep.subr.bf16.mxu0 0
    %8937 = vmatpush1.bf16.msra.mxu0 %v8918
    %8938 = vmatprep.subr.bf16.mxu0 0
    %8939 = vmatpush1.bf16.msra.mxu0 %v8917
    %8940 = vmatprep.subr.bf16.mxu0 0
    %8941 = vmatpush1.bf16.msra.mxu0 %v8916
    %8942 = vmatprep.subr.bf16.mxu0 0
    %8943 = vmatpush1.bf16.msra.mxu0 %v8915
    %8944 = vmatprep.subr.bf16.mxu0 0
    %8945 = vmatpush1.bf16.msra.mxu0 %v8914
    %8946 = vmatprep.subr.bf16.mxu0 0
    %8947 = vmatpush2.bf16.msra.mxu0 0
    %8948 = vmatprep.subr.bf16.mxu0 0
    %8949 = vmatpush2.bf16.msra.mxu0 0
    %8950 = vmatprep.subr.bf16.mxu0 0
    %8951 = vmatpush2.bf16.msra.mxu0 0
    %8952 = vmatprep.subr.bf16.mxu0 0
    %8953 = vmatpush2.bf16.msra.mxu0 0
    %8954 = vmatprep.subr.bf16.mxu0 0
    %8955 = vmatpush2.bf16.msra.mxu0 0
    %8956 = vmatprep.subr.bf16.mxu0 0
    %8957 = vmatpush2.bf16.msra.mxu0 0
    %8958 = vmatprep.subr.bf16.mxu0 0
    %8959 = vmatpush2.bf16.msra.mxu0 0
    %8960 = vmatprep.subr.bf16.mxu0 0
    %8961 = vmatpush2.bf16.msra.mxu0 0
    %8962 = vmatprep.mubr.bf16.mxu0 0
    %8963 = vmatmul.mubr.bf16.gmra.mxu0 %v8858
    %v8964 = vpop.f32.mrf.mxu0
    %v8965 = vadd.f32 %v8880, %v8964
    %v8966 = vpop.f32.mrf.mxu0
    %v8967 = vpop.f32.mrf.mxu0
    %v8968 = vpop.f32.mrf.mxu0
    %8969 = vdwg.mxu0
    %v8970 = vmax.f32 %v8965, 0.0
    %v8971 = vpack.c.bf16 %v8970, %v8970
    %v8972 = vld [vmem:[#allocation17] sm:$0xf]
    %v8973 = vld [vmem:[#allocation17 + $0x4] sm:$0xf]
    %v8974 = vld [vmem:[#allocation17 + $0x8] sm:$0xf]
    %v8975 = vld [vmem:[#allocation17 + $0xc] sm:$0xf]
    %v8976 = vld [vmem:[#allocation17 + $0x10] sm:$0xf]
    %v8977 = vld [vmem:[#allocation17 + $0x14] sm:$0xf]
    %v8978 = vld [vmem:[#allocation17 + $0x18] sm:$0xf]
    %v8979 = vld [vmem:[#allocation17 + $0x1c] sm:$0xf]
    %v8980 = vld [vmem:[#allocation17 + $0x20] sm:$0xf]
    %v8981 = vld [vmem:[#allocation17 + $0x24] sm:$0xf]
    %v8982 = vld [vmem:[#allocation17 + $0x28] sm:$0xf]
    %v8983 = vld [vmem:[#allocation17 + $0x2c] sm:$0xf]
    %v8984 = vld [vmem:[#allocation17 + $0x30] sm:$0xf]
    %v8985 = vld [vmem:[#allocation17 + $0x34] sm:$0xf]
    %v8986 = vld [vmem:[#allocation17 + $0x38] sm:$0xf]
    %v8987 = vld [vmem:[#allocation17 + $0x3c] sm:$0xf]
    %v8988 = vld [vmem:[%s13] sm:$0x1]
    %v8990 = vlaneseq
    %v8991 = vshrl.u32 %v8990, 7
    %v8992 = vsub.s32 0, %v8991
    %v8993 = vrot.slane %v8988, %v8992
    %v9011 = vunpack.c.l.b16 %v8972
    %v9012 = vunpack.c.l.b16 %v8973
    %v9013 = vunpack.c.l.b16 %v8974
    %v9014 = vunpack.c.l.b16 %v8975
    %v9015 = vunpack.c.l.b16 %v8976
    %v9016 = vunpack.c.l.b16 %v8977
    %v9017 = vunpack.c.l.b16 %v8978
    %v9018 = vunpack.c.l.b16 %v8979
    %v9019 = vunpack.c.l.b16 %v8980
    %v9020 = vunpack.c.l.b16 %v8981
    %v9021 = vunpack.c.l.b16 %v8982
    %v9022 = vunpack.c.l.b16 %v8983
    %v9023 = vunpack.c.l.b16 %v8984
    %v9024 = vunpack.c.l.b16 %v8985
    %v9025 = vunpack.c.l.b16 %v8986
    %v9026 = vunpack.c.l.b16 %v8987
    %v9027 = vpack.c.b16 %v9012, %v9011
    %v9028 = vpack.c.b16 %v9014, %v9013
    %v9029 = vpack.c.b16 %v9016, %v9015
    %v9030 = vpack.c.b16 %v9018, %v9017
    %v9031 = vpack.c.b16 %v9020, %v9019
    %v9032 = vpack.c.b16 %v9022, %v9021
    %v9033 = vpack.c.b16 %v9024, %v9023
    %v9034 = vpack.c.b16 %v9026, %v9025
    %9043 = vmatprep.subr.bf16.mxu0 0
    %9044 = vmatpush1.bf16.msra.mxu0 %v9034
    %9045 = vmatprep.subr.bf16.mxu0 0
    %9046 = vmatpush1.bf16.msra.mxu0 %v9033
    %9047 = vmatprep.subr.bf16.mxu0 0
    %9048 = vmatpush1.bf16.msra.mxu0 %v9032
    %9049 = vmatprep.subr.bf16.mxu0 0
    %9050 = vmatpush1.bf16.msra.mxu0 %v9031
    %9051 = vmatprep.subr.bf16.mxu0 0
    %9052 = vmatpush1.bf16.msra.mxu0 %v9030
    %9053 = vmatprep.subr.bf16.mxu0 0
    %9054 = vmatpush1.bf16.msra.mxu0 %v9029
    %9055 = vmatprep.subr.bf16.mxu0 0
    %9056 = vmatpush1.bf16.msra.mxu0 %v9028
    %9057 = vmatprep.subr.bf16.mxu0 0
    %9058 = vmatpush1.bf16.msra.mxu0 %v9027
    %9059 = vmatprep.subr.bf16.mxu0 0
    %9060 = vmatpush2.bf16.msra.mxu0 0
    %9061 = vmatprep.subr.bf16.mxu0 0
    %9062 = vmatpush2.bf16.msra.mxu0 0
    %9063 = vmatprep.subr.bf16.mxu0 0
    %9064 = vmatpush2.bf16.msra.mxu0 0
    %9065 = vmatprep.subr.bf16.mxu0 0
    %9066 = vmatpush2.bf16.msra.mxu0 0
    %9067 = vmatprep.subr.bf16.mxu0 0
    %9068 = vmatpush2.bf16.msra.mxu0 0
    %9069 = vmatprep.subr.bf16.mxu0 0
    %9070 = vmatpush2.bf16.msra.mxu0 0
    %9071 = vmatprep.subr.bf16.mxu0 0
    %9072 = vmatpush2.bf16.msra.mxu0 0
    %9073 = vmatprep.subr.bf16.mxu0 0
    %9074 = vmatpush2.bf16.msra.mxu0 0
    %9075 = vmatprep.mubr.bf16.mxu0 0
    %9076 = vmatmul.mubr.bf16.gmra.mxu0 %v8971
    %v9077 = vpop.f32.mrf.mxu0
    %v9078 = vadd.f32 %v8993, %v9077
    %v9079 = vpop.f32.mrf.mxu0
    %v9080 = vpop.f32.mrf.mxu0
    %v9081 = vpop.f32.mrf.mxu0
    %9082 = vdwg.mxu0
    %v9083 = vsub.f32 0.0, %v9078
    %v9084 = vmul.f32 %v9083, 1.442695
    %v9085 = vpow.pop %v9084
    %v9086 = vadd.f32 %v9085, 1.0
    %v9087 = vrcp.pop %v9086
    %v9088 = vld [vmem:[#allocation9] sm:$0xf]
    %v9089 = vld [vmem:[#allocation9 + $0x4] sm:$0xf]
    %v9090 = vld [vmem:[#allocation9 + $0x8] sm:$0xf]
    %v9091 = vld [vmem:[#allocation9 + $0xc] sm:$0xf]
    %v9092 = vld [vmem:[#allocation9 + $0x10] sm:$0xf]
    %v9093 = vld [vmem:[#allocation9 + $0x14] sm:$0xf]
    %v9094 = vld [vmem:[#allocation9 + $0x18] sm:$0xf]
    %v9095 = vld [vmem:[#allocation9 + $0x1c] sm:$0xf]
    %v9096 = vld [vmem:[#allocation9 + $0x20] sm:$0xf]
    %v9097 = vld [vmem:[#allocation9 + $0x24] sm:$0xf]
    %v9098 = vld [vmem:[#allocation9 + $0x28] sm:$0xf]
    %v9099 = vld [vmem:[#allocation9 + $0x2c] sm:$0xf]
    %v9100 = vld [vmem:[#allocation9 + $0x30] sm:$0xf]
    %v9101 = vld [vmem:[#allocation9 + $0x34] sm:$0xf]
    %v9102 = vld [vmem:[#allocation9 + $0x38] sm:$0xf]
    %v9103 = vld [vmem:[#allocation9 + $0x3c] sm:$0xf]
    %v9120 = vunpack.c.l.b16 %v9088
    %v9121 = vunpack.c.l.b16 %v9089
    %v9122 = vunpack.c.l.b16 %v9090
    %v9123 = vunpack.c.l.b16 %v9091
    %v9124 = vunpack.c.l.b16 %v9092
    %v9125 = vunpack.c.l.b16 %v9093
    %v9126 = vunpack.c.l.b16 %v9094
    %v9127 = vunpack.c.l.b16 %v9095
    %v9128 = vunpack.c.l.b16 %v9096
    %v9129 = vunpack.c.l.b16 %v9097
    %v9130 = vunpack.c.l.b16 %v9098
    %v9131 = vunpack.c.l.b16 %v9099
    %v9132 = vunpack.c.l.b16 %v9100
    %v9133 = vunpack.c.l.b16 %v9101
    %v9134 = vunpack.c.l.b16 %v9102
    %v9135 = vunpack.c.l.b16 %v9103
    %v9136 = vpack.c.b16 %v9121, %v9120
    %v9137 = vpack.c.b16 %v9123, %v9122
    %v9138 = vpack.c.b16 %v9125, %v9124
    %v9139 = vpack.c.b16 %v9127, %v9126
    %v9140 = vpack.c.b16 %v9129, %v9128
    %v9141 = vpack.c.b16 %v9131, %v9130
    %v9142 = vpack.c.b16 %v9133, %v9132
    %v9143 = vpack.c.b16 %v9135, %v9134
    %9152 = vmatprep.subr.bf16.mxu0 0
    %9153 = vmatpush1.bf16.msra.mxu0 %v9143
    %9154 = vmatprep.subr.bf16.mxu0 0
    %9155 = vmatpush1.bf16.msra.mxu0 %v9142
    %9156 = vmatprep.subr.bf16.mxu0 0
    %9157 = vmatpush1.bf16.msra.mxu0 %v9141
    %9158 = vmatprep.subr.bf16.mxu0 0
    %9159 = vmatpush1.bf16.msra.mxu0 %v9140
    %9160 = vmatprep.subr.bf16.mxu0 0
    %9161 = vmatpush1.bf16.msra.mxu0 %v9139
    %9162 = vmatprep.subr.bf16.mxu0 0
    %9163 = vmatpush1.bf16.msra.mxu0 %v9138
    %9164 = vmatprep.subr.bf16.mxu0 0
    %9165 = vmatpush1.bf16.msra.mxu0 %v9137
    %9166 = vmatprep.subr.bf16.mxu0 0
    %9167 = vmatpush1.bf16.msra.mxu0 %v9136
    %9168 = vmatprep.subr.bf16.mxu0 0
    %9169 = vmatpush2.bf16.msra.mxu0 0
    %9170 = vmatprep.subr.bf16.mxu0 0
    %9171 = vmatpush2.bf16.msra.mxu0 0
    %9172 = vmatprep.subr.bf16.mxu0 0
    %9173 = vmatpush2.bf16.msra.mxu0 0
    %9174 = vmatprep.subr.bf16.mxu0 0
    %9175 = vmatpush2.bf16.msra.mxu0 0
    %9176 = vmatprep.subr.bf16.mxu0 0
    %9177 = vmatpush2.bf16.msra.mxu0 0
    %9178 = vmatprep.subr.bf16.mxu0 0
    %9179 = vmatpush2.bf16.msra.mxu0 0
    %9180 = vmatprep.subr.bf16.mxu0 0
    %9181 = vmatpush2.bf16.msra.mxu0 0
    %9182 = vmatprep.subr.bf16.mxu0 0
    %9183 = vmatpush2.bf16.msra.mxu0 0
    %9184 = vmatprep.mubr.bf16.mxu0 0
    %9185 = vmatmul.mubr.bf16.gmra.mxu0 %v384
    %v9186 = vpop.f32.mrf.mxu0
    %v9187 = vadd.f32 0.0, %v9186
    %v9188 = vpop.f32.mrf.mxu0
    %v9189 = vpop.f32.mrf.mxu0
    %v9190 = vadd.f32 0.0, %v9189
    %v9191 = vpop.f32.mrf.mxu0
    %9192 = vmatprep.mubr.bf16.mxu0 0
    %9193 = vmatmul.mubr.bf16.gmra.mxu0 %v385
    %v9194 = vpop.f32.mrf.mxu0
    %v9195 = vadd.f32 0.0, %v9194
    %v9196 = vpop.f32.mrf.mxu0
    %v9197 = vpop.f32.mrf.mxu0
    %v9198 = vadd.f32 0.0, %v9197
    %v9199 = vpop.f32.mrf.mxu0
    %9200 = vmatprep.mubr.bf16.mxu0 0
    %9201 = vmatmul.mubr.bf16.gmra.mxu0 %v386
    %v9202 = vpop.f32.mrf.mxu0
    %v9203 = vadd.f32 0.0, %v9202
    %v9204 = vpop.f32.mrf.mxu0
    %v9205 = vpop.f32.mrf.mxu0
    %v9206 = vadd.f32 0.0, %v9205
    %v9207 = vpop.f32.mrf.mxu0
    %9208 = vmatprep.mubr.bf16.mxu0 0
    %9209 = vmatmul.mubr.bf16.gmra.mxu0 %v387
    %v9210 = vpop.f32.mrf.mxu0
    %v9211 = vadd.f32 0.0, %v9210
    %v9212 = vpop.f32.mrf.mxu0
    %v9213 = vpop.f32.mrf.mxu0
    %v9214 = vadd.f32 0.0, %v9213
    %v9215 = vpop.f32.mrf.mxu0
    %9216 = vmatprep.mubr.bf16.mxu0 0
    %9217 = vmatmul.mubr.bf16.gmra.mxu0 %v388
    %v9218 = vpop.f32.mrf.mxu0
    %v9219 = vadd.f32 0.0, %v9218
    %v9220 = vpop.f32.mrf.mxu0
    %v9221 = vpop.f32.mrf.mxu0
    %v9222 = vadd.f32 0.0, %v9221
    %v9223 = vpop.f32.mrf.mxu0
    %9224 = vmatprep.mubr.bf16.mxu0 0
    %9225 = vmatmul.mubr.bf16.gmra.mxu0 %v389
    %v9226 = vpop.f32.mrf.mxu0
    %v9227 = vadd.f32 0.0, %v9226
    %v9228 = vpop.f32.mrf.mxu0
    %v9229 = vpop.f32.mrf.mxu0
    %v9230 = vadd.f32 0.0, %v9229
    %v9231 = vpop.f32.mrf.mxu0
    %9232 = vmatprep.mubr.bf16.mxu0 0
    %9233 = vmatmul.mubr.bf16.gmra.mxu0 %v390
    %v9234 = vpop.f32.mrf.mxu0
    %v9235 = vadd.f32 0.0, %v9234
    %v9236 = vpop.f32.mrf.mxu0
    %v9237 = vpop.f32.mrf.mxu0
    %v9238 = vadd.f32 0.0, %v9237
    %v9239 = vpop.f32.mrf.mxu0
    %9240 = vmatprep.mubr.bf16.mxu0 0
    %9241 = vmatmul.mubr.bf16.gmra.mxu0 %v391
    %v9242 = vpop.f32.mrf.mxu0
    %v9243 = vadd.f32 0.0, %v9242
    %v9244 = vpop.f32.mrf.mxu0
    %v9245 = vpop.f32.mrf.mxu0
    %v9246 = vadd.f32 0.0, %v9245
    %v9247 = vpop.f32.mrf.mxu0
    %9248 = vmatprep.mubr.bf16.mxu0 0
    %9249 = vmatmul.mubr.bf16.gmra.mxu0 %v392
    %v9250 = vpop.f32.mrf.mxu0
    %v9251 = vadd.f32 0.0, %v9250
    %v9252 = vpop.f32.mrf.mxu0
    %v9253 = vpop.f32.mrf.mxu0
    %v9254 = vadd.f32 0.0, %v9253
    %v9255 = vpop.f32.mrf.mxu0
    %9256 = vmatprep.mubr.bf16.mxu0 0
    %9257 = vmatmul.mubr.bf16.gmra.mxu0 %v393
    %v9258 = vpop.f32.mrf.mxu0
    %v9259 = vadd.f32 0.0, %v9258
    %v9260 = vpop.f32.mrf.mxu0
    %v9261 = vpop.f32.mrf.mxu0
    %v9262 = vadd.f32 0.0, %v9261
    %v9263 = vpop.f32.mrf.mxu0
    %9264 = vmatprep.mubr.bf16.mxu0 0
    %9265 = vmatmul.mubr.bf16.gmra.mxu0 %v394
    %v9266 = vpop.f32.mrf.mxu0
    %v9267 = vadd.f32 0.0, %v9266
    %v9268 = vpop.f32.mrf.mxu0
    %v9269 = vpop.f32.mrf.mxu0
    %v9270 = vadd.f32 0.0, %v9269
    %v9271 = vpop.f32.mrf.mxu0
    %9272 = vmatprep.mubr.bf16.mxu0 0
    %9273 = vmatmul.mubr.bf16.gmra.mxu0 %v395
    %v9274 = vpop.f32.mrf.mxu0
    %v9275 = vadd.f32 0.0, %v9274
    %v9276 = vpop.f32.mrf.mxu0
    %v9277 = vpop.f32.mrf.mxu0
    %v9278 = vadd.f32 0.0, %v9277
    %v9279 = vpop.f32.mrf.mxu0
    %9280 = vmatprep.mubr.bf16.mxu0 0
    %9281 = vmatmul.mubr.bf16.gmra.mxu0 %v396
    %v9282 = vpop.f32.mrf.mxu0
    %v9283 = vadd.f32 0.0, %v9282
    %v9284 = vpop.f32.mrf.mxu0
    %v9285 = vpop.f32.mrf.mxu0
    %v9286 = vadd.f32 0.0, %v9285
    %v9287 = vpop.f32.mrf.mxu0
    %9288 = vmatprep.mubr.bf16.mxu0 0
    %9289 = vmatmul.mubr.bf16.gmra.mxu0 %v397
    %v9290 = vpop.f32.mrf.mxu0
    %v9291 = vadd.f32 0.0, %v9290
    %v9292 = vpop.f32.mrf.mxu0
    %v9293 = vpop.f32.mrf.mxu0
    %v9294 = vadd.f32 0.0, %v9293
    %v9295 = vpop.f32.mrf.mxu0
    %9296 = vmatprep.mubr.bf16.mxu0 0
    %9297 = vmatmul.mubr.bf16.gmra.mxu0 %v398
    %v9298 = vpop.f32.mrf.mxu0
    %v9299 = vadd.f32 0.0, %v9298
    %v9300 = vpop.f32.mrf.mxu0
    %v9301 = vpop.f32.mrf.mxu0
    %v9302 = vadd.f32 0.0, %v9301
    %v9303 = vpop.f32.mrf.mxu0
    %9304 = vmatprep.mubr.bf16.mxu0 0
    %9305 = vmatmul.mubr.bf16.gmra.mxu0 %v399
    %v9306 = vpop.f32.mrf.mxu0
    %v9307 = vadd.f32 0.0, %v9306
    %v9308 = vpop.f32.mrf.mxu0
    %v9309 = vpop.f32.mrf.mxu0
    %v9310 = vadd.f32 0.0, %v9309
    %v9311 = vpop.f32.mrf.mxu0
    %9312 = vmatprep.mubr.bf16.mxu0 0
    %9313 = vmatmul.mubr.bf16.gmra.mxu0 %v400
    %v9314 = vpop.f32.mrf.mxu0
    %v9315 = vadd.f32 0.0, %v9314
    %v9316 = vpop.f32.mrf.mxu0
    %v9317 = vpop.f32.mrf.mxu0
    %v9318 = vadd.f32 0.0, %v9317
    %v9319 = vpop.f32.mrf.mxu0
    %9320 = vmatprep.mubr.bf16.mxu0 0
    %9321 = vmatmul.mubr.bf16.gmra.mxu0 %v401
    %v9322 = vpop.f32.mrf.mxu0
    %v9323 = vadd.f32 0.0, %v9322
    %v9324 = vpop.f32.mrf.mxu0
    %v9325 = vpop.f32.mrf.mxu0
    %v9326 = vadd.f32 0.0, %v9325
    %v9327 = vpop.f32.mrf.mxu0
    %9328 = vmatprep.mubr.bf16.mxu0 0
    %9329 = vmatmul.mubr.bf16.gmra.mxu0 %v402
    %v9330 = vpop.f32.mrf.mxu0
    %v9331 = vadd.f32 0.0, %v9330
    %v9332 = vpop.f32.mrf.mxu0
    %v9333 = vpop.f32.mrf.mxu0
    %v9334 = vadd.f32 0.0, %v9333
    %v9335 = vpop.f32.mrf.mxu0
    %9336 = vmatprep.mubr.bf16.mxu0 0
    %9337 = vmatmul.mubr.bf16.gmra.mxu0 %v403
    %v9338 = vpop.f32.mrf.mxu0
    %v9339 = vadd.f32 0.0, %v9338
    %v9340 = vpop.f32.mrf.mxu0
    %v9341 = vpop.f32.mrf.mxu0
    %v9342 = vadd.f32 0.0, %v9341
    %v9343 = vpop.f32.mrf.mxu0
    %9344 = vmatprep.mubr.bf16.mxu0 0
    %9345 = vmatmul.mubr.bf16.gmra.mxu0 %v404
    %v9346 = vpop.f32.mrf.mxu0
    %v9347 = vadd.f32 0.0, %v9346
    %v9348 = vpop.f32.mrf.mxu0
    %v9349 = vpop.f32.mrf.mxu0
    %v9350 = vadd.f32 0.0, %v9349
    %v9351 = vpop.f32.mrf.mxu0
    %9352 = vmatprep.mubr.bf16.mxu0 0
    %9353 = vmatmul.mubr.bf16.gmra.mxu0 %v405
    %v9354 = vpop.f32.mrf.mxu0
    %v9355 = vadd.f32 0.0, %v9354
    %v9356 = vpop.f32.mrf.mxu0
    %v9357 = vpop.f32.mrf.mxu0
    %v9358 = vadd.f32 0.0, %v9357
    %v9359 = vpop.f32.mrf.mxu0
    %9360 = vmatprep.mubr.bf16.mxu0 0
    %9361 = vmatmul.mubr.bf16.gmra.mxu0 %v406
    %v9362 = vpop.f32.mrf.mxu0
    %v9363 = vadd.f32 0.0, %v9362
    %v9364 = vpop.f32.mrf.mxu0
    %v9365 = vpop.f32.mrf.mxu0
    %v9366 = vadd.f32 0.0, %v9365
    %v9367 = vpop.f32.mrf.mxu0
    %9368 = vmatprep.mubr.bf16.mxu0 0
    %9369 = vmatmul.mubr.bf16.gmra.mxu0 %v407
    %v9370 = vpop.f32.mrf.mxu0
    %v9371 = vadd.f32 0.0, %v9370
    %v9372 = vpop.f32.mrf.mxu0
    %v9373 = vpop.f32.mrf.mxu0
    %v9374 = vadd.f32 0.0, %v9373
    %v9375 = vpop.f32.mrf.mxu0
    %9376 = vmatprep.mubr.bf16.mxu0 0
    %9377 = vmatmul.mubr.bf16.gmra.mxu0 %v408
    %v9378 = vpop.f32.mrf.mxu0
    %v9379 = vadd.f32 0.0, %v9378
    %v9380 = vpop.f32.mrf.mxu0
    %v9381 = vpop.f32.mrf.mxu0
    %v9382 = vadd.f32 0.0, %v9381
    %v9383 = vpop.f32.mrf.mxu0
    %9384 = vmatprep.mubr.bf16.mxu0 0
    %9385 = vmatmul.mubr.bf16.gmra.mxu0 %v409
    %v9386 = vpop.f32.mrf.mxu0
    %v9387 = vadd.f32 0.0, %v9386
    %v9388 = vpop.f32.mrf.mxu0
    %v9389 = vpop.f32.mrf.mxu0
    %v9390 = vadd.f32 0.0, %v9389
    %v9391 = vpop.f32.mrf.mxu0
    %9392 = vmatprep.mubr.bf16.mxu0 0
    %9393 = vmatmul.mubr.bf16.gmra.mxu0 %v410
    %v9394 = vpop.f32.mrf.mxu0
    %v9395 = vadd.f32 0.0, %v9394
    %v9396 = vpop.f32.mrf.mxu0
    %v9397 = vpop.f32.mrf.mxu0
    %v9398 = vadd.f32 0.0, %v9397
    %v9399 = vpop.f32.mrf.mxu0
    %9400 = vmatprep.mubr.bf16.mxu0 0
    %9401 = vmatmul.mubr.bf16.gmra.mxu0 %v411
    %v9402 = vpop.f32.mrf.mxu0
    %v9403 = vadd.f32 0.0, %v9402
    %v9404 = vpop.f32.mrf.mxu0
    %v9405 = vpop.f32.mrf.mxu0
    %v9406 = vadd.f32 0.0, %v9405
    %v9407 = vpop.f32.mrf.mxu0
    %9408 = vmatprep.mubr.bf16.mxu0 0
    %9409 = vmatmul.mubr.bf16.gmra.mxu0 %v412
    %v9410 = vpop.f32.mrf.mxu0
    %v9411 = vadd.f32 0.0, %v9410
    %v9412 = vpop.f32.mrf.mxu0
    %v9413 = vpop.f32.mrf.mxu0
    %v9414 = vadd.f32 0.0, %v9413
    %v9415 = vpop.f32.mrf.mxu0
    %9416 = vmatprep.mubr.bf16.mxu0 0
    %9417 = vmatmul.mubr.bf16.gmra.mxu0 %v413
    %v9418 = vpop.f32.mrf.mxu0
    %v9419 = vadd.f32 0.0, %v9418
    %v9420 = vpop.f32.mrf.mxu0
    %v9421 = vpop.f32.mrf.mxu0
    %v9422 = vadd.f32 0.0, %v9421
    %v9423 = vpop.f32.mrf.mxu0
    %9424 = vmatprep.mubr.bf16.mxu0 0
    %9425 = vmatmul.mubr.bf16.gmra.mxu0 %v414
    %v9426 = vpop.f32.mrf.mxu0
    %v9427 = vadd.f32 0.0, %v9426
    %v9428 = vpop.f32.mrf.mxu0
    %v9429 = vpop.f32.mrf.mxu0
    %v9430 = vadd.f32 0.0, %v9429
    %v9431 = vpop.f32.mrf.mxu0
    %9432 = vmatprep.mubr.bf16.mxu0 0
    %9433 = vmatmul.mubr.bf16.gmra.mxu0 %v415
    %v9434 = vpop.f32.mrf.mxu0
    %v9435 = vadd.f32 0.0, %v9434
    %v9436 = vpop.f32.mrf.mxu0
    %v9437 = vpop.f32.mrf.mxu0
    %v9438 = vadd.f32 0.0, %v9437
    %v9439 = vpop.f32.mrf.mxu0
    %9440 = vdwg.mxu0
    %v9441 = vlaneseq
    %v9442 = vshrl.u32 %v9441, 7
    %v9443 = vsub.s32 0, %v9442
    %v9444 = vrot.slane %v9087, %v9443
    %v9445 = vmul.f32 %v8441, %v9444
    %v9446 = vmul.f32 %v8444, %v9444
    %v9447 = vmul.f32 %v8449, %v9444
    %v9448 = vmul.f32 %v8452, %v9444
    %v9449 = vmul.f32 %v8457, %v9444
    %v9450 = vmul.f32 %v8460, %v9444
    %v9451 = vmul.f32 %v8465, %v9444
    %v9452 = vmul.f32 %v8468, %v9444
    %v9453 = vmul.f32 %v8473, %v9444
    %v9454 = vmul.f32 %v8476, %v9444
    %v9455 = vmul.f32 %v8481, %v9444
    %v9456 = vmul.f32 %v8484, %v9444
    %v9457 = vmul.f32 %v8489, %v9444
    %v9458 = vmul.f32 %v8492, %v9444
    %v9459 = vmul.f32 %v8497, %v9444
    %v9460 = vmul.f32 %v8500, %v9444
    %v9461 = vmul.f32 %v8505, %v9444
    %v9462 = vmul.f32 %v8508, %v9444
    %v9463 = vmul.f32 %v8513, %v9444
    %v9464 = vmul.f32 %v8516, %v9444
    %v9465 = vmul.f32 %v8521, %v9444
    %v9466 = vmul.f32 %v8524, %v9444
    %v9467 = vmul.f32 %v8529, %v9444
    %v9468 = vmul.f32 %v8532, %v9444
    %v9469 = vmul.f32 %v8537, %v9444
    %v9470 = vmul.f32 %v8540, %v9444
    %v9471 = vmul.f32 %v8545, %v9444
    %v9472 = vmul.f32 %v8548, %v9444
    %v9473 = vmul.f32 %v8553, %v9444
    %v9474 = vmul.f32 %v8556, %v9444
    %v9475 = vmul.f32 %v8561, %v9444
    %v9476 = vmul.f32 %v8564, %v9444
    %v9477 = vadd.f32 %v9445, %v9187
    %v9478 = vadd.f32 %v9446, %v9190
    %v9479 = vadd.f32 %v9447, %v9195
    %v9480 = vadd.f32 %v9448, %v9198
    %v9481 = vadd.f32 %v9449, %v9203
    %v9482 = vadd.f32 %v9450, %v9206
    %v9483 = vadd.f32 %v9451, %v9211
    %v9484 = vadd.f32 %v9452, %v9214
    %v9485 = vadd.f32 %v9453, %v9219
    %v9486 = vadd.f32 %v9454, %v9222
    %v9487 = vadd.f32 %v9455, %v9227
    %v9488 = vadd.f32 %v9456, %v9230
    %v9489 = vadd.f32 %v9457, %v9235
    %v9490 = vadd.f32 %v9458, %v9238
    %v9491 = vadd.f32 %v9459, %v9243
    %v9492 = vadd.f32 %v9460, %v9246
    %v9493 = vadd.f32 %v9461, %v9251
    %v9494 = vadd.f32 %v9462, %v9254
    %v9495 = vadd.f32 %v9463, %v9259
    %v9496 = vadd.f32 %v9464, %v9262
    %v9497 = vadd.f32 %v9465, %v9267
    %v9498 = vadd.f32 %v9466, %v9270
    %v9499 = vadd.f32 %v9467, %v9275
    %v9500 = vadd.f32 %v9468, %v9278
    %v9501 = vadd.f32 %v9469, %v9283
    %v9502 = vadd.f32 %v9470, %v9286
    %v9503 = vadd.f32 %v9471, %v9291
    %v9504 = vadd.f32 %v9472, %v9294
    %v9505 = vadd.f32 %v9473, %v9299
    %v9506 = vadd.f32 %v9474, %v9302
    %v9507 = vadd.f32 %v9475, %v9307
    %v9508 = vadd.f32 %v9476, %v9310
    %v9509 = vmax.f32 %v9477, 0.0
    %v9510 = vmax.f32 %v9478, 0.0
    %v9511 = vmax.f32 %v9479, 0.0
    %v9512 = vmax.f32 %v9480, 0.0
    %v9513 = vmax.f32 %v9481, 0.0
    %v9514 = vmax.f32 %v9482, 0.0
    %v9515 = vmax.f32 %v9483, 0.0
    %v9516 = vmax.f32 %v9484, 0.0
    %v9517 = vmax.f32 %v9485, 0.0
    %v9518 = vmax.f32 %v9486, 0.0
    %v9519 = vmax.f32 %v9487, 0.0
    %v9520 = vmax.f32 %v9488, 0.0
    %v9521 = vmax.f32 %v9489, 0.0
    %v9522 = vmax.f32 %v9490, 0.0
    %v9523 = vmax.f32 %v9491, 0.0
    %v9524 = vmax.f32 %v9492, 0.0
    %v9525 = vmax.f32 %v9493, 0.0
    %v9526 = vmax.f32 %v9494, 0.0
    %v9527 = vmax.f32 %v9495, 0.0
    %v9528 = vmax.f32 %v9496, 0.0
    %v9529 = vmax.f32 %v9497, 0.0
    %v9530 = vmax.f32 %v9498, 0.0
    %v9531 = vmax.f32 %v9499, 0.0
    %v9532 = vmax.f32 %v9500, 0.0
    %v9533 = vmax.f32 %v9501, 0.0
    %v9534 = vmax.f32 %v9502, 0.0
    %v9535 = vmax.f32 %v9503, 0.0
    %v9536 = vmax.f32 %v9504, 0.0
    %v9537 = vmax.f32 %v9505, 0.0
    %v9538 = vmax.f32 %v9506, 0.0
    %v9539 = vmax.f32 %v9507, 0.0
    %v9540 = vmax.f32 %v9508, 0.0
    %9541 = vst [vmem:[#allocation18] sm:$0xff] %v9509
    %9542 = vst [vmem:[#allocation18 + $0x8] sm:$0xff] %v9510
    %9543 = vst [vmem:[#allocation18 + $0x10] sm:$0xff] %v9511
    %9544 = vst [vmem:[#allocation18 + $0x18] sm:$0xff] %v9512
    %9545 = vst [vmem:[#allocation18 + $0x20] sm:$0xff] %v9513
    %9546 = vst [vmem:[#allocation18 + $0x28] sm:$0xff] %v9514
    %9547 = vst [vmem:[#allocation18 + $0x30] sm:$0xff] %v9515
    %9548 = vst [vmem:[#allocation18 + $0x38] sm:$0xff] %v9516
    %9549 = vst [vmem:[#allocation18 + $0x40] sm:$0xff] %v9517
    %9550 = vst [vmem:[#allocation18 + $0x48] sm:$0xff] %v9518
    %9551 = vst [vmem:[#allocation18 + $0x50] sm:$0xff] %v9519
    %9552 = vst [vmem:[#allocation18 + $0x58] sm:$0xff] %v9520
    %9553 = vst [vmem:[#allocation18 + $0x60] sm:$0xff] %v9521
    %9554 = vst [vmem:[#allocation18 + $0x68] sm:$0xff] %v9522
    %9555 = vst [vmem:[#allocation18 + $0x70] sm:$0xff] %v9523
    %9556 = vst [vmem:[#allocation18 + $0x78] sm:$0xff] %v9524
    %9557 = vst [vmem:[#allocation18 + $0x80] sm:$0xff] %v9525
    %9558 = vst [vmem:[#allocation18 + $0x88] sm:$0xff] %v9526
    %9559 = vst [vmem:[#allocation18 + $0x90] sm:$0xff] %v9527
    %9560 = vst [vmem:[#allocation18 + $0x98] sm:$0xff] %v9528
    %9561 = vst [vmem:[#allocation18 + $0xa0] sm:$0xff] %v9529
    %9562 = vst [vmem:[#allocation18 + $0xa8] sm:$0xff] %v9530
    %9563 = vst [vmem:[#allocation18 + $0xb0] sm:$0xff] %v9531
    %9564 = vst [vmem:[#allocation18 + $0xb8] sm:$0xff] %v9532
    %9565 = vst [vmem:[#allocation18 + $0xc0] sm:$0xff] %v9533
    %9566 = vst [vmem:[#allocation18 + $0xc8] sm:$0xff] %v9534
    %9567 = vst [vmem:[#allocation18 + $0xd0] sm:$0xff] %v9535
    %9568 = vst [vmem:[#allocation18 + $0xd8] sm:$0xff] %v9536
    %9569 = vst [vmem:[#allocation18 + $0xe0] sm:$0xff] %v9537
    %9570 = vst [vmem:[#allocation18 + $0xe8] sm:$0xff] %v9538
    %9571 = vst [vmem:[#allocation18 + $0xf0] sm:$0xff] %v9539
    %9572 = vst [vmem:[#allocation18 + $0xf8] sm:$0xff] %v9540
    %v9573 = vlaneseq
    %v9574 = vshrl.u32 %v9573, 7
    %v9575 = vsub.s32 1, %v9574
    %v9576 = vrot.slane %v9087, %v9575
    %v9577 = vmul.f32 %v8569, %v9576
    %v9578 = vmul.f32 %v8572, %v9576
    %v9579 = vmul.f32 %v8577, %v9576
    %v9580 = vmul.f32 %v8580, %v9576
    %v9581 = vmul.f32 %v8585, %v9576
    %v9582 = vmul.f32 %v8588, %v9576
    %v9583 = vmul.f32 %v8593, %v9576
    %v9584 = vmul.f32 %v8596, %v9576
    %v9585 = vmul.f32 %v8601, %v9576
    %v9586 = vmul.f32 %v8604, %v9576
    %v9587 = vmul.f32 %v8609, %v9576
    %v9588 = vmul.f32 %v8612, %v9576
    %v9589 = vmul.f32 %v8617, %v9576
    %v9590 = vmul.f32 %v8620, %v9576
    %v9591 = vmul.f32 %v8625, %v9576
    %v9592 = vmul.f32 %v8628, %v9576
    %v9593 = vmul.f32 %v8633, %v9576
    %v9594 = vmul.f32 %v8636, %v9576
    %v9595 = vmul.f32 %v8641, %v9576
    %v9596 = vmul.f32 %v8644, %v9576
    %v9597 = vmul.f32 %v8649, %v9576
    %v9598 = vmul.f32 %v8652, %v9576
    %v9599 = vmul.f32 %v8657, %v9576
    %v9600 = vmul.f32 %v8660, %v9576
    %v9601 = vmul.f32 %v8665, %v9576
    %v9602 = vmul.f32 %v8668, %v9576
    %v9603 = vmul.f32 %v8673, %v9576
    %v9604 = vmul.f32 %v8676, %v9576
    %v9605 = vmul.f32 %v8681, %v9576
    %v9606 = vmul.f32 %v8684, %v9576
    %v9607 = vmul.f32 %v8689, %v9576
    %v9608 = vmul.f32 %v8692, %v9576
    %v9609 = vadd.f32 %v9577, %v9315
    %v9610 = vadd.f32 %v9578, %v9318
    %v9611 = vadd.f32 %v9579, %v9323
    %v9612 = vadd.f32 %v9580, %v9326
    %v9613 = vadd.f32 %v9581, %v9331
    %v9614 = vadd.f32 %v9582, %v9334
    %v9615 = vadd.f32 %v9583, %v9339
    %v9616 = vadd.f32 %v9584, %v9342
    %v9617 = vadd.f32 %v9585, %v9347
    %v9618 = vadd.f32 %v9586, %v9350
    %v9619 = vadd.f32 %v9587, %v9355
    %v9620 = vadd.f32 %v9588, %v9358
    %v9621 = vadd.f32 %v9589, %v9363
    %v9622 = vadd.f32 %v9590, %v9366
    %v9623 = vadd.f32 %v9591, %v9371
    %v9624 = vadd.f32 %v9592, %v9374
    %v9625 = vadd.f32 %v9593, %v9379
    %v9626 = vadd.f32 %v9594, %v9382
    %v9627 = vadd.f32 %v9595, %v9387
    %v9628 = vadd.f32 %v9596, %v9390
    %v9629 = vadd.f32 %v9597, %v9395
    %v9630 = vadd.f32 %v9598, %v9398
    %v9631 = vadd.f32 %v9599, %v9403
    %v9632 = vadd.f32 %v9600, %v9406
    %v9633 = vadd.f32 %v9601, %v9411
    %v9634 = vadd.f32 %v9602, %v9414
    %v9635 = vadd.f32 %v9603, %v9419
    %v9636 = vadd.f32 %v9604, %v9422
    %v9637 = vadd.f32 %v9605, %v9427
    %v9638 = vadd.f32 %v9606, %v9430
    %v9639 = vadd.f32 %v9607, %v9435
    %v9640 = vadd.f32 %v9608, %v9438
    %v9641 = vmax.f32 %v9609, 0.0
    %v9642 = vmax.f32 %v9610, 0.0
    %v9643 = vmax.f32 %v9611, 0.0
    %v9644 = vmax.f32 %v9612, 0.0
    %v9645 = vmax.f32 %v9613, 0.0
    %v9646 = vmax.f32 %v9614, 0.0
    %v9647 = vmax.f32 %v9615, 0.0
    %v9648 = vmax.f32 %v9616, 0.0
    %v9649 = vmax.f32 %v9617, 0.0
    %v9650 = vmax.f32 %v9618, 0.0
    %v9651 = vmax.f32 %v9619, 0.0
    %v9652 = vmax.f32 %v9620, 0.0
    %v9653 = vmax.f32 %v9621, 0.0
    %v9654 = vmax.f32 %v9622, 0.0
    %v9655 = vmax.f32 %v9623, 0.0
    %v9656 = vmax.f32 %v9624, 0.0
    %v9657 = vmax.f32 %v9625, 0.0
    %v9658 = vmax.f32 %v9626, 0.0
    %v9659 = vmax.f32 %v9627, 0.0
    %v9660 = vmax.f32 %v9628, 0.0
    %v9661 = vmax.f32 %v9629, 0.0
    %v9662 = vmax.f32 %v9630, 0.0
    %v9663 = vmax.f32 %v9631, 0.0
    %v9664 = vmax.f32 %v9632, 0.0
    %v9665 = vmax.f32 %v9633, 0.0
    %v9666 = vmax.f32 %v9634, 0.0
    %v9667 = vmax.f32 %v9635, 0.0
    %v9668 = vmax.f32 %v9636, 0.0
    %v9669 = vmax.f32 %v9637, 0.0
    %v9670 = vmax.f32 %v9638, 0.0
    %v9671 = vmax.f32 %v9639, 0.0
    %v9672 = vmax.f32 %v9640, 0.0
    %9673 = vst [vmem:[#allocation18 + $0x100] sm:$0xff] %v9641
    %9674 = vst [vmem:[#allocation18 + $0x108] sm:$0xff] %v9642
    %9675 = vst [vmem:[#allocation18 + $0x110] sm:$0xff] %v9643
    %9676 = vst [vmem:[#allocation18 + $0x118] sm:$0xff] %v9644
    %9677 = vst [vmem:[#allocation18 + $0x120] sm:$0xff] %v9645
    %9678 = vst [vmem:[#allocation18 + $0x128] sm:$0xff] %v9646
    %9679 = vst [vmem:[#allocation18 + $0x130] sm:$0xff] %v9647
    %9680 = vst [vmem:[#allocation18 + $0x138] sm:$0xff] %v9648
    %9681 = vst [vmem:[#allocation18 + $0x140] sm:$0xff] %v9649
    %9682 = vst [vmem:[#allocation18 + $0x148] sm:$0xff] %v9650
    %9683 = vst [vmem:[#allocation18 + $0x150] sm:$0xff] %v9651
    %9684 = vst [vmem:[#allocation18 + $0x158] sm:$0xff] %v9652
    %9685 = vst [vmem:[#allocation18 + $0x160] sm:$0xff] %v9653
    %9686 = vst [vmem:[#allocation18 + $0x168] sm:$0xff] %v9654
    %9687 = vst [vmem:[#allocation18 + $0x170] sm:$0xff] %v9655
    %9688 = vst [vmem:[#allocation18 + $0x178] sm:$0xff] %v9656
    %9689 = vst [vmem:[#allocation18 + $0x180] sm:$0xff] %v9657
    %9690 = vst [vmem:[#allocation18 + $0x188] sm:$0xff] %v9658
    %9691 = vst [vmem:[#allocation18 + $0x190] sm:$0xff] %v9659
    %9692 = vst [vmem:[#allocation18 + $0x198] sm:$0xff] %v9660
    %9693 = vst [vmem:[#allocation18 + $0x1a0] sm:$0xff] %v9661
    %9694 = vst [vmem:[#allocation18 + $0x1a8] sm:$0xff] %v9662
    %9695 = vst [vmem:[#allocation18 + $0x1b0] sm:$0xff] %v9663
    %9696 = vst [vmem:[#allocation18 + $0x1b8] sm:$0xff] %v9664
    %9697 = vst [vmem:[#allocation18 + $0x1c0] sm:$0xff] %v9665
    %9698 = vst [vmem:[#allocation18 + $0x1c8] sm:$0xff] %v9666
    %9699 = vst [vmem:[#allocation18 + $0x1d0] sm:$0xff] %v9667
    %9700 = vst [vmem:[#allocation18 + $0x1d8] sm:$0xff] %v9668
    %9701 = vst [vmem:[#allocation18 + $0x1e0] sm:$0xff] %v9669
    %9702 = vst [vmem:[#allocation18 + $0x1e8] sm:$0xff] %v9670
    %9703 = vst [vmem:[#allocation18 + $0x1f0] sm:$0xff] %v9671
    %9704 = vst [vmem:[#allocation18 + $0x1f8] sm:$0xff] %v9672
    // Predicated region
    $region94: #{tpu_custom_call.1} parent=1 // pred_check
      _
    $region95: #{tpu_custom_call.1} parent=1 // pred_check_branch
      %9706 = sbr.rel (0) target = $region97
    $region96: #{tpu_custom_call.1} parent=1 // pred_region
      %s9708 = ssub.s32 8192, 8192
      %9709 = vsyncadd [#allocation5], %s9708
      %s9710 = sshll.u32 [#allocation18], 4
      %s9711 = int_to_ptr.vmem [resolvable:$true] %s9710
      %9716 = dma.vmem_to_hbm [thread:$0]  %s9711, 8192, %s14, [#allocation5], 128, 128, 8
    $region97: #{tpu_custom_call.1} parent=1 // pred_fallthru
      _
    // Predicated region
    $region98: #{tpu_custom_call.1} parent=1 // pred_check
      _
    $region99: #{tpu_custom_call.1} parent=1 // pred_check_branch
      %9718 = sbr.rel (0) target = $region101
    $region100: #{tpu_custom_call.1} parent=1 // pred_region
      %9719 = dma.done [#allocation5], 8192
    $region101: #{tpu_custom_call.1} parent=1 // pred_fallthru
      _
    %9720 = vsyncpa [#allocation4], 1
    %9721 = vsyncpa [#allocation7], 1
    %9722 = vsyncpa [#allocation10], 1
    %9723 = vsyncpa [#allocation13], 1
    %9724 = vsyncpa [#allocation16], 1
    %9725 = vsyncpa [#allocation5], 1

</llo_original>
